<compile_context>
chip_gen: v5e
topology: v5e:2x2
jax: 0.10.0
libtpu: 0.0.40
codegen_flags: <defaults>
</compile_context>

<pallas_src>
import jax
import jax.numpy as jnp
from jax.experimental import pallas as pl
from jax.experimental.pallas import tpu as pltpu


# Conservative scoped-VMEM request: leaves headroom on v7x (64 MiB/TC total),
# comfortably under budget on v5e/v6e (128 MiB).
_VMEM_LIMIT = 48 * 1024 * 1024


def _round_up(x, m):
    return ((x + m - 1) // m) * m


def _pick_tile(dim, candidates):
    for c in candidates:
        if c <= dim and dim % c == 0:
            return c
    return dim


# ----------------------------------------------------------------------------
# Output projection: K-tiled matmul + bias, bf16 MXU operands, f32 accumulator.
# ----------------------------------------------------------------------------
def _matmul_bias_kernel(x_ref, w_ref, b_ref, o_ref, acc_ref):
    @pl.when(pl.program_id(2) == 0)
    def _():
        acc_ref[...] = jnp.zeros_like(acc_ref)

    acc_ref[...] += jnp.dot(x_ref[...].astype(jnp.bfloat16),
                            w_ref[...].astype(jnp.bfloat16),
                            preferred_element_type=jnp.float32)

    @pl.when(pl.program_id(2) == pl.num_programs(2) - 1)
    def _():
        # Bias added exactly once, on the last K step.
        o_ref[...] = (acc_ref[...] + b_ref[...]).astype(o_ref.dtype)


def matmul_bias_pallas(x, w, b):
    """x: (M, K), w: (K, N), b: (1, N)  ->  (M, N) float32.  M%8==0, K%128==0, N%128==0."""
    M, K = x.shape
    _, N = w.shape
    tm = _pick_tile(M, (512, 256, 128, 64, 32, 16, 8))
    tn = _pick_tile(N, (1024, 512, 256, 128))
    tk = _pick_tile(K, (512, 256, 128))
    grid = (M // tm, N // tn, K // tk)
    return pl.pallas_call(
        _matmul_bias_kernel,
        out_shape=jax.ShapeDtypeStruct((M, N), jnp.float32),
        grid_spec=pltpu.PrefetchScalarGridSpec(
            num_scalar_prefetch=0,
            grid=grid,
            in_specs=[
                pl.BlockSpec((tm, tk), lambda i, j, k: (i, k)),
                pl.BlockSpec((tk, tn), lambda i, j, k: (k, j)),
                pl.BlockSpec((1, tn), lambda i, j, k: (0, j)),
            ],
            out_specs=pl.BlockSpec((tm, tn), lambda i, j, k: (i, j)),
            scratch_shapes=[pltpu.VMEM((tm, tn), jnp.float32)],
        ),
        compiler_params=pltpu.CompilerParams(
            dimension_semantics=("parallel", "parallel", "arbitrary"),
            vmem_limit_bytes=_VMEM_LIMIT),
    )(x, w, b)


# ----------------------------------------------------------------------------
# Fused LSTM kernel: per grid step, (a) one block input projection
# (Bb*t_blk, Ep) @ W_ih + b into VMEM scratch, then (b) t_blk serial steps of
# h @ W_hh + elementwise gate math.  hs written back as one bf16 block store.
# ----------------------------------------------------------------------------
def _lstm_fused_kernel(x_ref, w_ih_ref, w_hh_ref, b_ref, hs_ref,
                       gx_sc, hsb_sc, h_sc, c_sc):
    # Reset recurrent state at the start of each batch block's time sweep.
    @pl.when(pl.program_id(1) == 0)
    def _():
        h_sc[...] = jnp.zeros_like(h_sc)
        c_sc[...] = jnp.zeros_like(c_sc)

    Bb, t_blk, Ep = x_ref.shape
    Hp = h_sc.shape[-1]

    # (a) Input projection for the whole time block (off the serial path).
    #     x block is f32 -> clean leading-dim merge reshape; operands cast to
    #     bf16 for the MXU, accumulation in f32.
    x2d = x_ref[...].reshape(Bb * t_blk, Ep)
    gx = jnp.dot(x2d.astype(jnp.bfloat16), w_ih_ref[...],
                 preferred_element_type=jnp.float32) + b_ref[...]
    gx_sc[...] = gx.reshape(Bb, t_blk, 4 * Hp)

    # (b) Serial recurrence: only h @ W_hh + gate elementwise per step.
    #     t_blk is kept small, so a static unroll is fine (switch to
    #     lax.fori_loop(..., unroll=True) if t_blk is raised past ~16).
    h = h_sc[...]
    c = c_sc[...]
    for t in range(t_blk):
        gates = gx_sc[:, t, :] + jnp.dot(
            h.astype(jnp.bfloat16), w_hh_ref[...],
            preferred_element_type=jnp.float32)          # (Bb, 4Hp) f32
        # PyTorch gate order i, f, g, o; each slice is 128-lane aligned.
        i_g = jax.nn.sigmoid(gates[:, 0 * Hp:1 * Hp])
        f_g = jax.nn.sigmoid(gates[:, 1 * Hp:2 * Hp])
        g_g = jnp.tanh(gates[:, 2 * Hp:3 * Hp])
        o_g = jax.nn.sigmoid(gates[:, 3 * Hp:4 * Hp])
        c = f_g * c + i_g * g_g
        h = o_g * jnp.tanh(c)
        hsb_sc[:, t, :] = h
    h_sc[...] = h
    c_sc[...] = c
    # One full-block, lane-dense bf16 store (no masked partial bf16 stores).
    hs_ref[...] = hsb_sc[...].astype(hs_ref.dtype)


def lstm_fused_pallas(x, w_ih_bf, w_hh_bf, b, *, t_blk, b_blk):
    """x: (Bp, Tp, Ep) f32, w_ih_bf: (Ep, 4Hp) bf16, w_hh_bf: (Hp, 4Hp) bf16,
    b: (1, 4Hp) f32  ->  hs: (Bp, Tp, Hp) bf16."""
    Bp, Tp, Ep = x.shape
    H4p = w_hh_bf.shape[1]
    Hp = H4p // 4
    grid = (Bp // b_blk, Tp // t_blk)
    return pl.pallas_call(
        _lstm_fused_kernel,
        out_shape=jax.ShapeDtypeStruct((Bp, Tp, Hp), jnp.bfloat16),
        grid_spec=pltpu.PrefetchScalarGridSpec(
            num_scalar_prefetch=0,
            grid=grid,
            in_specs=[
                pl.BlockSpec((b_blk, t_blk, Ep), lambda bb, tb: (bb, tb, 0)),
                pl.BlockSpec((Ep, H4p), lambda bb, tb: (0, 0)),   # resident
                pl.BlockSpec((Hp, H4p), lambda bb, tb: (0, 0)),   # resident
                pl.BlockSpec((1, H4p), lambda bb, tb: (0, 0)),    # resident
            ],
            out_specs=pl.BlockSpec((b_blk, t_blk, Hp), lambda bb, tb: (bb, tb, 0)),
            scratch_shapes=[
                pltpu.VMEM((b_blk, t_blk, H4p), jnp.float32),  # fused gates_x
                pltpu.VMEM((b_blk, t_blk, Hp), jnp.float32),   # hs staging
                pltpu.VMEM((b_blk, Hp), jnp.float32),          # h carry
                pltpu.VMEM((b_blk, Hp), jnp.float32),          # c carry
            ],
        ),
        # Batch-block axis is independent (megacore-shardable on v7x);
        # time axis MUST be "arbitrary": h/c scratch carries state across it.
        compiler_params=pltpu.CompilerParams(
            dimension_semantics=("parallel", "arbitrary"),
            vmem_limit_bytes=_VMEM_LIMIT),
    )(x, w_ih_bf, w_hh_bf, b)


# ----------------------------------------------------------------------------
# Padding helpers (zero-padding -> padded hidden units stay exactly zero).
# ----------------------------------------------------------------------------
def _pad_gate_cols(w, H, Hp):
    """(..., 4H) -> (..., 4Hp); gate k's H columns placed at offset k*Hp."""
    parts = []
    for k in range(4):
        g = w[..., k * H:(k + 1) * H]
        pad = [(0, 0)] * (w.ndim - 1) + [(0, Hp - H)]
        parts.append(jnp.pad(g, pad))
    return jnp.concatenate(parts, axis=-1)


# ----------------------------------------------------------------------------
# Forward pass mirroring DecoderRNN.forward.
# ----------------------------------------------------------------------------
def decoder_rnn_forward(params, features, captions, *, t_blk=8):
    """features: (B, E) f32, captions: (B, T_cap) i32  ->  logits (B, T_cap, V)."""
    B, E = features.shape
    # embeddings = self.embedded(captions[:, :-1]); inputs = cat((features, emb), 1)
    emb = jnp.take(params["emb"], captions[:, :-1], axis=0)        # (B, T_cap-1, E)
    inputs = jnp.concatenate([features[:, None, :], emb], axis=1)  # (B, T, E)
    T = inputs.shape[1]
    H = params["w_hh"].shape[0]
    V = params["w_score"].shape[1]

    Hp = _round_up(H, 128)       # lane-aligned gates
    Ep = _round_up(E, 128)       # lane-dense input projection
    Vp = _round_up(V, 128)       # lane-dense logits / bounded weight tiles
    Bp = _round_up(B, 8)         # sublane-full tiles
    Tp = _round_up(T, t_blk)     # whole time blocks

    # Pad parameters (exact: padded units contribute zero); weights to bf16 once.
    w_ih_p = _pad_gate_cols(
        jnp.pad(params["w_ih"], ((0, Ep - E), (0, 0))), H, Hp).astype(jnp.bfloat16)
    w_hh_p = _pad_gate_cols(
        jnp.pad(params["w_hh"], ((0, Hp - H), (0, 0))), H, Hp).astype(jnp.bfloat16)
    b_p = _pad_gate_cols(params["b"], H, Hp)                                   # (1,4Hp) f32
    w_score_p = jnp.pad(params["w_score"],
                        ((0, Hp - H), (0, Vp - V))).astype(jnp.bfloat16)       # (Hp,Vp)
    b_score_p = jnp.pad(params["b_score"], ((0, 0), (0, Vp - V)))              # (1,Vp) f32

    # Pad activations (batch-major throughout).
    x = jnp.pad(inputs, ((0, Bp - B), (0, Tp - T), (0, Ep - E)))               # (Bp,Tp,Ep)

    # Batch-block split: lets the serial recurrence shard across v7x's 2 TCs.
    if Bp >= 16 and (Bp // 2) % 8 == 0:
        b_blk = Bp // 2
    else:
        b_blk = Bp

    # (1)+(2) Fused input projection + serial LSTM recurrence (no gates_x HBM trip).
    hs = lstm_fused_pallas(x, w_ih_p, w_hh_p, b_p, t_blk=t_blk, b_blk=b_blk)   # (Bp,Tp,Hp) bf16

    # (3) Batched output projection, already batch-major -> no final transpose.
    logits = matmul_bias_pallas(hs.reshape(Bp * Tp, Hp), w_score_p, b_score_p)
    logits = logits.reshape(Bp, Tp, Vp)

    return logits[:B, :T, :V]                                                  # (B,T,V) f32


# ----------------------------------------------------------------------------
# Pure-JAX reference (lax.scan LSTM), bf16-matched matmul operands.
# ----------------------------------------------------------------------------
def _reference_forward(params, features, captions):
    B = features.shape[0]
    feats = features.reshape(B, 1, -1)
    emb = jnp.take(params["emb"], captions[:, :-1], axis=0)
    inputs = jnp.concatenate([feats, emb], axis=1)               # (B, T, E)
    H = params["w_hh"].shape[0]
    w_ih = params["w_ih"].astype(jnp.bfloat16)
    w_hh = params["w_hh"].astype(jnp.bfloat16)
    w_score = params["w_score"].astype(jnp.bfloat16)

    def step(carry, x_t):
        h, c = carry
        gates = (jnp.dot(x_t.astype(jnp.bfloat16), w_ih,
                         preferred_element_type=jnp.float32)
                 + jnp.dot(h.astype(jnp.bfloat16), w_hh,
                           preferred_element_type=jnp.float32)
                 + params["b"])
        i_g = jax.nn.sigmoid(gates[:, 0 * H:1 * H])
        f_g = jax.nn.sigmoid(gates[:, 1 * H:2 * H])
        g_g = jnp.tanh(gates[:, 2 * H:3 * H])
        o_g = jax.nn.sigmoid(gates[:, 3 * H:4 * H])
        c = f_g * c + i_g * g_g
        h = o_g * jnp.tanh(c)
        return (h, c), h.astype(jnp.bfloat16)

    h0 = jnp.zeros((B, H), jnp.float32)
    c0 = jnp.zeros((B, H), jnp.float32)
    _, hs = jax.lax.scan(step, (h0, c0), jnp.transpose(inputs, (1, 0, 2)))
    out = jnp.einsum("tbh,hv->tbv", hs, w_score,
                     preferred_element_type=jnp.float32) + params["b_score"]
    return jnp.transpose(out, (1, 0, 2))


def init_params(key, embed_size, hidden_size, vocab_size):
    k = 1.0 / jnp.sqrt(hidden_size)
    keys = jax.random.split(key, 8)
    emb = jax.random.normal(keys[0], (vocab_size, embed_size), jnp.float32)
    # Weights stored pre-transposed: (in_features, 4*H) so kernels do x @ W.
    w_ih = jax.random.uniform(keys[1], (embed_size, 4 * hidden_size),
                              jnp.float32, -k, k)
    w_hh = jax.random.uniform(keys[2], (hidden_size, 4 * hidden_size),
                              jnp.float32, -k, k)
    b_ih = jax.random.uniform(keys[3], (4 * hidden_size,), jnp.float32, -k, k)
    b_hh = jax.random.uniform(keys[4], (4 * hidden_size,), jnp.float32, -k, k)
    w_score = jax.random.uniform(keys[5], (hidden_size, vocab_size),
                                 jnp.float32, -k, k)
    b_score = jax.random.uniform(keys[6], (vocab_size,), jnp.float32, -k, k)
    return {
        "emb": emb,
        "w_ih": w_ih,
        "w_hh": w_hh,
        "b": (b_ih + b_hh).reshape(1, -1),
        "w_score": w_score,
        "b_score": b_score.reshape(1, -1),
    }


if __name__ == "__main__":
    embed_size, hidden_size, vocab_size = 32, 32, 128
    batch, cap_len = 2, 8          # total LSTM sequence length = 1 + (8-1) = 8

    key = jax.random.PRNGKey(0)
    pk, fk, ck = jax.random.split(key, 3)
    params = init_params(pk, embed_size, hidden_size, vocab_size)

    features = jax.random.normal(fk, (batch, embed_size), jnp.float32)
    captions = jax.random.randint(ck, (batch, cap_len), 0, vocab_size, jnp.int32)

    out = decoder_rnn_forward(params, features, captions)
    out = jax.block_until_ready(out)

    ref = _reference_forward(params, features, captions)
    assert out.shape == (batch, cap_len, vocab_size), out.shape
    # bf16 MXU operands on both sides -> only accumulation-order differences remain.
    assert jnp.allclose(out, ref, rtol=2e-2, atol=2e-2), \
        float(jnp.max(jnp.abs(out - ref)))

    # TODO(synk): DecoderRNN.sample (autoregressive greedy decode) not implemented.
    print("KERNEL_OK")
</pallas_src>

<mosaic_0001>
module attributes {stable_mosaic.version = 11 : i64} {
  func.func @_lstm_fused_kernel(%arg0: i32, %arg1: i32, %arg2: memref<8x8x128xf32, #tpu.memory_space<vmem>>, %arg3: memref<128x512xbf16, #tpu.memory_space<vmem>>, %arg4: memref<128x512xbf16, #tpu.memory_space<vmem>>, %arg5: memref<1x512xf32, #tpu.memory_space<vmem>>, %arg6: memref<8x8x128xbf16, #tpu.memory_space<vmem>>, %arg7: memref<8x8x512xf32, #tpu.memory_space<vmem>>, %arg8: memref<8x8x128xf32, #tpu.memory_space<vmem>>, %arg9: memref<8x128xf32, #tpu.memory_space<vmem>>, %arg10: memref<8x128xf32, #tpu.memory_space<vmem>>) attributes {dimension_semantics = [#tpu.dimension_semantics<parallel>, #tpu.dimension_semantics<arbitrary>], iteration_bounds = array<i64: 1, 1>, scalar_prefetch = 0 : i64, scratch_operands = 4 : i64, tpu.core_type = #tpu.core_type<tc>, window_params = [{transform_indices = @transform_0, window_bounds = array<i64: 8, 8, 128>}, {pipeline_mode = #tpu.pipeline_mode<synchronous>, transform_indices = @transform_1, window_bounds = array<i64: 128, 512>}, {pipeline_mode = #tpu.pipeline_mode<synchronous>, transform_indices = @transform_2, window_bounds = array<i64: 128, 512>}, {pipeline_mode = #tpu.pipeline_mode<synchronous>, transform_indices = @transform_3, window_bounds = array<i64: 1, 512>}, {transform_indices = @transform_4, window_bounds = array<i64: 8, 8, 128>}]} {
    %c0_i32 = arith.constant 0 : i32
    %0 = arith.cmpi eq, %arg1, %c0_i32 : i32
    %1 = arith.extui %0 : i1 to i32
    %c0_i32_0 = arith.constant 0 : i32
    %2 = arith.cmpi ne, %1, %c0_i32_0 : i32
    scf.if %2 {
      %cst_113 = arith.constant 0.000000e+00 : f32
      %292 = vector.broadcast %cst_113 : f32 to vector<8x128xf32>
      %c0_114 = arith.constant 0 : index
      %c0_115 = arith.constant 0 : index
      %293 = vector.load %arg9[%c0_114, %c0_115] : memref<8x128xf32, #tpu.memory_space<vmem>>, vector<8x128xf32>
      tpu.vector_store %arg9[%c0_114, %c0_115], %292 {strides = array<i32>} : memref<8x128xf32, #tpu.memory_space<vmem>>, vector<8x128xf32>,
      %cst_116 = arith.constant 0.000000e+00 : f32
      %294 = vector.broadcast %cst_116 : f32 to vector<8x128xf32>
      %c0_117 = arith.constant 0 : index
      %c0_118 = arith.constant 0 : index
      %295 = vector.load %arg10[%c0_117, %c0_118] : memref<8x128xf32, #tpu.memory_space<vmem>>, vector<8x128xf32>
      tpu.vector_store %arg10[%c0_117, %c0_118], %294 {strides = array<i32>} : memref<8x128xf32, #tpu.memory_space<vmem>>, vector<8x128xf32>,
    } else {
    }
    %c0 = arith.constant 0 : index
    %c0_1 = arith.constant 0 : index
    %c0_2 = arith.constant 0 : index
    %3 = vector.load %arg2[%c0, %c0_1, %c0_2] : memref<8x8x128xf32, #tpu.memory_space<vmem>>, vector<8x8x128xf32>
    %4 = vector.shape_cast %3 : vector<8x8x128xf32> to vector<64x128xf32>
    %5 = arith.truncf %4 : vector<64x128xf32> to vector<64x128xbf16>
    %c0_3 = arith.constant 0 : index
    %c0_4 = arith.constant 0 : index
    %6 = vector.load %arg3[%c0_3, %c0_4] : memref<128x512xbf16, #tpu.memory_space<vmem>>, vector<128x512xbf16>
    %cst = arith.constant dense<0.000000e+00> : vector<64x512xf32>
    %7 = tpu.matmul %5, %6, %cst {dimension_numbers = #tpu.dot_dimension_numbers<[1], [0], [0], [1], [0, 0, 1, 1], [], []>} : vector<64x128xbf16>, vector<128x512xbf16>, vector<64x512xf32> -> vector<64x512xf32>
    %c0_5 = arith.constant 0 : index
    %c0_6 = arith.constant 0 : index
    %8 = vector.load %arg5[%c0_5, %c0_6] : memref<1x512xf32, #tpu.memory_space<vmem>>, vector<1x512xf32>
    %9 = vector.broadcast %8 : vector<1x512xf32> to vector<64x512xf32>
    %10 = arith.addf %7, %9 : vector<64x512xf32>
    %11 = vector.shape_cast %10 : vector<64x512xf32> to vector<8x8x512xf32>
    %c0_7 = arith.constant 0 : index
    %c0_8 = arith.constant 0 : index
    %c0_9 = arith.constant 0 : index
    %12 = vector.load %arg7[%c0_7, %c0_8, %c0_9] : memref<8x8x512xf32, #tpu.memory_space<vmem>>, vector<8x8x512xf32>
    tpu.vector_store %arg7[%c0_7, %c0_8, %c0_9], %11 {strides = array<i32>} : memref<8x8x512xf32, #tpu.memory_space<vmem>>, vector<8x8x512xf32>,
    %c0_10 = arith.constant 0 : index
    %c0_11 = arith.constant 0 : index
    %13 = vector.load %arg9[%c0_10, %c0_11] : memref<8x128xf32, #tpu.memory_space<vmem>>, vector<8x128xf32>
    %c0_12 = arith.constant 0 : index
    %c0_13 = arith.constant 0 : index
    %14 = vector.load %arg10[%c0_12, %c0_13] : memref<8x128xf32, #tpu.memory_space<vmem>>, vector<8x128xf32>
    %c0_14 = arith.constant 0 : index
    %c0_15 = arith.constant 0 : index
    %c0_16 = arith.constant 0 : index
    %15 = vector.load %arg7[%c0_14, %c0_15, %c0_16] : memref<8x8x512xf32, #tpu.memory_space<vmem>>, vector<8x1x512xf32>
    %16 = vector.shape_cast %15 : vector<8x1x512xf32> to vector<8x512xf32>
    %17 = arith.truncf %13 : vector<8x128xf32> to vector<8x128xbf16>
    %c0_17 = arith.constant 0 : index
    %c0_18 = arith.constant 0 : index
    %18 = vector.load %arg4[%c0_17, %c0_18] : memref<128x512xbf16, #tpu.memory_space<vmem>>, vector<128x512xbf16>
    %cst_19 = arith.constant dense<0.000000e+00> : vector<8x512xf32>
    %19 = tpu.matmul %17, %18, %cst_19 {dimension_numbers = #tpu.dot_dimension_numbers<[1], [0], [0], [1], [0, 0, 1, 1], [], []>} : vector<8x128xbf16>, vector<128x512xbf16>, vector<8x512xf32> -> vector<8x512xf32>
    %20 = arith.addf %16, %19 : vector<8x512xf32>
    %21 = vector.extract_strided_slice %20 {offsets = [0, 0], sizes = [8, 128], strides = [1, 1]} : vector<8x512xf32> to vector<8x128xf32>
    %22 = arith.negf %21 : vector<8x128xf32>
    %23 = math.exp %22 : vector<8x128xf32>
    %cst_20 = arith.constant 1.000000e+00 : f32
    %24 = vector.broadcast %cst_20 : f32 to vector<8x128xf32>
    %25 = arith.addf %24, %23 : vector<8x128xf32>
    %26 = arith.divf %24, %25 : vector<8x128xf32>
    %27 = vector.extract_strided_slice %20 {offsets = [0, 128], sizes = [8, 128], strides = [1, 1]} : vector<8x512xf32> to vector<8x128xf32>
    %28 = arith.negf %27 : vector<8x128xf32>
    %29 = math.exp %28 : vector<8x128xf32>
    %cst_21 = arith.constant 1.000000e+00 : f32
    %30 = vector.broadcast %cst_21 : f32 to vector<8x128xf32>
    %31 = arith.addf %30, %29 : vector<8x128xf32>
    %32 = arith.divf %30, %31 : vector<8x128xf32>
    %33 = vector.extract_strided_slice %20 {offsets = [0, 256], sizes = [8, 128], strides = [1, 1]} : vector<8x512xf32> to vector<8x128xf32>
    %34 = math.tanh %33 : vector<8x128xf32>
    %35 = vector.extract_strided_slice %20 {offsets = [0, 384], sizes = [8, 128], strides = [1, 1]} : vector<8x512xf32> to vector<8x128xf32>
    %36 = arith.negf %35 : vector<8x128xf32>
    %37 = math.exp %36 : vector<8x128xf32>
    %cst_22 = arith.constant 1.000000e+00 : f32
    %38 = vector.broadcast %cst_22 : f32 to vector<8x128xf32>
    %39 = arith.addf %38, %37 : vector<8x128xf32>
    %40 = arith.divf %38, %39 : vector<8x128xf32>
    %41 = arith.mulf %32, %14 : vector<8x128xf32>
    %42 = arith.mulf %26, %34 : vector<8x128xf32>
    %43 = arith.addf %41, %42 : vector<8x128xf32>
    %44 = math.tanh %43 : vector<8x128xf32>
    %45 = arith.mulf %40, %44 : vector<8x128xf32>
    %c0_23 = arith.constant 0 : index
    %c0_24 = arith.constant 0 : index
    %c0_25 = arith.constant 0 : index
    %46 = vector.load %arg8[%c0_23, %c0_24, %c0_25] : memref<8x8x128xf32, #tpu.memory_space<vmem>>, vector<8x1x128xf32>
    %47 = vector.shape_cast %46 : vector<8x1x128xf32> to vector<8x128xf32>
    %48 = vector.shape_cast %45 : vector<8x128xf32> to vector<8x1x128xf32>
    tpu.vector_store %arg8[%c0_23, %c0_24, %c0_25], %48 {strides = array<i32>} : memref<8x8x128xf32, #tpu.memory_space<vmem>>, vector<8x1x128xf32>,
    %c0_26 = arith.constant 0 : index
    %c1 = arith.constant 1 : index
    %c0_27 = arith.constant 0 : index
    %49 = vector.load %arg7[%c0_26, %c1, %c0_27] : memref<8x8x512xf32, #tpu.memory_space<vmem>>, vector<8x1x512xf32>
    %50 = vector.shape_cast %49 : vector<8x1x512xf32> to vector<8x512xf32>
    %51 = arith.truncf %45 : vector<8x128xf32> to vector<8x128xbf16>
    %c0_28 = arith.constant 0 : index
    %c0_29 = arith.constant 0 : index
    %52 = vector.load %arg4[%c0_28, %c0_29] : memref<128x512xbf16, #tpu.memory_space<vmem>>, vector<128x512xbf16>
    %cst_30 = arith.constant dense<0.000000e+00> : vector<8x512xf32>
    %53 = tpu.matmul %51, %52, %cst_30 {dimension_numbers = #tpu.dot_dimension_numbers<[1], [0], [0], [1], [0, 0, 1, 1], [], []>} : vector<8x128xbf16>, vector<128x512xbf16>, vector<8x512xf32> -> vector<8x512xf32>
    %54 = arith.addf %50, %53 : vector<8x512xf32>
    %55 = vector.extract_strided_slice %54 {offsets = [0, 0], sizes = [8, 128], strides = [1, 1]} : vector<8x512xf32> to vector<8x128xf32>
    %56 = arith.negf %55 : vector<8x128xf32>
    %57 = math.exp %56 : vector<8x128xf32>
    %cst_31 = arith.constant 1.000000e+00 : f32
    %58 = vector.broadcast %cst_31 : f32 to vector<8x128xf32>
    %59 = arith.addf %58, %57 : vector<8x128xf32>
    %60 = arith.divf %58, %59 : vector<8x128xf32>
    %61 = vector.extract_strided_slice %54 {offsets = [0, 128], sizes = [8, 128], strides = [1, 1]} : vector<8x512xf32> to vector<8x128xf32>
    %62 = arith.negf %61 : vector<8x128xf32>
    %63 = math.exp %62 : vector<8x128xf32>
    %cst_32 = arith.constant 1.000000e+00 : f32
    %64 = vector.broadcast %cst_32 : f32 to vector<8x128xf32>
    %65 = arith.addf %64, %63 : vector<8x128xf32>
    %66 = arith.divf %64, %65 : vector<8x128xf32>
    %67 = vector.extract_strided_slice %54 {offsets = [0, 256], sizes = [8, 128], strides = [1, 1]} : vector<8x512xf32> to vector<8x128xf32>
    %68 = math.tanh %67 : vector<8x128xf32>
    %69 = vector.extract_strided_slice %54 {offsets = [0, 384], sizes = [8, 128], strides = [1, 1]} : vector<8x512xf32> to vector<8x128xf32>
    %70 = arith.negf %69 : vector<8x128xf32>
    %71 = math.exp %70 : vector<8x128xf32>
    %cst_33 = arith.constant 1.000000e+00 : f32
    %72 = vector.broadcast %cst_33 : f32 to vector<8x128xf32>
    %73 = arith.addf %72, %71 : vector<8x128xf32>
    %74 = arith.divf %72, %73 : vector<8x128xf32>
    %75 = arith.mulf %66, %43 : vector<8x128xf32>
    %76 = arith.mulf %60, %68 : vector<8x128xf32>
    %77 = arith.addf %75, %76 : vector<8x128xf32>
    %78 = math.tanh %77 : vector<8x128xf32>
    %79 = arith.mulf %74, %78 : vector<8x128xf32>
    %c0_34 = arith.constant 0 : index
    %c1_35 = arith.constant 1 : index
    %c0_36 = arith.constant 0 : index
    %80 = vector.load %arg8[%c0_34, %c1_35, %c0_36] : memref<8x8x128xf32, #tpu.memory_space<vmem>>, vector<8x1x128xf32>
    %81 = vector.shape_cast %80 : vector<8x1x128xf32> to vector<8x128xf32>
    %82 = vector.shape_cast %79 : vector<8x128xf32> to vector<8x1x128xf32>
    tpu.vector_store %arg8[%c0_34, %c1_35, %c0_36], %82 {strides = array<i32>} : memref<8x8x128xf32, #tpu.memory_space<vmem>>, vector<8x1x128xf32>,
    %c0_37 = arith.constant 0 : index
    %c2 = arith.constant 2 : index
    %c0_38 = arith.constant 0 : index
    %83 = vector.load %arg7[%c0_37, %c2, %c0_38] : memref<8x8x512xf32, #tpu.memory_space<vmem>>, vector<8x1x512xf32>
    %84 = vector.shape_cast %83 : vector<8x1x512xf32> to vector<8x512xf32>
    %85 = arith.truncf %79 : vector<8x128xf32> to vector<8x128xbf16>
    %c0_39 = arith.constant 0 : index
    %c0_40 = arith.constant 0 : index
    %86 = vector.load %arg4[%c0_39, %c0_40] : memref<128x512xbf16, #tpu.memory_space<vmem>>, vector<128x512xbf16>
    %cst_41 = arith.constant dense<0.000000e+00> : vector<8x512xf32>
    %87 = tpu.matmul %85, %86, %cst_41 {dimension_numbers = #tpu.dot_dimension_numbers<[1], [0], [0], [1], [0, 0, 1, 1], [], []>} : vector<8x128xbf16>, vector<128x512xbf16>, vector<8x512xf32> -> vector<8x512xf32>
    %88 = arith.addf %84, %87 : vector<8x512xf32>
    %89 = vector.extract_strided_slice %88 {offsets = [0, 0], sizes = [8, 128], strides = [1, 1]} : vector<8x512xf32> to vector<8x128xf32>
    %90 = arith.negf %89 : vector<8x128xf32>
    %91 = math.exp %90 : vector<8x128xf32>
    %cst_42 = arith.constant 1.000000e+00 : f32
    %92 = vector.broadcast %cst_42 : f32 to vector<8x128xf32>
    %93 = arith.addf %92, %91 : vector<8x128xf32>
    %94 = arith.divf %92, %93 : vector<8x128xf32>
    %95 = vector.extract_strided_slice %88 {offsets = [0, 128], sizes = [8, 128], strides = [1, 1]} : vector<8x512xf32> to vector<8x128xf32>
    %96 = arith.negf %95 : vector<8x128xf32>
    %97 = math.exp %96 : vector<8x128xf32>
    %cst_43 = arith.constant 1.000000e+00 : f32
    %98 = vector.broadcast %cst_43 : f32 to vector<8x128xf32>
    %99 = arith.addf %98, %97 : vector<8x128xf32>
    %100 = arith.divf %98, %99 : vector<8x128xf32>
    %101 = vector.extract_strided_slice %88 {offsets = [0, 256], sizes = [8, 128], strides = [1, 1]} : vector<8x512xf32> to vector<8x128xf32>
    %102 = math.tanh %101 : vector<8x128xf32>
    %103 = vector.extract_strided_slice %88 {offsets = [0, 384], sizes = [8, 128], strides = [1, 1]} : vector<8x512xf32> to vector<8x128xf32>
    %104 = arith.negf %103 : vector<8x128xf32>
    %105 = math.exp %104 : vector<8x128xf32>
    %cst_44 = arith.constant 1.000000e+00 : f32
    %106 = vector.broadcast %cst_44 : f32 to vector<8x128xf32>
    %107 = arith.addf %106, %105 : vector<8x128xf32>
    %108 = arith.divf %106, %107 : vector<8x128xf32>
    %109 = arith.mulf %100, %77 : vector<8x128xf32>
    %110 = arith.mulf %94, %102 : vector<8x128xf32>
    %111 = arith.addf %109, %110 : vector<8x128xf32>
    %112 = math.tanh %111 : vector<8x128xf32>
    %113 = arith.mulf %108, %112 : vector<8x128xf32>
    %c0_45 = arith.constant 0 : index
    %c2_46 = arith.constant 2 : index
    %c0_47 = arith.constant 0 : index
    %114 = vector.load %arg8[%c0_45, %c2_46, %c0_47] : memref<8x8x128xf32, #tpu.memory_space<vmem>>, vector<8x1x128xf32>
    %115 = vector.shape_cast %114 : vector<8x1x128xf32> to vector<8x128xf32>
    %116 = vector.shape_cast %113 : vector<8x128xf32> to vector<8x1x128xf32>
    tpu.vector_store %arg8[%c0_45, %c2_46, %c0_47], %116 {strides = array<i32>} : memref<8x8x128xf32, #tpu.memory_space<vmem>>, vector<8x1x128xf32>,
    %c0_48 = arith.constant 0 : index
    %c3 = arith.constant 3 : index
    %c0_49 = arith.constant 0 : index
    %117 = vector.load %arg7[%c0_48, %c3, %c0_49] : memref<8x8x512xf32, #tpu.memory_space<vmem>>, vector<8x1x512xf32>
    %118 = vector.shape_cast %117 : vector<8x1x512xf32> to vector<8x512xf32>
    %119 = arith.truncf %113 : vector<8x128xf32> to vector<8x128xbf16>
    %c0_50 = arith.constant 0 : index
    %c0_51 = arith.constant 0 : index
    %120 = vector.load %arg4[%c0_50, %c0_51] : memref<128x512xbf16, #tpu.memory_space<vmem>>, vector<128x512xbf16>
    %cst_52 = arith.constant dense<0.000000e+00> : vector<8x512xf32>
    %121 = tpu.matmul %119, %120, %cst_52 {dimension_numbers = #tpu.dot_dimension_numbers<[1], [0], [0], [1], [0, 0, 1, 1], [], []>} : vector<8x128xbf16>, vector<128x512xbf16>, vector<8x512xf32> -> vector<8x512xf32>
    %122 = arith.addf %118, %121 : vector<8x512xf32>
    %123 = vector.extract_strided_slice %122 {offsets = [0, 0], sizes = [8, 128], strides = [1, 1]} : vector<8x512xf32> to vector<8x128xf32>
    %124 = arith.negf %123 : vector<8x128xf32>
    %125 = math.exp %124 : vector<8x128xf32>
    %cst_53 = arith.constant 1.000000e+00 : f32
    %126 = vector.broadcast %cst_53 : f32 to vector<8x128xf32>
    %127 = arith.addf %126, %125 : vector<8x128xf32>
    %128 = arith.divf %126, %127 : vector<8x128xf32>
    %129 = vector.extract_strided_slice %122 {offsets = [0, 128], sizes = [8, 128], strides = [1, 1]} : vector<8x512xf32> to vector<8x128xf32>
    %130 = arith.negf %129 : vector<8x128xf32>
    %131 = math.exp %130 : vector<8x128xf32>
    %cst_54 = arith.constant 1.000000e+00 : f32
    %132 = vector.broadcast %cst_54 : f32 to vector<8x128xf32>
    %133 = arith.addf %132, %131 : vector<8x128xf32>
    %134 = arith.divf %132, %133 : vector<8x128xf32>
    %135 = vector.extract_strided_slice %122 {offsets = [0, 256], sizes = [8, 128], strides = [1, 1]} : vector<8x512xf32> to vector<8x128xf32>
    %136 = math.tanh %135 : vector<8x128xf32>
    %137 = vector.extract_strided_slice %122 {offsets = [0, 384], sizes = [8, 128], strides = [1, 1]} : vector<8x512xf32> to vector<8x128xf32>
    %138 = arith.negf %137 : vector<8x128xf32>
    %139 = math.exp %138 : vector<8x128xf32>
    %cst_55 = arith.constant 1.000000e+00 : f32
    %140 = vector.broadcast %cst_55 : f32 to vector<8x128xf32>
    %141 = arith.addf %140, %139 : vector<8x128xf32>
    %142 = arith.divf %140, %141 : vector<8x128xf32>
    %143 = arith.mulf %134, %111 : vector<8x128xf32>
    %144 = arith.mulf %128, %136 : vector<8x128xf32>
    %145 = arith.addf %143, %144 : vector<8x128xf32>
    %146 = math.tanh %145 : vector<8x128xf32>
    %147 = arith.mulf %142, %146 : vector<8x128xf32>
    %c0_56 = arith.constant 0 : index
    %c3_57 = arith.constant 3 : index
    %c0_58 = arith.constant 0 : index
    %148 = vector.load %arg8[%c0_56, %c3_57, %c0_58] : memref<8x8x128xf32, #tpu.memory_space<vmem>>, vector<8x1x128xf32>
    %149 = vector.shape_cast %148 : vector<8x1x128xf32> to vector<8x128xf32>
    %150 = vector.shape_cast %147 : vector<8x128xf32> to vector<8x1x128xf32>
    tpu.vector_store %arg8[%c0_56, %c3_57, %c0_58], %150 {strides = array<i32>} : memref<8x8x128xf32, #tpu.memory_space<vmem>>, vector<8x1x128xf32>,
    %c0_59 = arith.constant 0 : index
    %c4 = arith.constant 4 : index
    %c0_60 = arith.constant 0 : index
    %151 = vector.load %arg7[%c0_59, %c4, %c0_60] : memref<8x8x512xf32, #tpu.memory_space<vmem>>, vector<8x1x512xf32>
    %152 = vector.shape_cast %151 : vector<8x1x512xf32> to vector<8x512xf32>
    %153 = arith.truncf %147 : vector<8x128xf32> to vector<8x128xbf16>
    %c0_61 = arith.constant 0 : index
    %c0_62 = arith.constant 0 : index
    %154 = vector.load %arg4[%c0_61, %c0_62] : memref<128x512xbf16, #tpu.memory_space<vmem>>, vector<128x512xbf16>
    %cst_63 = arith.constant dense<0.000000e+00> : vector<8x512xf32>
    %155 = tpu.matmul %153, %154, %cst_63 {dimension_numbers = #tpu.dot_dimension_numbers<[1], [0], [0], [1], [0, 0, 1, 1], [], []>} : vector<8x128xbf16>, vector<128x512xbf16>, vector<8x512xf32> -> vector<8x512xf32>
    %156 = arith.addf %152, %155 : vector<8x512xf32>
    %157 = vector.extract_strided_slice %156 {offsets = [0, 0], sizes = [8, 128], strides = [1, 1]} : vector<8x512xf32> to vector<8x128xf32>
    %158 = arith.negf %157 : vector<8x128xf32>
    %159 = math.exp %158 : vector<8x128xf32>
    %cst_64 = arith.constant 1.000000e+00 : f32
    %160 = vector.broadcast %cst_64 : f32 to vector<8x128xf32>
    %161 = arith.addf %160, %159 : vector<8x128xf32>
    %162 = arith.divf %160, %161 : vector<8x128xf32>
    %163 = vector.extract_strided_slice %156 {offsets = [0, 128], sizes = [8, 128], strides = [1, 1]} : vector<8x512xf32> to vector<8x128xf32>
    %164 = arith.negf %163 : vector<8x128xf32>
    %165 = math.exp %164 : vector<8x128xf32>
    %cst_65 = arith.constant 1.000000e+00 : f32
    %166 = vector.broadcast %cst_65 : f32 to vector<8x128xf32>
    %167 = arith.addf %166, %165 : vector<8x128xf32>
    %168 = arith.divf %166, %167 : vector<8x128xf32>
    %169 = vector.extract_strided_slice %156 {offsets = [0, 256], sizes = [8, 128], strides = [1, 1]} : vector<8x512xf32> to vector<8x128xf32>
    %170 = math.tanh %169 : vector<8x128xf32>
    %171 = vector.extract_strided_slice %156 {offsets = [0, 384], sizes = [8, 128], strides = [1, 1]} : vector<8x512xf32> to vector<8x128xf32>
    %172 = arith.negf %171 : vector<8x128xf32>
    %173 = math.exp %172 : vector<8x128xf32>
    %cst_66 = arith.constant 1.000000e+00 : f32
    %174 = vector.broadcast %cst_66 : f32 to vector<8x128xf32>
    %175 = arith.addf %174, %173 : vector<8x128xf32>
    %176 = arith.divf %174, %175 : vector<8x128xf32>
    %177 = arith.mulf %168, %145 : vector<8x128xf32>
    %178 = arith.mulf %162, %170 : vector<8x128xf32>
    %179 = arith.addf %177, %178 : vector<8x128xf32>
    %180 = math.tanh %179 : vector<8x128xf32>
    %181 = arith.mulf %176, %180 : vector<8x128xf32>
    %c0_67 = arith.constant 0 : index
    %c4_68 = arith.constant 4 : index
    %c0_69 = arith.constant 0 : index
    %182 = vector.load %arg8[%c0_67, %c4_68, %c0_69] : memref<8x8x128xf32, #tpu.memory_space<vmem>>, vector<8x1x128xf32>
    %183 = vector.shape_cast %182 : vector<8x1x128xf32> to vector<8x128xf32>
    %184 = vector.shape_cast %181 : vector<8x128xf32> to vector<8x1x128xf32>
    tpu.vector_store %arg8[%c0_67, %c4_68, %c0_69], %184 {strides = array<i32>} : memref<8x8x128xf32, #tpu.memory_space<vmem>>, vector<8x1x128xf32>,
    %c0_70 = arith.constant 0 : index
    %c5 = arith.constant 5 : index
    %c0_71 = arith.constant 0 : index
    %185 = vector.load %arg7[%c0_70, %c5, %c0_71] : memref<8x8x512xf32, #tpu.memory_space<vmem>>, vector<8x1x512xf32>
    %186 = vector.shape_cast %185 : vector<8x1x512xf32> to vector<8x512xf32>
    %187 = arith.truncf %181 : vector<8x128xf32> to vector<8x128xbf16>
    %c0_72 = arith.constant 0 : index
    %c0_73 = arith.constant 0 : index
    %188 = vector.load %arg4[%c0_72, %c0_73] : memref<128x512xbf16, #tpu.memory_space<vmem>>, vector<128x512xbf16>
    %cst_74 = arith.constant dense<0.000000e+00> : vector<8x512xf32>
    %189 = tpu.matmul %187, %188, %cst_74 {dimension_numbers = #tpu.dot_dimension_numbers<[1], [0], [0], [1], [0, 0, 1, 1], [], []>} : vector<8x128xbf16>, vector<128x512xbf16>, vector<8x512xf32> -> vector<8x512xf32>
    %190 = arith.addf %186, %189 : vector<8x512xf32>
    %191 = vector.extract_strided_slice %190 {offsets = [0, 0], sizes = [8, 128], strides = [1, 1]} : vector<8x512xf32> to vector<8x128xf32>
    %192 = arith.negf %191 : vector<8x128xf32>
    %193 = math.exp %192 : vector<8x128xf32>
    %cst_75 = arith.constant 1.000000e+00 : f32
    %194 = vector.broadcast %cst_75 : f32 to vector<8x128xf32>
    %195 = arith.addf %194, %193 : vector<8x128xf32>
    %196 = arith.divf %194, %195 : vector<8x128xf32>
    %197 = vector.extract_strided_slice %190 {offsets = [0, 128], sizes = [8, 128], strides = [1, 1]} : vector<8x512xf32> to vector<8x128xf32>
    %198 = arith.negf %197 : vector<8x128xf32>
    %199 = math.exp %198 : vector<8x128xf32>
    %cst_76 = arith.constant 1.000000e+00 : f32
    %200 = vector.broadcast %cst_76 : f32 to vector<8x128xf32>
    %201 = arith.addf %200, %199 : vector<8x128xf32>
    %202 = arith.divf %200, %201 : vector<8x128xf32>
    %203 = vector.extract_strided_slice %190 {offsets = [0, 256], sizes = [8, 128], strides = [1, 1]} : vector<8x512xf32> to vector<8x128xf32>
    %204 = math.tanh %203 : vector<8x128xf32>
    %205 = vector.extract_strided_slice %190 {offsets = [0, 384], sizes = [8, 128], strides = [1, 1]} : vector<8x512xf32> to vector<8x128xf32>
    %206 = arith.negf %205 : vector<8x128xf32>
    %207 = math.exp %206 : vector<8x128xf32>
    %cst_77 = arith.constant 1.000000e+00 : f32
    %208 = vector.broadcast %cst_77 : f32 to vector<8x128xf32>
    %209 = arith.addf %208, %207 : vector<8x128xf32>
    %210 = arith.divf %208, %209 : vector<8x128xf32>
    %211 = arith.mulf %202, %179 : vector<8x128xf32>
    %212 = arith.mulf %196, %204 : vector<8x128xf32>
    %213 = arith.addf %211, %212 : vector<8x128xf32>
    %214 = math.tanh %213 : vector<8x128xf32>
    %215 = arith.mulf %210, %214 : vector<8x128xf32>
    %c0_78 = arith.constant 0 : index
    %c5_79 = arith.constant 5 : index
    %c0_80 = arith.constant 0 : index
    %216 = vector.load %arg8[%c0_78, %c5_79, %c0_80] : memref<8x8x128xf32, #tpu.memory_space<vmem>>, vector<8x1x128xf32>
    %217 = vector.shape_cast %216 : vector<8x1x128xf32> to vector<8x128xf32>
    %218 = vector.shape_cast %215 : vector<8x128xf32> to vector<8x1x128xf32>
    tpu.vector_store %arg8[%c0_78, %c5_79, %c0_80], %218 {strides = array<i32>} : memref<8x8x128xf32, #tpu.memory_space<vmem>>, vector<8x1x128xf32>,
    %c0_81 = arith.constant 0 : index
    %c6 = arith.constant 6 : index
    %c0_82 = arith.constant 0 : index
    %219 = vector.load %arg7[%c0_81, %c6, %c0_82] : memref<8x8x512xf32, #tpu.memory_space<vmem>>, vector<8x1x512xf32>
    %220 = vector.shape_cast %219 : vector<8x1x512xf32> to vector<8x512xf32>
    %221 = arith.truncf %215 : vector<8x128xf32> to vector<8x128xbf16>
    %c0_83 = arith.constant 0 : index
    %c0_84 = arith.constant 0 : index
    %222 = vector.load %arg4[%c0_83, %c0_84] : memref<128x512xbf16, #tpu.memory_space<vmem>>, vector<128x512xbf16>
    %cst_85 = arith.constant dense<0.000000e+00> : vector<8x512xf32>
    %223 = tpu.matmul %221, %222, %cst_85 {dimension_numbers = #tpu.dot_dimension_numbers<[1], [0], [0], [1], [0, 0, 1, 1], [], []>} : vector<8x128xbf16>, vector<128x512xbf16>, vector<8x512xf32> -> vector<8x512xf32>
    %224 = arith.addf %220, %223 : vector<8x512xf32>
    %225 = vector.extract_strided_slice %224 {offsets = [0, 0], sizes = [8, 128], strides = [1, 1]} : vector<8x512xf32> to vector<8x128xf32>
    %226 = arith.negf %225 : vector<8x128xf32>
    %227 = math.exp %226 : vector<8x128xf32>
    %cst_86 = arith.constant 1.000000e+00 : f32
    %228 = vector.broadcast %cst_86 : f32 to vector<8x128xf32>
    %229 = arith.addf %228, %227 : vector<8x128xf32>
    %230 = arith.divf %228, %229 : vector<8x128xf32>
    %231 = vector.extract_strided_slice %224 {offsets = [0, 128], sizes = [8, 128], strides = [1, 1]} : vector<8x512xf32> to vector<8x128xf32>
    %232 = arith.negf %231 : vector<8x128xf32>
    %233 = math.exp %232 : vector<8x128xf32>
    %cst_87 = arith.constant 1.000000e+00 : f32
    %234 = vector.broadcast %cst_87 : f32 to vector<8x128xf32>
    %235 = arith.addf %234, %233 : vector<8x128xf32>
    %236 = arith.divf %234, %235 : vector<8x128xf32>
    %237 = vector.extract_strided_slice %224 {offsets = [0, 256], sizes = [8, 128], strides = [1, 1]} : vector<8x512xf32> to vector<8x128xf32>
    %238 = math.tanh %237 : vector<8x128xf32>
    %239 = vector.extract_strided_slice %224 {offsets = [0, 384], sizes = [8, 128], strides = [1, 1]} : vector<8x512xf32> to vector<8x128xf32>
    %240 = arith.negf %239 : vector<8x128xf32>
    %241 = math.exp %240 : vector<8x128xf32>
    %cst_88 = arith.constant 1.000000e+00 : f32
    %242 = vector.broadcast %cst_88 : f32 to vector<8x128xf32>
    %243 = arith.addf %242, %241 : vector<8x128xf32>
    %244 = arith.divf %242, %243 : vector<8x128xf32>
    %245 = arith.mulf %236, %213 : vector<8x128xf32>
    %246 = arith.mulf %230, %238 : vector<8x128xf32>
    %247 = arith.addf %245, %246 : vector<8x128xf32>
    %248 = math.tanh %247 : vector<8x128xf32>
    %249 = arith.mulf %244, %248 : vector<8x128xf32>
    %c0_89 = arith.constant 0 : index
    %c6_90 = arith.constant 6 : index
    %c0_91 = arith.constant 0 : index
    %250 = vector.load %arg8[%c0_89, %c6_90, %c0_91] : memref<8x8x128xf32, #tpu.memory_space<vmem>>, vector<8x1x128xf32>
    %251 = vector.shape_cast %250 : vector<8x1x128xf32> to vector<8x128xf32>
    %252 = vector.shape_cast %249 : vector<8x128xf32> to vector<8x1x128xf32>
    tpu.vector_store %arg8[%c0_89, %c6_90, %c0_91], %252 {strides = array<i32>} : memref<8x8x128xf32, #tpu.memory_space<vmem>>, vector<8x1x128xf32>,
    %c0_92 = arith.constant 0 : index
    %c7 = arith.constant 7 : index
    %c0_93 = arith.constant 0 : index
    %253 = vector.load %arg7[%c0_92, %c7, %c0_93] : memref<8x8x512xf32, #tpu.memory_space<vmem>>, vector<8x1x512xf32>
    %254 = vector.shape_cast %253 : vector<8x1x512xf32> to vector<8x512xf32>
    %255 = arith.truncf %249 : vector<8x128xf32> to vector<8x128xbf16>
    %c0_94 = arith.constant 0 : index
    %c0_95 = arith.constant 0 : index
    %256 = vector.load %arg4[%c0_94, %c0_95] : memref<128x512xbf16, #tpu.memory_space<vmem>>, vector<128x512xbf16>
    %cst_96 = arith.constant dense<0.000000e+00> : vector<8x512xf32>
    %257 = tpu.matmul %255, %256, %cst_96 {dimension_numbers = #tpu.dot_dimension_numbers<[1], [0], [0], [1], [0, 0, 1, 1], [], []>} : vector<8x128xbf16>, vector<128x512xbf16>, vector<8x512xf32> -> vector<8x512xf32>
    %258 = arith.addf %254, %257 : vector<8x512xf32>
    %259 = vector.extract_strided_slice %258 {offsets = [0, 0], sizes = [8, 128], strides = [1, 1]} : vector<8x512xf32> to vector<8x128xf32>
    %260 = arith.negf %259 : vector<8x128xf32>
    %261 = math.exp %260 : vector<8x128xf32>
    %cst_97 = arith.constant 1.000000e+00 : f32
    %262 = vector.broadcast %cst_97 : f32 to vector<8x128xf32>
    %263 = arith.addf %262, %261 : vector<8x128xf32>
    %264 = arith.divf %262, %263 : vector<8x128xf32>
    %265 = vector.extract_strided_slice %258 {offsets = [0, 128], sizes = [8, 128], strides = [1, 1]} : vector<8x512xf32> to vector<8x128xf32>
    %266 = arith.negf %265 : vector<8x128xf32>
    %267 = math.exp %266 : vector<8x128xf32>
    %cst_98 = arith.constant 1.000000e+00 : f32
    %268 = vector.broadcast %cst_98 : f32 to vector<8x128xf32>
    %269 = arith.addf %268, %267 : vector<8x128xf32>
    %270 = arith.divf %268, %269 : vector<8x128xf32>
    %271 = vector.extract_strided_slice %258 {offsets = [0, 256], sizes = [8, 128], strides = [1, 1]} : vector<8x512xf32> to vector<8x128xf32>
    %272 = math.tanh %271 : vector<8x128xf32>
    %273 = vector.extract_strided_slice %258 {offsets = [0, 384], sizes = [8, 128], strides = [1, 1]} : vector<8x512xf32> to vector<8x128xf32>
    %274 = arith.negf %273 : vector<8x128xf32>
    %275 = math.exp %274 : vector<8x128xf32>
    %cst_99 = arith.constant 1.000000e+00 : f32
    %276 = vector.broadcast %cst_99 : f32 to vector<8x128xf32>
    %277 = arith.addf %276, %275 : vector<8x128xf32>
    %278 = arith.divf %276, %277 : vector<8x128xf32>
    %279 = arith.mulf %270, %247 : vector<8x128xf32>
    %280 = arith.mulf %264, %272 : vector<8x128xf32>
    %281 = arith.addf %279, %280 : vector<8x128xf32>
    %282 = math.tanh %281 : vector<8x128xf32>
    %283 = arith.mulf %278, %282 : vector<8x128xf32>
    %c0_100 = arith.constant 0 : index
    %c7_101 = arith.constant 7 : index
    %c0_102 = arith.constant 0 : index
    %284 = vector.load %arg8[%c0_100, %c7_101, %c0_102] : memref<8x8x128xf32, #tpu.memory_space<vmem>>, vector<8x1x128xf32>
    %285 = vector.shape_cast %284 : vector<8x1x128xf32> to vector<8x128xf32>
    %286 = vector.shape_cast %283 : vector<8x128xf32> to vector<8x1x128xf32>
    tpu.vector_store %arg8[%c0_100, %c7_101, %c0_102], %286 {strides = array<i32>} : memref<8x8x128xf32, #tpu.memory_space<vmem>>, vector<8x1x128xf32>,
    %c0_103 = arith.constant 0 : index
    %c0_104 = arith.constant 0 : index
    %287 = vector.load %arg9[%c0_103, %c0_104] : memref<8x128xf32, #tpu.memory_space<vmem>>, vector<8x128xf32>
    tpu.vector_store %arg9[%c0_103, %c0_104], %283 {strides = array<i32>} : memref<8x128xf32, #tpu.memory_space<vmem>>, vector<8x128xf32>,
    %c0_105 = arith.constant 0 : index
    %c0_106 = arith.constant 0 : index
    %288 = vector.load %arg10[%c0_105, %c0_106] : memref<8x128xf32, #tpu.memory_space<vmem>>, vector<8x128xf32>
    tpu.vector_store %arg10[%c0_105, %c0_106], %281 {strides = array<i32>} : memref<8x128xf32, #tpu.memory_space<vmem>>, vector<8x128xf32>,
    %c0_107 = arith.constant 0 : index
    %c0_108 = arith.constant 0 : index
    %c0_109 = arith.constant 0 : index
    %289 = vector.load %arg8[%c0_107, %c0_108, %c0_109] : memref<8x8x128xf32, #tpu.memory_space<vmem>>, vector<8x8x128xf32>
    %290 = arith.truncf %289 : vector<8x8x128xf32> to vector<8x8x128xbf16>
    %c0_110 = arith.constant 0 : index
    %c0_111 = arith.constant 0 : index
    %c0_112 = arith.constant 0 : index
    %291 = vector.load %arg6[%c0_110, %c0_111, %c0_112] : memref<8x8x128xbf16, #tpu.memory_space<vmem>>, vector<8x8x128xbf16>
    tpu.vector_store %arg6[%c0_110, %c0_111, %c0_112], %290 {strides = array<i32>} : memref<8x8x128xbf16, #tpu.memory_space<vmem>>, vector<8x8x128xbf16>,
    return
  }
  func.func @transform_0(%arg0: i32, %arg1: i32) -> (i32, i32, i32) {
    %c0_i32 = arith.constant 0 : i32
    %c0_i32_0 = arith.constant 0 : i32
    return %arg0, %arg1, %c0_i32 : i32, i32, i32
  }
  func.func @transform_1(%arg0: i32, %arg1: i32) -> (i32, i32) {
    %c0_i32 = arith.constant 0 : i32
    %c0_i32_0 = arith.constant 0 : i32
    %c0_i32_1 = arith.constant 0 : i32
    return %c0_i32, %c0_i32_0 : i32, i32
  }
  func.func @transform_2(%arg0: i32, %arg1: i32) -> (i32, i32) {
    %c0_i32 = arith.constant 0 : i32
    %c0_i32_0 = arith.constant 0 : i32
    %c0_i32_1 = arith.constant 0 : i32
    return %c0_i32, %c0_i32_0 : i32, i32
  }
  func.func @transform_3(%arg0: i32, %arg1: i32) -> (i32, i32) {
    %c0_i32 = arith.constant 0 : i32
    %c0_i32_0 = arith.constant 0 : i32
    %c0_i32_1 = arith.constant 0 : i32
    return %c0_i32, %c0_i32_0 : i32, i32
  }
  func.func @transform_4(%arg0: i32, %arg1: i32) -> (i32, i32, i32) {
    %c0_i32 = arith.constant 0 : i32
    %c0_i32_0 = arith.constant 0 : i32
    return %arg0, %arg1, %c0_i32 : i32, i32, i32
  }
}

</mosaic_0001>

<llo_original>
// kernel: tpu_custom_call.1
$region0: #{tpu_custom_call.1}
  #allocation0 [shape = 'u32[]', space=smem, size = 0x4, offset = 0x4, fixed_abs, tag = 'smem constant byte address 0x4 - core index']
  #allocation1 [shape = 'u32[72,128]{1,0:T(1,128)}', space=vmem, size = 0x9000, scoped, tag = 'internal scratch']
  #allocation2 [shape = 'f32[8,8,512]{2,1,0:T(8,128)}', space=vmem, size = 0x20000, scoped, tag = 'scratch operand']
  #allocation3 [shape = 'f32[8,8,128]{2,1,0:T(8,128)}', space=vmem, size = 0x8000, scoped, tag = 'scratch operand']
  #allocation4 [shape = 'f32[8,128]{1,0:T(8,128)}', space=vmem, size = 0x1000, scoped, tag = 'scratch operand']
  #allocation5 [shape = 'f32[8,128]{1,0:T(8,128)}', space=vmem, size = 0x1000, scoped, tag = 'scratch operand']
  %s0 = inlined_call_operand.hbm [shape: f32[8,8,128], index: 0, kind: input, shape index: {}]
  %s1 = inlined_call_operand.hbm [shape: bf16[128,512], index: 1, kind: input, shape index: {}]
  %s2 = inlined_call_operand.hbm [shape: bf16[128,512], index: 2, kind: input, shape index: {}]
  %s3 = inlined_call_operand.hbm [shape: f32[1,512], index: 3, kind: input, shape index: {}]
  %s4 = inlined_call_operand.hbm [shape: bf16[8,8,128], index: 4, kind: output, shape index: {}]
  %s5 = sld [smem:[#allocation0]]
  $region46: #{tpu_custom_call.1} parent=0
    _
  %s7 = ssub.s32 1, %s5
  %s8 = scalar_select 0, %s7, %s5
  $region1: #{tpu_custom_call.1} parent=0
    #allocation6 [shape = 'u8[32768]{0}', space=vmem, size = 0x8000, scoped, tag = 'input window, operand 0, single buffered']
    #allocation7 [shape = 's32[1]{0}', space=sflag, size = 0x4, scoped, tag = 'scoped memory for tpu_custom_call.1']
    #allocation8 [shape = 's32[1]{0}', space=sflag, size = 0x4, scoped, tag = 'scoped memory for tpu_custom_call.1']
    #allocation9 [shape = 'u8[131072]{0}', space=vmem, size = 0x20000, scoped, tag = 'input window, operand 1, single buffered']
    #allocation10 [shape = 's32[1]{0}', space=sflag, size = 0x4, scoped, tag = 'scoped memory for tpu_custom_call.1']
    #allocation11 [shape = 'u8[131072]{0}', space=vmem, size = 0x20000, scoped, tag = 'input window, operand 2, single buffered']
    #allocation12 [shape = 'u8[2048]{0}', space=vmem, size = 0x800, scoped, tag = 'input window, operand 3, single buffered']
    #allocation13 [shape = 's32[1]{0}', space=sflag, size = 0x4, scoped, tag = 'scoped memory for tpu_custom_call.1']
    #allocation14 [shape = 'u8[16384]{0}', space=vmem, size = 0x4000, scoped, tag = 'output window, operand 0, single buffered']
    %9 = vsyncpa [#allocation7], 0
    %10 = vsyncpa [#allocation10], 0
    %11 = vsyncpa [#allocation13], 0
    %12 = vsyncpa [#allocation8], 0
    // Predicated region
    $region2: #{tpu_custom_call.1} parent=1 // pred_check
      _
    $region3: #{tpu_custom_call.1} parent=1 // pred_check_branch
      %14 = sbr.rel (0) target = $region5
    $region4: #{tpu_custom_call.1} parent=1 // pred_region
      %16 = vsyncadd [#allocation7], 0
      %s17 = sshll.u32 %s0, 4
      %s18 = int_to_ptr.hbm [resolvable:$true] %s17
      %s19 = sshll.u32 [#allocation6], 4
      %s20 = int_to_ptr.vmem [resolvable:$true] %s19
      %25 = dma.hbm_to_vmem [thread:$0]  %s18, 1024, %s20, [#allocation7], 128, 128, 8
    $region5: #{tpu_custom_call.1} parent=1 // pred_fallthru
      _
    // Predicated region
    $region6: #{tpu_custom_call.1} parent=1 // pred_check
      _
    $region7: #{tpu_custom_call.1} parent=1 // pred_check_branch
      %27 = sbr.rel (0) target = $region9
    $region8: #{tpu_custom_call.1} parent=1 // pred_region
      %29 = vsyncadd [#allocation10], 0
      %s30 = sshll.u32 %s1, 4
      %s31 = int_to_ptr.hbm [resolvable:$true] %s30
      %s32 = sshll.u32 [#allocation9], 4
      %s33 = int_to_ptr.vmem [resolvable:$true] %s32
      %38 = dma.hbm_to_vmem [thread:$0]  %s31, 4096, %s33, [#allocation10], 256, 256, 16
    $region9: #{tpu_custom_call.1} parent=1 // pred_fallthru
      _
    // Predicated region
    $region10: #{tpu_custom_call.1} parent=1 // pred_check
      _
    $region11: #{tpu_custom_call.1} parent=1 // pred_check_branch
      %40 = sbr.rel (0) target = $region13
    $region12: #{tpu_custom_call.1} parent=1 // pred_region
      %42 = vsyncadd [#allocation10], 0
      %s43 = sshll.u32 %s2, 4
      %s44 = int_to_ptr.hbm [resolvable:$true] %s43
      %s45 = sshll.u32 [#allocation11], 4
      %s46 = int_to_ptr.vmem [resolvable:$true] %s45
      %51 = dma.hbm_to_vmem [thread:$0]  %s44, 4096, %s46, [#allocation10], 256, 256, 16
    $region13: #{tpu_custom_call.1} parent=1 // pred_fallthru
      _
    // Predicated region
    $region14: #{tpu_custom_call.1} parent=1 // pred_check
      _
    $region15: #{tpu_custom_call.1} parent=1 // pred_check_branch
      %53 = sbr.rel (0) target = $region17
    $region16: #{tpu_custom_call.1} parent=1 // pred_region
      %55 = vsyncadd [#allocation13], 0
      %s57 = sshll.u32 %s3, 4
      %s58 = int_to_ptr.hbm [resolvable:$true] %s57
      %s59 = sshll.u32 [#allocation12], 4
      %s60 = int_to_ptr.vmem [resolvable:$true] %s59
      %62 = dma.hbm_to_vmem [thread:$0]  %s58, 64, %s60, [#allocation13]
    $region17: #{tpu_custom_call.1} parent=1 // pred_fallthru
      _
    // Predicated region
    $region18: #{tpu_custom_call.1} parent=1 // pred_check
      _
    $region19: #{tpu_custom_call.1} parent=1 // pred_check_branch
      %64 = sbr.rel (0) target = $region21
    $region20: #{tpu_custom_call.1} parent=1 // pred_region
      %66 = dma.done [#allocation7], 1024
    $region21: #{tpu_custom_call.1} parent=1 // pred_fallthru
      _
    // Predicated region
    $region22: #{tpu_custom_call.1} parent=1 // pred_check
      _
    $region23: #{tpu_custom_call.1} parent=1 // pred_check_branch
      %68 = sbr.rel (0) target = $region25
    $region24: #{tpu_custom_call.1} parent=1 // pred_region
      %70 = dma.done [#allocation10], 4096
    $region25: #{tpu_custom_call.1} parent=1 // pred_fallthru
      _
    // Predicated region
    $region26: #{tpu_custom_call.1} parent=1 // pred_check
      _
    $region27: #{tpu_custom_call.1} parent=1 // pred_check_branch
      %72 = sbr.rel (0) target = $region29
    $region28: #{tpu_custom_call.1} parent=1 // pred_region
      %74 = dma.done [#allocation10], 4096
    $region29: #{tpu_custom_call.1} parent=1 // pred_fallthru
      _
    // Predicated region
    $region30: #{tpu_custom_call.1} parent=1 // pred_check
      _
    $region31: #{tpu_custom_call.1} parent=1 // pred_check_branch
      %76 = sbr.rel (0) target = $region33
    $region32: #{tpu_custom_call.1} parent=1 // pred_region
      %78 = dma.done [#allocation13], 64
    $region33: #{tpu_custom_call.1} parent=1 // pred_fallthru
      _
    %p79 = scmp.eq.s32.totalorder 0, 0
    // Predicated region
    $region34: #{tpu_custom_call.1} parent=1 // pred_check
      %p80 = pneg %p79
    $region35: #{tpu_custom_call.1} parent=1 // pred_check_branch
      %82 = sbr.rel (%p80) target = $region37
    $region36: #{tpu_custom_call.1} parent=1 // pred_region
      %83 = vst [vmem:[#allocation4] sm:$0xff] 0.0
      %84 = vst [vmem:[#allocation5] sm:$0xff] 0.0
    $region37: #{tpu_custom_call.1} parent=1 // pred_fallthru
      _
    %v85 = vld [vmem:[#allocation6] sm:$0xff]
    %v86 = vld [vmem:[#allocation6 + $0x8] sm:$0xff]
    %v87 = vld [vmem:[#allocation6 + $0x10] sm:$0xff]
    %v88 = vld [vmem:[#allocation6 + $0x18] sm:$0xff]
    %v89 = vld [vmem:[#allocation6 + $0x20] sm:$0xff]
    %v90 = vld [vmem:[#allocation6 + $0x28] sm:$0xff]
    %v91 = vld [vmem:[#allocation6 + $0x30] sm:$0xff]
    %v92 = vld [vmem:[#allocation6 + $0x38] sm:$0xff]
    %v93 = vpack.c.bf16 %v86, %v85
    %v94 = vpack.c.bf16 %v88, %v87
    %v95 = vpack.c.bf16 %v90, %v89
    %v96 = vpack.c.bf16 %v92, %v91
    %v97 = vld [vmem:[#allocation9] sm:$0xff]
    %v98 = vld [vmem:[#allocation9 + $0x8] sm:$0xff]
    %v99 = vld [vmem:[#allocation9 + $0x10] sm:$0xff]
    %v100 = vld [vmem:[#allocation9 + $0x18] sm:$0xff]
    %v101 = vld [vmem:[#allocation9 + $0x20] sm:$0xff]
    %v102 = vld [vmem:[#allocation9 + $0x28] sm:$0xff]
    %v103 = vld [vmem:[#allocation9 + $0x30] sm:$0xff]
    %v104 = vld [vmem:[#allocation9 + $0x38] sm:$0xff]
    %v105 = vld [vmem:[#allocation9 + $0x40] sm:$0xff]
    %v106 = vld [vmem:[#allocation9 + $0x48] sm:$0xff]
    %v107 = vld [vmem:[#allocation9 + $0x50] sm:$0xff]
    %v108 = vld [vmem:[#allocation9 + $0x58] sm:$0xff]
    %v109 = vld [vmem:[#allocation9 + $0x60] sm:$0xff]
    %v110 = vld [vmem:[#allocation9 + $0x68] sm:$0xff]
    %v111 = vld [vmem:[#allocation9 + $0x70] sm:$0xff]
    %v112 = vld [vmem:[#allocation9 + $0x78] sm:$0xff]
    %v113 = vld [vmem:[#allocation9 + $0x80] sm:$0xff]
    %v114 = vld [vmem:[#allocation9 + $0x88] sm:$0xff]
    %v115 = vld [vmem:[#allocation9 + $0x90] sm:$0xff]
    %v116 = vld [vmem:[#allocation9 + $0x98] sm:$0xff]
    %v117 = vld [vmem:[#allocation9 + $0xa0] sm:$0xff]
    %v118 = vld [vmem:[#allocation9 + $0xa8] sm:$0xff]
    %v119 = vld [vmem:[#allocation9 + $0xb0] sm:$0xff]
    %v120 = vld [vmem:[#allocation9 + $0xb8] sm:$0xff]
    %v121 = vld [vmem:[#allocation9 + $0xc0] sm:$0xff]
    %v122 = vld [vmem:[#allocation9 + $0xc8] sm:$0xff]
    %v123 = vld [vmem:[#allocation9 + $0xd0] sm:$0xff]
    %v124 = vld [vmem:[#allocation9 + $0xd8] sm:$0xff]
    %v125 = vld [vmem:[#allocation9 + $0xe0] sm:$0xff]
    %v126 = vld [vmem:[#allocation9 + $0xe8] sm:$0xff]
    %v127 = vld [vmem:[#allocation9 + $0xf0] sm:$0xff]
    %v128 = vld [vmem:[#allocation9 + $0xf8] sm:$0xff]
    %v129 = vld [vmem:[#allocation12] sm:$0xf]
    %v131 = vperm.slane %v129, 0
    %v132 = vperm.slane %v129, 1
    %v133 = vperm.slane %v129, 2
    %v134 = vperm.slane %v129, 3
    %v171 = vunpack.c.l.b16 %v97
    %v172 = vunpack.c.h.b16 %v97
    %v173 = vunpack.c.l.b16 %v98
    %v174 = vunpack.c.h.b16 %v98
    %v175 = vunpack.c.l.b16 %v99
    %v176 = vunpack.c.h.b16 %v99
    %v177 = vunpack.c.l.b16 %v100
    %v178 = vunpack.c.h.b16 %v100
    %v179 = vunpack.c.l.b16 %v101
    %v180 = vunpack.c.h.b16 %v101
    %v181 = vunpack.c.l.b16 %v102
    %v182 = vunpack.c.h.b16 %v102
    %v183 = vunpack.c.l.b16 %v103
    %v184 = vunpack.c.h.b16 %v103
    %v185 = vunpack.c.l.b16 %v104
    %v186 = vunpack.c.h.b16 %v104
    %v187 = vunpack.c.l.b16 %v105
    %v188 = vunpack.c.h.b16 %v105
    %v189 = vunpack.c.l.b16 %v106
    %v190 = vunpack.c.h.b16 %v106
    %v191 = vunpack.c.l.b16 %v107
    %v192 = vunpack.c.h.b16 %v107
    %v193 = vunpack.c.l.b16 %v108
    %v194 = vunpack.c.h.b16 %v108
    %v195 = vunpack.c.l.b16 %v109
    %v196 = vunpack.c.h.b16 %v109
    %v197 = vunpack.c.l.b16 %v110
    %v198 = vunpack.c.h.b16 %v110
    %v199 = vunpack.c.l.b16 %v111
    %v200 = vunpack.c.h.b16 %v111
    %v201 = vunpack.c.l.b16 %v112
    %v202 = vunpack.c.h.b16 %v112
    %v203 = vunpack.c.l.b16 %v113
    %v204 = vunpack.c.h.b16 %v113
    %v205 = vunpack.c.l.b16 %v114
    %v206 = vunpack.c.h.b16 %v114
    %v207 = vunpack.c.l.b16 %v115
    %v208 = vunpack.c.h.b16 %v115
    %v209 = vunpack.c.l.b16 %v116
    %v210 = vunpack.c.h.b16 %v116
    %v211 = vunpack.c.l.b16 %v117
    %v212 = vunpack.c.h.b16 %v117
    %v213 = vunpack.c.l.b16 %v118
    %v214 = vunpack.c.h.b16 %v118
    %v215 = vunpack.c.l.b16 %v119
    %v216 = vunpack.c.h.b16 %v119
    %v217 = vunpack.c.l.b16 %v120
    %v218 = vunpack.c.h.b16 %v120
    %v219 = vunpack.c.l.b16 %v121
    %v220 = vunpack.c.h.b16 %v121
    %v221 = vunpack.c.l.b16 %v122
    %v222 = vunpack.c.h.b16 %v122
    %v223 = vunpack.c.l.b16 %v123
    %v224 = vunpack.c.h.b16 %v123
    %v225 = vunpack.c.l.b16 %v124
    %v226 = vunpack.c.h.b16 %v124
    %v227 = vunpack.c.l.b16 %v125
    %v228 = vunpack.c.h.b16 %v125
    %v229 = vunpack.c.l.b16 %v126
    %v230 = vunpack.c.h.b16 %v126
    %v231 = vunpack.c.l.b16 %v127
    %v232 = vunpack.c.h.b16 %v127
    %v233 = vunpack.c.l.b16 %v128
    %v234 = vunpack.c.h.b16 %v128
    %v235 = vpack.c.b16 %v175, %v171
    %v236 = vpack.c.b16 %v176, %v172
    %v237 = vpack.c.b16 %v177, %v173
    %v238 = vpack.c.b16 %v178, %v174
    %v239 = vpack.c.b16 %v183, %v179
    %v240 = vpack.c.b16 %v184, %v180
    %v241 = vpack.c.b16 %v185, %v181
    %v242 = vpack.c.b16 %v186, %v182
    %v243 = vpack.c.b16 %v191, %v187
    %v244 = vpack.c.b16 %v192, %v188
    %v245 = vpack.c.b16 %v193, %v189
    %v246 = vpack.c.b16 %v194, %v190
    %v247 = vpack.c.b16 %v199, %v195
    %v248 = vpack.c.b16 %v200, %v196
    %v249 = vpack.c.b16 %v201, %v197
    %v250 = vpack.c.b16 %v202, %v198
    %v251 = vpack.c.b16 %v207, %v203
    %v252 = vpack.c.b16 %v208, %v204
    %v253 = vpack.c.b16 %v209, %v205
    %v254 = vpack.c.b16 %v210, %v206
    %v255 = vpack.c.b16 %v215, %v211
    %v256 = vpack.c.b16 %v216, %v212
    %v257 = vpack.c.b16 %v217, %v213
    %v258 = vpack.c.b16 %v218, %v214
    %v259 = vpack.c.b16 %v223, %v219
    %v260 = vpack.c.b16 %v224, %v220
    %v261 = vpack.c.b16 %v225, %v221
    %v262 = vpack.c.b16 %v226, %v222
    %v263 = vpack.c.b16 %v231, %v227
    %v264 = vpack.c.b16 %v232, %v228
    %v265 = vpack.c.b16 %v233, %v229
    %v266 = vpack.c.b16 %v234, %v230
    %299 = vmatpush.bf16.msra.mxu0 %v263
    %300 = vmatpush.bf16.msra.mxu0 %v259
    %301 = vmatpush.bf16.msra.mxu0 %v255
    %302 = vmatpush.bf16.msra.mxu0 %v251
    %303 = vmatpush.bf16.msra.mxu0 %v247
    %304 = vmatpush.bf16.msra.mxu0 %v243
    %305 = vmatpush.bf16.msra.mxu0 %v239
    %306 = vmatpush.bf16.msra.mxu0 %v235
    %307 = vmatmul.bf16.gmra.mxu0 %v93
    %v308 = vpop.f32.mrf.mxu0
    %v309 = vadd.f32 %v131, %v308
    %v310 = vpop.f32.mrf.mxu0
    %v311 = vadd.f32 %v131, %v310
    %312 = vmatmul.bf16.gmra.mxu0 %v94
    %v313 = vpop.f32.mrf.mxu0
    %v314 = vadd.f32 %v131, %v313
    %v315 = vpop.f32.mrf.mxu0
    %v316 = vadd.f32 %v131, %v315
    %317 = vmatmul.bf16.gmra.mxu0 %v95
    %v318 = vpop.f32.mrf.mxu0
    %v319 = vadd.f32 %v131, %v318
    %v320 = vpop.f32.mrf.mxu0
    %v321 = vadd.f32 %v131, %v320
    %322 = vmatmul.bf16.gmra.mxu0 %v96
    %v323 = vpop.f32.mrf.mxu0
    %v324 = vadd.f32 %v131, %v323
    %v325 = vpop.f32.mrf.mxu0
    %v326 = vadd.f32 %v131, %v325
    %327 = vdwg.mxu0
    %328 = vmatpush.bf16.msra.mxu0 %v264
    %329 = vmatpush.bf16.msra.mxu0 %v260
    %330 = vmatpush.bf16.msra.mxu0 %v256
    %331 = vmatpush.bf16.msra.mxu0 %v252
    %332 = vmatpush.bf16.msra.mxu0 %v248
    %333 = vmatpush.bf16.msra.mxu0 %v244
    %334 = vmatpush.bf16.msra.mxu0 %v240
    %335 = vmatpush.bf16.msra.mxu0 %v236
    %336 = vmatmul.bf16.gmra.mxu0 %v93
    %v337 = vpop.f32.mrf.mxu0
    %v338 = vadd.f32 %v132, %v337
    %v339 = vpop.f32.mrf.mxu0
    %v340 = vadd.f32 %v132, %v339
    %341 = vmatmul.bf16.gmra.mxu0 %v94
    %v342 = vpop.f32.mrf.mxu0
    %v343 = vadd.f32 %v132, %v342
    %v344 = vpop.f32.mrf.mxu0
    %v345 = vadd.f32 %v132, %v344
    %346 = vmatmul.bf16.gmra.mxu0 %v95
    %v347 = vpop.f32.mrf.mxu0
    %v348 = vadd.f32 %v132, %v347
    %v349 = vpop.f32.mrf.mxu0
    %v350 = vadd.f32 %v132, %v349
    %351 = vmatmul.bf16.gmra.mxu0 %v96
    %v352 = vpop.f32.mrf.mxu0
    %v353 = vadd.f32 %v132, %v352
    %v354 = vpop.f32.mrf.mxu0
    %v355 = vadd.f32 %v132, %v354
    %356 = vdwg.mxu0
    %357 = vmatpush.bf16.msra.mxu0 %v265
    %358 = vmatpush.bf16.msra.mxu0 %v261
    %359 = vmatpush.bf16.msra.mxu0 %v257
    %360 = vmatpush.bf16.msra.mxu0 %v253
    %361 = vmatpush.bf16.msra.mxu0 %v249
    %362 = vmatpush.bf16.msra.mxu0 %v245
    %363 = vmatpush.bf16.msra.mxu0 %v241
    %364 = vmatpush.bf16.msra.mxu0 %v237
    %365 = vmatmul.bf16.gmra.mxu0 %v93
    %v366 = vpop.f32.mrf.mxu0
    %v367 = vadd.f32 %v133, %v366
    %v368 = vpop.f32.mrf.mxu0
    %v369 = vadd.f32 %v133, %v368
    %370 = vmatmul.bf16.gmra.mxu0 %v94
    %v371 = vpop.f32.mrf.mxu0
    %v372 = vadd.f32 %v133, %v371
    %v373 = vpop.f32.mrf.mxu0
    %v374 = vadd.f32 %v133, %v373
    %375 = vmatmul.bf16.gmra.mxu0 %v95
    %v376 = vpop.f32.mrf.mxu0
    %v377 = vadd.f32 %v133, %v376
    %v378 = vpop.f32.mrf.mxu0
    %v379 = vadd.f32 %v133, %v378
    %380 = vmatmul.bf16.gmra.mxu0 %v96
    %v381 = vpop.f32.mrf.mxu0
    %v382 = vadd.f32 %v133, %v381
    %v383 = vpop.f32.mrf.mxu0
    %v384 = vadd.f32 %v133, %v383
    %385 = vdwg.mxu0
    %386 = vmatpush.bf16.msra.mxu0 %v266
    %387 = vmatpush.bf16.msra.mxu0 %v262
    %388 = vmatpush.bf16.msra.mxu0 %v258
    %389 = vmatpush.bf16.msra.mxu0 %v254
    %390 = vmatpush.bf16.msra.mxu0 %v250
    %391 = vmatpush.bf16.msra.mxu0 %v246
    %392 = vmatpush.bf16.msra.mxu0 %v242
    %393 = vmatpush.bf16.msra.mxu0 %v238
    %394 = vmatmul.bf16.gmra.mxu0 %v93
    %v395 = vpop.f32.mrf.mxu0
    %v396 = vadd.f32 %v134, %v395
    %v397 = vpop.f32.mrf.mxu0
    %v398 = vadd.f32 %v134, %v397
    %399 = vmatmul.bf16.gmra.mxu0 %v94
    %v400 = vpop.f32.mrf.mxu0
    %v401 = vadd.f32 %v134, %v400
    %v402 = vpop.f32.mrf.mxu0
    %v403 = vadd.f32 %v134, %v402
    %404 = vmatmul.bf16.gmra.mxu0 %v95
    %v405 = vpop.f32.mrf.mxu0
    %v406 = vadd.f32 %v134, %v405
    %v407 = vpop.f32.mrf.mxu0
    %v408 = vadd.f32 %v134, %v407
    %409 = vmatmul.bf16.gmra.mxu0 %v96
    %v410 = vpop.f32.mrf.mxu0
    %v411 = vadd.f32 %v134, %v410
    %v412 = vpop.f32.mrf.mxu0
    %v413 = vadd.f32 %v134, %v412
    %414 = vdwg.mxu0
    %415 = vst [vmem:[#allocation2] sm:$0xff] %v309
    %416 = vst [vmem:[#allocation2 + $0x8] sm:$0xff] %v338
    %417 = vst [vmem:[#allocation2 + $0x10] sm:$0xff] %v367
    %418 = vst [vmem:[#allocation2 + $0x18] sm:$0xff] %v396
    %419 = vst [vmem:[#allocation2 + $0x20] sm:$0xff] %v311
    %420 = vst [vmem:[#allocation2 + $0x28] sm:$0xff] %v340
    %421 = vst [vmem:[#allocation2 + $0x30] sm:$0xff] %v369
    %422 = vst [vmem:[#allocation2 + $0x38] sm:$0xff] %v398
    %423 = vst [vmem:[#allocation2 + $0x40] sm:$0xff] %v314
    %424 = vst [vmem:[#allocation2 + $0x48] sm:$0xff] %v343
    %425 = vst [vmem:[#allocation2 + $0x50] sm:$0xff] %v372
    %426 = vst [vmem:[#allocation2 + $0x58] sm:$0xff] %v401
    %427 = vst [vmem:[#allocation2 + $0x60] sm:$0xff] %v316
    %428 = vst [vmem:[#allocation2 + $0x68] sm:$0xff] %v345
    %429 = vst [vmem:[#allocation2 + $0x70] sm:$0xff] %v374
    %430 = vst [vmem:[#allocation2 + $0x78] sm:$0xff] %v403
    %431 = vst [vmem:[#allocation2 + $0x80] sm:$0xff] %v319
    %432 = vst [vmem:[#allocation2 + $0x88] sm:$0xff] %v348
    %433 = vst [vmem:[#allocation2 + $0x90] sm:$0xff] %v377
    %434 = vst [vmem:[#allocation2 + $0x98] sm:$0xff] %v406
    %435 = vst [vmem:[#allocation2 + $0xa0] sm:$0xff] %v321
    %436 = vst [vmem:[#allocation2 + $0xa8] sm:$0xff] %v350
    %437 = vst [vmem:[#allocation2 + $0xb0] sm:$0xff] %v379
    %438 = vst [vmem:[#allocation2 + $0xb8] sm:$0xff] %v408
    %439 = vst [vmem:[#allocation2 + $0xc0] sm:$0xff] %v324
    %440 = vst [vmem:[#allocation2 + $0xc8] sm:$0xff] %v353
    %441 = vst [vmem:[#allocation2 + $0xd0] sm:$0xff] %v382
    %442 = vst [vmem:[#allocation2 + $0xd8] sm:$0xff] %v411
    %443 = vst [vmem:[#allocation2 + $0xe0] sm:$0xff] %v326
    %444 = vst [vmem:[#allocation2 + $0xe8] sm:$0xff] %v355
    %445 = vst [vmem:[#allocation2 + $0xf0] sm:$0xff] %v384
    %446 = vst [vmem:[#allocation2 + $0xf8] sm:$0xff] %v413
    %v447 = vld [vmem:[#allocation4] sm:$0xff]
    %v448 = vld [vmem:[#allocation5] sm:$0xff]
    %v449 = vld [vmem:[#allocation2] ss:$8 sm:$0xf]
    %s450 = scalar_lea.vmem [#allocation2], 32
    %v451 = vld [vmem:[%s450] ss:$8 sm:$0xf]
    %s452 = scalar_lea.vmem [#allocation2], 64
    %v453 = vld [vmem:[%s452] ss:$8 sm:$0xf]
    %s454 = scalar_lea.vmem [#allocation2], 96
    %v455 = vld [vmem:[%s454] ss:$8 sm:$0xf]
    %s456 = scalar_lea.vmem [#allocation2], 128
    %v457 = vld [vmem:[%s456] ss:$8 sm:$0xf]
    %s458 = scalar_lea.vmem [#allocation2], 160
    %v459 = vld [vmem:[%s458] ss:$8 sm:$0xf]
    %s460 = scalar_lea.vmem [#allocation2], 192
    %v461 = vld [vmem:[%s460] ss:$8 sm:$0xf]
    %s462 = scalar_lea.vmem [#allocation2], 224
    %v463 = vld [vmem:[%s462] ss:$8 sm:$0xf]
    %v464 = vpack.c.bf16 %v447, %v447
    %v465 = vld [vmem:[#allocation11] sm:$0xff]
    %v466 = vld [vmem:[#allocation11 + $0x8] sm:$0xff]
    %v467 = vld [vmem:[#allocation11 + $0x10] sm:$0xff]
    %v468 = vld [vmem:[#allocation11 + $0x18] sm:$0xff]
    %v469 = vld [vmem:[#allocation11 + $0x20] sm:$0xff]
    %v470 = vld [vmem:[#allocation11 + $0x28] sm:$0xff]
    %v471 = vld [vmem:[#allocation11 + $0x30] sm:$0xff]
    %v472 = vld [vmem:[#allocation11 + $0x38] sm:$0xff]
    %v473 = vld [vmem:[#allocation11 + $0x40] sm:$0xff]
    %v474 = vld [vmem:[#allocation11 + $0x48] sm:$0xff]
    %v475 = vld [vmem:[#allocation11 + $0x50] sm:$0xff]
    %v476 = vld [vmem:[#allocation11 + $0x58] sm:$0xff]
    %v477 = vld [vmem:[#allocation11 + $0x60] sm:$0xff]
    %v478 = vld [vmem:[#allocation11 + $0x68] sm:$0xff]
    %v479 = vld [vmem:[#allocation11 + $0x70] sm:$0xff]
    %v480 = vld [vmem:[#allocation11 + $0x78] sm:$0xff]
    %v481 = vld [vmem:[#allocation11 + $0x80] sm:$0xff]
    %v482 = vld [vmem:[#allocation11 + $0x88] sm:$0xff]
    %v483 = vld [vmem:[#allocation11 + $0x90] sm:$0xff]
    %v484 = vld [vmem:[#allocation11 + $0x98] sm:$0xff]
    %v485 = vld [vmem:[#allocation11 + $0xa0] sm:$0xff]
    %v486 = vld [vmem:[#allocation11 + $0xa8] sm:$0xff]
    %v487 = vld [vmem:[#allocation11 + $0xb0] sm:$0xff]
    %v488 = vld [vmem:[#allocation11 + $0xb8] sm:$0xff]
    %v489 = vld [vmem:[#allocation11 + $0xc0] sm:$0xff]
    %v490 = vld [vmem:[#allocation11 + $0xc8] sm:$0xff]
    %v491 = vld [vmem:[#allocation11 + $0xd0] sm:$0xff]
    %v492 = vld [vmem:[#allocation11 + $0xd8] sm:$0xff]
    %v493 = vld [vmem:[#allocation11 + $0xe0] sm:$0xff]
    %v494 = vld [vmem:[#allocation11 + $0xe8] sm:$0xff]
    %v495 = vld [vmem:[#allocation11 + $0xf0] sm:$0xff]
    %v496 = vld [vmem:[#allocation11 + $0xf8] sm:$0xff]
    %v529 = vunpack.c.l.b16 %v465
    %v530 = vunpack.c.h.b16 %v465
    %v531 = vunpack.c.l.b16 %v466
    %v532 = vunpack.c.h.b16 %v466
    %v533 = vunpack.c.l.b16 %v467
    %v534 = vunpack.c.h.b16 %v467
    %v535 = vunpack.c.l.b16 %v468
    %v536 = vunpack.c.h.b16 %v468
    %v537 = vunpack.c.l.b16 %v469
    %v538 = vunpack.c.h.b16 %v469
    %v539 = vunpack.c.l.b16 %v470
    %v540 = vunpack.c.h.b16 %v470
    %v541 = vunpack.c.l.b16 %v471
    %v542 = vunpack.c.h.b16 %v471
    %v543 = vunpack.c.l.b16 %v472
    %v544 = vunpack.c.h.b16 %v472
    %v545 = vunpack.c.l.b16 %v473
    %v546 = vunpack.c.h.b16 %v473
    %v547 = vunpack.c.l.b16 %v474
    %v548 = vunpack.c.h.b16 %v474
    %v549 = vunpack.c.l.b16 %v475
    %v550 = vunpack.c.h.b16 %v475
    %v551 = vunpack.c.l.b16 %v476
    %v552 = vunpack.c.h.b16 %v476
    %v553 = vunpack.c.l.b16 %v477
    %v554 = vunpack.c.h.b16 %v477
    %v555 = vunpack.c.l.b16 %v478
    %v556 = vunpack.c.h.b16 %v478
    %v557 = vunpack.c.l.b16 %v479
    %v558 = vunpack.c.h.b16 %v479
    %v559 = vunpack.c.l.b16 %v480
    %v560 = vunpack.c.h.b16 %v480
    %v561 = vunpack.c.l.b16 %v481
    %v562 = vunpack.c.h.b16 %v481
    %v563 = vunpack.c.l.b16 %v482
    %v564 = vunpack.c.h.b16 %v482
    %v565 = vunpack.c.l.b16 %v483
    %v566 = vunpack.c.h.b16 %v483
    %v567 = vunpack.c.l.b16 %v484
    %v568 = vunpack.c.h.b16 %v484
    %v569 = vunpack.c.l.b16 %v485
    %v570 = vunpack.c.h.b16 %v485
    %v571 = vunpack.c.l.b16 %v486
    %v572 = vunpack.c.h.b16 %v486
    %v573 = vunpack.c.l.b16 %v487
    %v574 = vunpack.c.h.b16 %v487
    %v575 = vunpack.c.l.b16 %v488
    %v576 = vunpack.c.h.b16 %v488
    %v577 = vunpack.c.l.b16 %v489
    %v578 = vunpack.c.h.b16 %v489
    %v579 = vunpack.c.l.b16 %v490
    %v580 = vunpack.c.h.b16 %v490
    %v581 = vunpack.c.l.b16 %v491
    %v582 = vunpack.c.h.b16 %v491
    %v583 = vunpack.c.l.b16 %v492
    %v584 = vunpack.c.h.b16 %v492
    %v585 = vunpack.c.l.b16 %v493
    %v586 = vunpack.c.h.b16 %v493
    %v587 = vunpack.c.l.b16 %v494
    %v588 = vunpack.c.h.b16 %v494
    %v589 = vunpack.c.l.b16 %v495
    %v590 = vunpack.c.h.b16 %v495
    %v591 = vunpack.c.l.b16 %v496
    %v592 = vunpack.c.h.b16 %v496
    %v593 = vpack.c.b16 %v533, %v529
    %v594 = vpack.c.b16 %v534, %v530
    %v595 = vpack.c.b16 %v535, %v531
    %v596 = vpack.c.b16 %v536, %v532
    %v597 = vpack.c.b16 %v541, %v537
    %v598 = vpack.c.b16 %v542, %v538
    %v599 = vpack.c.b16 %v543, %v539
    %v600 = vpack.c.b16 %v544, %v540
    %v601 = vpack.c.b16 %v549, %v545
    %v602 = vpack.c.b16 %v550, %v546
    %v603 = vpack.c.b16 %v551, %v547
    %v604 = vpack.c.b16 %v552, %v548
    %v605 = vpack.c.b16 %v557, %v553
    %v606 = vpack.c.b16 %v558, %v554
    %v607 = vpack.c.b16 %v559, %v555
    %v608 = vpack.c.b16 %v560, %v556
    %v609 = vpack.c.b16 %v565, %v561
    %v610 = vpack.c.b16 %v566, %v562
    %v611 = vpack.c.b16 %v567, %v563
    %v612 = vpack.c.b16 %v568, %v564
    %v613 = vpack.c.b16 %v573, %v569
    %v614 = vpack.c.b16 %v574, %v570
    %v615 = vpack.c.b16 %v575, %v571
    %v616 = vpack.c.b16 %v576, %v572
    %v617 = vpack.c.b16 %v581, %v577
    %v618 = vpack.c.b16 %v582, %v578
    %v619 = vpack.c.b16 %v583, %v579
    %v620 = vpack.c.b16 %v584, %v580
    %v621 = vpack.c.b16 %v589, %v585
    %v622 = vpack.c.b16 %v590, %v586
    %v623 = vpack.c.b16 %v591, %v587
    %v624 = vpack.c.b16 %v592, %v588
    %657 = vmatpush.bf16.msra.mxu0 %v621
    %658 = vmatpush.bf16.msra.mxu0 %v617
    %659 = vmatpush.bf16.msra.mxu0 %v613
    %660 = vmatpush.bf16.msra.mxu0 %v609
    %661 = vmatpush.bf16.msra.mxu0 %v605
    %662 = vmatpush.bf16.msra.mxu0 %v601
    %663 = vmatpush.bf16.msra.mxu0 %v597
    %664 = vmatpush.bf16.msra.mxu0 %v593
    %665 = vmatmul.bf16.gmra.mxu0 %v464
    %v666 = vpop.f32.mrf.mxu0
    %v667 = vadd.f32 0.0, %v666
    %v668 = vpop.f32.mrf.mxu0
    %669 = vdwg.mxu0
    %670 = vmatpush.bf16.msra.mxu0 %v622
    %671 = vmatpush.bf16.msra.mxu0 %v618
    %672 = vmatpush.bf16.msra.mxu0 %v614
    %673 = vmatpush.bf16.msra.mxu0 %v610
    %674 = vmatpush.bf16.msra.mxu0 %v606
    %675 = vmatpush.bf16.msra.mxu0 %v602
    %676 = vmatpush.bf16.msra.mxu0 %v598
    %677 = vmatpush.bf16.msra.mxu0 %v594
    %678 = vmatmul.bf16.gmra.mxu0 %v464
    %v679 = vpop.f32.mrf.mxu0
    %v680 = vadd.f32 0.0, %v679
    %v681 = vpop.f32.mrf.mxu0
    %682 = vdwg.mxu0
    %683 = vmatpush.bf16.msra.mxu0 %v623
    %684 = vmatpush.bf16.msra.mxu0 %v619
    %685 = vmatpush.bf16.msra.mxu0 %v615
    %686 = vmatpush.bf16.msra.mxu0 %v611
    %687 = vmatpush.bf16.msra.mxu0 %v607
    %688 = vmatpush.bf16.msra.mxu0 %v603
    %689 = vmatpush.bf16.msra.mxu0 %v599
    %690 = vmatpush.bf16.msra.mxu0 %v595
    %691 = vmatmul.bf16.gmra.mxu0 %v464
    %v692 = vpop.f32.mrf.mxu0
    %v693 = vadd.f32 0.0, %v692
    %v694 = vpop.f32.mrf.mxu0
    %695 = vdwg.mxu0
    %696 = vmatpush.bf16.msra.mxu0 %v624
    %697 = vmatpush.bf16.msra.mxu0 %v620
    %698 = vmatpush.bf16.msra.mxu0 %v616
    %699 = vmatpush.bf16.msra.mxu0 %v612
    %700 = vmatpush.bf16.msra.mxu0 %v608
    %701 = vmatpush.bf16.msra.mxu0 %v604
    %702 = vmatpush.bf16.msra.mxu0 %v600
    %703 = vmatpush.bf16.msra.mxu0 %v596
    %704 = vmatmul.bf16.gmra.mxu0 %v464
    %v705 = vpop.f32.mrf.mxu0
    %v706 = vadd.f32 0.0, %v705
    %v707 = vpop.f32.mrf.mxu0
    %708 = vdwg.mxu0
    %v713 = vrot.slane %v680, 7
    %v714 = vrot.slane %v693, 6
    %v715 = vrot.slane %v706, 5
    %vm716 = vcmask 1040384
    %v717 = vsel %vm716, %v667, %v713
    %vm718 = vcmask 1042434
    %v719 = vsel %vm718, %v714, %v715
    %vm720 = vcmask 1041408
    %v721 = vsel %vm720, %v717, %v719
    %vm722 = vcmask 1041409
    %v723 = vsel %vm722, %v667, %v713
    %vm724 = vcmask 1043459
    %v725 = vsel %vm724, %v714, %v715
    %vm726 = vcmask 1042433
    %v727 = vsel %vm726, %v723, %v725
    %v728 = vrot.slane %v727, 1
    %v729 = vsel %vm718, %v667, %v713
    %vm730 = vcmask 1044484
    %v731 = vsel %vm730, %v714, %v715
    %vm732 = vcmask 1043458
    %v733 = vsel %vm732, %v729, %v731
    %v734 = vrot.slane %v733, 2
    %v735 = vsel %vm724, %v667, %v713
    %vm736 = vcmask 1045509
    %v737 = vsel %vm736, %v714, %v715
    %vm738 = vcmask 1044483
    %v739 = vsel %vm738, %v735, %v737
    %v740 = vrot.slane %v739, 3
    %v741 = vsel %vm730, %v667, %v713
    %vm742 = vcmask 1046534
    %v743 = vsel %vm742, %v714, %v715
    %vm744 = vcmask 1045508
    %v745 = vsel %vm744, %v741, %v743
    %v746 = vrot.slane %v745, 4
    %v747 = vsel %vm736, %v667, %v713
    %vm748 = vcmask 1046528
    %v749 = vsel %vm748, %v715, %v714
    %vm750 = vcmask 1046533
    %v751 = vsel %vm750, %v747, %v749
    %v752 = vrot.slane %v751, 5
    %v753 = vsel %vm742, %v667, %v713
    %v754 = vsel %vm716, %v714, %v715
    %vm755 = vcmask 1045504
    %v756 = vsel %vm755, %v754, %v753
    %v757 = vrot.slane %v756, 6
    %v758 = vsel %vm748, %v713, %v667
    %v759 = vsel %vm722, %v714, %v715
    %vm760 = vcmask 1046529
    %v761 = vsel %vm760, %v759, %v758
    %v762 = vrot.slane %v761, 7
    %v771 = vadd.f32 %v449, %v721
    %v772 = vadd.f32 %v451, %v728
    %v773 = vadd.f32 %v453, %v734
    %v774 = vadd.f32 %v455, %v740
    %v775 = vadd.f32 %v457, %v746
    %v776 = vadd.f32 %v459, %v752
    %v777 = vadd.f32 %v461, %v757
    %v778 = vadd.f32 %v463, %v762
    %v779 = vxor.u32 %v771, 2147483648
    %v780 = vxor.u32 %v772, 2147483648
    %v781 = vxor.u32 %v773, 2147483648
    %v782 = vxor.u32 %v774, 2147483648
    %v783 = vxor.u32 %v775, 2147483648
    %v784 = vxor.u32 %v776, 2147483648
    %v785 = vxor.u32 %v777, 2147483648
    %v786 = vxor.u32 %v778, 2147483648
    %v787 = vmul.f32 %v779, 1.442695
    %v788 = vpow.pop %v787
    %v789 = vmul.f32 %v780, 1.442695
    %v790 = vpow.pop %v789
    %v791 = vmul.f32 %v781, 1.442695
    %v792 = vpow.pop %v791
    %v793 = vmul.f32 %v782, 1.442695
    %v794 = vpow.pop %v793
    %v795 = vmul.f32 %v783, 1.442695
    %v796 = vpow.pop %v795
    %v797 = vmul.f32 %v784, 1.442695
    %v798 = vpow.pop %v797
    %v799 = vmul.f32 %v785, 1.442695
    %v800 = vpow.pop %v799
    %v801 = vmul.f32 %v786, 1.442695
    %v802 = vpow.pop %v801
    %v803 = vadd.f32 %v788, 1.0
    %v804 = vadd.f32 %v790, 1.0
    %v805 = vadd.f32 %v792, 1.0
    %v806 = vadd.f32 %v794, 1.0
    %v807 = vadd.f32 %v796, 1.0
    %v808 = vadd.f32 %v798, 1.0
    %v809 = vadd.f32 %v800, 1.0
    %v810 = vadd.f32 %v802, 1.0
    %v811 = vrcp.pop %v803
    %v812 = vmul.f32 %v803, %v811
    %v813 = vsub.f32 1.0, %v812
    %v814 = vmul.f32 %v811, %v813
    %v815 = vadd.f32 %v811, %v814
    %vm816 = vweird.f32 %v803
    %vm817 = vweird.f32 %v811
    %vm818 = vmor %vm816, %vm817
    %v819 = vsel %vm818, %v811, %v815
    %v820 = vand.u32 2147483647, %v803
    %vm821 = vcmp.eq.f32.partialorder %v820, 8.507059e+37
    %v822 = vand.u32 %v803, 2147483648
    %v823 = vor.u32 1.1754944e-38, %v822
    %v824 = vsel %vm821, %v823, %v819
    %v825 = vmul.f32 1.0, %v824
    %v826 = vrcp.pop %v804
    %v827 = vmul.f32 %v804, %v826
    %v828 = vsub.f32 1.0, %v827
    %v829 = vmul.f32 %v826, %v828
    %v830 = vadd.f32 %v826, %v829
    %vm831 = vweird.f32 %v804
    %vm832 = vweird.f32 %v826
    %vm833 = vmor %vm831, %vm832
    %v834 = vsel %vm833, %v826, %v830
    %v835 = vand.u32 2147483647, %v804
    %vm836 = vcmp.eq.f32.partialorder %v835, 8.507059e+37
    %v837 = vand.u32 %v804, 2147483648
    %v838 = vor.u32 1.1754944e-38, %v837
    %v839 = vsel %vm836, %v838, %v834
    %v840 = vmul.f32 1.0, %v839
    %v841 = vrcp.pop %v805
    %v842 = vmul.f32 %v805, %v841
    %v843 = vsub.f32 1.0, %v842
    %v844 = vmul.f32 %v841, %v843
    %v845 = vadd.f32 %v841, %v844
    %vm846 = vweird.f32 %v805
    %vm847 = vweird.f32 %v841
    %vm848 = vmor %vm846, %vm847
    %v849 = vsel %vm848, %v841, %v845
    %v850 = vand.u32 2147483647, %v805
    %vm851 = vcmp.eq.f32.partialorder %v850, 8.507059e+37
    %v852 = vand.u32 %v805, 2147483648
    %v853 = vor.u32 1.1754944e-38, %v852
    %v854 = vsel %vm851, %v853, %v849
    %v855 = vmul.f32 1.0, %v854
    %v856 = vrcp.pop %v806
    %v857 = vmul.f32 %v806, %v856
    %v858 = vsub.f32 1.0, %v857
    %v859 = vmul.f32 %v856, %v858
    %v860 = vadd.f32 %v856, %v859
    %vm861 = vweird.f32 %v806
    %vm862 = vweird.f32 %v856
    %vm863 = vmor %vm861, %vm862
    %v864 = vsel %vm863, %v856, %v860
    %v865 = vand.u32 2147483647, %v806
    %vm866 = vcmp.eq.f32.partialorder %v865, 8.507059e+37
    %v867 = vand.u32 %v806, 2147483648
    %v868 = vor.u32 1.1754944e-38, %v867
    %v869 = vsel %vm866, %v868, %v864
    %v870 = vmul.f32 1.0, %v869
    %v871 = vrcp.pop %v807
    %v872 = vmul.f32 %v807, %v871
    %v873 = vsub.f32 1.0, %v872
    %v874 = vmul.f32 %v871, %v873
    %v875 = vadd.f32 %v871, %v874
    %vm876 = vweird.f32 %v807
    %vm877 = vweird.f32 %v871
    %vm878 = vmor %vm876, %vm877
    %v879 = vsel %vm878, %v871, %v875
    %v880 = vand.u32 2147483647, %v807
    %vm881 = vcmp.eq.f32.partialorder %v880, 8.507059e+37
    %v882 = vand.u32 %v807, 2147483648
    %v883 = vor.u32 1.1754944e-38, %v882
    %v884 = vsel %vm881, %v883, %v879
    %v885 = vmul.f32 1.0, %v884
    %v886 = vrcp.pop %v808
    %v887 = vmul.f32 %v808, %v886
    %v888 = vsub.f32 1.0, %v887
    %v889 = vmul.f32 %v886, %v888
    %v890 = vadd.f32 %v886, %v889
    %vm891 = vweird.f32 %v808
    %vm892 = vweird.f32 %v886
    %vm893 = vmor %vm891, %vm892
    %v894 = vsel %vm893, %v886, %v890
    %v895 = vand.u32 2147483647, %v808
    %vm896 = vcmp.eq.f32.partialorder %v895, 8.507059e+37
    %v897 = vand.u32 %v808, 2147483648
    %v898 = vor.u32 1.1754944e-38, %v897
    %v899 = vsel %vm896, %v898, %v894
    %v900 = vmul.f32 1.0, %v899
    %v901 = vrcp.pop %v809
    %v902 = vmul.f32 %v809, %v901
    %v903 = vsub.f32 1.0, %v902
    %v904 = vmul.f32 %v901, %v903
    %v905 = vadd.f32 %v901, %v904
    %vm906 = vweird.f32 %v809
    %vm907 = vweird.f32 %v901
    %vm908 = vmor %vm906, %vm907
    %v909 = vsel %vm908, %v901, %v905
    %v910 = vand.u32 2147483647, %v809
    %vm911 = vcmp.eq.f32.partialorder %v910, 8.507059e+37
    %v912 = vand.u32 %v809, 2147483648
    %v913 = vor.u32 1.1754944e-38, %v912
    %v914 = vsel %vm911, %v913, %v909
    %v915 = vmul.f32 1.0, %v914
    %v916 = vrcp.pop %v810
    %v917 = vmul.f32 %v810, %v916
    %v918 = vsub.f32 1.0, %v917
    %v919 = vmul.f32 %v916, %v918
    %v920 = vadd.f32 %v916, %v919
    %vm921 = vweird.f32 %v810
    %vm922 = vweird.f32 %v916
    %vm923 = vmor %vm921, %vm922
    %v924 = vsel %vm923, %v916, %v920
    %v925 = vand.u32 2147483647, %v810
    %vm926 = vcmp.eq.f32.partialorder %v925, 8.507059e+37
    %v927 = vand.u32 %v810, 2147483648
    %v928 = vor.u32 1.1754944e-38, %v927
    %v929 = vsel %vm926, %v928, %v924
    %v930 = vmul.f32 1.0, %v929
    %v939 = vrot.slane %v771, 1
    %v940 = vrot.slane %v772, 1
    %v941 = vrot.slane %v773, 1
    %v942 = vrot.slane %v774, 1
    %v943 = vrot.slane %v775, 1
    %v944 = vrot.slane %v776, 1
    %v945 = vrot.slane %v777, 1
    %v946 = vrot.slane %v778, 1
    %v955 = vxor.u32 %v939, 2147483648
    %v956 = vxor.u32 %v940, 2147483648
    %v957 = vxor.u32 %v941, 2147483648
    %v958 = vxor.u32 %v942, 2147483648
    %v959 = vxor.u32 %v943, 2147483648
    %v960 = vxor.u32 %v944, 2147483648
    %v961 = vxor.u32 %v945, 2147483648
    %v962 = vxor.u32 %v946, 2147483648
    %v963 = vmul.f32 %v955, 1.442695
    %v964 = vpow.pop %v963
    %v965 = vmul.f32 %v956, 1.442695
    %v966 = vpow.pop %v965
    %v967 = vmul.f32 %v957, 1.442695
    %v968 = vpow.pop %v967
    %v969 = vmul.f32 %v958, 1.442695
    %v970 = vpow.pop %v969
    %v971 = vmul.f32 %v959, 1.442695
    %v972 = vpow.pop %v971
    %v973 = vmul.f32 %v960, 1.442695
    %v974 = vpow.pop %v973
    %v975 = vmul.f32 %v961, 1.442695
    %v976 = vpow.pop %v975
    %v977 = vmul.f32 %v962, 1.442695
    %v978 = vpow.pop %v977
    %v979 = vadd.f32 %v964, 1.0
    %v980 = vadd.f32 %v966, 1.0
    %v981 = vadd.f32 %v968, 1.0
    %v982 = vadd.f32 %v970, 1.0
    %v983 = vadd.f32 %v972, 1.0
    %v984 = vadd.f32 %v974, 1.0
    %v985 = vadd.f32 %v976, 1.0
    %v986 = vadd.f32 %v978, 1.0
    %v987 = vrcp.pop %v979
    %v988 = vmul.f32 %v979, %v987
    %v989 = vsub.f32 1.0, %v988
    %v990 = vmul.f32 %v987, %v989
    %v991 = vadd.f32 %v987, %v990
    %vm992 = vweird.f32 %v979
    %vm993 = vweird.f32 %v987
    %vm994 = vmor %vm992, %vm993
    %v995 = vsel %vm994, %v987, %v991
    %v996 = vand.u32 2147483647, %v979
    %vm997 = vcmp.eq.f32.partialorder %v996, 8.507059e+37
    %v998 = vand.u32 %v979, 2147483648
    %v999 = vor.u32 1.1754944e-38, %v998
    %v1000 = vsel %vm997, %v999, %v995
    %v1001 = vmul.f32 1.0, %v1000
    %v1002 = vrcp.pop %v980
    %v1003 = vmul.f32 %v980, %v1002
    %v1004 = vsub.f32 1.0, %v1003
    %v1005 = vmul.f32 %v1002, %v1004
    %v1006 = vadd.f32 %v1002, %v1005
    %vm1007 = vweird.f32 %v980
    %vm1008 = vweird.f32 %v1002
    %vm1009 = vmor %vm1007, %vm1008
    %v1010 = vsel %vm1009, %v1002, %v1006
    %v1011 = vand.u32 2147483647, %v980
    %vm1012 = vcmp.eq.f32.partialorder %v1011, 8.507059e+37
    %v1013 = vand.u32 %v980, 2147483648
    %v1014 = vor.u32 1.1754944e-38, %v1013
    %v1015 = vsel %vm1012, %v1014, %v1010
    %v1016 = vmul.f32 1.0, %v1015
    %v1017 = vrcp.pop %v981
    %v1018 = vmul.f32 %v981, %v1017
    %v1019 = vsub.f32 1.0, %v1018
    %v1020 = vmul.f32 %v1017, %v1019
    %v1021 = vadd.f32 %v1017, %v1020
    %vm1022 = vweird.f32 %v981
    %vm1023 = vweird.f32 %v1017
    %vm1024 = vmor %vm1022, %vm1023
    %v1025 = vsel %vm1024, %v1017, %v1021
    %v1026 = vand.u32 2147483647, %v981
    %vm1027 = vcmp.eq.f32.partialorder %v1026, 8.507059e+37
    %v1028 = vand.u32 %v981, 2147483648
    %v1029 = vor.u32 1.1754944e-38, %v1028
    %v1030 = vsel %vm1027, %v1029, %v1025
    %v1031 = vmul.f32 1.0, %v1030
    %v1032 = vrcp.pop %v982
    %v1033 = vmul.f32 %v982, %v1032
    %v1034 = vsub.f32 1.0, %v1033
    %v1035 = vmul.f32 %v1032, %v1034
    %v1036 = vadd.f32 %v1032, %v1035
    %vm1037 = vweird.f32 %v982
    %vm1038 = vweird.f32 %v1032
    %vm1039 = vmor %vm1037, %vm1038
    %v1040 = vsel %vm1039, %v1032, %v1036
    %v1041 = vand.u32 2147483647, %v982
    %vm1042 = vcmp.eq.f32.partialorder %v1041, 8.507059e+37
    %v1043 = vand.u32 %v982, 2147483648
    %v1044 = vor.u32 1.1754944e-38, %v1043
    %v1045 = vsel %vm1042, %v1044, %v1040
    %v1046 = vmul.f32 1.0, %v1045
    %v1047 = vrcp.pop %v983
    %v1048 = vmul.f32 %v983, %v1047
    %v1049 = vsub.f32 1.0, %v1048
    %v1050 = vmul.f32 %v1047, %v1049
    %v1051 = vadd.f32 %v1047, %v1050
    %vm1052 = vweird.f32 %v983
    %vm1053 = vweird.f32 %v1047
    %vm1054 = vmor %vm1052, %vm1053
    %v1055 = vsel %vm1054, %v1047, %v1051
    %v1056 = vand.u32 2147483647, %v983
    %vm1057 = vcmp.eq.f32.partialorder %v1056, 8.507059e+37
    %v1058 = vand.u32 %v983, 2147483648
    %v1059 = vor.u32 1.1754944e-38, %v1058
    %v1060 = vsel %vm1057, %v1059, %v1055
    %v1061 = vmul.f32 1.0, %v1060
    %v1062 = vrcp.pop %v984
    %v1063 = vmul.f32 %v984, %v1062
    %v1064 = vsub.f32 1.0, %v1063
    %v1065 = vmul.f32 %v1062, %v1064
    %v1066 = vadd.f32 %v1062, %v1065
    %vm1067 = vweird.f32 %v984
    %vm1068 = vweird.f32 %v1062
    %vm1069 = vmor %vm1067, %vm1068
    %v1070 = vsel %vm1069, %v1062, %v1066
    %v1071 = vand.u32 2147483647, %v984
    %vm1072 = vcmp.eq.f32.partialorder %v1071, 8.507059e+37
    %v1073 = vand.u32 %v984, 2147483648
    %v1074 = vor.u32 1.1754944e-38, %v1073
    %v1075 = vsel %vm1072, %v1074, %v1070
    %v1076 = vmul.f32 1.0, %v1075
    %v1077 = vrcp.pop %v985
    %v1078 = vmul.f32 %v985, %v1077
    %v1079 = vsub.f32 1.0, %v1078
    %v1080 = vmul.f32 %v1077, %v1079
    %v1081 = vadd.f32 %v1077, %v1080
    %vm1082 = vweird.f32 %v985
    %vm1083 = vweird.f32 %v1077
    %vm1084 = vmor %vm1082, %vm1083
    %v1085 = vsel %vm1084, %v1077, %v1081
    %v1086 = vand.u32 2147483647, %v985
    %vm1087 = vcmp.eq.f32.partialorder %v1086, 8.507059e+37
    %v1088 = vand.u32 %v985, 2147483648
    %v1089 = vor.u32 1.1754944e-38, %v1088
    %v1090 = vsel %vm1087, %v1089, %v1085
    %v1091 = vmul.f32 1.0, %v1090
    %v1092 = vrcp.pop %v986
    %v1093 = vmul.f32 %v986, %v1092
    %v1094 = vsub.f32 1.0, %v1093
    %v1095 = vmul.f32 %v1092, %v1094
    %v1096 = vadd.f32 %v1092, %v1095
    %vm1097 = vweird.f32 %v986
    %vm1098 = vweird.f32 %v1092
    %vm1099 = vmor %vm1097, %vm1098
    %v1100 = vsel %vm1099, %v1092, %v1096
    %v1101 = vand.u32 2147483647, %v986
    %vm1102 = vcmp.eq.f32.partialorder %v1101, 8.507059e+37
    %v1103 = vand.u32 %v986, 2147483648
    %v1104 = vor.u32 1.1754944e-38, %v1103
    %v1105 = vsel %vm1102, %v1104, %v1100
    %v1106 = vmul.f32 1.0, %v1105
    %v1107 = vrot.slane %v771, 2
    %v1108 = vrot.slane %v772, 2
    %v1109 = vrot.slane %v773, 2
    %v1110 = vrot.slane %v774, 2
    %v1111 = vrot.slane %v775, 2
    %v1112 = vrot.slane %v776, 2
    %v1113 = vrot.slane %v777, 2
    %v1114 = vrot.slane %v778, 2
    %v1123 = vtanh.pop %v1107
    %v1124 = vtanh.pop %v1108
    %v1125 = vtanh.pop %v1109
    %v1126 = vtanh.pop %v1110
    %v1127 = vtanh.pop %v1111
    %v1128 = vtanh.pop %v1112
    %v1129 = vtanh.pop %v1113
    %v1130 = vtanh.pop %v1114
    %v1131 = vrot.slane %v771, 3
    %v1132 = vrot.slane %v772, 3
    %v1133 = vrot.slane %v773, 3
    %v1134 = vrot.slane %v774, 3
    %v1135 = vrot.slane %v775, 3
    %v1136 = vrot.slane %v776, 3
    %v1137 = vrot.slane %v777, 3
    %v1138 = vrot.slane %v778, 3
    %v1147 = vxor.u32 %v1131, 2147483648
    %v1148 = vxor.u32 %v1132, 2147483648
    %v1149 = vxor.u32 %v1133, 2147483648
    %v1150 = vxor.u32 %v1134, 2147483648
    %v1151 = vxor.u32 %v1135, 2147483648
    %v1152 = vxor.u32 %v1136, 2147483648
    %v1153 = vxor.u32 %v1137, 2147483648
    %v1154 = vxor.u32 %v1138, 2147483648
    %v1155 = vmul.f32 %v1147, 1.442695
    %v1156 = vpow.pop %v1155
    %v1157 = vmul.f32 %v1148, 1.442695
    %v1158 = vpow.pop %v1157
    %v1159 = vmul.f32 %v1149, 1.442695
    %v1160 = vpow.pop %v1159
    %v1161 = vmul.f32 %v1150, 1.442695
    %v1162 = vpow.pop %v1161
    %v1163 = vmul.f32 %v1151, 1.442695
    %v1164 = vpow.pop %v1163
    %v1165 = vmul.f32 %v1152, 1.442695
    %v1166 = vpow.pop %v1165
    %v1167 = vmul.f32 %v1153, 1.442695
    %v1168 = vpow.pop %v1167
    %v1169 = vmul.f32 %v1154, 1.442695
    %v1170 = vpow.pop %v1169
    %v1171 = vadd.f32 %v1156, 1.0
    %v1172 = vadd.f32 %v1158, 1.0
    %v1173 = vadd.f32 %v1160, 1.0
    %v1174 = vadd.f32 %v1162, 1.0
    %v1175 = vadd.f32 %v1164, 1.0
    %v1176 = vadd.f32 %v1166, 1.0
    %v1177 = vadd.f32 %v1168, 1.0
    %v1178 = vadd.f32 %v1170, 1.0
    %v1179 = vrcp.pop %v1171
    %v1180 = vmul.f32 %v1171, %v1179
    %v1181 = vsub.f32 1.0, %v1180
    %v1182 = vmul.f32 %v1179, %v1181
    %v1183 = vadd.f32 %v1179, %v1182
    %vm1184 = vweird.f32 %v1171
    %vm1185 = vweird.f32 %v1179
    %vm1186 = vmor %vm1184, %vm1185
    %v1187 = vsel %vm1186, %v1179, %v1183
    %v1188 = vand.u32 2147483647, %v1171
    %vm1189 = vcmp.eq.f32.partialorder %v1188, 8.507059e+37
    %v1190 = vand.u32 %v1171, 2147483648
    %v1191 = vor.u32 1.1754944e-38, %v1190
    %v1192 = vsel %vm1189, %v1191, %v1187
    %v1193 = vmul.f32 1.0, %v1192
    %v1194 = vrcp.pop %v1172
    %v1195 = vmul.f32 %v1172, %v1194
    %v1196 = vsub.f32 1.0, %v1195
    %v1197 = vmul.f32 %v1194, %v1196
    %v1198 = vadd.f32 %v1194, %v1197
    %vm1199 = vweird.f32 %v1172
    %vm1200 = vweird.f32 %v1194
    %vm1201 = vmor %vm1199, %vm1200
    %v1202 = vsel %vm1201, %v1194, %v1198
    %v1203 = vand.u32 2147483647, %v1172
    %vm1204 = vcmp.eq.f32.partialorder %v1203, 8.507059e+37
    %v1205 = vand.u32 %v1172, 2147483648
    %v1206 = vor.u32 1.1754944e-38, %v1205
    %v1207 = vsel %vm1204, %v1206, %v1202
    %v1208 = vmul.f32 1.0, %v1207
    %v1209 = vrcp.pop %v1173
    %v1210 = vmul.f32 %v1173, %v1209
    %v1211 = vsub.f32 1.0, %v1210
    %v1212 = vmul.f32 %v1209, %v1211
    %v1213 = vadd.f32 %v1209, %v1212
    %vm1214 = vweird.f32 %v1173
    %vm1215 = vweird.f32 %v1209
    %vm1216 = vmor %vm1214, %vm1215
    %v1217 = vsel %vm1216, %v1209, %v1213
    %v1218 = vand.u32 2147483647, %v1173
    %vm1219 = vcmp.eq.f32.partialorder %v1218, 8.507059e+37
    %v1220 = vand.u32 %v1173, 2147483648
    %v1221 = vor.u32 1.1754944e-38, %v1220
    %v1222 = vsel %vm1219, %v1221, %v1217
    %v1223 = vmul.f32 1.0, %v1222
    %v1224 = vrcp.pop %v1174
    %v1225 = vmul.f32 %v1174, %v1224
    %v1226 = vsub.f32 1.0, %v1225
    %v1227 = vmul.f32 %v1224, %v1226
    %v1228 = vadd.f32 %v1224, %v1227
    %vm1229 = vweird.f32 %v1174
    %vm1230 = vweird.f32 %v1224
    %vm1231 = vmor %vm1229, %vm1230
    %v1232 = vsel %vm1231, %v1224, %v1228
    %v1233 = vand.u32 2147483647, %v1174
    %vm1234 = vcmp.eq.f32.partialorder %v1233, 8.507059e+37
    %v1235 = vand.u32 %v1174, 2147483648
    %v1236 = vor.u32 1.1754944e-38, %v1235
    %v1237 = vsel %vm1234, %v1236, %v1232
    %v1238 = vmul.f32 1.0, %v1237
    %v1239 = vrcp.pop %v1175
    %v1240 = vmul.f32 %v1175, %v1239
    %v1241 = vsub.f32 1.0, %v1240
    %v1242 = vmul.f32 %v1239, %v1241
    %v1243 = vadd.f32 %v1239, %v1242
    %vm1244 = vweird.f32 %v1175
    %vm1245 = vweird.f32 %v1239
    %vm1246 = vmor %vm1244, %vm1245
    %v1247 = vsel %vm1246, %v1239, %v1243
    %v1248 = vand.u32 2147483647, %v1175
    %vm1249 = vcmp.eq.f32.partialorder %v1248, 8.507059e+37
    %v1250 = vand.u32 %v1175, 2147483648
    %v1251 = vor.u32 1.1754944e-38, %v1250
    %v1252 = vsel %vm1249, %v1251, %v1247
    %v1253 = vmul.f32 1.0, %v1252
    %v1254 = vrcp.pop %v1176
    %v1255 = vmul.f32 %v1176, %v1254
    %v1256 = vsub.f32 1.0, %v1255
    %v1257 = vmul.f32 %v1254, %v1256
    %v1258 = vadd.f32 %v1254, %v1257
    %vm1259 = vweird.f32 %v1176
    %vm1260 = vweird.f32 %v1254
    %vm1261 = vmor %vm1259, %vm1260
    %v1262 = vsel %vm1261, %v1254, %v1258
    %v1263 = vand.u32 2147483647, %v1176
    %vm1264 = vcmp.eq.f32.partialorder %v1263, 8.507059e+37
    %v1265 = vand.u32 %v1176, 2147483648
    %v1266 = vor.u32 1.1754944e-38, %v1265
    %v1267 = vsel %vm1264, %v1266, %v1262
    %v1268 = vmul.f32 1.0, %v1267
    %v1269 = vrcp.pop %v1177
    %v1270 = vmul.f32 %v1177, %v1269
    %v1271 = vsub.f32 1.0, %v1270
    %v1272 = vmul.f32 %v1269, %v1271
    %v1273 = vadd.f32 %v1269, %v1272
    %vm1274 = vweird.f32 %v1177
    %vm1275 = vweird.f32 %v1269
    %vm1276 = vmor %vm1274, %vm1275
    %v1277 = vsel %vm1276, %v1269, %v1273
    %v1278 = vand.u32 2147483647, %v1177
    %vm1279 = vcmp.eq.f32.partialorder %v1278, 8.507059e+37
    %v1280 = vand.u32 %v1177, 2147483648
    %v1281 = vor.u32 1.1754944e-38, %v1280
    %v1282 = vsel %vm1279, %v1281, %v1277
    %v1283 = vmul.f32 1.0, %v1282
    %v1284 = vrcp.pop %v1178
    %v1285 = vmul.f32 %v1178, %v1284
    %v1286 = vsub.f32 1.0, %v1285
    %v1287 = vmul.f32 %v1284, %v1286
    %v1288 = vadd.f32 %v1284, %v1287
    %vm1289 = vweird.f32 %v1178
    %vm1290 = vweird.f32 %v1284
    %vm1291 = vmor %vm1289, %vm1290
    %v1292 = vsel %vm1291, %v1284, %v1288
    %v1293 = vand.u32 2147483647, %v1178
    %vm1294 = vcmp.eq.f32.partialorder %v1293, 8.507059e+37
    %v1295 = vand.u32 %v1178, 2147483648
    %v1296 = vor.u32 1.1754944e-38, %v1295
    %v1297 = vsel %vm1294, %v1296, %v1292
    %v1298 = vmul.f32 1.0, %v1297
    %v1300 = vrot.slane %v448, 1
    %v1301 = vrot.slane %v448, 2
    %v1302 = vrot.slane %v448, 3
    %v1303 = vrot.slane %v448, 4
    %v1304 = vrot.slane %v448, 5
    %v1305 = vrot.slane %v448, 6
    %v1306 = vrot.slane %v448, 7
    %v1314 = vmul.f32 %v1001, %v448
    %v1315 = vmul.f32 %v1016, %v1300
    %v1316 = vmul.f32 %v1031, %v1301
    %v1317 = vmul.f32 %v1046, %v1302
    %v1318 = vmul.f32 %v1061, %v1303
    %v1319 = vmul.f32 %v1076, %v1304
    %v1320 = vmul.f32 %v1091, %v1305
    %v1321 = vmul.f32 %v1106, %v1306
    %v1322 = vmul.f32 %v825, %v1123
    %v1323 = vmul.f32 %v840, %v1124
    %v1324 = vmul.f32 %v855, %v1125
    %v1325 = vmul.f32 %v870, %v1126
    %v1326 = vmul.f32 %v885, %v1127
    %v1327 = vmul.f32 %v900, %v1128
    %v1328 = vmul.f32 %v915, %v1129
    %v1329 = vmul.f32 %v930, %v1130
    %v1330 = vadd.f32 %v1314, %v1322
    %v1331 = vadd.f32 %v1315, %v1323
    %v1332 = vadd.f32 %v1316, %v1324
    %v1333 = vadd.f32 %v1317, %v1325
    %v1334 = vadd.f32 %v1318, %v1326
    %v1335 = vadd.f32 %v1319, %v1327
    %v1336 = vadd.f32 %v1320, %v1328
    %v1337 = vadd.f32 %v1321, %v1329
    %v1338 = vtanh.pop %v1330
    %v1339 = vtanh.pop %v1331
    %v1340 = vtanh.pop %v1332
    %v1341 = vtanh.pop %v1333
    %v1342 = vtanh.pop %v1334
    %v1343 = vtanh.pop %v1335
    %v1344 = vtanh.pop %v1336
    %v1345 = vtanh.pop %v1337
    %v1346 = vmul.f32 %v1193, %v1338
    %v1347 = vmul.f32 %v1208, %v1339
    %v1348 = vmul.f32 %v1223, %v1340
    %v1349 = vmul.f32 %v1238, %v1341
    %v1350 = vmul.f32 %v1253, %v1342
    %v1351 = vmul.f32 %v1268, %v1343
    %v1352 = vmul.f32 %v1283, %v1344
    %v1353 = vmul.f32 %v1298, %v1345
    %1354 = vst [vmem:[#allocation3] sm:$0x1] %v1346
    %1355 = vst [vmem:[#allocation3 + $0x8] sm:$0x1] %v1347
    %1356 = vst [vmem:[#allocation3 + $0x10] sm:$0x1] %v1348
    %1357 = vst [vmem:[#allocation3 + $0x18] sm:$0x1] %v1349
    %1358 = vst [vmem:[#allocation3 + $0x20] sm:$0x1] %v1350
    %1359 = vst [vmem:[#allocation3 + $0x28] sm:$0x1] %v1351
    %1360 = vst [vmem:[#allocation3 + $0x30] sm:$0x1] %v1352
    %1361 = vst [vmem:[#allocation3 + $0x38] sm:$0x1] %v1353
    %s1362 = scalar_lea.vmem [#allocation2], 1
    %v1363 = vld [vmem:[%s1362] ss:$8 sm:$0xf]
    %s1364 = scalar_lea.vmem [#allocation2], 33
    %v1365 = vld [vmem:[%s1364] ss:$8 sm:$0xf]
    %s1366 = scalar_lea.vmem [#allocation2], 65
    %v1367 = vld [vmem:[%s1366] ss:$8 sm:$0xf]
    %s1368 = scalar_lea.vmem [#allocation2], 97
    %v1369 = vld [vmem:[%s1368] ss:$8 sm:$0xf]
    %s1370 = scalar_lea.vmem [#allocation2], 129
    %v1371 = vld [vmem:[%s1370] ss:$8 sm:$0xf]
    %s1372 = scalar_lea.vmem [#allocation2], 161
    %v1373 = vld [vmem:[%s1372] ss:$8 sm:$0xf]
    %s1374 = scalar_lea.vmem [#allocation2], 193
    %v1375 = vld [vmem:[%s1374] ss:$8 sm:$0xf]
    %s1376 = scalar_lea.vmem [#allocation2], 225
    %v1377 = vld [vmem:[%s1376] ss:$8 sm:$0xf]
    %v1378 = vpack.c.bf16 %v1346, %v1346
    %v1379 = vpack.c.bf16 %v1347, %v1347
    %v1380 = vpack.c.bf16 %v1348, %v1348
    %v1381 = vpack.c.bf16 %v1349, %v1349
    %v1382 = vpack.c.bf16 %v1350, %v1350
    %v1383 = vpack.c.bf16 %v1351, %v1351
    %v1384 = vpack.c.bf16 %v1352, %v1352
    %v1385 = vpack.c.bf16 %v1353, %v1353
    %v1386 = vld [vmem:[#allocation11] sm:$0xff]
    %v1387 = vld [vmem:[#allocation11 + $0x8] sm:$0xff]
    %v1388 = vld [vmem:[#allocation11 + $0x10] sm:$0xff]
    %v1389 = vld [vmem:[#allocation11 + $0x18] sm:$0xff]
    %v1390 = vld [vmem:[#allocation11 + $0x20] sm:$0xff]
    %v1391 = vld [vmem:[#allocation11 + $0x28] sm:$0xff]
    %v1392 = vld [vmem:[#allocation11 + $0x30] sm:$0xff]
    %v1393 = vld [vmem:[#allocation11 + $0x38] sm:$0xff]
    %v1394 = vld [vmem:[#allocation11 + $0x40] sm:$0xff]
    %v1395 = vld [vmem:[#allocation11 + $0x48] sm:$0xff]
    %v1396 = vld [vmem:[#allocation11 + $0x50] sm:$0xff]
    %v1397 = vld [vmem:[#allocation11 + $0x58] sm:$0xff]
    %v1398 = vld [vmem:[#allocation11 + $0x60] sm:$0xff]
    %v1399 = vld [vmem:[#allocation11 + $0x68] sm:$0xff]
    %v1400 = vld [vmem:[#allocation11 + $0x70] sm:$0xff]
    %v1401 = vld [vmem:[#allocation11 + $0x78] sm:$0xff]
    %v1402 = vld [vmem:[#allocation11 + $0x80] sm:$0xff]
    %v1403 = vld [vmem:[#allocation11 + $0x88] sm:$0xff]
    %v1404 = vld [vmem:[#allocation11 + $0x90] sm:$0xff]
    %v1405 = vld [vmem:[#allocation11 + $0x98] sm:$0xff]
    %v1406 = vld [vmem:[#allocation11 + $0xa0] sm:$0xff]
    %v1407 = vld [vmem:[#allocation11 + $0xa8] sm:$0xff]
    %v1408 = vld [vmem:[#allocation11 + $0xb0] sm:$0xff]
    %v1409 = vld [vmem:[#allocation11 + $0xb8] sm:$0xff]
    %v1410 = vld [vmem:[#allocation11 + $0xc0] sm:$0xff]
    %v1411 = vld [vmem:[#allocation11 + $0xc8] sm:$0xff]
    %v1412 = vld [vmem:[#allocation11 + $0xd0] sm:$0xff]
    %v1413 = vld [vmem:[#allocation11 + $0xd8] sm:$0xff]
    %v1414 = vld [vmem:[#allocation11 + $0xe0] sm:$0xff]
    %v1415 = vld [vmem:[#allocation11 + $0xe8] sm:$0xff]
    %v1416 = vld [vmem:[#allocation11 + $0xf0] sm:$0xff]
    %v1417 = vld [vmem:[#allocation11 + $0xf8] sm:$0xff]
    %v1426 = vunpack.c.l.b16 %v1378
    %v1427 = vunpack.c.l.b16 %v1379
    %v1428 = vunpack.c.l.b16 %v1380
    %v1429 = vunpack.c.l.b16 %v1381
    %v1430 = vunpack.c.l.b16 %v1382
    %v1431 = vunpack.c.l.b16 %v1383
    %v1432 = vunpack.c.l.b16 %v1384
    %v1433 = vunpack.c.l.b16 %v1385
    %v1434 = vrot.slane %v1427, 7
    %v1435 = vsel %vm722, %v1434, %v1426
    %v1436 = vrot.slane %v1428, 6
    %v1437 = vsel %vm718, %v1436, %v1435
    %v1438 = vrot.slane %v1429, 5
    %v1439 = vsel %vm724, %v1438, %v1437
    %v1440 = vrot.slane %v1430, 4
    %v1441 = vsel %vm730, %v1440, %v1439
    %v1442 = vrot.slane %v1431, 3
    %v1443 = vsel %vm736, %v1442, %v1441
    %v1444 = vrot.slane %v1432, 2
    %v1445 = vsel %vm742, %v1444, %v1443
    %v1446 = vrot.slane %v1433, 1
    %vm1447 = vcmask 1047559
    %v1448 = vsel %vm1447, %v1446, %v1445
    %v1449 = vpack.c.b16 %v1448, %v1448
    %v1483 = vunpack.c.l.b16 %v1386
    %v1484 = vunpack.c.h.b16 %v1386
    %v1485 = vunpack.c.l.b16 %v1387
    %v1486 = vunpack.c.h.b16 %v1387
    %v1487 = vunpack.c.l.b16 %v1388
    %v1488 = vunpack.c.h.b16 %v1388
    %v1489 = vunpack.c.l.b16 %v1389
    %v1490 = vunpack.c.h.b16 %v1389
    %v1491 = vunpack.c.l.b16 %v1390
    %v1492 = vunpack.c.h.b16 %v1390
    %v1493 = vunpack.c.l.b16 %v1391
    %v1494 = vunpack.c.h.b16 %v1391
    %v1495 = vunpack.c.l.b16 %v1392
    %v1496 = vunpack.c.h.b16 %v1392
    %v1497 = vunpack.c.l.b16 %v1393
    %v1498 = vunpack.c.h.b16 %v1393
    %v1499 = vunpack.c.l.b16 %v1394
    %v1500 = vunpack.c.h.b16 %v1394
    %v1501 = vunpack.c.l.b16 %v1395
    %v1502 = vunpack.c.h.b16 %v1395
    %v1503 = vunpack.c.l.b16 %v1396
    %v1504 = vunpack.c.h.b16 %v1396
    %v1505 = vunpack.c.l.b16 %v1397
    %v1506 = vunpack.c.h.b16 %v1397
    %v1507 = vunpack.c.l.b16 %v1398
    %v1508 = vunpack.c.h.b16 %v1398
    %v1509 = vunpack.c.l.b16 %v1399
    %v1510 = vunpack.c.h.b16 %v1399
    %v1511 = vunpack.c.l.b16 %v1400
    %v1512 = vunpack.c.h.b16 %v1400
    %v1513 = vunpack.c.l.b16 %v1401
    %v1514 = vunpack.c.h.b16 %v1401
    %v1515 = vunpack.c.l.b16 %v1402
    %v1516 = vunpack.c.h.b16 %v1402
    %v1517 = vunpack.c.l.b16 %v1403
    %v1518 = vunpack.c.h.b16 %v1403
    %v1519 = vunpack.c.l.b16 %v1404
    %v1520 = vunpack.c.h.b16 %v1404
    %v1521 = vunpack.c.l.b16 %v1405
    %v1522 = vunpack.c.h.b16 %v1405
    %v1523 = vunpack.c.l.b16 %v1406
    %v1524 = vunpack.c.h.b16 %v1406
    %v1525 = vunpack.c.l.b16 %v1407
    %v1526 = vunpack.c.h.b16 %v1407
    %v1527 = vunpack.c.l.b16 %v1408
    %v1528 = vunpack.c.h.b16 %v1408
    %v1529 = vunpack.c.l.b16 %v1409
    %v1530 = vunpack.c.h.b16 %v1409
    %v1531 = vunpack.c.l.b16 %v1410
    %v1532 = vunpack.c.h.b16 %v1410
    %v1533 = vunpack.c.l.b16 %v1411
    %v1534 = vunpack.c.h.b16 %v1411
    %v1535 = vunpack.c.l.b16 %v1412
    %v1536 = vunpack.c.h.b16 %v1412
    %v1537 = vunpack.c.l.b16 %v1413
    %v1538 = vunpack.c.h.b16 %v1413
    %v1539 = vunpack.c.l.b16 %v1414
    %v1540 = vunpack.c.h.b16 %v1414
    %v1541 = vunpack.c.l.b16 %v1415
    %v1542 = vunpack.c.h.b16 %v1415
    %v1543 = vunpack.c.l.b16 %v1416
    %v1544 = vunpack.c.h.b16 %v1416
    %v1545 = vunpack.c.l.b16 %v1417
    %v1546 = vunpack.c.h.b16 %v1417
    %v1547 = vpack.c.b16 %v1487, %v1483
    %v1548 = vpack.c.b16 %v1488, %v1484
    %v1549 = vpack.c.b16 %v1489, %v1485
    %v1550 = vpack.c.b16 %v1490, %v1486
    %v1551 = vpack.c.b16 %v1495, %v1491
    %v1552 = vpack.c.b16 %v1496, %v1492
    %v1553 = vpack.c.b16 %v1497, %v1493
    %v1554 = vpack.c.b16 %v1498, %v1494
    %v1555 = vpack.c.b16 %v1503, %v1499
    %v1556 = vpack.c.b16 %v1504, %v1500
    %v1557 = vpack.c.b16 %v1505, %v1501
    %v1558 = vpack.c.b16 %v1506, %v1502
    %v1559 = vpack.c.b16 %v1511, %v1507
    %v1560 = vpack.c.b16 %v1512, %v1508
    %v1561 = vpack.c.b16 %v1513, %v1509
    %v1562 = vpack.c.b16 %v1514, %v1510
    %v1563 = vpack.c.b16 %v1519, %v1515
    %v1564 = vpack.c.b16 %v1520, %v1516
    %v1565 = vpack.c.b16 %v1521, %v1517
    %v1566 = vpack.c.b16 %v1522, %v1518
    %v1567 = vpack.c.b16 %v1527, %v1523
    %v1568 = vpack.c.b16 %v1528, %v1524
    %v1569 = vpack.c.b16 %v1529, %v1525
    %v1570 = vpack.c.b16 %v1530, %v1526
    %v1571 = vpack.c.b16 %v1535, %v1531
    %v1572 = vpack.c.b16 %v1536, %v1532
    %v1573 = vpack.c.b16 %v1537, %v1533
    %v1574 = vpack.c.b16 %v1538, %v1534
    %v1575 = vpack.c.b16 %v1543, %v1539
    %v1576 = vpack.c.b16 %v1544, %v1540
    %v1577 = vpack.c.b16 %v1545, %v1541
    %v1578 = vpack.c.b16 %v1546, %v1542
    %1611 = vmatpush.bf16.msra.mxu0 %v1575
    %1612 = vmatpush.bf16.msra.mxu0 %v1571
    %1613 = vmatpush.bf16.msra.mxu0 %v1567
    %1614 = vmatpush.bf16.msra.mxu0 %v1563
    %1615 = vmatpush.bf16.msra.mxu0 %v1559
    %1616 = vmatpush.bf16.msra.mxu0 %v1555
    %1617 = vmatpush.bf16.msra.mxu0 %v1551
    %1618 = vmatpush.bf16.msra.mxu0 %v1547
    %1619 = vmatmul.bf16.gmra.mxu0 %v1449
    %v1620 = vpop.f32.mrf.mxu0
    %v1621 = vadd.f32 0.0, %v1620
    %v1622 = vpop.f32.mrf.mxu0
    %1623 = vdwg.mxu0
    %1624 = vmatpush.bf16.msra.mxu0 %v1576
    %1625 = vmatpush.bf16.msra.mxu0 %v1572
    %1626 = vmatpush.bf16.msra.mxu0 %v1568
    %1627 = vmatpush.bf16.msra.mxu0 %v1564
    %1628 = vmatpush.bf16.msra.mxu0 %v1560
    %1629 = vmatpush.bf16.msra.mxu0 %v1556
    %1630 = vmatpush.bf16.msra.mxu0 %v1552
    %1631 = vmatpush.bf16.msra.mxu0 %v1548
    %1632 = vmatmul.bf16.gmra.mxu0 %v1449
    %v1633 = vpop.f32.mrf.mxu0
    %v1634 = vadd.f32 0.0, %v1633
    %v1635 = vpop.f32.mrf.mxu0
    %1636 = vdwg.mxu0
    %1637 = vmatpush.bf16.msra.mxu0 %v1577
    %1638 = vmatpush.bf16.msra.mxu0 %v1573
    %1639 = vmatpush.bf16.msra.mxu0 %v1569
    %1640 = vmatpush.bf16.msra.mxu0 %v1565
    %1641 = vmatpush.bf16.msra.mxu0 %v1561
    %1642 = vmatpush.bf16.msra.mxu0 %v1557
    %1643 = vmatpush.bf16.msra.mxu0 %v1553
    %1644 = vmatpush.bf16.msra.mxu0 %v1549
    %1645 = vmatmul.bf16.gmra.mxu0 %v1449
    %v1646 = vpop.f32.mrf.mxu0
    %v1647 = vadd.f32 0.0, %v1646
    %v1648 = vpop.f32.mrf.mxu0
    %1649 = vdwg.mxu0
    %1650 = vmatpush.bf16.msra.mxu0 %v1578
    %1651 = vmatpush.bf16.msra.mxu0 %v1574
    %1652 = vmatpush.bf16.msra.mxu0 %v1570
    %1653 = vmatpush.bf16.msra.mxu0 %v1566
    %1654 = vmatpush.bf16.msra.mxu0 %v1562
    %1655 = vmatpush.bf16.msra.mxu0 %v1558
    %1656 = vmatpush.bf16.msra.mxu0 %v1554
    %1657 = vmatpush.bf16.msra.mxu0 %v1550
    %1658 = vmatmul.bf16.gmra.mxu0 %v1449
    %v1659 = vpop.f32.mrf.mxu0
    %v1660 = vadd.f32 0.0, %v1659
    %v1661 = vpop.f32.mrf.mxu0
    %1662 = vdwg.mxu0
    %v1667 = vrot.slane %v1634, 7
    %v1668 = vrot.slane %v1647, 6
    %v1669 = vrot.slane %v1660, 5
    %v1670 = vsel %vm716, %v1621, %v1667
    %v1671 = vsel %vm718, %v1668, %v1669
    %v1672 = vsel %vm720, %v1670, %v1671
    %v1673 = vsel %vm722, %v1621, %v1667
    %v1674 = vsel %vm724, %v1668, %v1669
    %v1675 = vsel %vm726, %v1673, %v1674
    %v1676 = vrot.slane %v1675, 1
    %v1677 = vsel %vm718, %v1621, %v1667
    %v1678 = vsel %vm730, %v1668, %v1669
    %v1679 = vsel %vm732, %v1677, %v1678
    %v1680 = vrot.slane %v1679, 2
    %v1681 = vsel %vm724, %v1621, %v1667
    %v1682 = vsel %vm736, %v1668, %v1669
    %v1683 = vsel %vm738, %v1681, %v1682
    %v1684 = vrot.slane %v1683, 3
    %v1685 = vsel %vm730, %v1621, %v1667
    %v1686 = vsel %vm742, %v1668, %v1669
    %v1687 = vsel %vm744, %v1685, %v1686
    %v1688 = vrot.slane %v1687, 4
    %v1689 = vsel %vm736, %v1621, %v1667
    %v1690 = vsel %vm748, %v1669, %v1668
    %v1691 = vsel %vm750, %v1689, %v1690
    %v1692 = vrot.slane %v1691, 5
    %v1693 = vsel %vm742, %v1621, %v1667
    %v1694 = vsel %vm716, %v1668, %v1669
    %v1695 = vsel %vm755, %v1694, %v1693
    %v1696 = vrot.slane %v1695, 6
    %v1697 = vsel %vm748, %v1667, %v1621
    %v1698 = vsel %vm722, %v1668, %v1669
    %v1699 = vsel %vm760, %v1698, %v1697
    %v1700 = vrot.slane %v1699, 7
    %v1709 = vadd.f32 %v1363, %v1672
    %v1710 = vadd.f32 %v1365, %v1676
    %v1711 = vadd.f32 %v1367, %v1680
    %v1712 = vadd.f32 %v1369, %v1684
    %v1713 = vadd.f32 %v1371, %v1688
    %v1714 = vadd.f32 %v1373, %v1692
    %v1715 = vadd.f32 %v1375, %v1696
    %v1716 = vadd.f32 %v1377, %v1700
    %v1717 = vxor.u32 %v1709, 2147483648
    %v1718 = vxor.u32 %v1710, 2147483648
    %v1719 = vxor.u32 %v1711, 2147483648
    %v1720 = vxor.u32 %v1712, 2147483648
    %v1721 = vxor.u32 %v1713, 2147483648
    %v1722 = vxor.u32 %v1714, 2147483648
    %v1723 = vxor.u32 %v1715, 2147483648
    %v1724 = vxor.u32 %v1716, 2147483648
    %v1725 = vmul.f32 %v1717, 1.442695
    %v1726 = vpow.pop %v1725
    %v1727 = vmul.f32 %v1718, 1.442695
    %v1728 = vpow.pop %v1727
    %v1729 = vmul.f32 %v1719, 1.442695
    %v1730 = vpow.pop %v1729
    %v1731 = vmul.f32 %v1720, 1.442695
    %v1732 = vpow.pop %v1731
    %v1733 = vmul.f32 %v1721, 1.442695
    %v1734 = vpow.pop %v1733
    %v1735 = vmul.f32 %v1722, 1.442695
    %v1736 = vpow.pop %v1735
    %v1737 = vmul.f32 %v1723, 1.442695
    %v1738 = vpow.pop %v1737
    %v1739 = vmul.f32 %v1724, 1.442695
    %v1740 = vpow.pop %v1739
    %v1741 = vadd.f32 %v1726, 1.0
    %v1742 = vadd.f32 %v1728, 1.0
    %v1743 = vadd.f32 %v1730, 1.0
    %v1744 = vadd.f32 %v1732, 1.0
    %v1745 = vadd.f32 %v1734, 1.0
    %v1746 = vadd.f32 %v1736, 1.0
    %v1747 = vadd.f32 %v1738, 1.0
    %v1748 = vadd.f32 %v1740, 1.0
    %v1749 = vrcp.pop %v1741
    %v1750 = vmul.f32 %v1741, %v1749
    %v1751 = vsub.f32 1.0, %v1750
    %v1752 = vmul.f32 %v1749, %v1751
    %v1753 = vadd.f32 %v1749, %v1752
    %vm1754 = vweird.f32 %v1741
    %vm1755 = vweird.f32 %v1749
    %vm1756 = vmor %vm1754, %vm1755
    %v1757 = vsel %vm1756, %v1749, %v1753
    %v1758 = vand.u32 2147483647, %v1741
    %vm1759 = vcmp.eq.f32.partialorder %v1758, 8.507059e+37
    %v1760 = vand.u32 %v1741, 2147483648
    %v1761 = vor.u32 1.1754944e-38, %v1760
    %v1762 = vsel %vm1759, %v1761, %v1757
    %v1763 = vmul.f32 1.0, %v1762
    %v1764 = vrcp.pop %v1742
    %v1765 = vmul.f32 %v1742, %v1764
    %v1766 = vsub.f32 1.0, %v1765
    %v1767 = vmul.f32 %v1764, %v1766
    %v1768 = vadd.f32 %v1764, %v1767
    %vm1769 = vweird.f32 %v1742
    %vm1770 = vweird.f32 %v1764
    %vm1771 = vmor %vm1769, %vm1770
    %v1772 = vsel %vm1771, %v1764, %v1768
    %v1773 = vand.u32 2147483647, %v1742
    %vm1774 = vcmp.eq.f32.partialorder %v1773, 8.507059e+37
    %v1775 = vand.u32 %v1742, 2147483648
    %v1776 = vor.u32 1.1754944e-38, %v1775
    %v1777 = vsel %vm1774, %v1776, %v1772
    %v1778 = vmul.f32 1.0, %v1777
    %v1779 = vrcp.pop %v1743
    %v1780 = vmul.f32 %v1743, %v1779
    %v1781 = vsub.f32 1.0, %v1780
    %v1782 = vmul.f32 %v1779, %v1781
    %v1783 = vadd.f32 %v1779, %v1782
    %vm1784 = vweird.f32 %v1743
    %vm1785 = vweird.f32 %v1779
    %vm1786 = vmor %vm1784, %vm1785
    %v1787 = vsel %vm1786, %v1779, %v1783
    %v1788 = vand.u32 2147483647, %v1743
    %vm1789 = vcmp.eq.f32.partialorder %v1788, 8.507059e+37
    %v1790 = vand.u32 %v1743, 2147483648
    %v1791 = vor.u32 1.1754944e-38, %v1790
    %v1792 = vsel %vm1789, %v1791, %v1787
    %v1793 = vmul.f32 1.0, %v1792
    %v1794 = vrcp.pop %v1744
    %v1795 = vmul.f32 %v1744, %v1794
    %v1796 = vsub.f32 1.0, %v1795
    %v1797 = vmul.f32 %v1794, %v1796
    %v1798 = vadd.f32 %v1794, %v1797
    %vm1799 = vweird.f32 %v1744
    %vm1800 = vweird.f32 %v1794
    %vm1801 = vmor %vm1799, %vm1800
    %v1802 = vsel %vm1801, %v1794, %v1798
    %v1803 = vand.u32 2147483647, %v1744
    %vm1804 = vcmp.eq.f32.partialorder %v1803, 8.507059e+37
    %v1805 = vand.u32 %v1744, 2147483648
    %v1806 = vor.u32 1.1754944e-38, %v1805
    %v1807 = vsel %vm1804, %v1806, %v1802
    %v1808 = vmul.f32 1.0, %v1807
    %v1809 = vrcp.pop %v1745
    %v1810 = vmul.f32 %v1745, %v1809
    %v1811 = vsub.f32 1.0, %v1810
    %v1812 = vmul.f32 %v1809, %v1811
    %v1813 = vadd.f32 %v1809, %v1812
    %vm1814 = vweird.f32 %v1745
    %vm1815 = vweird.f32 %v1809
    %vm1816 = vmor %vm1814, %vm1815
    %v1817 = vsel %vm1816, %v1809, %v1813
    %v1818 = vand.u32 2147483647, %v1745
    %vm1819 = vcmp.eq.f32.partialorder %v1818, 8.507059e+37
    %v1820 = vand.u32 %v1745, 2147483648
    %v1821 = vor.u32 1.1754944e-38, %v1820
    %v1822 = vsel %vm1819, %v1821, %v1817
    %v1823 = vmul.f32 1.0, %v1822
    %v1824 = vrcp.pop %v1746
    %v1825 = vmul.f32 %v1746, %v1824
    %v1826 = vsub.f32 1.0, %v1825
    %v1827 = vmul.f32 %v1824, %v1826
    %v1828 = vadd.f32 %v1824, %v1827
    %vm1829 = vweird.f32 %v1746
    %vm1830 = vweird.f32 %v1824
    %vm1831 = vmor %vm1829, %vm1830
    %v1832 = vsel %vm1831, %v1824, %v1828
    %v1833 = vand.u32 2147483647, %v1746
    %vm1834 = vcmp.eq.f32.partialorder %v1833, 8.507059e+37
    %v1835 = vand.u32 %v1746, 2147483648
    %v1836 = vor.u32 1.1754944e-38, %v1835
    %v1837 = vsel %vm1834, %v1836, %v1832
    %v1838 = vmul.f32 1.0, %v1837
    %v1839 = vrcp.pop %v1747
    %v1840 = vmul.f32 %v1747, %v1839
    %v1841 = vsub.f32 1.0, %v1840
    %v1842 = vmul.f32 %v1839, %v1841
    %v1843 = vadd.f32 %v1839, %v1842
    %vm1844 = vweird.f32 %v1747
    %vm1845 = vweird.f32 %v1839
    %vm1846 = vmor %vm1844, %vm1845
    %v1847 = vsel %vm1846, %v1839, %v1843
    %v1848 = vand.u32 2147483647, %v1747
    %vm1849 = vcmp.eq.f32.partialorder %v1848, 8.507059e+37
    %v1850 = vand.u32 %v1747, 2147483648
    %v1851 = vor.u32 1.1754944e-38, %v1850
    %v1852 = vsel %vm1849, %v1851, %v1847
    %v1853 = vmul.f32 1.0, %v1852
    %v1854 = vrcp.pop %v1748
    %v1855 = vmul.f32 %v1748, %v1854
    %v1856 = vsub.f32 1.0, %v1855
    %v1857 = vmul.f32 %v1854, %v1856
    %v1858 = vadd.f32 %v1854, %v1857
    %vm1859 = vweird.f32 %v1748
    %vm1860 = vweird.f32 %v1854
    %vm1861 = vmor %vm1859, %vm1860
    %v1862 = vsel %vm1861, %v1854, %v1858
    %v1863 = vand.u32 2147483647, %v1748
    %vm1864 = vcmp.eq.f32.partialorder %v1863, 8.507059e+37
    %v1865 = vand.u32 %v1748, 2147483648
    %v1866 = vor.u32 1.1754944e-38, %v1865
    %v1867 = vsel %vm1864, %v1866, %v1862
    %v1868 = vmul.f32 1.0, %v1867
    %v1877 = vrot.slane %v1709, 1
    %v1878 = vrot.slane %v1710, 1
    %v1879 = vrot.slane %v1711, 1
    %v1880 = vrot.slane %v1712, 1
    %v1881 = vrot.slane %v1713, 1
    %v1882 = vrot.slane %v1714, 1
    %v1883 = vrot.slane %v1715, 1
    %v1884 = vrot.slane %v1716, 1
    %v1893 = vxor.u32 %v1877, 2147483648
    %v1894 = vxor.u32 %v1878, 2147483648
    %v1895 = vxor.u32 %v1879, 2147483648
    %v1896 = vxor.u32 %v1880, 2147483648
    %v1897 = vxor.u32 %v1881, 2147483648
    %v1898 = vxor.u32 %v1882, 2147483648
    %v1899 = vxor.u32 %v1883, 2147483648
    %v1900 = vxor.u32 %v1884, 2147483648
    %v1901 = vmul.f32 %v1893, 1.442695
    %v1902 = vpow.pop %v1901
    %v1903 = vmul.f32 %v1894, 1.442695
    %v1904 = vpow.pop %v1903
    %v1905 = vmul.f32 %v1895, 1.442695
    %v1906 = vpow.pop %v1905
    %v1907 = vmul.f32 %v1896, 1.442695
    %v1908 = vpow.pop %v1907
    %v1909 = vmul.f32 %v1897, 1.442695
    %v1910 = vpow.pop %v1909
    %v1911 = vmul.f32 %v1898, 1.442695
    %v1912 = vpow.pop %v1911
    %v1913 = vmul.f32 %v1899, 1.442695
    %v1914 = vpow.pop %v1913
    %v1915 = vmul.f32 %v1900, 1.442695
    %v1916 = vpow.pop %v1915
    %v1917 = vadd.f32 %v1902, 1.0
    %v1918 = vadd.f32 %v1904, 1.0
    %v1919 = vadd.f32 %v1906, 1.0
    %v1920 = vadd.f32 %v1908, 1.0
    %v1921 = vadd.f32 %v1910, 1.0
    %v1922 = vadd.f32 %v1912, 1.0
    %v1923 = vadd.f32 %v1914, 1.0
    %v1924 = vadd.f32 %v1916, 1.0
    %v1925 = vrcp.pop %v1917
    %v1926 = vmul.f32 %v1917, %v1925
    %v1927 = vsub.f32 1.0, %v1926
    %v1928 = vmul.f32 %v1925, %v1927
    %v1929 = vadd.f32 %v1925, %v1928
    %vm1930 = vweird.f32 %v1917
    %vm1931 = vweird.f32 %v1925
    %vm1932 = vmor %vm1930, %vm1931
    %v1933 = vsel %vm1932, %v1925, %v1929
    %v1934 = vand.u32 2147483647, %v1917
    %vm1935 = vcmp.eq.f32.partialorder %v1934, 8.507059e+37
    %v1936 = vand.u32 %v1917, 2147483648
    %v1937 = vor.u32 1.1754944e-38, %v1936
    %v1938 = vsel %vm1935, %v1937, %v1933
    %v1939 = vmul.f32 1.0, %v1938
    %v1940 = vrcp.pop %v1918
    %v1941 = vmul.f32 %v1918, %v1940
    %v1942 = vsub.f32 1.0, %v1941
    %v1943 = vmul.f32 %v1940, %v1942
    %v1944 = vadd.f32 %v1940, %v1943
    %vm1945 = vweird.f32 %v1918
    %vm1946 = vweird.f32 %v1940
    %vm1947 = vmor %vm1945, %vm1946
    %v1948 = vsel %vm1947, %v1940, %v1944
    %v1949 = vand.u32 2147483647, %v1918
    %vm1950 = vcmp.eq.f32.partialorder %v1949, 8.507059e+37
    %v1951 = vand.u32 %v1918, 2147483648
    %v1952 = vor.u32 1.1754944e-38, %v1951
    %v1953 = vsel %vm1950, %v1952, %v1948
    %v1954 = vmul.f32 1.0, %v1953
    %v1955 = vrcp.pop %v1919
    %v1956 = vmul.f32 %v1919, %v1955
    %v1957 = vsub.f32 1.0, %v1956
    %v1958 = vmul.f32 %v1955, %v1957
    %v1959 = vadd.f32 %v1955, %v1958
    %vm1960 = vweird.f32 %v1919
    %vm1961 = vweird.f32 %v1955
    %vm1962 = vmor %vm1960, %vm1961
    %v1963 = vsel %vm1962, %v1955, %v1959
    %v1964 = vand.u32 2147483647, %v1919
    %vm1965 = vcmp.eq.f32.partialorder %v1964, 8.507059e+37
    %v1966 = vand.u32 %v1919, 2147483648
    %v1967 = vor.u32 1.1754944e-38, %v1966
    %v1968 = vsel %vm1965, %v1967, %v1963
    %v1969 = vmul.f32 1.0, %v1968
    %v1970 = vrcp.pop %v1920
    %v1971 = vmul.f32 %v1920, %v1970
    %v1972 = vsub.f32 1.0, %v1971
    %v1973 = vmul.f32 %v1970, %v1972
    %v1974 = vadd.f32 %v1970, %v1973
    %vm1975 = vweird.f32 %v1920
    %vm1976 = vweird.f32 %v1970
    %vm1977 = vmor %vm1975, %vm1976
    %v1978 = vsel %vm1977, %v1970, %v1974
    %v1979 = vand.u32 2147483647, %v1920
    %vm1980 = vcmp.eq.f32.partialorder %v1979, 8.507059e+37
    %v1981 = vand.u32 %v1920, 2147483648
    %v1982 = vor.u32 1.1754944e-38, %v1981
    %v1983 = vsel %vm1980, %v1982, %v1978
    %v1984 = vmul.f32 1.0, %v1983
    %v1985 = vrcp.pop %v1921
    %v1986 = vmul.f32 %v1921, %v1985
    %v1987 = vsub.f32 1.0, %v1986
    %v1988 = vmul.f32 %v1985, %v1987
    %v1989 = vadd.f32 %v1985, %v1988
    %vm1990 = vweird.f32 %v1921
    %vm1991 = vweird.f32 %v1985
    %vm1992 = vmor %vm1990, %vm1991
    %v1993 = vsel %vm1992, %v1985, %v1989
    %v1994 = vand.u32 2147483647, %v1921
    %vm1995 = vcmp.eq.f32.partialorder %v1994, 8.507059e+37
    %v1996 = vand.u32 %v1921, 2147483648
    %v1997 = vor.u32 1.1754944e-38, %v1996
    %v1998 = vsel %vm1995, %v1997, %v1993
    %v1999 = vmul.f32 1.0, %v1998
    %v2000 = vrcp.pop %v1922
    %v2001 = vmul.f32 %v1922, %v2000
    %v2002 = vsub.f32 1.0, %v2001
    %v2003 = vmul.f32 %v2000, %v2002
    %v2004 = vadd.f32 %v2000, %v2003
    %vm2005 = vweird.f32 %v1922
    %vm2006 = vweird.f32 %v2000
    %vm2007 = vmor %vm2005, %vm2006
    %v2008 = vsel %vm2007, %v2000, %v2004
    %v2009 = vand.u32 2147483647, %v1922
    %vm2010 = vcmp.eq.f32.partialorder %v2009, 8.507059e+37
    %v2011 = vand.u32 %v1922, 2147483648
    %v2012 = vor.u32 1.1754944e-38, %v2011
    %v2013 = vsel %vm2010, %v2012, %v2008
    %v2014 = vmul.f32 1.0, %v2013
    %v2015 = vrcp.pop %v1923
    %v2016 = vmul.f32 %v1923, %v2015
    %v2017 = vsub.f32 1.0, %v2016
    %v2018 = vmul.f32 %v2015, %v2017
    %v2019 = vadd.f32 %v2015, %v2018
    %vm2020 = vweird.f32 %v1923
    %vm2021 = vweird.f32 %v2015
    %vm2022 = vmor %vm2020, %vm2021
    %v2023 = vsel %vm2022, %v2015, %v2019
    %v2024 = vand.u32 2147483647, %v1923
    %vm2025 = vcmp.eq.f32.partialorder %v2024, 8.507059e+37
    %v2026 = vand.u32 %v1923, 2147483648
    %v2027 = vor.u32 1.1754944e-38, %v2026
    %v2028 = vsel %vm2025, %v2027, %v2023
    %v2029 = vmul.f32 1.0, %v2028
    %v2030 = vrcp.pop %v1924
    %v2031 = vmul.f32 %v1924, %v2030
    %v2032 = vsub.f32 1.0, %v2031
    %v2033 = vmul.f32 %v2030, %v2032
    %v2034 = vadd.f32 %v2030, %v2033
    %vm2035 = vweird.f32 %v1924
    %vm2036 = vweird.f32 %v2030
    %vm2037 = vmor %vm2035, %vm2036
    %v2038 = vsel %vm2037, %v2030, %v2034
    %v2039 = vand.u32 2147483647, %v1924
    %vm2040 = vcmp.eq.f32.partialorder %v2039, 8.507059e+37
    %v2041 = vand.u32 %v1924, 2147483648
    %v2042 = vor.u32 1.1754944e-38, %v2041
    %v2043 = vsel %vm2040, %v2042, %v2038
    %v2044 = vmul.f32 1.0, %v2043
    %v2045 = vrot.slane %v1709, 2
    %v2046 = vrot.slane %v1710, 2
    %v2047 = vrot.slane %v1711, 2
    %v2048 = vrot.slane %v1712, 2
    %v2049 = vrot.slane %v1713, 2
    %v2050 = vrot.slane %v1714, 2
    %v2051 = vrot.slane %v1715, 2
    %v2052 = vrot.slane %v1716, 2
    %v2061 = vtanh.pop %v2045
    %v2062 = vtanh.pop %v2046
    %v2063 = vtanh.pop %v2047
    %v2064 = vtanh.pop %v2048
    %v2065 = vtanh.pop %v2049
    %v2066 = vtanh.pop %v2050
    %v2067 = vtanh.pop %v2051
    %v2068 = vtanh.pop %v2052
    %v2069 = vrot.slane %v1709, 3
    %v2070 = vrot.slane %v1710, 3
    %v2071 = vrot.slane %v1711, 3
    %v2072 = vrot.slane %v1712, 3
    %v2073 = vrot.slane %v1713, 3
    %v2074 = vrot.slane %v1714, 3
    %v2075 = vrot.slane %v1715, 3
    %v2076 = vrot.slane %v1716, 3
    %v2085 = vxor.u32 %v2069, 2147483648
    %v2086 = vxor.u32 %v2070, 2147483648
    %v2087 = vxor.u32 %v2071, 2147483648
    %v2088 = vxor.u32 %v2072, 2147483648
    %v2089 = vxor.u32 %v2073, 2147483648
    %v2090 = vxor.u32 %v2074, 2147483648
    %v2091 = vxor.u32 %v2075, 2147483648
    %v2092 = vxor.u32 %v2076, 2147483648
    %v2093 = vmul.f32 %v2085, 1.442695
    %v2094 = vpow.pop %v2093
    %v2095 = vmul.f32 %v2086, 1.442695
    %v2096 = vpow.pop %v2095
    %v2097 = vmul.f32 %v2087, 1.442695
    %v2098 = vpow.pop %v2097
    %v2099 = vmul.f32 %v2088, 1.442695
    %v2100 = vpow.pop %v2099
    %v2101 = vmul.f32 %v2089, 1.442695
    %v2102 = vpow.pop %v2101
    %v2103 = vmul.f32 %v2090, 1.442695
    %v2104 = vpow.pop %v2103
    %v2105 = vmul.f32 %v2091, 1.442695
    %v2106 = vpow.pop %v2105
    %v2107 = vmul.f32 %v2092, 1.442695
    %v2108 = vpow.pop %v2107
    %v2109 = vadd.f32 %v2094, 1.0
    %v2110 = vadd.f32 %v2096, 1.0
    %v2111 = vadd.f32 %v2098, 1.0
    %v2112 = vadd.f32 %v2100, 1.0
    %v2113 = vadd.f32 %v2102, 1.0
    %v2114 = vadd.f32 %v2104, 1.0
    %v2115 = vadd.f32 %v2106, 1.0
    %v2116 = vadd.f32 %v2108, 1.0
    %v2117 = vrcp.pop %v2109
    %v2118 = vmul.f32 %v2109, %v2117
    %v2119 = vsub.f32 1.0, %v2118
    %v2120 = vmul.f32 %v2117, %v2119
    %v2121 = vadd.f32 %v2117, %v2120
    %vm2122 = vweird.f32 %v2109
    %vm2123 = vweird.f32 %v2117
    %vm2124 = vmor %vm2122, %vm2123
    %v2125 = vsel %vm2124, %v2117, %v2121
    %v2126 = vand.u32 2147483647, %v2109
    %vm2127 = vcmp.eq.f32.partialorder %v2126, 8.507059e+37
    %v2128 = vand.u32 %v2109, 2147483648
    %v2129 = vor.u32 1.1754944e-38, %v2128
    %v2130 = vsel %vm2127, %v2129, %v2125
    %v2131 = vmul.f32 1.0, %v2130
    %v2132 = vrcp.pop %v2110
    %v2133 = vmul.f32 %v2110, %v2132
    %v2134 = vsub.f32 1.0, %v2133
    %v2135 = vmul.f32 %v2132, %v2134
    %v2136 = vadd.f32 %v2132, %v2135
    %vm2137 = vweird.f32 %v2110
    %vm2138 = vweird.f32 %v2132
    %vm2139 = vmor %vm2137, %vm2138
    %v2140 = vsel %vm2139, %v2132, %v2136
    %v2141 = vand.u32 2147483647, %v2110
    %vm2142 = vcmp.eq.f32.partialorder %v2141, 8.507059e+37
    %v2143 = vand.u32 %v2110, 2147483648
    %v2144 = vor.u32 1.1754944e-38, %v2143
    %v2145 = vsel %vm2142, %v2144, %v2140
    %v2146 = vmul.f32 1.0, %v2145
    %v2147 = vrcp.pop %v2111
    %v2148 = vmul.f32 %v2111, %v2147
    %v2149 = vsub.f32 1.0, %v2148
    %v2150 = vmul.f32 %v2147, %v2149
    %v2151 = vadd.f32 %v2147, %v2150
    %vm2152 = vweird.f32 %v2111
    %vm2153 = vweird.f32 %v2147
    %vm2154 = vmor %vm2152, %vm2153
    %v2155 = vsel %vm2154, %v2147, %v2151
    %v2156 = vand.u32 2147483647, %v2111
    %vm2157 = vcmp.eq.f32.partialorder %v2156, 8.507059e+37
    %v2158 = vand.u32 %v2111, 2147483648
    %v2159 = vor.u32 1.1754944e-38, %v2158
    %v2160 = vsel %vm2157, %v2159, %v2155
    %v2161 = vmul.f32 1.0, %v2160
    %v2162 = vrcp.pop %v2112
    %v2163 = vmul.f32 %v2112, %v2162
    %v2164 = vsub.f32 1.0, %v2163
    %v2165 = vmul.f32 %v2162, %v2164
    %v2166 = vadd.f32 %v2162, %v2165
    %vm2167 = vweird.f32 %v2112
    %vm2168 = vweird.f32 %v2162
    %vm2169 = vmor %vm2167, %vm2168
    %v2170 = vsel %vm2169, %v2162, %v2166
    %v2171 = vand.u32 2147483647, %v2112
    %vm2172 = vcmp.eq.f32.partialorder %v2171, 8.507059e+37
    %v2173 = vand.u32 %v2112, 2147483648
    %v2174 = vor.u32 1.1754944e-38, %v2173
    %v2175 = vsel %vm2172, %v2174, %v2170
    %v2176 = vmul.f32 1.0, %v2175
    %v2177 = vrcp.pop %v2113
    %v2178 = vmul.f32 %v2113, %v2177
    %v2179 = vsub.f32 1.0, %v2178
    %v2180 = vmul.f32 %v2177, %v2179
    %v2181 = vadd.f32 %v2177, %v2180
    %vm2182 = vweird.f32 %v2113
    %vm2183 = vweird.f32 %v2177
    %vm2184 = vmor %vm2182, %vm2183
    %v2185 = vsel %vm2184, %v2177, %v2181
    %v2186 = vand.u32 2147483647, %v2113
    %vm2187 = vcmp.eq.f32.partialorder %v2186, 8.507059e+37
    %v2188 = vand.u32 %v2113, 2147483648
    %v2189 = vor.u32 1.1754944e-38, %v2188
    %v2190 = vsel %vm2187, %v2189, %v2185
    %v2191 = vmul.f32 1.0, %v2190
    %v2192 = vrcp.pop %v2114
    %v2193 = vmul.f32 %v2114, %v2192
    %v2194 = vsub.f32 1.0, %v2193
    %v2195 = vmul.f32 %v2192, %v2194
    %v2196 = vadd.f32 %v2192, %v2195
    %vm2197 = vweird.f32 %v2114
    %vm2198 = vweird.f32 %v2192
    %vm2199 = vmor %vm2197, %vm2198
    %v2200 = vsel %vm2199, %v2192, %v2196
    %v2201 = vand.u32 2147483647, %v2114
    %vm2202 = vcmp.eq.f32.partialorder %v2201, 8.507059e+37
    %v2203 = vand.u32 %v2114, 2147483648
    %v2204 = vor.u32 1.1754944e-38, %v2203
    %v2205 = vsel %vm2202, %v2204, %v2200
    %v2206 = vmul.f32 1.0, %v2205
    %v2207 = vrcp.pop %v2115
    %v2208 = vmul.f32 %v2115, %v2207
    %v2209 = vsub.f32 1.0, %v2208
    %v2210 = vmul.f32 %v2207, %v2209
    %v2211 = vadd.f32 %v2207, %v2210
    %vm2212 = vweird.f32 %v2115
    %vm2213 = vweird.f32 %v2207
    %vm2214 = vmor %vm2212, %vm2213
    %v2215 = vsel %vm2214, %v2207, %v2211
    %v2216 = vand.u32 2147483647, %v2115
    %vm2217 = vcmp.eq.f32.partialorder %v2216, 8.507059e+37
    %v2218 = vand.u32 %v2115, 2147483648
    %v2219 = vor.u32 1.1754944e-38, %v2218
    %v2220 = vsel %vm2217, %v2219, %v2215
    %v2221 = vmul.f32 1.0, %v2220
    %v2222 = vrcp.pop %v2116
    %v2223 = vmul.f32 %v2116, %v2222
    %v2224 = vsub.f32 1.0, %v2223
    %v2225 = vmul.f32 %v2222, %v2224
    %v2226 = vadd.f32 %v2222, %v2225
    %vm2227 = vweird.f32 %v2116
    %vm2228 = vweird.f32 %v2222
    %vm2229 = vmor %vm2227, %vm2228
    %v2230 = vsel %vm2229, %v2222, %v2226
    %v2231 = vand.u32 2147483647, %v2116
    %vm2232 = vcmp.eq.f32.partialorder %v2231, 8.507059e+37
    %v2233 = vand.u32 %v2116, 2147483648
    %v2234 = vor.u32 1.1754944e-38, %v2233
    %v2235 = vsel %vm2232, %v2234, %v2230
    %v2236 = vmul.f32 1.0, %v2235
    %v2237 = vmul.f32 %v1939, %v1330
    %v2238 = vmul.f32 %v1954, %v1331
    %v2239 = vmul.f32 %v1969, %v1332
    %v2240 = vmul.f32 %v1984, %v1333
    %v2241 = vmul.f32 %v1999, %v1334
    %v2242 = vmul.f32 %v2014, %v1335
    %v2243 = vmul.f32 %v2029, %v1336
    %v2244 = vmul.f32 %v2044, %v1337
    %v2245 = vmul.f32 %v1763, %v2061
    %v2246 = vmul.f32 %v1778, %v2062
    %v2247 = vmul.f32 %v1793, %v2063
    %v2248 = vmul.f32 %v1808, %v2064
    %v2249 = vmul.f32 %v1823, %v2065
    %v2250 = vmul.f32 %v1838, %v2066
    %v2251 = vmul.f32 %v1853, %v2067
    %v2252 = vmul.f32 %v1868, %v2068
    %v2253 = vadd.f32 %v2237, %v2245
    %v2254 = vadd.f32 %v2238, %v2246
    %v2255 = vadd.f32 %v2239, %v2247
    %v2256 = vadd.f32 %v2240, %v2248
    %v2257 = vadd.f32 %v2241, %v2249
    %v2258 = vadd.f32 %v2242, %v2250
    %v2259 = vadd.f32 %v2243, %v2251
    %v2260 = vadd.f32 %v2244, %v2252
    %v2261 = vtanh.pop %v2253
    %v2262 = vtanh.pop %v2254
    %v2263 = vtanh.pop %v2255
    %v2264 = vtanh.pop %v2256
    %v2265 = vtanh.pop %v2257
    %v2266 = vtanh.pop %v2258
    %v2267 = vtanh.pop %v2259
    %v2268 = vtanh.pop %v2260
    %v2269 = vmul.f32 %v2131, %v2261
    %v2270 = vmul.f32 %v2146, %v2262
    %v2271 = vmul.f32 %v2161, %v2263
    %v2272 = vmul.f32 %v2176, %v2264
    %v2273 = vmul.f32 %v2191, %v2265
    %v2274 = vmul.f32 %v2206, %v2266
    %v2275 = vmul.f32 %v2221, %v2267
    %v2276 = vmul.f32 %v2236, %v2268
    %2277 = vst [vmem:[#allocation3 + $0x1] sm:$0x1] %v2269
    %2278 = vst [vmem:[#allocation3 + $0x9] sm:$0x1] %v2270
    %2279 = vst [vmem:[#allocation3 + $0x11] sm:$0x1] %v2271
    %2280 = vst [vmem:[#allocation3 + $0x19] sm:$0x1] %v2272
    %2281 = vst [vmem:[#allocation3 + $0x21] sm:$0x1] %v2273
    %2282 = vst [vmem:[#allocation3 + $0x29] sm:$0x1] %v2274
    %2283 = vst [vmem:[#allocation3 + $0x31] sm:$0x1] %v2275
    %2284 = vst [vmem:[#allocation3 + $0x39] sm:$0x1] %v2276
    %s2285 = scalar_lea.vmem [#allocation2], 2
    %v2286 = vld [vmem:[%s2285] ss:$8 sm:$0xf]
    %s2287 = scalar_lea.vmem [#allocation2], 34
    %v2288 = vld [vmem:[%s2287] ss:$8 sm:$0xf]
    %s2289 = scalar_lea.vmem [#allocation2], 66
    %v2290 = vld [vmem:[%s2289] ss:$8 sm:$0xf]
    %s2291 = scalar_lea.vmem [#allocation2], 98
    %v2292 = vld [vmem:[%s2291] ss:$8 sm:$0xf]
    %s2293 = scalar_lea.vmem [#allocation2], 130
    %v2294 = vld [vmem:[%s2293] ss:$8 sm:$0xf]
    %s2295 = scalar_lea.vmem [#allocation2], 162
    %v2296 = vld [vmem:[%s2295] ss:$8 sm:$0xf]
    %s2297 = scalar_lea.vmem [#allocation2], 194
    %v2298 = vld [vmem:[%s2297] ss:$8 sm:$0xf]
    %s2299 = scalar_lea.vmem [#allocation2], 226
    %v2300 = vld [vmem:[%s2299] ss:$8 sm:$0xf]
    %v2301 = vpack.c.bf16 %v2269, %v2269
    %v2302 = vpack.c.bf16 %v2270, %v2270
    %v2303 = vpack.c.bf16 %v2271, %v2271
    %v2304 = vpack.c.bf16 %v2272, %v2272
    %v2305 = vpack.c.bf16 %v2273, %v2273
    %v2306 = vpack.c.bf16 %v2274, %v2274
    %v2307 = vpack.c.bf16 %v2275, %v2275
    %v2308 = vpack.c.bf16 %v2276, %v2276
    %v2309 = vld [vmem:[#allocation11] sm:$0xff]
    %v2310 = vld [vmem:[#allocation11 + $0x8] sm:$0xff]
    %v2311 = vld [vmem:[#allocation11 + $0x10] sm:$0xff]
    %v2312 = vld [vmem:[#allocation11 + $0x18] sm:$0xff]
    %v2313 = vld [vmem:[#allocation11 + $0x20] sm:$0xff]
    %v2314 = vld [vmem:[#allocation11 + $0x28] sm:$0xff]
    %v2315 = vld [vmem:[#allocation11 + $0x30] sm:$0xff]
    %v2316 = vld [vmem:[#allocation11 + $0x38] sm:$0xff]
    %v2317 = vld [vmem:[#allocation11 + $0x40] sm:$0xff]
    %v2318 = vld [vmem:[#allocation11 + $0x48] sm:$0xff]
    %v2319 = vld [vmem:[#allocation11 + $0x50] sm:$0xff]
    %v2320 = vld [vmem:[#allocation11 + $0x58] sm:$0xff]
    %v2321 = vld [vmem:[#allocation11 + $0x60] sm:$0xff]
    %v2322 = vld [vmem:[#allocation11 + $0x68] sm:$0xff]
    %v2323 = vld [vmem:[#allocation11 + $0x70] sm:$0xff]
    %v2324 = vld [vmem:[#allocation11 + $0x78] sm:$0xff]
    %v2325 = vld [vmem:[#allocation11 + $0x80] sm:$0xff]
    %v2326 = vld [vmem:[#allocation11 + $0x88] sm:$0xff]
    %v2327 = vld [vmem:[#allocation11 + $0x90] sm:$0xff]
    %v2328 = vld [vmem:[#allocation11 + $0x98] sm:$0xff]
    %v2329 = vld [vmem:[#allocation11 + $0xa0] sm:$0xff]
    %v2330 = vld [vmem:[#allocation11 + $0xa8] sm:$0xff]
    %v2331 = vld [vmem:[#allocation11 + $0xb0] sm:$0xff]
    %v2332 = vld [vmem:[#allocation11 + $0xb8] sm:$0xff]
    %v2333 = vld [vmem:[#allocation11 + $0xc0] sm:$0xff]
    %v2334 = vld [vmem:[#allocation11 + $0xc8] sm:$0xff]
    %v2335 = vld [vmem:[#allocation11 + $0xd0] sm:$0xff]
    %v2336 = vld [vmem:[#allocation11 + $0xd8] sm:$0xff]
    %v2337 = vld [vmem:[#allocation11 + $0xe0] sm:$0xff]
    %v2338 = vld [vmem:[#allocation11 + $0xe8] sm:$0xff]
    %v2339 = vld [vmem:[#allocation11 + $0xf0] sm:$0xff]
    %v2340 = vld [vmem:[#allocation11 + $0xf8] sm:$0xff]
    %v2349 = vunpack.c.l.b16 %v2301
    %v2350 = vunpack.c.l.b16 %v2302
    %v2351 = vunpack.c.l.b16 %v2303
    %v2352 = vunpack.c.l.b16 %v2304
    %v2353 = vunpack.c.l.b16 %v2305
    %v2354 = vunpack.c.l.b16 %v2306
    %v2355 = vunpack.c.l.b16 %v2307
    %v2356 = vunpack.c.l.b16 %v2308
    %v2357 = vrot.slane %v2350, 7
    %v2358 = vsel %vm722, %v2357, %v2349
    %v2359 = vrot.slane %v2351, 6
    %v2360 = vsel %vm718, %v2359, %v2358
    %v2361 = vrot.slane %v2352, 5
    %v2362 = vsel %vm724, %v2361, %v2360
    %v2363 = vrot.slane %v2353, 4
    %v2364 = vsel %vm730, %v2363, %v2362
    %v2365 = vrot.slane %v2354, 3
    %v2366 = vsel %vm736, %v2365, %v2364
    %v2367 = vrot.slane %v2355, 2
    %v2368 = vsel %vm742, %v2367, %v2366
    %v2369 = vrot.slane %v2356, 1
    %v2370 = vsel %vm1447, %v2369, %v2368
    %v2371 = vpack.c.b16 %v2370, %v2370
    %v2405 = vunpack.c.l.b16 %v2309
    %v2406 = vunpack.c.h.b16 %v2309
    %v2407 = vunpack.c.l.b16 %v2310
    %v2408 = vunpack.c.h.b16 %v2310
    %v2409 = vunpack.c.l.b16 %v2311
    %v2410 = vunpack.c.h.b16 %v2311
    %v2411 = vunpack.c.l.b16 %v2312
    %v2412 = vunpack.c.h.b16 %v2312
    %v2413 = vunpack.c.l.b16 %v2313
    %v2414 = vunpack.c.h.b16 %v2313
    %v2415 = vunpack.c.l.b16 %v2314
    %v2416 = vunpack.c.h.b16 %v2314
    %v2417 = vunpack.c.l.b16 %v2315
    %v2418 = vunpack.c.h.b16 %v2315
    %v2419 = vunpack.c.l.b16 %v2316
    %v2420 = vunpack.c.h.b16 %v2316
    %v2421 = vunpack.c.l.b16 %v2317
    %v2422 = vunpack.c.h.b16 %v2317
    %v2423 = vunpack.c.l.b16 %v2318
    %v2424 = vunpack.c.h.b16 %v2318
    %v2425 = vunpack.c.l.b16 %v2319
    %v2426 = vunpack.c.h.b16 %v2319
    %v2427 = vunpack.c.l.b16 %v2320
    %v2428 = vunpack.c.h.b16 %v2320
    %v2429 = vunpack.c.l.b16 %v2321
    %v2430 = vunpack.c.h.b16 %v2321
    %v2431 = vunpack.c.l.b16 %v2322
    %v2432 = vunpack.c.h.b16 %v2322
    %v2433 = vunpack.c.l.b16 %v2323
    %v2434 = vunpack.c.h.b16 %v2323
    %v2435 = vunpack.c.l.b16 %v2324
    %v2436 = vunpack.c.h.b16 %v2324
    %v2437 = vunpack.c.l.b16 %v2325
    %v2438 = vunpack.c.h.b16 %v2325
    %v2439 = vunpack.c.l.b16 %v2326
    %v2440 = vunpack.c.h.b16 %v2326
    %v2441 = vunpack.c.l.b16 %v2327
    %v2442 = vunpack.c.h.b16 %v2327
    %v2443 = vunpack.c.l.b16 %v2328
    %v2444 = vunpack.c.h.b16 %v2328
    %v2445 = vunpack.c.l.b16 %v2329
    %v2446 = vunpack.c.h.b16 %v2329
    %v2447 = vunpack.c.l.b16 %v2330
    %v2448 = vunpack.c.h.b16 %v2330
    %v2449 = vunpack.c.l.b16 %v2331
    %v2450 = vunpack.c.h.b16 %v2331
    %v2451 = vunpack.c.l.b16 %v2332
    %v2452 = vunpack.c.h.b16 %v2332
    %v2453 = vunpack.c.l.b16 %v2333
    %v2454 = vunpack.c.h.b16 %v2333
    %v2455 = vunpack.c.l.b16 %v2334
    %v2456 = vunpack.c.h.b16 %v2334
    %v2457 = vunpack.c.l.b16 %v2335
    %v2458 = vunpack.c.h.b16 %v2335
    %v2459 = vunpack.c.l.b16 %v2336
    %v2460 = vunpack.c.h.b16 %v2336
    %v2461 = vunpack.c.l.b16 %v2337
    %v2462 = vunpack.c.h.b16 %v2337
    %v2463 = vunpack.c.l.b16 %v2338
    %v2464 = vunpack.c.h.b16 %v2338
    %v2465 = vunpack.c.l.b16 %v2339
    %v2466 = vunpack.c.h.b16 %v2339
    %v2467 = vunpack.c.l.b16 %v2340
    %v2468 = vunpack.c.h.b16 %v2340
    %v2469 = vpack.c.b16 %v2409, %v2405
    %v2470 = vpack.c.b16 %v2410, %v2406
    %v2471 = vpack.c.b16 %v2411, %v2407
    %v2472 = vpack.c.b16 %v2412, %v2408
    %v2473 = vpack.c.b16 %v2417, %v2413
    %v2474 = vpack.c.b16 %v2418, %v2414
    %v2475 = vpack.c.b16 %v2419, %v2415
    %v2476 = vpack.c.b16 %v2420, %v2416
    %v2477 = vpack.c.b16 %v2425, %v2421
    %v2478 = vpack.c.b16 %v2426, %v2422
    %v2479 = vpack.c.b16 %v2427, %v2423
    %v2480 = vpack.c.b16 %v2428, %v2424
    %v2481 = vpack.c.b16 %v2433, %v2429
    %v2482 = vpack.c.b16 %v2434, %v2430
    %v2483 = vpack.c.b16 %v2435, %v2431
    %v2484 = vpack.c.b16 %v2436, %v2432
    %v2485 = vpack.c.b16 %v2441, %v2437
    %v2486 = vpack.c.b16 %v2442, %v2438
    %v2487 = vpack.c.b16 %v2443, %v2439
    %v2488 = vpack.c.b16 %v2444, %v2440
    %v2489 = vpack.c.b16 %v2449, %v2445
    %v2490 = vpack.c.b16 %v2450, %v2446
    %v2491 = vpack.c.b16 %v2451, %v2447
    %v2492 = vpack.c.b16 %v2452, %v2448
    %v2493 = vpack.c.b16 %v2457, %v2453
    %v2494 = vpack.c.b16 %v2458, %v2454
    %v2495 = vpack.c.b16 %v2459, %v2455
    %v2496 = vpack.c.b16 %v2460, %v2456
    %v2497 = vpack.c.b16 %v2465, %v2461
    %v2498 = vpack.c.b16 %v2466, %v2462
    %v2499 = vpack.c.b16 %v2467, %v2463
    %v2500 = vpack.c.b16 %v2468, %v2464
    %2533 = vmatpush.bf16.msra.mxu0 %v2497
    %2534 = vmatpush.bf16.msra.mxu0 %v2493
    %2535 = vmatpush.bf16.msra.mxu0 %v2489
    %2536 = vmatpush.bf16.msra.mxu0 %v2485
    %2537 = vmatpush.bf16.msra.mxu0 %v2481
    %2538 = vmatpush.bf16.msra.mxu0 %v2477
    %2539 = vmatpush.bf16.msra.mxu0 %v2473
    %2540 = vmatpush.bf16.msra.mxu0 %v2469
    %2541 = vmatmul.bf16.gmra.mxu0 %v2371
    %v2542 = vpop.f32.mrf.mxu0
    %v2543 = vadd.f32 0.0, %v2542
    %v2544 = vpop.f32.mrf.mxu0
    %2545 = vdwg.mxu0
    %2546 = vmatpush.bf16.msra.mxu0 %v2498
    %2547 = vmatpush.bf16.msra.mxu0 %v2494
    %2548 = vmatpush.bf16.msra.mxu0 %v2490
    %2549 = vmatpush.bf16.msra.mxu0 %v2486
    %2550 = vmatpush.bf16.msra.mxu0 %v2482
    %2551 = vmatpush.bf16.msra.mxu0 %v2478
    %2552 = vmatpush.bf16.msra.mxu0 %v2474
    %2553 = vmatpush.bf16.msra.mxu0 %v2470
    %2554 = vmatmul.bf16.gmra.mxu0 %v2371
    %v2555 = vpop.f32.mrf.mxu0
    %v2556 = vadd.f32 0.0, %v2555
    %v2557 = vpop.f32.mrf.mxu0
    %2558 = vdwg.mxu0
    %2559 = vmatpush.bf16.msra.mxu0 %v2499
    %2560 = vmatpush.bf16.msra.mxu0 %v2495
    %2561 = vmatpush.bf16.msra.mxu0 %v2491
    %2562 = vmatpush.bf16.msra.mxu0 %v2487
    %2563 = vmatpush.bf16.msra.mxu0 %v2483
    %2564 = vmatpush.bf16.msra.mxu0 %v2479
    %2565 = vmatpush.bf16.msra.mxu0 %v2475
    %2566 = vmatpush.bf16.msra.mxu0 %v2471
    %2567 = vmatmul.bf16.gmra.mxu0 %v2371
    %v2568 = vpop.f32.mrf.mxu0
    %v2569 = vadd.f32 0.0, %v2568
    %v2570 = vpop.f32.mrf.mxu0
    %2571 = vdwg.mxu0
    %2572 = vmatpush.bf16.msra.mxu0 %v2500
    %2573 = vmatpush.bf16.msra.mxu0 %v2496
    %2574 = vmatpush.bf16.msra.mxu0 %v2492
    %2575 = vmatpush.bf16.msra.mxu0 %v2488
    %2576 = vmatpush.bf16.msra.mxu0 %v2484
    %2577 = vmatpush.bf16.msra.mxu0 %v2480
    %2578 = vmatpush.bf16.msra.mxu0 %v2476
    %2579 = vmatpush.bf16.msra.mxu0 %v2472
    %2580 = vmatmul.bf16.gmra.mxu0 %v2371
    %v2581 = vpop.f32.mrf.mxu0
    %v2582 = vadd.f32 0.0, %v2581
    %v2583 = vpop.f32.mrf.mxu0
    %2584 = vdwg.mxu0
    %v2589 = vrot.slane %v2556, 7
    %v2590 = vrot.slane %v2569, 6
    %v2591 = vrot.slane %v2582, 5
    %v2592 = vsel %vm716, %v2543, %v2589
    %v2593 = vsel %vm718, %v2590, %v2591
    %v2594 = vsel %vm720, %v2592, %v2593
    %v2595 = vsel %vm722, %v2543, %v2589
    %v2596 = vsel %vm724, %v2590, %v2591
    %v2597 = vsel %vm726, %v2595, %v2596
    %v2598 = vrot.slane %v2597, 1
    %v2599 = vsel %vm718, %v2543, %v2589
    %v2600 = vsel %vm730, %v2590, %v2591
    %v2601 = vsel %vm732, %v2599, %v2600
    %v2602 = vrot.slane %v2601, 2
    %v2603 = vsel %vm724, %v2543, %v2589
    %v2604 = vsel %vm736, %v2590, %v2591
    %v2605 = vsel %vm738, %v2603, %v2604
    %v2606 = vrot.slane %v2605, 3
    %v2607 = vsel %vm730, %v2543, %v2589
    %v2608 = vsel %vm742, %v2590, %v2591
    %v2609 = vsel %vm744, %v2607, %v2608
    %v2610 = vrot.slane %v2609, 4
    %v2611 = vsel %vm736, %v2543, %v2589
    %v2612 = vsel %vm748, %v2591, %v2590
    %v2613 = vsel %vm750, %v2611, %v2612
    %v2614 = vrot.slane %v2613, 5
    %v2615 = vsel %vm742, %v2543, %v2589
    %v2616 = vsel %vm716, %v2590, %v2591
    %v2617 = vsel %vm755, %v2616, %v2615
    %v2618 = vrot.slane %v2617, 6
    %v2619 = vsel %vm748, %v2589, %v2543
    %v2620 = vsel %vm722, %v2590, %v2591
    %v2621 = vsel %vm760, %v2620, %v2619
    %v2622 = vrot.slane %v2621, 7
    %v2631 = vadd.f32 %v2286, %v2594
    %v2632 = vadd.f32 %v2288, %v2598
    %v2633 = vadd.f32 %v2290, %v2602
    %v2634 = vadd.f32 %v2292, %v2606
    %v2635 = vadd.f32 %v2294, %v2610
    %v2636 = vadd.f32 %v2296, %v2614
    %v2637 = vadd.f32 %v2298, %v2618
    %v2638 = vadd.f32 %v2300, %v2622
    %v2639 = vxor.u32 %v2631, 2147483648
    %v2640 = vxor.u32 %v2632, 2147483648
    %v2641 = vxor.u32 %v2633, 2147483648
    %v2642 = vxor.u32 %v2634, 2147483648
    %v2643 = vxor.u32 %v2635, 2147483648
    %v2644 = vxor.u32 %v2636, 2147483648
    %v2645 = vxor.u32 %v2637, 2147483648
    %v2646 = vxor.u32 %v2638, 2147483648
    %v2647 = vmul.f32 %v2639, 1.442695
    %v2648 = vpow.pop %v2647
    %v2649 = vmul.f32 %v2640, 1.442695
    %v2650 = vpow.pop %v2649
    %v2651 = vmul.f32 %v2641, 1.442695
    %v2652 = vpow.pop %v2651
    %v2653 = vmul.f32 %v2642, 1.442695
    %v2654 = vpow.pop %v2653
    %v2655 = vmul.f32 %v2643, 1.442695
    %v2656 = vpow.pop %v2655
    %v2657 = vmul.f32 %v2644, 1.442695
    %v2658 = vpow.pop %v2657
    %v2659 = vmul.f32 %v2645, 1.442695
    %v2660 = vpow.pop %v2659
    %v2661 = vmul.f32 %v2646, 1.442695
    %v2662 = vpow.pop %v2661
    %v2663 = vadd.f32 %v2648, 1.0
    %v2664 = vadd.f32 %v2650, 1.0
    %v2665 = vadd.f32 %v2652, 1.0
    %v2666 = vadd.f32 %v2654, 1.0
    %v2667 = vadd.f32 %v2656, 1.0
    %v2668 = vadd.f32 %v2658, 1.0
    %v2669 = vadd.f32 %v2660, 1.0
    %v2670 = vadd.f32 %v2662, 1.0
    %v2671 = vrcp.pop %v2663
    %v2672 = vmul.f32 %v2663, %v2671
    %v2673 = vsub.f32 1.0, %v2672
    %v2674 = vmul.f32 %v2671, %v2673
    %v2675 = vadd.f32 %v2671, %v2674
    %vm2676 = vweird.f32 %v2663
    %vm2677 = vweird.f32 %v2671
    %vm2678 = vmor %vm2676, %vm2677
    %v2679 = vsel %vm2678, %v2671, %v2675
    %v2680 = vand.u32 2147483647, %v2663
    %vm2681 = vcmp.eq.f32.partialorder %v2680, 8.507059e+37
    %v2682 = vand.u32 %v2663, 2147483648
    %v2683 = vor.u32 1.1754944e-38, %v2682
    %v2684 = vsel %vm2681, %v2683, %v2679
    %v2685 = vmul.f32 1.0, %v2684
    %v2686 = vrcp.pop %v2664
    %v2687 = vmul.f32 %v2664, %v2686
    %v2688 = vsub.f32 1.0, %v2687
    %v2689 = vmul.f32 %v2686, %v2688
    %v2690 = vadd.f32 %v2686, %v2689
    %vm2691 = vweird.f32 %v2664
    %vm2692 = vweird.f32 %v2686
    %vm2693 = vmor %vm2691, %vm2692
    %v2694 = vsel %vm2693, %v2686, %v2690
    %v2695 = vand.u32 2147483647, %v2664
    %vm2696 = vcmp.eq.f32.partialorder %v2695, 8.507059e+37
    %v2697 = vand.u32 %v2664, 2147483648
    %v2698 = vor.u32 1.1754944e-38, %v2697
    %v2699 = vsel %vm2696, %v2698, %v2694
    %v2700 = vmul.f32 1.0, %v2699
    %v2701 = vrcp.pop %v2665
    %v2702 = vmul.f32 %v2665, %v2701
    %v2703 = vsub.f32 1.0, %v2702
    %v2704 = vmul.f32 %v2701, %v2703
    %v2705 = vadd.f32 %v2701, %v2704
    %vm2706 = vweird.f32 %v2665
    %vm2707 = vweird.f32 %v2701
    %vm2708 = vmor %vm2706, %vm2707
    %v2709 = vsel %vm2708, %v2701, %v2705
    %v2710 = vand.u32 2147483647, %v2665
    %vm2711 = vcmp.eq.f32.partialorder %v2710, 8.507059e+37
    %v2712 = vand.u32 %v2665, 2147483648
    %v2713 = vor.u32 1.1754944e-38, %v2712
    %v2714 = vsel %vm2711, %v2713, %v2709
    %v2715 = vmul.f32 1.0, %v2714
    %v2716 = vrcp.pop %v2666
    %v2717 = vmul.f32 %v2666, %v2716
    %v2718 = vsub.f32 1.0, %v2717
    %v2719 = vmul.f32 %v2716, %v2718
    %v2720 = vadd.f32 %v2716, %v2719
    %vm2721 = vweird.f32 %v2666
    %vm2722 = vweird.f32 %v2716
    %vm2723 = vmor %vm2721, %vm2722
    %v2724 = vsel %vm2723, %v2716, %v2720
    %v2725 = vand.u32 2147483647, %v2666
    %vm2726 = vcmp.eq.f32.partialorder %v2725, 8.507059e+37
    %v2727 = vand.u32 %v2666, 2147483648
    %v2728 = vor.u32 1.1754944e-38, %v2727
    %v2729 = vsel %vm2726, %v2728, %v2724
    %v2730 = vmul.f32 1.0, %v2729
    %v2731 = vrcp.pop %v2667
    %v2732 = vmul.f32 %v2667, %v2731
    %v2733 = vsub.f32 1.0, %v2732
    %v2734 = vmul.f32 %v2731, %v2733
    %v2735 = vadd.f32 %v2731, %v2734
    %vm2736 = vweird.f32 %v2667
    %vm2737 = vweird.f32 %v2731
    %vm2738 = vmor %vm2736, %vm2737
    %v2739 = vsel %vm2738, %v2731, %v2735
    %v2740 = vand.u32 2147483647, %v2667
    %vm2741 = vcmp.eq.f32.partialorder %v2740, 8.507059e+37
    %v2742 = vand.u32 %v2667, 2147483648
    %v2743 = vor.u32 1.1754944e-38, %v2742
    %v2744 = vsel %vm2741, %v2743, %v2739
    %v2745 = vmul.f32 1.0, %v2744
    %v2746 = vrcp.pop %v2668
    %v2747 = vmul.f32 %v2668, %v2746
    %v2748 = vsub.f32 1.0, %v2747
    %v2749 = vmul.f32 %v2746, %v2748
    %v2750 = vadd.f32 %v2746, %v2749
    %vm2751 = vweird.f32 %v2668
    %vm2752 = vweird.f32 %v2746
    %vm2753 = vmor %vm2751, %vm2752
    %v2754 = vsel %vm2753, %v2746, %v2750
    %v2755 = vand.u32 2147483647, %v2668
    %vm2756 = vcmp.eq.f32.partialorder %v2755, 8.507059e+37
    %v2757 = vand.u32 %v2668, 2147483648
    %v2758 = vor.u32 1.1754944e-38, %v2757
    %v2759 = vsel %vm2756, %v2758, %v2754
    %v2760 = vmul.f32 1.0, %v2759
    %v2761 = vrcp.pop %v2669
    %v2762 = vmul.f32 %v2669, %v2761
    %v2763 = vsub.f32 1.0, %v2762
    %v2764 = vmul.f32 %v2761, %v2763
    %v2765 = vadd.f32 %v2761, %v2764
    %vm2766 = vweird.f32 %v2669
    %vm2767 = vweird.f32 %v2761
    %vm2768 = vmor %vm2766, %vm2767
    %v2769 = vsel %vm2768, %v2761, %v2765
    %v2770 = vand.u32 2147483647, %v2669
    %vm2771 = vcmp.eq.f32.partialorder %v2770, 8.507059e+37
    %v2772 = vand.u32 %v2669, 2147483648
    %v2773 = vor.u32 1.1754944e-38, %v2772
    %v2774 = vsel %vm2771, %v2773, %v2769
    %v2775 = vmul.f32 1.0, %v2774
    %v2776 = vrcp.pop %v2670
    %v2777 = vmul.f32 %v2670, %v2776
    %v2778 = vsub.f32 1.0, %v2777
    %v2779 = vmul.f32 %v2776, %v2778
    %v2780 = vadd.f32 %v2776, %v2779
    %vm2781 = vweird.f32 %v2670
    %vm2782 = vweird.f32 %v2776
    %vm2783 = vmor %vm2781, %vm2782
    %v2784 = vsel %vm2783, %v2776, %v2780
    %v2785 = vand.u32 2147483647, %v2670
    %vm2786 = vcmp.eq.f32.partialorder %v2785, 8.507059e+37
    %v2787 = vand.u32 %v2670, 2147483648
    %v2788 = vor.u32 1.1754944e-38, %v2787
    %v2789 = vsel %vm2786, %v2788, %v2784
    %v2790 = vmul.f32 1.0, %v2789
    %v2799 = vrot.slane %v2631, 1
    %v2800 = vrot.slane %v2632, 1
    %v2801 = vrot.slane %v2633, 1
    %v2802 = vrot.slane %v2634, 1
    %v2803 = vrot.slane %v2635, 1
    %v2804 = vrot.slane %v2636, 1
    %v2805 = vrot.slane %v2637, 1
    %v2806 = vrot.slane %v2638, 1
    %v2815 = vxor.u32 %v2799, 2147483648
    %v2816 = vxor.u32 %v2800, 2147483648
    %v2817 = vxor.u32 %v2801, 2147483648
    %v2818 = vxor.u32 %v2802, 2147483648
    %v2819 = vxor.u32 %v2803, 2147483648
    %v2820 = vxor.u32 %v2804, 2147483648
    %v2821 = vxor.u32 %v2805, 2147483648
    %v2822 = vxor.u32 %v2806, 2147483648
    %v2823 = vmul.f32 %v2815, 1.442695
    %v2824 = vpow.pop %v2823
    %v2825 = vmul.f32 %v2816, 1.442695
    %v2826 = vpow.pop %v2825
    %v2827 = vmul.f32 %v2817, 1.442695
    %v2828 = vpow.pop %v2827
    %v2829 = vmul.f32 %v2818, 1.442695
    %v2830 = vpow.pop %v2829
    %v2831 = vmul.f32 %v2819, 1.442695
    %v2832 = vpow.pop %v2831
    %v2833 = vmul.f32 %v2820, 1.442695
    %v2834 = vpow.pop %v2833
    %v2835 = vmul.f32 %v2821, 1.442695
    %v2836 = vpow.pop %v2835
    %v2837 = vmul.f32 %v2822, 1.442695
    %v2838 = vpow.pop %v2837
    %v2839 = vadd.f32 %v2824, 1.0
    %v2840 = vadd.f32 %v2826, 1.0
    %v2841 = vadd.f32 %v2828, 1.0
    %v2842 = vadd.f32 %v2830, 1.0
    %v2843 = vadd.f32 %v2832, 1.0
    %v2844 = vadd.f32 %v2834, 1.0
    %v2845 = vadd.f32 %v2836, 1.0
    %v2846 = vadd.f32 %v2838, 1.0
    %v2847 = vrcp.pop %v2839
    %v2848 = vmul.f32 %v2839, %v2847
    %v2849 = vsub.f32 1.0, %v2848
    %v2850 = vmul.f32 %v2847, %v2849
    %v2851 = vadd.f32 %v2847, %v2850
    %vm2852 = vweird.f32 %v2839
    %vm2853 = vweird.f32 %v2847
    %vm2854 = vmor %vm2852, %vm2853
    %v2855 = vsel %vm2854, %v2847, %v2851
    %v2856 = vand.u32 2147483647, %v2839
    %vm2857 = vcmp.eq.f32.partialorder %v2856, 8.507059e+37
    %v2858 = vand.u32 %v2839, 2147483648
    %v2859 = vor.u32 1.1754944e-38, %v2858
    %v2860 = vsel %vm2857, %v2859, %v2855
    %v2861 = vmul.f32 1.0, %v2860
    %v2862 = vrcp.pop %v2840
    %v2863 = vmul.f32 %v2840, %v2862
    %v2864 = vsub.f32 1.0, %v2863
    %v2865 = vmul.f32 %v2862, %v2864
    %v2866 = vadd.f32 %v2862, %v2865
    %vm2867 = vweird.f32 %v2840
    %vm2868 = vweird.f32 %v2862
    %vm2869 = vmor %vm2867, %vm2868
    %v2870 = vsel %vm2869, %v2862, %v2866
    %v2871 = vand.u32 2147483647, %v2840
    %vm2872 = vcmp.eq.f32.partialorder %v2871, 8.507059e+37
    %v2873 = vand.u32 %v2840, 2147483648
    %v2874 = vor.u32 1.1754944e-38, %v2873
    %v2875 = vsel %vm2872, %v2874, %v2870
    %v2876 = vmul.f32 1.0, %v2875
    %v2877 = vrcp.pop %v2841
    %v2878 = vmul.f32 %v2841, %v2877
    %v2879 = vsub.f32 1.0, %v2878
    %v2880 = vmul.f32 %v2877, %v2879
    %v2881 = vadd.f32 %v2877, %v2880
    %vm2882 = vweird.f32 %v2841
    %vm2883 = vweird.f32 %v2877
    %vm2884 = vmor %vm2882, %vm2883
    %v2885 = vsel %vm2884, %v2877, %v2881
    %v2886 = vand.u32 2147483647, %v2841
    %vm2887 = vcmp.eq.f32.partialorder %v2886, 8.507059e+37
    %v2888 = vand.u32 %v2841, 2147483648
    %v2889 = vor.u32 1.1754944e-38, %v2888
    %v2890 = vsel %vm2887, %v2889, %v2885
    %v2891 = vmul.f32 1.0, %v2890
    %v2892 = vrcp.pop %v2842
    %v2893 = vmul.f32 %v2842, %v2892
    %v2894 = vsub.f32 1.0, %v2893
    %v2895 = vmul.f32 %v2892, %v2894
    %v2896 = vadd.f32 %v2892, %v2895
    %vm2897 = vweird.f32 %v2842
    %vm2898 = vweird.f32 %v2892
    %vm2899 = vmor %vm2897, %vm2898
    %v2900 = vsel %vm2899, %v2892, %v2896
    %v2901 = vand.u32 2147483647, %v2842
    %vm2902 = vcmp.eq.f32.partialorder %v2901, 8.507059e+37
    %v2903 = vand.u32 %v2842, 2147483648
    %v2904 = vor.u32 1.1754944e-38, %v2903
    %v2905 = vsel %vm2902, %v2904, %v2900
    %v2906 = vmul.f32 1.0, %v2905
    %v2907 = vrcp.pop %v2843
    %v2908 = vmul.f32 %v2843, %v2907
    %v2909 = vsub.f32 1.0, %v2908
    %v2910 = vmul.f32 %v2907, %v2909
    %v2911 = vadd.f32 %v2907, %v2910
    %vm2912 = vweird.f32 %v2843
    %vm2913 = vweird.f32 %v2907
    %vm2914 = vmor %vm2912, %vm2913
    %v2915 = vsel %vm2914, %v2907, %v2911
    %v2916 = vand.u32 2147483647, %v2843
    %vm2917 = vcmp.eq.f32.partialorder %v2916, 8.507059e+37
    %v2918 = vand.u32 %v2843, 2147483648
    %v2919 = vor.u32 1.1754944e-38, %v2918
    %v2920 = vsel %vm2917, %v2919, %v2915
    %v2921 = vmul.f32 1.0, %v2920
    %v2922 = vrcp.pop %v2844
    %v2923 = vmul.f32 %v2844, %v2922
    %v2924 = vsub.f32 1.0, %v2923
    %v2925 = vmul.f32 %v2922, %v2924
    %v2926 = vadd.f32 %v2922, %v2925
    %vm2927 = vweird.f32 %v2844
    %vm2928 = vweird.f32 %v2922
    %vm2929 = vmor %vm2927, %vm2928
    %v2930 = vsel %vm2929, %v2922, %v2926
    %v2931 = vand.u32 2147483647, %v2844
    %vm2932 = vcmp.eq.f32.partialorder %v2931, 8.507059e+37
    %v2933 = vand.u32 %v2844, 2147483648
    %v2934 = vor.u32 1.1754944e-38, %v2933
    %v2935 = vsel %vm2932, %v2934, %v2930
    %v2936 = vmul.f32 1.0, %v2935
    %v2937 = vrcp.pop %v2845
    %v2938 = vmul.f32 %v2845, %v2937
    %v2939 = vsub.f32 1.0, %v2938
    %v2940 = vmul.f32 %v2937, %v2939
    %v2941 = vadd.f32 %v2937, %v2940
    %vm2942 = vweird.f32 %v2845
    %vm2943 = vweird.f32 %v2937
    %vm2944 = vmor %vm2942, %vm2943
    %v2945 = vsel %vm2944, %v2937, %v2941
    %v2946 = vand.u32 2147483647, %v2845
    %vm2947 = vcmp.eq.f32.partialorder %v2946, 8.507059e+37
    %v2948 = vand.u32 %v2845, 2147483648
    %v2949 = vor.u32 1.1754944e-38, %v2948
    %v2950 = vsel %vm2947, %v2949, %v2945
    %v2951 = vmul.f32 1.0, %v2950
    %v2952 = vrcp.pop %v2846
    %v2953 = vmul.f32 %v2846, %v2952
    %v2954 = vsub.f32 1.0, %v2953
    %v2955 = vmul.f32 %v2952, %v2954
    %v2956 = vadd.f32 %v2952, %v2955
    %vm2957 = vweird.f32 %v2846
    %vm2958 = vweird.f32 %v2952
    %vm2959 = vmor %vm2957, %vm2958
    %v2960 = vsel %vm2959, %v2952, %v2956
    %v2961 = vand.u32 2147483647, %v2846
    %vm2962 = vcmp.eq.f32.partialorder %v2961, 8.507059e+37
    %v2963 = vand.u32 %v2846, 2147483648
    %v2964 = vor.u32 1.1754944e-38, %v2963
    %v2965 = vsel %vm2962, %v2964, %v2960
    %v2966 = vmul.f32 1.0, %v2965
    %v2967 = vrot.slane %v2631, 2
    %v2968 = vrot.slane %v2632, 2
    %v2969 = vrot.slane %v2633, 2
    %v2970 = vrot.slane %v2634, 2
    %v2971 = vrot.slane %v2635, 2
    %v2972 = vrot.slane %v2636, 2
    %v2973 = vrot.slane %v2637, 2
    %v2974 = vrot.slane %v2638, 2
    %v2983 = vtanh.pop %v2967
    %v2984 = vtanh.pop %v2968
    %v2985 = vtanh.pop %v2969
    %v2986 = vtanh.pop %v2970
    %v2987 = vtanh.pop %v2971
    %v2988 = vtanh.pop %v2972
    %v2989 = vtanh.pop %v2973
    %v2990 = vtanh.pop %v2974
    %v2991 = vrot.slane %v2631, 3
    %v2992 = vrot.slane %v2632, 3
    %v2993 = vrot.slane %v2633, 3
    %v2994 = vrot.slane %v2634, 3
    %v2995 = vrot.slane %v2635, 3
    %v2996 = vrot.slane %v2636, 3
    %v2997 = vrot.slane %v2637, 3
    %v2998 = vrot.slane %v2638, 3
    %v3007 = vxor.u32 %v2991, 2147483648
    %v3008 = vxor.u32 %v2992, 2147483648
    %v3009 = vxor.u32 %v2993, 2147483648
    %v3010 = vxor.u32 %v2994, 2147483648
    %v3011 = vxor.u32 %v2995, 2147483648
    %v3012 = vxor.u32 %v2996, 2147483648
    %v3013 = vxor.u32 %v2997, 2147483648
    %v3014 = vxor.u32 %v2998, 2147483648
    %v3015 = vmul.f32 %v3007, 1.442695
    %v3016 = vpow.pop %v3015
    %v3017 = vmul.f32 %v3008, 1.442695
    %v3018 = vpow.pop %v3017
    %v3019 = vmul.f32 %v3009, 1.442695
    %v3020 = vpow.pop %v3019
    %v3021 = vmul.f32 %v3010, 1.442695
    %v3022 = vpow.pop %v3021
    %v3023 = vmul.f32 %v3011, 1.442695
    %v3024 = vpow.pop %v3023
    %v3025 = vmul.f32 %v3012, 1.442695
    %v3026 = vpow.pop %v3025
    %v3027 = vmul.f32 %v3013, 1.442695
    %v3028 = vpow.pop %v3027
    %v3029 = vmul.f32 %v3014, 1.442695
    %v3030 = vpow.pop %v3029
    %v3031 = vadd.f32 %v3016, 1.0
    %v3032 = vadd.f32 %v3018, 1.0
    %v3033 = vadd.f32 %v3020, 1.0
    %v3034 = vadd.f32 %v3022, 1.0
    %v3035 = vadd.f32 %v3024, 1.0
    %v3036 = vadd.f32 %v3026, 1.0
    %v3037 = vadd.f32 %v3028, 1.0
    %v3038 = vadd.f32 %v3030, 1.0
    %v3039 = vrcp.pop %v3031
    %v3040 = vmul.f32 %v3031, %v3039
    %v3041 = vsub.f32 1.0, %v3040
    %v3042 = vmul.f32 %v3039, %v3041
    %v3043 = vadd.f32 %v3039, %v3042
    %vm3044 = vweird.f32 %v3031
    %vm3045 = vweird.f32 %v3039
    %vm3046 = vmor %vm3044, %vm3045
    %v3047 = vsel %vm3046, %v3039, %v3043
    %v3048 = vand.u32 2147483647, %v3031
    %vm3049 = vcmp.eq.f32.partialorder %v3048, 8.507059e+37
    %v3050 = vand.u32 %v3031, 2147483648
    %v3051 = vor.u32 1.1754944e-38, %v3050
    %v3052 = vsel %vm3049, %v3051, %v3047
    %v3053 = vmul.f32 1.0, %v3052
    %v3054 = vrcp.pop %v3032
    %v3055 = vmul.f32 %v3032, %v3054
    %v3056 = vsub.f32 1.0, %v3055
    %v3057 = vmul.f32 %v3054, %v3056
    %v3058 = vadd.f32 %v3054, %v3057
    %vm3059 = vweird.f32 %v3032
    %vm3060 = vweird.f32 %v3054
    %vm3061 = vmor %vm3059, %vm3060
    %v3062 = vsel %vm3061, %v3054, %v3058
    %v3063 = vand.u32 2147483647, %v3032
    %vm3064 = vcmp.eq.f32.partialorder %v3063, 8.507059e+37
    %v3065 = vand.u32 %v3032, 2147483648
    %v3066 = vor.u32 1.1754944e-38, %v3065
    %v3067 = vsel %vm3064, %v3066, %v3062
    %v3068 = vmul.f32 1.0, %v3067
    %v3069 = vrcp.pop %v3033
    %v3070 = vmul.f32 %v3033, %v3069
    %v3071 = vsub.f32 1.0, %v3070
    %v3072 = vmul.f32 %v3069, %v3071
    %v3073 = vadd.f32 %v3069, %v3072
    %vm3074 = vweird.f32 %v3033
    %vm3075 = vweird.f32 %v3069
    %vm3076 = vmor %vm3074, %vm3075
    %v3077 = vsel %vm3076, %v3069, %v3073
    %v3078 = vand.u32 2147483647, %v3033
    %vm3079 = vcmp.eq.f32.partialorder %v3078, 8.507059e+37
    %v3080 = vand.u32 %v3033, 2147483648
    %v3081 = vor.u32 1.1754944e-38, %v3080
    %v3082 = vsel %vm3079, %v3081, %v3077
    %v3083 = vmul.f32 1.0, %v3082
    %v3084 = vrcp.pop %v3034
    %v3085 = vmul.f32 %v3034, %v3084
    %v3086 = vsub.f32 1.0, %v3085
    %v3087 = vmul.f32 %v3084, %v3086
    %v3088 = vadd.f32 %v3084, %v3087
    %vm3089 = vweird.f32 %v3034
    %vm3090 = vweird.f32 %v3084
    %vm3091 = vmor %vm3089, %vm3090
    %v3092 = vsel %vm3091, %v3084, %v3088
    %v3093 = vand.u32 2147483647, %v3034
    %vm3094 = vcmp.eq.f32.partialorder %v3093, 8.507059e+37
    %v3095 = vand.u32 %v3034, 2147483648
    %v3096 = vor.u32 1.1754944e-38, %v3095
    %v3097 = vsel %vm3094, %v3096, %v3092
    %v3098 = vmul.f32 1.0, %v3097
    %v3099 = vrcp.pop %v3035
    %v3100 = vmul.f32 %v3035, %v3099
    %v3101 = vsub.f32 1.0, %v3100
    %v3102 = vmul.f32 %v3099, %v3101
    %v3103 = vadd.f32 %v3099, %v3102
    %vm3104 = vweird.f32 %v3035
    %vm3105 = vweird.f32 %v3099
    %vm3106 = vmor %vm3104, %vm3105
    %v3107 = vsel %vm3106, %v3099, %v3103
    %v3108 = vand.u32 2147483647, %v3035
    %vm3109 = vcmp.eq.f32.partialorder %v3108, 8.507059e+37
    %v3110 = vand.u32 %v3035, 2147483648
    %v3111 = vor.u32 1.1754944e-38, %v3110
    %v3112 = vsel %vm3109, %v3111, %v3107
    %v3113 = vmul.f32 1.0, %v3112
    %v3114 = vrcp.pop %v3036
    %v3115 = vmul.f32 %v3036, %v3114
    %v3116 = vsub.f32 1.0, %v3115
    %v3117 = vmul.f32 %v3114, %v3116
    %v3118 = vadd.f32 %v3114, %v3117
    %vm3119 = vweird.f32 %v3036
    %vm3120 = vweird.f32 %v3114
    %vm3121 = vmor %vm3119, %vm3120
    %v3122 = vsel %vm3121, %v3114, %v3118
    %v3123 = vand.u32 2147483647, %v3036
    %vm3124 = vcmp.eq.f32.partialorder %v3123, 8.507059e+37
    %v3125 = vand.u32 %v3036, 2147483648
    %v3126 = vor.u32 1.1754944e-38, %v3125
    %v3127 = vsel %vm3124, %v3126, %v3122
    %v3128 = vmul.f32 1.0, %v3127
    %v3129 = vrcp.pop %v3037
    %v3130 = vmul.f32 %v3037, %v3129
    %v3131 = vsub.f32 1.0, %v3130
    %v3132 = vmul.f32 %v3129, %v3131
    %v3133 = vadd.f32 %v3129, %v3132
    %vm3134 = vweird.f32 %v3037
    %vm3135 = vweird.f32 %v3129
    %vm3136 = vmor %vm3134, %vm3135
    %v3137 = vsel %vm3136, %v3129, %v3133
    %v3138 = vand.u32 2147483647, %v3037
    %vm3139 = vcmp.eq.f32.partialorder %v3138, 8.507059e+37
    %v3140 = vand.u32 %v3037, 2147483648
    %v3141 = vor.u32 1.1754944e-38, %v3140
    %v3142 = vsel %vm3139, %v3141, %v3137
    %v3143 = vmul.f32 1.0, %v3142
    %v3144 = vrcp.pop %v3038
    %v3145 = vmul.f32 %v3038, %v3144
    %v3146 = vsub.f32 1.0, %v3145
    %v3147 = vmul.f32 %v3144, %v3146
    %v3148 = vadd.f32 %v3144, %v3147
    %vm3149 = vweird.f32 %v3038
    %vm3150 = vweird.f32 %v3144
    %vm3151 = vmor %vm3149, %vm3150
    %v3152 = vsel %vm3151, %v3144, %v3148
    %v3153 = vand.u32 2147483647, %v3038
    %vm3154 = vcmp.eq.f32.partialorder %v3153, 8.507059e+37
    %v3155 = vand.u32 %v3038, 2147483648
    %v3156 = vor.u32 1.1754944e-38, %v3155
    %v3157 = vsel %vm3154, %v3156, %v3152
    %v3158 = vmul.f32 1.0, %v3157
    %v3159 = vmul.f32 %v2861, %v2253
    %v3160 = vmul.f32 %v2876, %v2254
    %v3161 = vmul.f32 %v2891, %v2255
    %v3162 = vmul.f32 %v2906, %v2256
    %v3163 = vmul.f32 %v2921, %v2257
    %v3164 = vmul.f32 %v2936, %v2258
    %v3165 = vmul.f32 %v2951, %v2259
    %v3166 = vmul.f32 %v2966, %v2260
    %v3167 = vmul.f32 %v2685, %v2983
    %v3168 = vmul.f32 %v2700, %v2984
    %v3169 = vmul.f32 %v2715, %v2985
    %v3170 = vmul.f32 %v2730, %v2986
    %v3171 = vmul.f32 %v2745, %v2987
    %v3172 = vmul.f32 %v2760, %v2988
    %v3173 = vmul.f32 %v2775, %v2989
    %v3174 = vmul.f32 %v2790, %v2990
    %v3175 = vadd.f32 %v3159, %v3167
    %v3176 = vadd.f32 %v3160, %v3168
    %v3177 = vadd.f32 %v3161, %v3169
    %v3178 = vadd.f32 %v3162, %v3170
    %v3179 = vadd.f32 %v3163, %v3171
    %v3180 = vadd.f32 %v3164, %v3172
    %v3181 = vadd.f32 %v3165, %v3173
    %v3182 = vadd.f32 %v3166, %v3174
    %v3183 = vtanh.pop %v3175
    %v3184 = vtanh.pop %v3176
    %v3185 = vtanh.pop %v3177
    %v3186 = vtanh.pop %v3178
    %v3187 = vtanh.pop %v3179
    %v3188 = vtanh.pop %v3180
    %v3189 = vtanh.pop %v3181
    %v3190 = vtanh.pop %v3182
    %v3191 = vmul.f32 %v3053, %v3183
    %v3192 = vmul.f32 %v3068, %v3184
    %v3193 = vmul.f32 %v3083, %v3185
    %v3194 = vmul.f32 %v3098, %v3186
    %v3195 = vmul.f32 %v3113, %v3187
    %v3196 = vmul.f32 %v3128, %v3188
    %v3197 = vmul.f32 %v3143, %v3189
    %v3198 = vmul.f32 %v3158, %v3190
    %3199 = vst [vmem:[#allocation3 + $0x2] sm:$0x1] %v3191
    %3200 = vst [vmem:[#allocation3 + $0xa] sm:$0x1] %v3192
    %3201 = vst [vmem:[#allocation3 + $0x12] sm:$0x1] %v3193
    %3202 = vst [vmem:[#allocation3 + $0x1a] sm:$0x1] %v3194
    %3203 = vst [vmem:[#allocation3 + $0x22] sm:$0x1] %v3195
    %3204 = vst [vmem:[#allocation3 + $0x2a] sm:$0x1] %v3196
    %3205 = vst [vmem:[#allocation3 + $0x32] sm:$0x1] %v3197
    %3206 = vst [vmem:[#allocation3 + $0x3a] sm:$0x1] %v3198
    %s3207 = scalar_lea.vmem [#allocation2], 3
    %v3208 = vld [vmem:[%s3207] ss:$8 sm:$0xf]
    %s3209 = scalar_lea.vmem [#allocation2], 35
    %v3210 = vld [vmem:[%s3209] ss:$8 sm:$0xf]
    %s3211 = scalar_lea.vmem [#allocation2], 67
    %v3212 = vld [vmem:[%s3211] ss:$8 sm:$0xf]
    %s3213 = scalar_lea.vmem [#allocation2], 99
    %v3214 = vld [vmem:[%s3213] ss:$8 sm:$0xf]
    %s3215 = scalar_lea.vmem [#allocation2], 131
    %v3216 = vld [vmem:[%s3215] ss:$8 sm:$0xf]
    %s3217 = scalar_lea.vmem [#allocation2], 163
    %v3218 = vld [vmem:[%s3217] ss:$8 sm:$0xf]
    %s3219 = scalar_lea.vmem [#allocation2], 195
    %v3220 = vld [vmem:[%s3219] ss:$8 sm:$0xf]
    %s3221 = scalar_lea.vmem [#allocation2], 227
    %v3222 = vld [vmem:[%s3221] ss:$8 sm:$0xf]
    %v3223 = vpack.c.bf16 %v3191, %v3191
    %v3224 = vpack.c.bf16 %v3192, %v3192
    %v3225 = vpack.c.bf16 %v3193, %v3193
    %v3226 = vpack.c.bf16 %v3194, %v3194
    %v3227 = vpack.c.bf16 %v3195, %v3195
    %v3228 = vpack.c.bf16 %v3196, %v3196
    %v3229 = vpack.c.bf16 %v3197, %v3197
    %v3230 = vpack.c.bf16 %v3198, %v3198
    %v3231 = vld [vmem:[#allocation11] sm:$0xff]
    %v3232 = vld [vmem:[#allocation11 + $0x8] sm:$0xff]
    %v3233 = vld [vmem:[#allocation11 + $0x10] sm:$0xff]
    %v3234 = vld [vmem:[#allocation11 + $0x18] sm:$0xff]
    %v3235 = vld [vmem:[#allocation11 + $0x20] sm:$0xff]
    %v3236 = vld [vmem:[#allocation11 + $0x28] sm:$0xff]
    %v3237 = vld [vmem:[#allocation11 + $0x30] sm:$0xff]
    %v3238 = vld [vmem:[#allocation11 + $0x38] sm:$0xff]
    %v3239 = vld [vmem:[#allocation11 + $0x40] sm:$0xff]
    %v3240 = vld [vmem:[#allocation11 + $0x48] sm:$0xff]
    %v3241 = vld [vmem:[#allocation11 + $0x50] sm:$0xff]
    %v3242 = vld [vmem:[#allocation11 + $0x58] sm:$0xff]
    %v3243 = vld [vmem:[#allocation11 + $0x60] sm:$0xff]
    %v3244 = vld [vmem:[#allocation11 + $0x68] sm:$0xff]
    %v3245 = vld [vmem:[#allocation11 + $0x70] sm:$0xff]
    %v3246 = vld [vmem:[#allocation11 + $0x78] sm:$0xff]
    %v3247 = vld [vmem:[#allocation11 + $0x80] sm:$0xff]
    %v3248 = vld [vmem:[#allocation11 + $0x88] sm:$0xff]
    %v3249 = vld [vmem:[#allocation11 + $0x90] sm:$0xff]
    %v3250 = vld [vmem:[#allocation11 + $0x98] sm:$0xff]
    %v3251 = vld [vmem:[#allocation11 + $0xa0] sm:$0xff]
    %v3252 = vld [vmem:[#allocation11 + $0xa8] sm:$0xff]
    %v3253 = vld [vmem:[#allocation11 + $0xb0] sm:$0xff]
    %v3254 = vld [vmem:[#allocation11 + $0xb8] sm:$0xff]
    %v3255 = vld [vmem:[#allocation11 + $0xc0] sm:$0xff]
    %v3256 = vld [vmem:[#allocation11 + $0xc8] sm:$0xff]
    %v3257 = vld [vmem:[#allocation11 + $0xd0] sm:$0xff]
    %v3258 = vld [vmem:[#allocation11 + $0xd8] sm:$0xff]
    %v3259 = vld [vmem:[#allocation11 + $0xe0] sm:$0xff]
    %v3260 = vld [vmem:[#allocation11 + $0xe8] sm:$0xff]
    %v3261 = vld [vmem:[#allocation11 + $0xf0] sm:$0xff]
    %v3262 = vld [vmem:[#allocation11 + $0xf8] sm:$0xff]
    %v3271 = vunpack.c.l.b16 %v3223
    %v3272 = vunpack.c.l.b16 %v3224
    %v3273 = vunpack.c.l.b16 %v3225
    %v3274 = vunpack.c.l.b16 %v3226
    %v3275 = vunpack.c.l.b16 %v3227
    %v3276 = vunpack.c.l.b16 %v3228
    %v3277 = vunpack.c.l.b16 %v3229
    %v3278 = vunpack.c.l.b16 %v3230
    %v3279 = vrot.slane %v3272, 7
    %v3280 = vsel %vm722, %v3279, %v3271
    %v3281 = vrot.slane %v3273, 6
    %v3282 = vsel %vm718, %v3281, %v3280
    %v3283 = vrot.slane %v3274, 5
    %v3284 = vsel %vm724, %v3283, %v3282
    %v3285 = vrot.slane %v3275, 4
    %v3286 = vsel %vm730, %v3285, %v3284
    %v3287 = vrot.slane %v3276, 3
    %v3288 = vsel %vm736, %v3287, %v3286
    %v3289 = vrot.slane %v3277, 2
    %v3290 = vsel %vm742, %v3289, %v3288
    %v3291 = vrot.slane %v3278, 1
    %v3292 = vsel %vm1447, %v3291, %v3290
    %v3293 = vpack.c.b16 %v3292, %v3292
    %v3327 = vunpack.c.l.b16 %v3231
    %v3328 = vunpack.c.h.b16 %v3231
    %v3329 = vunpack.c.l.b16 %v3232
    %v3330 = vunpack.c.h.b16 %v3232
    %v3331 = vunpack.c.l.b16 %v3233
    %v3332 = vunpack.c.h.b16 %v3233
    %v3333 = vunpack.c.l.b16 %v3234
    %v3334 = vunpack.c.h.b16 %v3234
    %v3335 = vunpack.c.l.b16 %v3235
    %v3336 = vunpack.c.h.b16 %v3235
    %v3337 = vunpack.c.l.b16 %v3236
    %v3338 = vunpack.c.h.b16 %v3236
    %v3339 = vunpack.c.l.b16 %v3237
    %v3340 = vunpack.c.h.b16 %v3237
    %v3341 = vunpack.c.l.b16 %v3238
    %v3342 = vunpack.c.h.b16 %v3238
    %v3343 = vunpack.c.l.b16 %v3239
    %v3344 = vunpack.c.h.b16 %v3239
    %v3345 = vunpack.c.l.b16 %v3240
    %v3346 = vunpack.c.h.b16 %v3240
    %v3347 = vunpack.c.l.b16 %v3241
    %v3348 = vunpack.c.h.b16 %v3241
    %v3349 = vunpack.c.l.b16 %v3242
    %v3350 = vunpack.c.h.b16 %v3242
    %v3351 = vunpack.c.l.b16 %v3243
    %v3352 = vunpack.c.h.b16 %v3243
    %v3353 = vunpack.c.l.b16 %v3244
    %v3354 = vunpack.c.h.b16 %v3244
    %v3355 = vunpack.c.l.b16 %v3245
    %v3356 = vunpack.c.h.b16 %v3245
    %v3357 = vunpack.c.l.b16 %v3246
    %v3358 = vunpack.c.h.b16 %v3246
    %v3359 = vunpack.c.l.b16 %v3247
    %v3360 = vunpack.c.h.b16 %v3247
    %v3361 = vunpack.c.l.b16 %v3248
    %v3362 = vunpack.c.h.b16 %v3248
    %v3363 = vunpack.c.l.b16 %v3249
    %v3364 = vunpack.c.h.b16 %v3249
    %v3365 = vunpack.c.l.b16 %v3250
    %v3366 = vunpack.c.h.b16 %v3250
    %v3367 = vunpack.c.l.b16 %v3251
    %v3368 = vunpack.c.h.b16 %v3251
    %v3369 = vunpack.c.l.b16 %v3252
    %v3370 = vunpack.c.h.b16 %v3252
    %v3371 = vunpack.c.l.b16 %v3253
    %v3372 = vunpack.c.h.b16 %v3253
    %v3373 = vunpack.c.l.b16 %v3254
    %v3374 = vunpack.c.h.b16 %v3254
    %v3375 = vunpack.c.l.b16 %v3255
    %v3376 = vunpack.c.h.b16 %v3255
    %v3377 = vunpack.c.l.b16 %v3256
    %v3378 = vunpack.c.h.b16 %v3256
    %v3379 = vunpack.c.l.b16 %v3257
    %v3380 = vunpack.c.h.b16 %v3257
    %v3381 = vunpack.c.l.b16 %v3258
    %v3382 = vunpack.c.h.b16 %v3258
    %v3383 = vunpack.c.l.b16 %v3259
    %v3384 = vunpack.c.h.b16 %v3259
    %v3385 = vunpack.c.l.b16 %v3260
    %v3386 = vunpack.c.h.b16 %v3260
    %v3387 = vunpack.c.l.b16 %v3261
    %v3388 = vunpack.c.h.b16 %v3261
    %v3389 = vunpack.c.l.b16 %v3262
    %v3390 = vunpack.c.h.b16 %v3262
    %v3391 = vpack.c.b16 %v3331, %v3327
    %v3392 = vpack.c.b16 %v3332, %v3328
    %v3393 = vpack.c.b16 %v3333, %v3329
    %v3394 = vpack.c.b16 %v3334, %v3330
    %v3395 = vpack.c.b16 %v3339, %v3335
    %v3396 = vpack.c.b16 %v3340, %v3336
    %v3397 = vpack.c.b16 %v3341, %v3337
    %v3398 = vpack.c.b16 %v3342, %v3338
    %v3399 = vpack.c.b16 %v3347, %v3343
    %v3400 = vpack.c.b16 %v3348, %v3344
    %v3401 = vpack.c.b16 %v3349, %v3345
    %v3402 = vpack.c.b16 %v3350, %v3346
    %v3403 = vpack.c.b16 %v3355, %v3351
    %v3404 = vpack.c.b16 %v3356, %v3352
    %v3405 = vpack.c.b16 %v3357, %v3353
    %v3406 = vpack.c.b16 %v3358, %v3354
    %v3407 = vpack.c.b16 %v3363, %v3359
    %v3408 = vpack.c.b16 %v3364, %v3360
    %v3409 = vpack.c.b16 %v3365, %v3361
    %v3410 = vpack.c.b16 %v3366, %v3362
    %v3411 = vpack.c.b16 %v3371, %v3367
    %v3412 = vpack.c.b16 %v3372, %v3368
    %v3413 = vpack.c.b16 %v3373, %v3369
    %v3414 = vpack.c.b16 %v3374, %v3370
    %v3415 = vpack.c.b16 %v3379, %v3375
    %v3416 = vpack.c.b16 %v3380, %v3376
    %v3417 = vpack.c.b16 %v3381, %v3377
    %v3418 = vpack.c.b16 %v3382, %v3378
    %v3419 = vpack.c.b16 %v3387, %v3383
    %v3420 = vpack.c.b16 %v3388, %v3384
    %v3421 = vpack.c.b16 %v3389, %v3385
    %v3422 = vpack.c.b16 %v3390, %v3386
    %3455 = vmatpush.bf16.msra.mxu0 %v3419
    %3456 = vmatpush.bf16.msra.mxu0 %v3415
    %3457 = vmatpush.bf16.msra.mxu0 %v3411
    %3458 = vmatpush.bf16.msra.mxu0 %v3407
    %3459 = vmatpush.bf16.msra.mxu0 %v3403
    %3460 = vmatpush.bf16.msra.mxu0 %v3399
    %3461 = vmatpush.bf16.msra.mxu0 %v3395
    %3462 = vmatpush.bf16.msra.mxu0 %v3391
    %3463 = vmatmul.bf16.gmra.mxu0 %v3293
    %v3464 = vpop.f32.mrf.mxu0
    %v3465 = vadd.f32 0.0, %v3464
    %v3466 = vpop.f32.mrf.mxu0
    %3467 = vdwg.mxu0
    %3468 = vmatpush.bf16.msra.mxu0 %v3420
    %3469 = vmatpush.bf16.msra.mxu0 %v3416
    %3470 = vmatpush.bf16.msra.mxu0 %v3412
    %3471 = vmatpush.bf16.msra.mxu0 %v3408
    %3472 = vmatpush.bf16.msra.mxu0 %v3404
    %3473 = vmatpush.bf16.msra.mxu0 %v3400
    %3474 = vmatpush.bf16.msra.mxu0 %v3396
    %3475 = vmatpush.bf16.msra.mxu0 %v3392
    %3476 = vmatmul.bf16.gmra.mxu0 %v3293
    %v3477 = vpop.f32.mrf.mxu0
    %v3478 = vadd.f32 0.0, %v3477
    %v3479 = vpop.f32.mrf.mxu0
    %3480 = vdwg.mxu0
    %3481 = vmatpush.bf16.msra.mxu0 %v3421
    %3482 = vmatpush.bf16.msra.mxu0 %v3417
    %3483 = vmatpush.bf16.msra.mxu0 %v3413
    %3484 = vmatpush.bf16.msra.mxu0 %v3409
    %3485 = vmatpush.bf16.msra.mxu0 %v3405
    %3486 = vmatpush.bf16.msra.mxu0 %v3401
    %3487 = vmatpush.bf16.msra.mxu0 %v3397
    %3488 = vmatpush.bf16.msra.mxu0 %v3393
    %3489 = vmatmul.bf16.gmra.mxu0 %v3293
    %v3490 = vpop.f32.mrf.mxu0
    %v3491 = vadd.f32 0.0, %v3490
    %v3492 = vpop.f32.mrf.mxu0
    %3493 = vdwg.mxu0
    %3494 = vmatpush.bf16.msra.mxu0 %v3422
    %3495 = vmatpush.bf16.msra.mxu0 %v3418
    %3496 = vmatpush.bf16.msra.mxu0 %v3414
    %3497 = vmatpush.bf16.msra.mxu0 %v3410
    %3498 = vmatpush.bf16.msra.mxu0 %v3406
    %3499 = vmatpush.bf16.msra.mxu0 %v3402
    %3500 = vmatpush.bf16.msra.mxu0 %v3398
    %3501 = vmatpush.bf16.msra.mxu0 %v3394
    %3502 = vmatmul.bf16.gmra.mxu0 %v3293
    %v3503 = vpop.f32.mrf.mxu0
    %v3504 = vadd.f32 0.0, %v3503
    %v3505 = vpop.f32.mrf.mxu0
    %3506 = vdwg.mxu0
    %v3511 = vrot.slane %v3478, 7
    %v3512 = vrot.slane %v3491, 6
    %v3513 = vrot.slane %v3504, 5
    %v3514 = vsel %vm716, %v3465, %v3511
    %v3515 = vsel %vm718, %v3512, %v3513
    %v3516 = vsel %vm720, %v3514, %v3515
    %v3517 = vsel %vm722, %v3465, %v3511
    %v3518 = vsel %vm724, %v3512, %v3513
    %v3519 = vsel %vm726, %v3517, %v3518
    %v3520 = vrot.slane %v3519, 1
    %v3521 = vsel %vm718, %v3465, %v3511
    %v3522 = vsel %vm730, %v3512, %v3513
    %v3523 = vsel %vm732, %v3521, %v3522
    %v3524 = vrot.slane %v3523, 2
    %v3525 = vsel %vm724, %v3465, %v3511
    %v3526 = vsel %vm736, %v3512, %v3513
    %v3527 = vsel %vm738, %v3525, %v3526
    %v3528 = vrot.slane %v3527, 3
    %v3529 = vsel %vm730, %v3465, %v3511
    %v3530 = vsel %vm742, %v3512, %v3513
    %v3531 = vsel %vm744, %v3529, %v3530
    %v3532 = vrot.slane %v3531, 4
    %v3533 = vsel %vm736, %v3465, %v3511
    %v3534 = vsel %vm748, %v3513, %v3512
    %v3535 = vsel %vm750, %v3533, %v3534
    %v3536 = vrot.slane %v3535, 5
    %v3537 = vsel %vm742, %v3465, %v3511
    %v3538 = vsel %vm716, %v3512, %v3513
    %v3539 = vsel %vm755, %v3538, %v3537
    %v3540 = vrot.slane %v3539, 6
    %v3541 = vsel %vm748, %v3511, %v3465
    %v3542 = vsel %vm722, %v3512, %v3513
    %v3543 = vsel %vm760, %v3542, %v3541
    %v3544 = vrot.slane %v3543, 7
    %v3553 = vadd.f32 %v3208, %v3516
    %v3554 = vadd.f32 %v3210, %v3520
    %v3555 = vadd.f32 %v3212, %v3524
    %v3556 = vadd.f32 %v3214, %v3528
    %v3557 = vadd.f32 %v3216, %v3532
    %v3558 = vadd.f32 %v3218, %v3536
    %v3559 = vadd.f32 %v3220, %v3540
    %v3560 = vadd.f32 %v3222, %v3544
    %v3561 = vxor.u32 %v3553, 2147483648
    %v3562 = vxor.u32 %v3554, 2147483648
    %v3563 = vxor.u32 %v3555, 2147483648
    %v3564 = vxor.u32 %v3556, 2147483648
    %v3565 = vxor.u32 %v3557, 2147483648
    %v3566 = vxor.u32 %v3558, 2147483648
    %v3567 = vxor.u32 %v3559, 2147483648
    %v3568 = vxor.u32 %v3560, 2147483648
    %v3569 = vmul.f32 %v3561, 1.442695
    %v3570 = vpow.pop %v3569
    %v3571 = vmul.f32 %v3562, 1.442695
    %v3572 = vpow.pop %v3571
    %v3573 = vmul.f32 %v3563, 1.442695
    %v3574 = vpow.pop %v3573
    %v3575 = vmul.f32 %v3564, 1.442695
    %v3576 = vpow.pop %v3575
    %v3577 = vmul.f32 %v3565, 1.442695
    %v3578 = vpow.pop %v3577
    %v3579 = vmul.f32 %v3566, 1.442695
    %v3580 = vpow.pop %v3579
    %v3581 = vmul.f32 %v3567, 1.442695
    %v3582 = vpow.pop %v3581
    %v3583 = vmul.f32 %v3568, 1.442695
    %v3584 = vpow.pop %v3583
    %v3585 = vadd.f32 %v3570, 1.0
    %v3586 = vadd.f32 %v3572, 1.0
    %v3587 = vadd.f32 %v3574, 1.0
    %v3588 = vadd.f32 %v3576, 1.0
    %v3589 = vadd.f32 %v3578, 1.0
    %v3590 = vadd.f32 %v3580, 1.0
    %v3591 = vadd.f32 %v3582, 1.0
    %v3592 = vadd.f32 %v3584, 1.0
    %v3593 = vrcp.pop %v3585
    %v3594 = vmul.f32 %v3585, %v3593
    %v3595 = vsub.f32 1.0, %v3594
    %v3596 = vmul.f32 %v3593, %v3595
    %v3597 = vadd.f32 %v3593, %v3596
    %vm3598 = vweird.f32 %v3585
    %vm3599 = vweird.f32 %v3593
    %vm3600 = vmor %vm3598, %vm3599
    %v3601 = vsel %vm3600, %v3593, %v3597
    %v3602 = vand.u32 2147483647, %v3585
    %vm3603 = vcmp.eq.f32.partialorder %v3602, 8.507059e+37
    %v3604 = vand.u32 %v3585, 2147483648
    %v3605 = vor.u32 1.1754944e-38, %v3604
    %v3606 = vsel %vm3603, %v3605, %v3601
    %v3607 = vmul.f32 1.0, %v3606
    %v3608 = vrcp.pop %v3586
    %v3609 = vmul.f32 %v3586, %v3608
    %v3610 = vsub.f32 1.0, %v3609
    %v3611 = vmul.f32 %v3608, %v3610
    %v3612 = vadd.f32 %v3608, %v3611
    %vm3613 = vweird.f32 %v3586
    %vm3614 = vweird.f32 %v3608
    %vm3615 = vmor %vm3613, %vm3614
    %v3616 = vsel %vm3615, %v3608, %v3612
    %v3617 = vand.u32 2147483647, %v3586
    %vm3618 = vcmp.eq.f32.partialorder %v3617, 8.507059e+37
    %v3619 = vand.u32 %v3586, 2147483648
    %v3620 = vor.u32 1.1754944e-38, %v3619
    %v3621 = vsel %vm3618, %v3620, %v3616
    %v3622 = vmul.f32 1.0, %v3621
    %v3623 = vrcp.pop %v3587
    %v3624 = vmul.f32 %v3587, %v3623
    %v3625 = vsub.f32 1.0, %v3624
    %v3626 = vmul.f32 %v3623, %v3625
    %v3627 = vadd.f32 %v3623, %v3626
    %vm3628 = vweird.f32 %v3587
    %vm3629 = vweird.f32 %v3623
    %vm3630 = vmor %vm3628, %vm3629
    %v3631 = vsel %vm3630, %v3623, %v3627
    %v3632 = vand.u32 2147483647, %v3587
    %vm3633 = vcmp.eq.f32.partialorder %v3632, 8.507059e+37
    %v3634 = vand.u32 %v3587, 2147483648
    %v3635 = vor.u32 1.1754944e-38, %v3634
    %v3636 = vsel %vm3633, %v3635, %v3631
    %v3637 = vmul.f32 1.0, %v3636
    %v3638 = vrcp.pop %v3588
    %v3639 = vmul.f32 %v3588, %v3638
    %v3640 = vsub.f32 1.0, %v3639
    %v3641 = vmul.f32 %v3638, %v3640
    %v3642 = vadd.f32 %v3638, %v3641
    %vm3643 = vweird.f32 %v3588
    %vm3644 = vweird.f32 %v3638
    %vm3645 = vmor %vm3643, %vm3644
    %v3646 = vsel %vm3645, %v3638, %v3642
    %v3647 = vand.u32 2147483647, %v3588
    %vm3648 = vcmp.eq.f32.partialorder %v3647, 8.507059e+37
    %v3649 = vand.u32 %v3588, 2147483648
    %v3650 = vor.u32 1.1754944e-38, %v3649
    %v3651 = vsel %vm3648, %v3650, %v3646
    %v3652 = vmul.f32 1.0, %v3651
    %v3653 = vrcp.pop %v3589
    %v3654 = vmul.f32 %v3589, %v3653
    %v3655 = vsub.f32 1.0, %v3654
    %v3656 = vmul.f32 %v3653, %v3655
    %v3657 = vadd.f32 %v3653, %v3656
    %vm3658 = vweird.f32 %v3589
    %vm3659 = vweird.f32 %v3653
    %vm3660 = vmor %vm3658, %vm3659
    %v3661 = vsel %vm3660, %v3653, %v3657
    %v3662 = vand.u32 2147483647, %v3589
    %vm3663 = vcmp.eq.f32.partialorder %v3662, 8.507059e+37
    %v3664 = vand.u32 %v3589, 2147483648
    %v3665 = vor.u32 1.1754944e-38, %v3664
    %v3666 = vsel %vm3663, %v3665, %v3661
    %v3667 = vmul.f32 1.0, %v3666
    %v3668 = vrcp.pop %v3590
    %v3669 = vmul.f32 %v3590, %v3668
    %v3670 = vsub.f32 1.0, %v3669
    %v3671 = vmul.f32 %v3668, %v3670
    %v3672 = vadd.f32 %v3668, %v3671
    %vm3673 = vweird.f32 %v3590
    %vm3674 = vweird.f32 %v3668
    %vm3675 = vmor %vm3673, %vm3674
    %v3676 = vsel %vm3675, %v3668, %v3672
    %v3677 = vand.u32 2147483647, %v3590
    %vm3678 = vcmp.eq.f32.partialorder %v3677, 8.507059e+37
    %v3679 = vand.u32 %v3590, 2147483648
    %v3680 = vor.u32 1.1754944e-38, %v3679
    %v3681 = vsel %vm3678, %v3680, %v3676
    %v3682 = vmul.f32 1.0, %v3681
    %v3683 = vrcp.pop %v3591
    %v3684 = vmul.f32 %v3591, %v3683
    %v3685 = vsub.f32 1.0, %v3684
    %v3686 = vmul.f32 %v3683, %v3685
    %v3687 = vadd.f32 %v3683, %v3686
    %vm3688 = vweird.f32 %v3591
    %vm3689 = vweird.f32 %v3683
    %vm3690 = vmor %vm3688, %vm3689
    %v3691 = vsel %vm3690, %v3683, %v3687
    %v3692 = vand.u32 2147483647, %v3591
    %vm3693 = vcmp.eq.f32.partialorder %v3692, 8.507059e+37
    %v3694 = vand.u32 %v3591, 2147483648
    %v3695 = vor.u32 1.1754944e-38, %v3694
    %v3696 = vsel %vm3693, %v3695, %v3691
    %v3697 = vmul.f32 1.0, %v3696
    %v3698 = vrcp.pop %v3592
    %v3699 = vmul.f32 %v3592, %v3698
    %v3700 = vsub.f32 1.0, %v3699
    %v3701 = vmul.f32 %v3698, %v3700
    %v3702 = vadd.f32 %v3698, %v3701
    %vm3703 = vweird.f32 %v3592
    %vm3704 = vweird.f32 %v3698
    %vm3705 = vmor %vm3703, %vm3704
    %v3706 = vsel %vm3705, %v3698, %v3702
    %v3707 = vand.u32 2147483647, %v3592
    %vm3708 = vcmp.eq.f32.partialorder %v3707, 8.507059e+37
    %v3709 = vand.u32 %v3592, 2147483648
    %v3710 = vor.u32 1.1754944e-38, %v3709
    %v3711 = vsel %vm3708, %v3710, %v3706
    %v3712 = vmul.f32 1.0, %v3711
    %v3721 = vrot.slane %v3553, 1
    %v3722 = vrot.slane %v3554, 1
    %v3723 = vrot.slane %v3555, 1
    %v3724 = vrot.slane %v3556, 1
    %v3725 = vrot.slane %v3557, 1
    %v3726 = vrot.slane %v3558, 1
    %v3727 = vrot.slane %v3559, 1
    %v3728 = vrot.slane %v3560, 1
    %v3737 = vxor.u32 %v3721, 2147483648
    %v3738 = vxor.u32 %v3722, 2147483648
    %v3739 = vxor.u32 %v3723, 2147483648
    %v3740 = vxor.u32 %v3724, 2147483648
    %v3741 = vxor.u32 %v3725, 2147483648
    %v3742 = vxor.u32 %v3726, 2147483648
    %v3743 = vxor.u32 %v3727, 2147483648
    %v3744 = vxor.u32 %v3728, 2147483648
    %v3745 = vmul.f32 %v3737, 1.442695
    %v3746 = vpow.pop %v3745
    %v3747 = vmul.f32 %v3738, 1.442695
    %v3748 = vpow.pop %v3747
    %v3749 = vmul.f32 %v3739, 1.442695
    %v3750 = vpow.pop %v3749
    %v3751 = vmul.f32 %v3740, 1.442695
    %v3752 = vpow.pop %v3751
    %v3753 = vmul.f32 %v3741, 1.442695
    %v3754 = vpow.pop %v3753
    %v3755 = vmul.f32 %v3742, 1.442695
    %v3756 = vpow.pop %v3755
    %v3757 = vmul.f32 %v3743, 1.442695
    %v3758 = vpow.pop %v3757
    %v3759 = vmul.f32 %v3744, 1.442695
    %v3760 = vpow.pop %v3759
    %v3761 = vadd.f32 %v3746, 1.0
    %v3762 = vadd.f32 %v3748, 1.0
    %v3763 = vadd.f32 %v3750, 1.0
    %v3764 = vadd.f32 %v3752, 1.0
    %v3765 = vadd.f32 %v3754, 1.0
    %v3766 = vadd.f32 %v3756, 1.0
    %v3767 = vadd.f32 %v3758, 1.0
    %v3768 = vadd.f32 %v3760, 1.0
    %v3769 = vrcp.pop %v3761
    %v3770 = vmul.f32 %v3761, %v3769
    %v3771 = vsub.f32 1.0, %v3770
    %v3772 = vmul.f32 %v3769, %v3771
    %v3773 = vadd.f32 %v3769, %v3772
    %vm3774 = vweird.f32 %v3761
    %vm3775 = vweird.f32 %v3769
    %vm3776 = vmor %vm3774, %vm3775
    %v3777 = vsel %vm3776, %v3769, %v3773
    %v3778 = vand.u32 2147483647, %v3761
    %vm3779 = vcmp.eq.f32.partialorder %v3778, 8.507059e+37
    %v3780 = vand.u32 %v3761, 2147483648
    %v3781 = vor.u32 1.1754944e-38, %v3780
    %v3782 = vsel %vm3779, %v3781, %v3777
    %v3783 = vmul.f32 1.0, %v3782
    %v3784 = vrcp.pop %v3762
    %v3785 = vmul.f32 %v3762, %v3784
    %v3786 = vsub.f32 1.0, %v3785
    %v3787 = vmul.f32 %v3784, %v3786
    %v3788 = vadd.f32 %v3784, %v3787
    %vm3789 = vweird.f32 %v3762
    %vm3790 = vweird.f32 %v3784
    %vm3791 = vmor %vm3789, %vm3790
    %v3792 = vsel %vm3791, %v3784, %v3788
    %v3793 = vand.u32 2147483647, %v3762
    %vm3794 = vcmp.eq.f32.partialorder %v3793, 8.507059e+37
    %v3795 = vand.u32 %v3762, 2147483648
    %v3796 = vor.u32 1.1754944e-38, %v3795
    %v3797 = vsel %vm3794, %v3796, %v3792
    %v3798 = vmul.f32 1.0, %v3797
    %v3799 = vrcp.pop %v3763
    %v3800 = vmul.f32 %v3763, %v3799
    %v3801 = vsub.f32 1.0, %v3800
    %v3802 = vmul.f32 %v3799, %v3801
    %v3803 = vadd.f32 %v3799, %v3802
    %vm3804 = vweird.f32 %v3763
    %vm3805 = vweird.f32 %v3799
    %vm3806 = vmor %vm3804, %vm3805
    %v3807 = vsel %vm3806, %v3799, %v3803
    %v3808 = vand.u32 2147483647, %v3763
    %vm3809 = vcmp.eq.f32.partialorder %v3808, 8.507059e+37
    %v3810 = vand.u32 %v3763, 2147483648
    %v3811 = vor.u32 1.1754944e-38, %v3810
    %v3812 = vsel %vm3809, %v3811, %v3807
    %v3813 = vmul.f32 1.0, %v3812
    %v3814 = vrcp.pop %v3764
    %v3815 = vmul.f32 %v3764, %v3814
    %v3816 = vsub.f32 1.0, %v3815
    %v3817 = vmul.f32 %v3814, %v3816
    %v3818 = vadd.f32 %v3814, %v3817
    %vm3819 = vweird.f32 %v3764
    %vm3820 = vweird.f32 %v3814
    %vm3821 = vmor %vm3819, %vm3820
    %v3822 = vsel %vm3821, %v3814, %v3818
    %v3823 = vand.u32 2147483647, %v3764
    %vm3824 = vcmp.eq.f32.partialorder %v3823, 8.507059e+37
    %v3825 = vand.u32 %v3764, 2147483648
    %v3826 = vor.u32 1.1754944e-38, %v3825
    %v3827 = vsel %vm3824, %v3826, %v3822
    %v3828 = vmul.f32 1.0, %v3827
    %v3829 = vrcp.pop %v3765
    %v3830 = vmul.f32 %v3765, %v3829
    %v3831 = vsub.f32 1.0, %v3830
    %v3832 = vmul.f32 %v3829, %v3831
    %v3833 = vadd.f32 %v3829, %v3832
    %vm3834 = vweird.f32 %v3765
    %vm3835 = vweird.f32 %v3829
    %vm3836 = vmor %vm3834, %vm3835
    %v3837 = vsel %vm3836, %v3829, %v3833
    %v3838 = vand.u32 2147483647, %v3765
    %vm3839 = vcmp.eq.f32.partialorder %v3838, 8.507059e+37
    %v3840 = vand.u32 %v3765, 2147483648
    %v3841 = vor.u32 1.1754944e-38, %v3840
    %v3842 = vsel %vm3839, %v3841, %v3837
    %v3843 = vmul.f32 1.0, %v3842
    %v3844 = vrcp.pop %v3766
    %v3845 = vmul.f32 %v3766, %v3844
    %v3846 = vsub.f32 1.0, %v3845
    %v3847 = vmul.f32 %v3844, %v3846
    %v3848 = vadd.f32 %v3844, %v3847
    %vm3849 = vweird.f32 %v3766
    %vm3850 = vweird.f32 %v3844
    %vm3851 = vmor %vm3849, %vm3850
    %v3852 = vsel %vm3851, %v3844, %v3848
    %v3853 = vand.u32 2147483647, %v3766
    %vm3854 = vcmp.eq.f32.partialorder %v3853, 8.507059e+37
    %v3855 = vand.u32 %v3766, 2147483648
    %v3856 = vor.u32 1.1754944e-38, %v3855
    %v3857 = vsel %vm3854, %v3856, %v3852
    %v3858 = vmul.f32 1.0, %v3857
    %v3859 = vrcp.pop %v3767
    %v3860 = vmul.f32 %v3767, %v3859
    %v3861 = vsub.f32 1.0, %v3860
    %v3862 = vmul.f32 %v3859, %v3861
    %v3863 = vadd.f32 %v3859, %v3862
    %vm3864 = vweird.f32 %v3767
    %vm3865 = vweird.f32 %v3859
    %vm3866 = vmor %vm3864, %vm3865
    %v3867 = vsel %vm3866, %v3859, %v3863
    %v3868 = vand.u32 2147483647, %v3767
    %vm3869 = vcmp.eq.f32.partialorder %v3868, 8.507059e+37
    %v3870 = vand.u32 %v3767, 2147483648
    %v3871 = vor.u32 1.1754944e-38, %v3870
    %v3872 = vsel %vm3869, %v3871, %v3867
    %v3873 = vmul.f32 1.0, %v3872
    %v3874 = vrcp.pop %v3768
    %v3875 = vmul.f32 %v3768, %v3874
    %v3876 = vsub.f32 1.0, %v3875
    %v3877 = vmul.f32 %v3874, %v3876
    %v3878 = vadd.f32 %v3874, %v3877
    %vm3879 = vweird.f32 %v3768
    %vm3880 = vweird.f32 %v3874
    %vm3881 = vmor %vm3879, %vm3880
    %v3882 = vsel %vm3881, %v3874, %v3878
    %v3883 = vand.u32 2147483647, %v3768
    %vm3884 = vcmp.eq.f32.partialorder %v3883, 8.507059e+37
    %v3885 = vand.u32 %v3768, 2147483648
    %v3886 = vor.u32 1.1754944e-38, %v3885
    %v3887 = vsel %vm3884, %v3886, %v3882
    %v3888 = vmul.f32 1.0, %v3887
    %v3889 = vrot.slane %v3553, 2
    %v3890 = vrot.slane %v3554, 2
    %v3891 = vrot.slane %v3555, 2
    %v3892 = vrot.slane %v3556, 2
    %v3893 = vrot.slane %v3557, 2
    %v3894 = vrot.slane %v3558, 2
    %v3895 = vrot.slane %v3559, 2
    %v3896 = vrot.slane %v3560, 2
    %v3905 = vtanh.pop %v3889
    %v3906 = vtanh.pop %v3890
    %v3907 = vtanh.pop %v3891
    %v3908 = vtanh.pop %v3892
    %v3909 = vtanh.pop %v3893
    %v3910 = vtanh.pop %v3894
    %v3911 = vtanh.pop %v3895
    %v3912 = vtanh.pop %v3896
    %v3913 = vrot.slane %v3553, 3
    %v3914 = vrot.slane %v3554, 3
    %v3915 = vrot.slane %v3555, 3
    %v3916 = vrot.slane %v3556, 3
    %v3917 = vrot.slane %v3557, 3
    %v3918 = vrot.slane %v3558, 3
    %v3919 = vrot.slane %v3559, 3
    %v3920 = vrot.slane %v3560, 3
    %v3929 = vxor.u32 %v3913, 2147483648
    %v3930 = vxor.u32 %v3914, 2147483648
    %v3931 = vxor.u32 %v3915, 2147483648
    %v3932 = vxor.u32 %v3916, 2147483648
    %v3933 = vxor.u32 %v3917, 2147483648
    %v3934 = vxor.u32 %v3918, 2147483648
    %v3935 = vxor.u32 %v3919, 2147483648
    %v3936 = vxor.u32 %v3920, 2147483648
    %v3937 = vmul.f32 %v3929, 1.442695
    %v3938 = vpow.pop %v3937
    %v3939 = vmul.f32 %v3930, 1.442695
    %v3940 = vpow.pop %v3939
    %v3941 = vmul.f32 %v3931, 1.442695
    %v3942 = vpow.pop %v3941
    %v3943 = vmul.f32 %v3932, 1.442695
    %v3944 = vpow.pop %v3943
    %v3945 = vmul.f32 %v3933, 1.442695
    %v3946 = vpow.pop %v3945
    %v3947 = vmul.f32 %v3934, 1.442695
    %v3948 = vpow.pop %v3947
    %v3949 = vmul.f32 %v3935, 1.442695
    %v3950 = vpow.pop %v3949
    %v3951 = vmul.f32 %v3936, 1.442695
    %v3952 = vpow.pop %v3951
    %v3953 = vadd.f32 %v3938, 1.0
    %v3954 = vadd.f32 %v3940, 1.0
    %v3955 = vadd.f32 %v3942, 1.0
    %v3956 = vadd.f32 %v3944, 1.0
    %v3957 = vadd.f32 %v3946, 1.0
    %v3958 = vadd.f32 %v3948, 1.0
    %v3959 = vadd.f32 %v3950, 1.0
    %v3960 = vadd.f32 %v3952, 1.0
    %v3961 = vrcp.pop %v3953
    %v3962 = vmul.f32 %v3953, %v3961
    %v3963 = vsub.f32 1.0, %v3962
    %v3964 = vmul.f32 %v3961, %v3963
    %v3965 = vadd.f32 %v3961, %v3964
    %vm3966 = vweird.f32 %v3953
    %vm3967 = vweird.f32 %v3961
    %vm3968 = vmor %vm3966, %vm3967
    %v3969 = vsel %vm3968, %v3961, %v3965
    %v3970 = vand.u32 2147483647, %v3953
    %vm3971 = vcmp.eq.f32.partialorder %v3970, 8.507059e+37
    %v3972 = vand.u32 %v3953, 2147483648
    %v3973 = vor.u32 1.1754944e-38, %v3972
    %v3974 = vsel %vm3971, %v3973, %v3969
    %v3975 = vmul.f32 1.0, %v3974
    %v3976 = vrcp.pop %v3954
    %v3977 = vmul.f32 %v3954, %v3976
    %v3978 = vsub.f32 1.0, %v3977
    %v3979 = vmul.f32 %v3976, %v3978
    %v3980 = vadd.f32 %v3976, %v3979
    %vm3981 = vweird.f32 %v3954
    %vm3982 = vweird.f32 %v3976
    %vm3983 = vmor %vm3981, %vm3982
    %v3984 = vsel %vm3983, %v3976, %v3980
    %v3985 = vand.u32 2147483647, %v3954
    %vm3986 = vcmp.eq.f32.partialorder %v3985, 8.507059e+37
    %v3987 = vand.u32 %v3954, 2147483648
    %v3988 = vor.u32 1.1754944e-38, %v3987
    %v3989 = vsel %vm3986, %v3988, %v3984
    %v3990 = vmul.f32 1.0, %v3989
    %v3991 = vrcp.pop %v3955
    %v3992 = vmul.f32 %v3955, %v3991
    %v3993 = vsub.f32 1.0, %v3992
    %v3994 = vmul.f32 %v3991, %v3993
    %v3995 = vadd.f32 %v3991, %v3994
    %vm3996 = vweird.f32 %v3955
    %vm3997 = vweird.f32 %v3991
    %vm3998 = vmor %vm3996, %vm3997
    %v3999 = vsel %vm3998, %v3991, %v3995
    %v4000 = vand.u32 2147483647, %v3955
    %vm4001 = vcmp.eq.f32.partialorder %v4000, 8.507059e+37
    %v4002 = vand.u32 %v3955, 2147483648
    %v4003 = vor.u32 1.1754944e-38, %v4002
    %v4004 = vsel %vm4001, %v4003, %v3999
    %v4005 = vmul.f32 1.0, %v4004
    %v4006 = vrcp.pop %v3956
    %v4007 = vmul.f32 %v3956, %v4006
    %v4008 = vsub.f32 1.0, %v4007
    %v4009 = vmul.f32 %v4006, %v4008
    %v4010 = vadd.f32 %v4006, %v4009
    %vm4011 = vweird.f32 %v3956
    %vm4012 = vweird.f32 %v4006
    %vm4013 = vmor %vm4011, %vm4012
    %v4014 = vsel %vm4013, %v4006, %v4010
    %v4015 = vand.u32 2147483647, %v3956
    %vm4016 = vcmp.eq.f32.partialorder %v4015, 8.507059e+37
    %v4017 = vand.u32 %v3956, 2147483648
    %v4018 = vor.u32 1.1754944e-38, %v4017
    %v4019 = vsel %vm4016, %v4018, %v4014
    %v4020 = vmul.f32 1.0, %v4019
    %v4021 = vrcp.pop %v3957
    %v4022 = vmul.f32 %v3957, %v4021
    %v4023 = vsub.f32 1.0, %v4022
    %v4024 = vmul.f32 %v4021, %v4023
    %v4025 = vadd.f32 %v4021, %v4024
    %vm4026 = vweird.f32 %v3957
    %vm4027 = vweird.f32 %v4021
    %vm4028 = vmor %vm4026, %vm4027
    %v4029 = vsel %vm4028, %v4021, %v4025
    %v4030 = vand.u32 2147483647, %v3957
    %vm4031 = vcmp.eq.f32.partialorder %v4030, 8.507059e+37
    %v4032 = vand.u32 %v3957, 2147483648
    %v4033 = vor.u32 1.1754944e-38, %v4032
    %v4034 = vsel %vm4031, %v4033, %v4029
    %v4035 = vmul.f32 1.0, %v4034
    %v4036 = vrcp.pop %v3958
    %v4037 = vmul.f32 %v3958, %v4036
    %v4038 = vsub.f32 1.0, %v4037
    %v4039 = vmul.f32 %v4036, %v4038
    %v4040 = vadd.f32 %v4036, %v4039
    %vm4041 = vweird.f32 %v3958
    %vm4042 = vweird.f32 %v4036
    %vm4043 = vmor %vm4041, %vm4042
    %v4044 = vsel %vm4043, %v4036, %v4040
    %v4045 = vand.u32 2147483647, %v3958
    %vm4046 = vcmp.eq.f32.partialorder %v4045, 8.507059e+37
    %v4047 = vand.u32 %v3958, 2147483648
    %v4048 = vor.u32 1.1754944e-38, %v4047
    %v4049 = vsel %vm4046, %v4048, %v4044
    %v4050 = vmul.f32 1.0, %v4049
    %v4051 = vrcp.pop %v3959
    %v4052 = vmul.f32 %v3959, %v4051
    %v4053 = vsub.f32 1.0, %v4052
    %v4054 = vmul.f32 %v4051, %v4053
    %v4055 = vadd.f32 %v4051, %v4054
    %vm4056 = vweird.f32 %v3959
    %vm4057 = vweird.f32 %v4051
    %vm4058 = vmor %vm4056, %vm4057
    %v4059 = vsel %vm4058, %v4051, %v4055
    %v4060 = vand.u32 2147483647, %v3959
    %vm4061 = vcmp.eq.f32.partialorder %v4060, 8.507059e+37
    %v4062 = vand.u32 %v3959, 2147483648
    %v4063 = vor.u32 1.1754944e-38, %v4062
    %v4064 = vsel %vm4061, %v4063, %v4059
    %v4065 = vmul.f32 1.0, %v4064
    %v4066 = vrcp.pop %v3960
    %v4067 = vmul.f32 %v3960, %v4066
    %v4068 = vsub.f32 1.0, %v4067
    %v4069 = vmul.f32 %v4066, %v4068
    %v4070 = vadd.f32 %v4066, %v4069
    %vm4071 = vweird.f32 %v3960
    %vm4072 = vweird.f32 %v4066
    %vm4073 = vmor %vm4071, %vm4072
    %v4074 = vsel %vm4073, %v4066, %v4070
    %v4075 = vand.u32 2147483647, %v3960
    %vm4076 = vcmp.eq.f32.partialorder %v4075, 8.507059e+37
    %v4077 = vand.u32 %v3960, 2147483648
    %v4078 = vor.u32 1.1754944e-38, %v4077
    %v4079 = vsel %vm4076, %v4078, %v4074
    %v4080 = vmul.f32 1.0, %v4079
    %v4081 = vmul.f32 %v3783, %v3175
    %v4082 = vmul.f32 %v3798, %v3176
    %v4083 = vmul.f32 %v3813, %v3177
    %v4084 = vmul.f32 %v3828, %v3178
    %v4085 = vmul.f32 %v3843, %v3179
    %v4086 = vmul.f32 %v3858, %v3180
    %v4087 = vmul.f32 %v3873, %v3181
    %v4088 = vmul.f32 %v3888, %v3182
    %v4089 = vmul.f32 %v3607, %v3905
    %v4090 = vmul.f32 %v3622, %v3906
    %v4091 = vmul.f32 %v3637, %v3907
    %v4092 = vmul.f32 %v3652, %v3908
    %v4093 = vmul.f32 %v3667, %v3909
    %v4094 = vmul.f32 %v3682, %v3910
    %v4095 = vmul.f32 %v3697, %v3911
    %v4096 = vmul.f32 %v3712, %v3912
    %v4097 = vadd.f32 %v4081, %v4089
    %v4098 = vadd.f32 %v4082, %v4090
    %v4099 = vadd.f32 %v4083, %v4091
    %v4100 = vadd.f32 %v4084, %v4092
    %v4101 = vadd.f32 %v4085, %v4093
    %v4102 = vadd.f32 %v4086, %v4094
    %v4103 = vadd.f32 %v4087, %v4095
    %v4104 = vadd.f32 %v4088, %v4096
    %v4105 = vtanh.pop %v4097
    %v4106 = vtanh.pop %v4098
    %v4107 = vtanh.pop %v4099
    %v4108 = vtanh.pop %v4100
    %v4109 = vtanh.pop %v4101
    %v4110 = vtanh.pop %v4102
    %v4111 = vtanh.pop %v4103
    %v4112 = vtanh.pop %v4104
    %v4113 = vmul.f32 %v3975, %v4105
    %v4114 = vmul.f32 %v3990, %v4106
    %v4115 = vmul.f32 %v4005, %v4107
    %v4116 = vmul.f32 %v4020, %v4108
    %v4117 = vmul.f32 %v4035, %v4109
    %v4118 = vmul.f32 %v4050, %v4110
    %v4119 = vmul.f32 %v4065, %v4111
    %v4120 = vmul.f32 %v4080, %v4112
    %4121 = vst [vmem:[#allocation3 + $0x3] sm:$0x1] %v4113
    %4122 = vst [vmem:[#allocation3 + $0xb] sm:$0x1] %v4114
    %4123 = vst [vmem:[#allocation3 + $0x13] sm:$0x1] %v4115
    %4124 = vst [vmem:[#allocation3 + $0x1b] sm:$0x1] %v4116
    %4125 = vst [vmem:[#allocation3 + $0x23] sm:$0x1] %v4117
    %4126 = vst [vmem:[#allocation3 + $0x2b] sm:$0x1] %v4118
    %4127 = vst [vmem:[#allocation3 + $0x33] sm:$0x1] %v4119
    %4128 = vst [vmem:[#allocation3 + $0x3b] sm:$0x1] %v4120
    %s4129 = scalar_lea.vmem [#allocation2], 4
    %v4130 = vld [vmem:[%s4129] ss:$8 sm:$0xf]
    %s4131 = scalar_lea.vmem [#allocation2], 36
    %v4132 = vld [vmem:[%s4131] ss:$8 sm:$0xf]
    %s4133 = scalar_lea.vmem [#allocation2], 68
    %v4134 = vld [vmem:[%s4133] ss:$8 sm:$0xf]
    %s4135 = scalar_lea.vmem [#allocation2], 100
    %v4136 = vld [vmem:[%s4135] ss:$8 sm:$0xf]
    %s4137 = scalar_lea.vmem [#allocation2], 132
    %v4138 = vld [vmem:[%s4137] ss:$8 sm:$0xf]
    %s4139 = scalar_lea.vmem [#allocation2], 164
    %v4140 = vld [vmem:[%s4139] ss:$8 sm:$0xf]
    %s4141 = scalar_lea.vmem [#allocation2], 196
    %v4142 = vld [vmem:[%s4141] ss:$8 sm:$0xf]
    %s4143 = scalar_lea.vmem [#allocation2], 228
    %v4144 = vld [vmem:[%s4143] ss:$8 sm:$0xf]
    %v4145 = vpack.c.bf16 %v4113, %v4113
    %v4146 = vpack.c.bf16 %v4114, %v4114
    %v4147 = vpack.c.bf16 %v4115, %v4115
    %v4148 = vpack.c.bf16 %v4116, %v4116
    %v4149 = vpack.c.bf16 %v4117, %v4117
    %v4150 = vpack.c.bf16 %v4118, %v4118
    %v4151 = vpack.c.bf16 %v4119, %v4119
    %v4152 = vpack.c.bf16 %v4120, %v4120
    %v4153 = vld [vmem:[#allocation11] sm:$0xff]
    %v4154 = vld [vmem:[#allocation11 + $0x8] sm:$0xff]
    %v4155 = vld [vmem:[#allocation11 + $0x10] sm:$0xff]
    %v4156 = vld [vmem:[#allocation11 + $0x18] sm:$0xff]
    %v4157 = vld [vmem:[#allocation11 + $0x20] sm:$0xff]
    %v4158 = vld [vmem:[#allocation11 + $0x28] sm:$0xff]
    %v4159 = vld [vmem:[#allocation11 + $0x30] sm:$0xff]
    %v4160 = vld [vmem:[#allocation11 + $0x38] sm:$0xff]
    %v4161 = vld [vmem:[#allocation11 + $0x40] sm:$0xff]
    %v4162 = vld [vmem:[#allocation11 + $0x48] sm:$0xff]
    %v4163 = vld [vmem:[#allocation11 + $0x50] sm:$0xff]
    %v4164 = vld [vmem:[#allocation11 + $0x58] sm:$0xff]
    %v4165 = vld [vmem:[#allocation11 + $0x60] sm:$0xff]
    %v4166 = vld [vmem:[#allocation11 + $0x68] sm:$0xff]
    %v4167 = vld [vmem:[#allocation11 + $0x70] sm:$0xff]
    %v4168 = vld [vmem:[#allocation11 + $0x78] sm:$0xff]
    %v4169 = vld [vmem:[#allocation11 + $0x80] sm:$0xff]
    %v4170 = vld [vmem:[#allocation11 + $0x88] sm:$0xff]
    %v4171 = vld [vmem:[#allocation11 + $0x90] sm:$0xff]
    %v4172 = vld [vmem:[#allocation11 + $0x98] sm:$0xff]
    %v4173 = vld [vmem:[#allocation11 + $0xa0] sm:$0xff]
    %v4174 = vld [vmem:[#allocation11 + $0xa8] sm:$0xff]
    %v4175 = vld [vmem:[#allocation11 + $0xb0] sm:$0xff]
    %v4176 = vld [vmem:[#allocation11 + $0xb8] sm:$0xff]
    %v4177 = vld [vmem:[#allocation11 + $0xc0] sm:$0xff]
    %v4178 = vld [vmem:[#allocation11 + $0xc8] sm:$0xff]
    %v4179 = vld [vmem:[#allocation11 + $0xd0] sm:$0xff]
    %v4180 = vld [vmem:[#allocation11 + $0xd8] sm:$0xff]
    %v4181 = vld [vmem:[#allocation11 + $0xe0] sm:$0xff]
    %v4182 = vld [vmem:[#allocation11 + $0xe8] sm:$0xff]
    %v4183 = vld [vmem:[#allocation11 + $0xf0] sm:$0xff]
    %v4184 = vld [vmem:[#allocation11 + $0xf8] sm:$0xff]
    %v4193 = vunpack.c.l.b16 %v4145
    %v4194 = vunpack.c.l.b16 %v4146
    %v4195 = vunpack.c.l.b16 %v4147
    %v4196 = vunpack.c.l.b16 %v4148
    %v4197 = vunpack.c.l.b16 %v4149
    %v4198 = vunpack.c.l.b16 %v4150
    %v4199 = vunpack.c.l.b16 %v4151
    %v4200 = vunpack.c.l.b16 %v4152
    %v4201 = vrot.slane %v4194, 7
    %v4202 = vsel %vm722, %v4201, %v4193
    %v4203 = vrot.slane %v4195, 6
    %v4204 = vsel %vm718, %v4203, %v4202
    %v4205 = vrot.slane %v4196, 5
    %v4206 = vsel %vm724, %v4205, %v4204
    %v4207 = vrot.slane %v4197, 4
    %v4208 = vsel %vm730, %v4207, %v4206
    %v4209 = vrot.slane %v4198, 3
    %v4210 = vsel %vm736, %v4209, %v4208
    %v4211 = vrot.slane %v4199, 2
    %v4212 = vsel %vm742, %v4211, %v4210
    %v4213 = vrot.slane %v4200, 1
    %v4214 = vsel %vm1447, %v4213, %v4212
    %v4215 = vpack.c.b16 %v4214, %v4214
    %v4249 = vunpack.c.l.b16 %v4153
    %v4250 = vunpack.c.h.b16 %v4153
    %v4251 = vunpack.c.l.b16 %v4154
    %v4252 = vunpack.c.h.b16 %v4154
    %v4253 = vunpack.c.l.b16 %v4155
    %v4254 = vunpack.c.h.b16 %v4155
    %v4255 = vunpack.c.l.b16 %v4156
    %v4256 = vunpack.c.h.b16 %v4156
    %v4257 = vunpack.c.l.b16 %v4157
    %v4258 = vunpack.c.h.b16 %v4157
    %v4259 = vunpack.c.l.b16 %v4158
    %v4260 = vunpack.c.h.b16 %v4158
    %v4261 = vunpack.c.l.b16 %v4159
    %v4262 = vunpack.c.h.b16 %v4159
    %v4263 = vunpack.c.l.b16 %v4160
    %v4264 = vunpack.c.h.b16 %v4160
    %v4265 = vunpack.c.l.b16 %v4161
    %v4266 = vunpack.c.h.b16 %v4161
    %v4267 = vunpack.c.l.b16 %v4162
    %v4268 = vunpack.c.h.b16 %v4162
    %v4269 = vunpack.c.l.b16 %v4163
    %v4270 = vunpack.c.h.b16 %v4163
    %v4271 = vunpack.c.l.b16 %v4164
    %v4272 = vunpack.c.h.b16 %v4164
    %v4273 = vunpack.c.l.b16 %v4165
    %v4274 = vunpack.c.h.b16 %v4165
    %v4275 = vunpack.c.l.b16 %v4166
    %v4276 = vunpack.c.h.b16 %v4166
    %v4277 = vunpack.c.l.b16 %v4167
    %v4278 = vunpack.c.h.b16 %v4167
    %v4279 = vunpack.c.l.b16 %v4168
    %v4280 = vunpack.c.h.b16 %v4168
    %v4281 = vunpack.c.l.b16 %v4169
    %v4282 = vunpack.c.h.b16 %v4169
    %v4283 = vunpack.c.l.b16 %v4170
    %v4284 = vunpack.c.h.b16 %v4170
    %v4285 = vunpack.c.l.b16 %v4171
    %v4286 = vunpack.c.h.b16 %v4171
    %v4287 = vunpack.c.l.b16 %v4172
    %v4288 = vunpack.c.h.b16 %v4172
    %v4289 = vunpack.c.l.b16 %v4173
    %v4290 = vunpack.c.h.b16 %v4173
    %v4291 = vunpack.c.l.b16 %v4174
    %v4292 = vunpack.c.h.b16 %v4174
    %v4293 = vunpack.c.l.b16 %v4175
    %v4294 = vunpack.c.h.b16 %v4175
    %v4295 = vunpack.c.l.b16 %v4176
    %v4296 = vunpack.c.h.b16 %v4176
    %v4297 = vunpack.c.l.b16 %v4177
    %v4298 = vunpack.c.h.b16 %v4177
    %v4299 = vunpack.c.l.b16 %v4178
    %v4300 = vunpack.c.h.b16 %v4178
    %v4301 = vunpack.c.l.b16 %v4179
    %v4302 = vunpack.c.h.b16 %v4179
    %v4303 = vunpack.c.l.b16 %v4180
    %v4304 = vunpack.c.h.b16 %v4180
    %v4305 = vunpack.c.l.b16 %v4181
    %v4306 = vunpack.c.h.b16 %v4181
    %v4307 = vunpack.c.l.b16 %v4182
    %v4308 = vunpack.c.h.b16 %v4182
    %v4309 = vunpack.c.l.b16 %v4183
    %v4310 = vunpack.c.h.b16 %v4183
    %v4311 = vunpack.c.l.b16 %v4184
    %v4312 = vunpack.c.h.b16 %v4184
    %v4313 = vpack.c.b16 %v4253, %v4249
    %v4314 = vpack.c.b16 %v4254, %v4250
    %v4315 = vpack.c.b16 %v4255, %v4251
    %v4316 = vpack.c.b16 %v4256, %v4252
    %v4317 = vpack.c.b16 %v4261, %v4257
    %v4318 = vpack.c.b16 %v4262, %v4258
    %v4319 = vpack.c.b16 %v4263, %v4259
    %v4320 = vpack.c.b16 %v4264, %v4260
    %v4321 = vpack.c.b16 %v4269, %v4265
    %v4322 = vpack.c.b16 %v4270, %v4266
    %v4323 = vpack.c.b16 %v4271, %v4267
    %v4324 = vpack.c.b16 %v4272, %v4268
    %v4325 = vpack.c.b16 %v4277, %v4273
    %v4326 = vpack.c.b16 %v4278, %v4274
    %v4327 = vpack.c.b16 %v4279, %v4275
    %v4328 = vpack.c.b16 %v4280, %v4276
    %v4329 = vpack.c.b16 %v4285, %v4281
    %v4330 = vpack.c.b16 %v4286, %v4282
    %v4331 = vpack.c.b16 %v4287, %v4283
    %v4332 = vpack.c.b16 %v4288, %v4284
    %v4333 = vpack.c.b16 %v4293, %v4289
    %v4334 = vpack.c.b16 %v4294, %v4290
    %v4335 = vpack.c.b16 %v4295, %v4291
    %v4336 = vpack.c.b16 %v4296, %v4292
    %v4337 = vpack.c.b16 %v4301, %v4297
    %v4338 = vpack.c.b16 %v4302, %v4298
    %v4339 = vpack.c.b16 %v4303, %v4299
    %v4340 = vpack.c.b16 %v4304, %v4300
    %v4341 = vpack.c.b16 %v4309, %v4305
    %v4342 = vpack.c.b16 %v4310, %v4306
    %v4343 = vpack.c.b16 %v4311, %v4307
    %v4344 = vpack.c.b16 %v4312, %v4308
    %4377 = vmatpush.bf16.msra.mxu0 %v4341
    %4378 = vmatpush.bf16.msra.mxu0 %v4337
    %4379 = vmatpush.bf16.msra.mxu0 %v4333
    %4380 = vmatpush.bf16.msra.mxu0 %v4329
    %4381 = vmatpush.bf16.msra.mxu0 %v4325
    %4382 = vmatpush.bf16.msra.mxu0 %v4321
    %4383 = vmatpush.bf16.msra.mxu0 %v4317
    %4384 = vmatpush.bf16.msra.mxu0 %v4313
    %4385 = vmatmul.bf16.gmra.mxu0 %v4215
    %v4386 = vpop.f32.mrf.mxu0
    %v4387 = vadd.f32 0.0, %v4386
    %v4388 = vpop.f32.mrf.mxu0
    %4389 = vdwg.mxu0
    %4390 = vmatpush.bf16.msra.mxu0 %v4342
    %4391 = vmatpush.bf16.msra.mxu0 %v4338
    %4392 = vmatpush.bf16.msra.mxu0 %v4334
    %4393 = vmatpush.bf16.msra.mxu0 %v4330
    %4394 = vmatpush.bf16.msra.mxu0 %v4326
    %4395 = vmatpush.bf16.msra.mxu0 %v4322
    %4396 = vmatpush.bf16.msra.mxu0 %v4318
    %4397 = vmatpush.bf16.msra.mxu0 %v4314
    %4398 = vmatmul.bf16.gmra.mxu0 %v4215
    %v4399 = vpop.f32.mrf.mxu0
    %v4400 = vadd.f32 0.0, %v4399
    %v4401 = vpop.f32.mrf.mxu0
    %4402 = vdwg.mxu0
    %4403 = vmatpush.bf16.msra.mxu0 %v4343
    %4404 = vmatpush.bf16.msra.mxu0 %v4339
    %4405 = vmatpush.bf16.msra.mxu0 %v4335
    %4406 = vmatpush.bf16.msra.mxu0 %v4331
    %4407 = vmatpush.bf16.msra.mxu0 %v4327
    %4408 = vmatpush.bf16.msra.mxu0 %v4323
    %4409 = vmatpush.bf16.msra.mxu0 %v4319
    %4410 = vmatpush.bf16.msra.mxu0 %v4315
    %4411 = vmatmul.bf16.gmra.mxu0 %v4215
    %v4412 = vpop.f32.mrf.mxu0
    %v4413 = vadd.f32 0.0, %v4412
    %v4414 = vpop.f32.mrf.mxu0
    %4415 = vdwg.mxu0
    %4416 = vmatpush.bf16.msra.mxu0 %v4344
    %4417 = vmatpush.bf16.msra.mxu0 %v4340
    %4418 = vmatpush.bf16.msra.mxu0 %v4336
    %4419 = vmatpush.bf16.msra.mxu0 %v4332
    %4420 = vmatpush.bf16.msra.mxu0 %v4328
    %4421 = vmatpush.bf16.msra.mxu0 %v4324
    %4422 = vmatpush.bf16.msra.mxu0 %v4320
    %4423 = vmatpush.bf16.msra.mxu0 %v4316
    %4424 = vmatmul.bf16.gmra.mxu0 %v4215
    %v4425 = vpop.f32.mrf.mxu0
    %v4426 = vadd.f32 0.0, %v4425
    %v4427 = vpop.f32.mrf.mxu0
    %4428 = vdwg.mxu0
    %v4433 = vrot.slane %v4400, 7
    %v4434 = vrot.slane %v4413, 6
    %v4435 = vrot.slane %v4426, 5
    %v4436 = vsel %vm716, %v4387, %v4433
    %v4437 = vsel %vm718, %v4434, %v4435
    %v4438 = vsel %vm720, %v4436, %v4437
    %v4439 = vsel %vm722, %v4387, %v4433
    %v4440 = vsel %vm724, %v4434, %v4435
    %v4441 = vsel %vm726, %v4439, %v4440
    %v4442 = vrot.slane %v4441, 1
    %v4443 = vsel %vm718, %v4387, %v4433
    %v4444 = vsel %vm730, %v4434, %v4435
    %v4445 = vsel %vm732, %v4443, %v4444
    %v4446 = vrot.slane %v4445, 2
    %v4447 = vsel %vm724, %v4387, %v4433
    %v4448 = vsel %vm736, %v4434, %v4435
    %v4449 = vsel %vm738, %v4447, %v4448
    %v4450 = vrot.slane %v4449, 3
    %v4451 = vsel %vm730, %v4387, %v4433
    %v4452 = vsel %vm742, %v4434, %v4435
    %v4453 = vsel %vm744, %v4451, %v4452
    %v4454 = vrot.slane %v4453, 4
    %v4455 = vsel %vm736, %v4387, %v4433
    %v4456 = vsel %vm748, %v4435, %v4434
    %v4457 = vsel %vm750, %v4455, %v4456
    %v4458 = vrot.slane %v4457, 5
    %v4459 = vsel %vm742, %v4387, %v4433
    %v4460 = vsel %vm716, %v4434, %v4435
    %v4461 = vsel %vm755, %v4460, %v4459
    %v4462 = vrot.slane %v4461, 6
    %v4463 = vsel %vm748, %v4433, %v4387
    %v4464 = vsel %vm722, %v4434, %v4435
    %v4465 = vsel %vm760, %v4464, %v4463
    %v4466 = vrot.slane %v4465, 7
    %v4475 = vadd.f32 %v4130, %v4438
    %v4476 = vadd.f32 %v4132, %v4442
    %v4477 = vadd.f32 %v4134, %v4446
    %v4478 = vadd.f32 %v4136, %v4450
    %v4479 = vadd.f32 %v4138, %v4454
    %v4480 = vadd.f32 %v4140, %v4458
    %v4481 = vadd.f32 %v4142, %v4462
    %v4482 = vadd.f32 %v4144, %v4466
    %v4483 = vxor.u32 %v4475, 2147483648
    %v4484 = vxor.u32 %v4476, 2147483648
    %v4485 = vxor.u32 %v4477, 2147483648
    %v4486 = vxor.u32 %v4478, 2147483648
    %v4487 = vxor.u32 %v4479, 2147483648
    %v4488 = vxor.u32 %v4480, 2147483648
    %v4489 = vxor.u32 %v4481, 2147483648
    %v4490 = vxor.u32 %v4482, 2147483648
    %v4491 = vmul.f32 %v4483, 1.442695
    %v4492 = vpow.pop %v4491
    %v4493 = vmul.f32 %v4484, 1.442695
    %v4494 = vpow.pop %v4493
    %v4495 = vmul.f32 %v4485, 1.442695
    %v4496 = vpow.pop %v4495
    %v4497 = vmul.f32 %v4486, 1.442695
    %v4498 = vpow.pop %v4497
    %v4499 = vmul.f32 %v4487, 1.442695
    %v4500 = vpow.pop %v4499
    %v4501 = vmul.f32 %v4488, 1.442695
    %v4502 = vpow.pop %v4501
    %v4503 = vmul.f32 %v4489, 1.442695
    %v4504 = vpow.pop %v4503
    %v4505 = vmul.f32 %v4490, 1.442695
    %v4506 = vpow.pop %v4505
    %v4507 = vadd.f32 %v4492, 1.0
    %v4508 = vadd.f32 %v4494, 1.0
    %v4509 = vadd.f32 %v4496, 1.0
    %v4510 = vadd.f32 %v4498, 1.0
    %v4511 = vadd.f32 %v4500, 1.0
    %v4512 = vadd.f32 %v4502, 1.0
    %v4513 = vadd.f32 %v4504, 1.0
    %v4514 = vadd.f32 %v4506, 1.0
    %v4515 = vrcp.pop %v4507
    %v4516 = vmul.f32 %v4507, %v4515
    %v4517 = vsub.f32 1.0, %v4516
    %v4518 = vmul.f32 %v4515, %v4517
    %v4519 = vadd.f32 %v4515, %v4518
    %vm4520 = vweird.f32 %v4507
    %vm4521 = vweird.f32 %v4515
    %vm4522 = vmor %vm4520, %vm4521
    %v4523 = vsel %vm4522, %v4515, %v4519
    %v4524 = vand.u32 2147483647, %v4507
    %vm4525 = vcmp.eq.f32.partialorder %v4524, 8.507059e+37
    %v4526 = vand.u32 %v4507, 2147483648
    %v4527 = vor.u32 1.1754944e-38, %v4526
    %v4528 = vsel %vm4525, %v4527, %v4523
    %v4529 = vmul.f32 1.0, %v4528
    %v4530 = vrcp.pop %v4508
    %v4531 = vmul.f32 %v4508, %v4530
    %v4532 = vsub.f32 1.0, %v4531
    %v4533 = vmul.f32 %v4530, %v4532
    %v4534 = vadd.f32 %v4530, %v4533
    %vm4535 = vweird.f32 %v4508
    %vm4536 = vweird.f32 %v4530
    %vm4537 = vmor %vm4535, %vm4536
    %v4538 = vsel %vm4537, %v4530, %v4534
    %v4539 = vand.u32 2147483647, %v4508
    %vm4540 = vcmp.eq.f32.partialorder %v4539, 8.507059e+37
    %v4541 = vand.u32 %v4508, 2147483648
    %v4542 = vor.u32 1.1754944e-38, %v4541
    %v4543 = vsel %vm4540, %v4542, %v4538
    %v4544 = vmul.f32 1.0, %v4543
    %v4545 = vrcp.pop %v4509
    %v4546 = vmul.f32 %v4509, %v4545
    %v4547 = vsub.f32 1.0, %v4546
    %v4548 = vmul.f32 %v4545, %v4547
    %v4549 = vadd.f32 %v4545, %v4548
    %vm4550 = vweird.f32 %v4509
    %vm4551 = vweird.f32 %v4545
    %vm4552 = vmor %vm4550, %vm4551
    %v4553 = vsel %vm4552, %v4545, %v4549
    %v4554 = vand.u32 2147483647, %v4509
    %vm4555 = vcmp.eq.f32.partialorder %v4554, 8.507059e+37
    %v4556 = vand.u32 %v4509, 2147483648
    %v4557 = vor.u32 1.1754944e-38, %v4556
    %v4558 = vsel %vm4555, %v4557, %v4553
    %v4559 = vmul.f32 1.0, %v4558
    %v4560 = vrcp.pop %v4510
    %v4561 = vmul.f32 %v4510, %v4560
    %v4562 = vsub.f32 1.0, %v4561
    %v4563 = vmul.f32 %v4560, %v4562
    %v4564 = vadd.f32 %v4560, %v4563
    %vm4565 = vweird.f32 %v4510
    %vm4566 = vweird.f32 %v4560
    %vm4567 = vmor %vm4565, %vm4566
    %v4568 = vsel %vm4567, %v4560, %v4564
    %v4569 = vand.u32 2147483647, %v4510
    %vm4570 = vcmp.eq.f32.partialorder %v4569, 8.507059e+37
    %v4571 = vand.u32 %v4510, 2147483648
    %v4572 = vor.u32 1.1754944e-38, %v4571
    %v4573 = vsel %vm4570, %v4572, %v4568
    %v4574 = vmul.f32 1.0, %v4573
    %v4575 = vrcp.pop %v4511
    %v4576 = vmul.f32 %v4511, %v4575
    %v4577 = vsub.f32 1.0, %v4576
    %v4578 = vmul.f32 %v4575, %v4577
    %v4579 = vadd.f32 %v4575, %v4578
    %vm4580 = vweird.f32 %v4511
    %vm4581 = vweird.f32 %v4575
    %vm4582 = vmor %vm4580, %vm4581
    %v4583 = vsel %vm4582, %v4575, %v4579
    %v4584 = vand.u32 2147483647, %v4511
    %vm4585 = vcmp.eq.f32.partialorder %v4584, 8.507059e+37
    %v4586 = vand.u32 %v4511, 2147483648
    %v4587 = vor.u32 1.1754944e-38, %v4586
    %v4588 = vsel %vm4585, %v4587, %v4583
    %v4589 = vmul.f32 1.0, %v4588
    %v4590 = vrcp.pop %v4512
    %v4591 = vmul.f32 %v4512, %v4590
    %v4592 = vsub.f32 1.0, %v4591
    %v4593 = vmul.f32 %v4590, %v4592
    %v4594 = vadd.f32 %v4590, %v4593
    %vm4595 = vweird.f32 %v4512
    %vm4596 = vweird.f32 %v4590
    %vm4597 = vmor %vm4595, %vm4596
    %v4598 = vsel %vm4597, %v4590, %v4594
    %v4599 = vand.u32 2147483647, %v4512
    %vm4600 = vcmp.eq.f32.partialorder %v4599, 8.507059e+37
    %v4601 = vand.u32 %v4512, 2147483648
    %v4602 = vor.u32 1.1754944e-38, %v4601
    %v4603 = vsel %vm4600, %v4602, %v4598
    %v4604 = vmul.f32 1.0, %v4603
    %v4605 = vrcp.pop %v4513
    %v4606 = vmul.f32 %v4513, %v4605
    %v4607 = vsub.f32 1.0, %v4606
    %v4608 = vmul.f32 %v4605, %v4607
    %v4609 = vadd.f32 %v4605, %v4608
    %vm4610 = vweird.f32 %v4513
    %vm4611 = vweird.f32 %v4605
    %vm4612 = vmor %vm4610, %vm4611
    %v4613 = vsel %vm4612, %v4605, %v4609
    %v4614 = vand.u32 2147483647, %v4513
    %vm4615 = vcmp.eq.f32.partialorder %v4614, 8.507059e+37
    %v4616 = vand.u32 %v4513, 2147483648
    %v4617 = vor.u32 1.1754944e-38, %v4616
    %v4618 = vsel %vm4615, %v4617, %v4613
    %v4619 = vmul.f32 1.0, %v4618
    %v4620 = vrcp.pop %v4514
    %v4621 = vmul.f32 %v4514, %v4620
    %v4622 = vsub.f32 1.0, %v4621
    %v4623 = vmul.f32 %v4620, %v4622
    %v4624 = vadd.f32 %v4620, %v4623
    %vm4625 = vweird.f32 %v4514
    %vm4626 = vweird.f32 %v4620
    %vm4627 = vmor %vm4625, %vm4626
    %v4628 = vsel %vm4627, %v4620, %v4624
    %v4629 = vand.u32 2147483647, %v4514
    %vm4630 = vcmp.eq.f32.partialorder %v4629, 8.507059e+37
    %v4631 = vand.u32 %v4514, 2147483648
    %v4632 = vor.u32 1.1754944e-38, %v4631
    %v4633 = vsel %vm4630, %v4632, %v4628
    %v4634 = vmul.f32 1.0, %v4633
    %v4643 = vrot.slane %v4475, 1
    %v4644 = vrot.slane %v4476, 1
    %v4645 = vrot.slane %v4477, 1
    %v4646 = vrot.slane %v4478, 1
    %v4647 = vrot.slane %v4479, 1
    %v4648 = vrot.slane %v4480, 1
    %v4649 = vrot.slane %v4481, 1
    %v4650 = vrot.slane %v4482, 1
    %v4659 = vxor.u32 %v4643, 2147483648
    %v4660 = vxor.u32 %v4644, 2147483648
    %v4661 = vxor.u32 %v4645, 2147483648
    %v4662 = vxor.u32 %v4646, 2147483648
    %v4663 = vxor.u32 %v4647, 2147483648
    %v4664 = vxor.u32 %v4648, 2147483648
    %v4665 = vxor.u32 %v4649, 2147483648
    %v4666 = vxor.u32 %v4650, 2147483648
    %v4667 = vmul.f32 %v4659, 1.442695
    %v4668 = vpow.pop %v4667
    %v4669 = vmul.f32 %v4660, 1.442695
    %v4670 = vpow.pop %v4669
    %v4671 = vmul.f32 %v4661, 1.442695
    %v4672 = vpow.pop %v4671
    %v4673 = vmul.f32 %v4662, 1.442695
    %v4674 = vpow.pop %v4673
    %v4675 = vmul.f32 %v4663, 1.442695
    %v4676 = vpow.pop %v4675
    %v4677 = vmul.f32 %v4664, 1.442695
    %v4678 = vpow.pop %v4677
    %v4679 = vmul.f32 %v4665, 1.442695
    %v4680 = vpow.pop %v4679
    %v4681 = vmul.f32 %v4666, 1.442695
    %v4682 = vpow.pop %v4681
    %v4683 = vadd.f32 %v4668, 1.0
    %v4684 = vadd.f32 %v4670, 1.0
    %v4685 = vadd.f32 %v4672, 1.0
    %v4686 = vadd.f32 %v4674, 1.0
    %v4687 = vadd.f32 %v4676, 1.0
    %v4688 = vadd.f32 %v4678, 1.0
    %v4689 = vadd.f32 %v4680, 1.0
    %v4690 = vadd.f32 %v4682, 1.0
    %v4691 = vrcp.pop %v4683
    %v4692 = vmul.f32 %v4683, %v4691
    %v4693 = vsub.f32 1.0, %v4692
    %v4694 = vmul.f32 %v4691, %v4693
    %v4695 = vadd.f32 %v4691, %v4694
    %vm4696 = vweird.f32 %v4683
    %vm4697 = vweird.f32 %v4691
    %vm4698 = vmor %vm4696, %vm4697
    %v4699 = vsel %vm4698, %v4691, %v4695
    %v4700 = vand.u32 2147483647, %v4683
    %vm4701 = vcmp.eq.f32.partialorder %v4700, 8.507059e+37
    %v4702 = vand.u32 %v4683, 2147483648
    %v4703 = vor.u32 1.1754944e-38, %v4702
    %v4704 = vsel %vm4701, %v4703, %v4699
    %v4705 = vmul.f32 1.0, %v4704
    %v4706 = vrcp.pop %v4684
    %v4707 = vmul.f32 %v4684, %v4706
    %v4708 = vsub.f32 1.0, %v4707
    %v4709 = vmul.f32 %v4706, %v4708
    %v4710 = vadd.f32 %v4706, %v4709
    %vm4711 = vweird.f32 %v4684
    %vm4712 = vweird.f32 %v4706
    %vm4713 = vmor %vm4711, %vm4712
    %v4714 = vsel %vm4713, %v4706, %v4710
    %v4715 = vand.u32 2147483647, %v4684
    %vm4716 = vcmp.eq.f32.partialorder %v4715, 8.507059e+37
    %v4717 = vand.u32 %v4684, 2147483648
    %v4718 = vor.u32 1.1754944e-38, %v4717
    %v4719 = vsel %vm4716, %v4718, %v4714
    %v4720 = vmul.f32 1.0, %v4719
    %v4721 = vrcp.pop %v4685
    %v4722 = vmul.f32 %v4685, %v4721
    %v4723 = vsub.f32 1.0, %v4722
    %v4724 = vmul.f32 %v4721, %v4723
    %v4725 = vadd.f32 %v4721, %v4724
    %vm4726 = vweird.f32 %v4685
    %vm4727 = vweird.f32 %v4721
    %vm4728 = vmor %vm4726, %vm4727
    %v4729 = vsel %vm4728, %v4721, %v4725
    %v4730 = vand.u32 2147483647, %v4685
    %vm4731 = vcmp.eq.f32.partialorder %v4730, 8.507059e+37
    %v4732 = vand.u32 %v4685, 2147483648
    %v4733 = vor.u32 1.1754944e-38, %v4732
    %v4734 = vsel %vm4731, %v4733, %v4729
    %v4735 = vmul.f32 1.0, %v4734
    %v4736 = vrcp.pop %v4686
    %v4737 = vmul.f32 %v4686, %v4736
    %v4738 = vsub.f32 1.0, %v4737
    %v4739 = vmul.f32 %v4736, %v4738
    %v4740 = vadd.f32 %v4736, %v4739
    %vm4741 = vweird.f32 %v4686
    %vm4742 = vweird.f32 %v4736
    %vm4743 = vmor %vm4741, %vm4742
    %v4744 = vsel %vm4743, %v4736, %v4740
    %v4745 = vand.u32 2147483647, %v4686
    %vm4746 = vcmp.eq.f32.partialorder %v4745, 8.507059e+37
    %v4747 = vand.u32 %v4686, 2147483648
    %v4748 = vor.u32 1.1754944e-38, %v4747
    %v4749 = vsel %vm4746, %v4748, %v4744
    %v4750 = vmul.f32 1.0, %v4749
    %v4751 = vrcp.pop %v4687
    %v4752 = vmul.f32 %v4687, %v4751
    %v4753 = vsub.f32 1.0, %v4752
    %v4754 = vmul.f32 %v4751, %v4753
    %v4755 = vadd.f32 %v4751, %v4754
    %vm4756 = vweird.f32 %v4687
    %vm4757 = vweird.f32 %v4751
    %vm4758 = vmor %vm4756, %vm4757
    %v4759 = vsel %vm4758, %v4751, %v4755
    %v4760 = vand.u32 2147483647, %v4687
    %vm4761 = vcmp.eq.f32.partialorder %v4760, 8.507059e+37
    %v4762 = vand.u32 %v4687, 2147483648
    %v4763 = vor.u32 1.1754944e-38, %v4762
    %v4764 = vsel %vm4761, %v4763, %v4759
    %v4765 = vmul.f32 1.0, %v4764
    %v4766 = vrcp.pop %v4688
    %v4767 = vmul.f32 %v4688, %v4766
    %v4768 = vsub.f32 1.0, %v4767
    %v4769 = vmul.f32 %v4766, %v4768
    %v4770 = vadd.f32 %v4766, %v4769
    %vm4771 = vweird.f32 %v4688
    %vm4772 = vweird.f32 %v4766
    %vm4773 = vmor %vm4771, %vm4772
    %v4774 = vsel %vm4773, %v4766, %v4770
    %v4775 = vand.u32 2147483647, %v4688
    %vm4776 = vcmp.eq.f32.partialorder %v4775, 8.507059e+37
    %v4777 = vand.u32 %v4688, 2147483648
    %v4778 = vor.u32 1.1754944e-38, %v4777
    %v4779 = vsel %vm4776, %v4778, %v4774
    %v4780 = vmul.f32 1.0, %v4779
    %v4781 = vrcp.pop %v4689
    %v4782 = vmul.f32 %v4689, %v4781
    %v4783 = vsub.f32 1.0, %v4782
    %v4784 = vmul.f32 %v4781, %v4783
    %v4785 = vadd.f32 %v4781, %v4784
    %vm4786 = vweird.f32 %v4689
    %vm4787 = vweird.f32 %v4781
    %vm4788 = vmor %vm4786, %vm4787
    %v4789 = vsel %vm4788, %v4781, %v4785
    %v4790 = vand.u32 2147483647, %v4689
    %vm4791 = vcmp.eq.f32.partialorder %v4790, 8.507059e+37
    %v4792 = vand.u32 %v4689, 2147483648
    %v4793 = vor.u32 1.1754944e-38, %v4792
    %v4794 = vsel %vm4791, %v4793, %v4789
    %v4795 = vmul.f32 1.0, %v4794
    %v4796 = vrcp.pop %v4690
    %v4797 = vmul.f32 %v4690, %v4796
    %v4798 = vsub.f32 1.0, %v4797
    %v4799 = vmul.f32 %v4796, %v4798
    %v4800 = vadd.f32 %v4796, %v4799
    %vm4801 = vweird.f32 %v4690
    %vm4802 = vweird.f32 %v4796
    %vm4803 = vmor %vm4801, %vm4802
    %v4804 = vsel %vm4803, %v4796, %v4800
    %v4805 = vand.u32 2147483647, %v4690
    %vm4806 = vcmp.eq.f32.partialorder %v4805, 8.507059e+37
    %v4807 = vand.u32 %v4690, 2147483648
    %v4808 = vor.u32 1.1754944e-38, %v4807
    %v4809 = vsel %vm4806, %v4808, %v4804
    %v4810 = vmul.f32 1.0, %v4809
    %v4811 = vrot.slane %v4475, 2
    %v4812 = vrot.slane %v4476, 2
    %v4813 = vrot.slane %v4477, 2
    %v4814 = vrot.slane %v4478, 2
    %v4815 = vrot.slane %v4479, 2
    %v4816 = vrot.slane %v4480, 2
    %v4817 = vrot.slane %v4481, 2
    %v4818 = vrot.slane %v4482, 2
    %v4827 = vtanh.pop %v4811
    %v4828 = vtanh.pop %v4812
    %v4829 = vtanh.pop %v4813
    %v4830 = vtanh.pop %v4814
    %v4831 = vtanh.pop %v4815
    %v4832 = vtanh.pop %v4816
    %v4833 = vtanh.pop %v4817
    %v4834 = vtanh.pop %v4818
    %v4835 = vrot.slane %v4475, 3
    %v4836 = vrot.slane %v4476, 3
    %v4837 = vrot.slane %v4477, 3
    %v4838 = vrot.slane %v4478, 3
    %v4839 = vrot.slane %v4479, 3
    %v4840 = vrot.slane %v4480, 3
    %v4841 = vrot.slane %v4481, 3
    %v4842 = vrot.slane %v4482, 3
    %v4851 = vxor.u32 %v4835, 2147483648
    %v4852 = vxor.u32 %v4836, 2147483648
    %v4853 = vxor.u32 %v4837, 2147483648
    %v4854 = vxor.u32 %v4838, 2147483648
    %v4855 = vxor.u32 %v4839, 2147483648
    %v4856 = vxor.u32 %v4840, 2147483648
    %v4857 = vxor.u32 %v4841, 2147483648
    %v4858 = vxor.u32 %v4842, 2147483648
    %v4859 = vmul.f32 %v4851, 1.442695
    %v4860 = vpow.pop %v4859
    %v4861 = vmul.f32 %v4852, 1.442695
    %v4862 = vpow.pop %v4861
    %v4863 = vmul.f32 %v4853, 1.442695
    %v4864 = vpow.pop %v4863
    %v4865 = vmul.f32 %v4854, 1.442695
    %v4866 = vpow.pop %v4865
    %v4867 = vmul.f32 %v4855, 1.442695
    %v4868 = vpow.pop %v4867
    %v4869 = vmul.f32 %v4856, 1.442695
    %v4870 = vpow.pop %v4869
    %v4871 = vmul.f32 %v4857, 1.442695
    %v4872 = vpow.pop %v4871
    %v4873 = vmul.f32 %v4858, 1.442695
    %v4874 = vpow.pop %v4873
    %v4875 = vadd.f32 %v4860, 1.0
    %v4876 = vadd.f32 %v4862, 1.0
    %v4877 = vadd.f32 %v4864, 1.0
    %v4878 = vadd.f32 %v4866, 1.0
    %v4879 = vadd.f32 %v4868, 1.0
    %v4880 = vadd.f32 %v4870, 1.0
    %v4881 = vadd.f32 %v4872, 1.0
    %v4882 = vadd.f32 %v4874, 1.0
    %v4883 = vrcp.pop %v4875
    %v4884 = vmul.f32 %v4875, %v4883
    %v4885 = vsub.f32 1.0, %v4884
    %v4886 = vmul.f32 %v4883, %v4885
    %v4887 = vadd.f32 %v4883, %v4886
    %vm4888 = vweird.f32 %v4875
    %vm4889 = vweird.f32 %v4883
    %vm4890 = vmor %vm4888, %vm4889
    %v4891 = vsel %vm4890, %v4883, %v4887
    %v4892 = vand.u32 2147483647, %v4875
    %vm4893 = vcmp.eq.f32.partialorder %v4892, 8.507059e+37
    %v4894 = vand.u32 %v4875, 2147483648
    %v4895 = vor.u32 1.1754944e-38, %v4894
    %v4896 = vsel %vm4893, %v4895, %v4891
    %v4897 = vmul.f32 1.0, %v4896
    %v4898 = vrcp.pop %v4876
    %v4899 = vmul.f32 %v4876, %v4898
    %v4900 = vsub.f32 1.0, %v4899
    %v4901 = vmul.f32 %v4898, %v4900
    %v4902 = vadd.f32 %v4898, %v4901
    %vm4903 = vweird.f32 %v4876
    %vm4904 = vweird.f32 %v4898
    %vm4905 = vmor %vm4903, %vm4904
    %v4906 = vsel %vm4905, %v4898, %v4902
    %v4907 = vand.u32 2147483647, %v4876
    %vm4908 = vcmp.eq.f32.partialorder %v4907, 8.507059e+37
    %v4909 = vand.u32 %v4876, 2147483648
    %v4910 = vor.u32 1.1754944e-38, %v4909
    %v4911 = vsel %vm4908, %v4910, %v4906
    %v4912 = vmul.f32 1.0, %v4911
    %v4913 = vrcp.pop %v4877
    %v4914 = vmul.f32 %v4877, %v4913
    %v4915 = vsub.f32 1.0, %v4914
    %v4916 = vmul.f32 %v4913, %v4915
    %v4917 = vadd.f32 %v4913, %v4916
    %vm4918 = vweird.f32 %v4877
    %vm4919 = vweird.f32 %v4913
    %vm4920 = vmor %vm4918, %vm4919
    %v4921 = vsel %vm4920, %v4913, %v4917
    %v4922 = vand.u32 2147483647, %v4877
    %vm4923 = vcmp.eq.f32.partialorder %v4922, 8.507059e+37
    %v4924 = vand.u32 %v4877, 2147483648
    %v4925 = vor.u32 1.1754944e-38, %v4924
    %v4926 = vsel %vm4923, %v4925, %v4921
    %v4927 = vmul.f32 1.0, %v4926
    %v4928 = vrcp.pop %v4878
    %v4929 = vmul.f32 %v4878, %v4928
    %v4930 = vsub.f32 1.0, %v4929
    %v4931 = vmul.f32 %v4928, %v4930
    %v4932 = vadd.f32 %v4928, %v4931
    %vm4933 = vweird.f32 %v4878
    %vm4934 = vweird.f32 %v4928
    %vm4935 = vmor %vm4933, %vm4934
    %v4936 = vsel %vm4935, %v4928, %v4932
    %v4937 = vand.u32 2147483647, %v4878
    %vm4938 = vcmp.eq.f32.partialorder %v4937, 8.507059e+37
    %v4939 = vand.u32 %v4878, 2147483648
    %v4940 = vor.u32 1.1754944e-38, %v4939
    %v4941 = vsel %vm4938, %v4940, %v4936
    %v4942 = vmul.f32 1.0, %v4941
    %v4943 = vrcp.pop %v4879
    %v4944 = vmul.f32 %v4879, %v4943
    %v4945 = vsub.f32 1.0, %v4944
    %v4946 = vmul.f32 %v4943, %v4945
    %v4947 = vadd.f32 %v4943, %v4946
    %vm4948 = vweird.f32 %v4879
    %vm4949 = vweird.f32 %v4943
    %vm4950 = vmor %vm4948, %vm4949
    %v4951 = vsel %vm4950, %v4943, %v4947
    %v4952 = vand.u32 2147483647, %v4879
    %vm4953 = vcmp.eq.f32.partialorder %v4952, 8.507059e+37
    %v4954 = vand.u32 %v4879, 2147483648
    %v4955 = vor.u32 1.1754944e-38, %v4954
    %v4956 = vsel %vm4953, %v4955, %v4951
    %v4957 = vmul.f32 1.0, %v4956
    %v4958 = vrcp.pop %v4880
    %v4959 = vmul.f32 %v4880, %v4958
    %v4960 = vsub.f32 1.0, %v4959
    %v4961 = vmul.f32 %v4958, %v4960
    %v4962 = vadd.f32 %v4958, %v4961
    %vm4963 = vweird.f32 %v4880
    %vm4964 = vweird.f32 %v4958
    %vm4965 = vmor %vm4963, %vm4964
    %v4966 = vsel %vm4965, %v4958, %v4962
    %v4967 = vand.u32 2147483647, %v4880
    %vm4968 = vcmp.eq.f32.partialorder %v4967, 8.507059e+37
    %v4969 = vand.u32 %v4880, 2147483648
    %v4970 = vor.u32 1.1754944e-38, %v4969
    %v4971 = vsel %vm4968, %v4970, %v4966
    %v4972 = vmul.f32 1.0, %v4971
    %v4973 = vrcp.pop %v4881
    %v4974 = vmul.f32 %v4881, %v4973
    %v4975 = vsub.f32 1.0, %v4974
    %v4976 = vmul.f32 %v4973, %v4975
    %v4977 = vadd.f32 %v4973, %v4976
    %vm4978 = vweird.f32 %v4881
    %vm4979 = vweird.f32 %v4973
    %vm4980 = vmor %vm4978, %vm4979
    %v4981 = vsel %vm4980, %v4973, %v4977
    %v4982 = vand.u32 2147483647, %v4881
    %vm4983 = vcmp.eq.f32.partialorder %v4982, 8.507059e+37
    %v4984 = vand.u32 %v4881, 2147483648
    %v4985 = vor.u32 1.1754944e-38, %v4984
    %v4986 = vsel %vm4983, %v4985, %v4981
    %v4987 = vmul.f32 1.0, %v4986
    %v4988 = vrcp.pop %v4882
    %v4989 = vmul.f32 %v4882, %v4988
    %v4990 = vsub.f32 1.0, %v4989
    %v4991 = vmul.f32 %v4988, %v4990
    %v4992 = vadd.f32 %v4988, %v4991
    %vm4993 = vweird.f32 %v4882
    %vm4994 = vweird.f32 %v4988
    %vm4995 = vmor %vm4993, %vm4994
    %v4996 = vsel %vm4995, %v4988, %v4992
    %v4997 = vand.u32 2147483647, %v4882
    %vm4998 = vcmp.eq.f32.partialorder %v4997, 8.507059e+37
    %v4999 = vand.u32 %v4882, 2147483648
    %v5000 = vor.u32 1.1754944e-38, %v4999
    %v5001 = vsel %vm4998, %v5000, %v4996
    %v5002 = vmul.f32 1.0, %v5001
    %v5003 = vmul.f32 %v4705, %v4097
    %v5004 = vmul.f32 %v4720, %v4098
    %v5005 = vmul.f32 %v4735, %v4099
    %v5006 = vmul.f32 %v4750, %v4100
    %v5007 = vmul.f32 %v4765, %v4101
    %v5008 = vmul.f32 %v4780, %v4102
    %v5009 = vmul.f32 %v4795, %v4103
    %v5010 = vmul.f32 %v4810, %v4104
    %v5011 = vmul.f32 %v4529, %v4827
    %v5012 = vmul.f32 %v4544, %v4828
    %v5013 = vmul.f32 %v4559, %v4829
    %v5014 = vmul.f32 %v4574, %v4830
    %v5015 = vmul.f32 %v4589, %v4831
    %v5016 = vmul.f32 %v4604, %v4832
    %v5017 = vmul.f32 %v4619, %v4833
    %v5018 = vmul.f32 %v4634, %v4834
    %v5019 = vadd.f32 %v5003, %v5011
    %v5020 = vadd.f32 %v5004, %v5012
    %v5021 = vadd.f32 %v5005, %v5013
    %v5022 = vadd.f32 %v5006, %v5014
    %v5023 = vadd.f32 %v5007, %v5015
    %v5024 = vadd.f32 %v5008, %v5016
    %v5025 = vadd.f32 %v5009, %v5017
    %v5026 = vadd.f32 %v5010, %v5018
    %v5027 = vtanh.pop %v5019
    %v5028 = vtanh.pop %v5020
    %v5029 = vtanh.pop %v5021
    %v5030 = vtanh.pop %v5022
    %v5031 = vtanh.pop %v5023
    %v5032 = vtanh.pop %v5024
    %v5033 = vtanh.pop %v5025
    %v5034 = vtanh.pop %v5026
    %v5035 = vmul.f32 %v4897, %v5027
    %v5036 = vmul.f32 %v4912, %v5028
    %v5037 = vmul.f32 %v4927, %v5029
    %v5038 = vmul.f32 %v4942, %v5030
    %v5039 = vmul.f32 %v4957, %v5031
    %v5040 = vmul.f32 %v4972, %v5032
    %v5041 = vmul.f32 %v4987, %v5033
    %v5042 = vmul.f32 %v5002, %v5034
    %5043 = vst [vmem:[#allocation3 + $0x4] sm:$0x1] %v5035
    %5044 = vst [vmem:[#allocation3 + $0xc] sm:$0x1] %v5036
    %5045 = vst [vmem:[#allocation3 + $0x14] sm:$0x1] %v5037
    %5046 = vst [vmem:[#allocation3 + $0x1c] sm:$0x1] %v5038
    %5047 = vst [vmem:[#allocation3 + $0x24] sm:$0x1] %v5039
    %5048 = vst [vmem:[#allocation3 + $0x2c] sm:$0x1] %v5040
    %5049 = vst [vmem:[#allocation3 + $0x34] sm:$0x1] %v5041
    %5050 = vst [vmem:[#allocation3 + $0x3c] sm:$0x1] %v5042
    %s5051 = scalar_lea.vmem [#allocation2], 5
    %v5052 = vld [vmem:[%s5051] ss:$8 sm:$0xf]
    %s5053 = scalar_lea.vmem [#allocation2], 37
    %v5054 = vld [vmem:[%s5053] ss:$8 sm:$0xf]
    %s5055 = scalar_lea.vmem [#allocation2], 69
    %v5056 = vld [vmem:[%s5055] ss:$8 sm:$0xf]
    %s5057 = scalar_lea.vmem [#allocation2], 101
    %v5058 = vld [vmem:[%s5057] ss:$8 sm:$0xf]
    %s5059 = scalar_lea.vmem [#allocation2], 133
    %v5060 = vld [vmem:[%s5059] ss:$8 sm:$0xf]
    %s5061 = scalar_lea.vmem [#allocation2], 165
    %v5062 = vld [vmem:[%s5061] ss:$8 sm:$0xf]
    %s5063 = scalar_lea.vmem [#allocation2], 197
    %v5064 = vld [vmem:[%s5063] ss:$8 sm:$0xf]
    %s5065 = scalar_lea.vmem [#allocation2], 229
    %v5066 = vld [vmem:[%s5065] ss:$8 sm:$0xf]
    %v5067 = vpack.c.bf16 %v5035, %v5035
    %v5068 = vpack.c.bf16 %v5036, %v5036
    %v5069 = vpack.c.bf16 %v5037, %v5037
    %v5070 = vpack.c.bf16 %v5038, %v5038
    %v5071 = vpack.c.bf16 %v5039, %v5039
    %v5072 = vpack.c.bf16 %v5040, %v5040
    %v5073 = vpack.c.bf16 %v5041, %v5041
    %v5074 = vpack.c.bf16 %v5042, %v5042
    %v5075 = vld [vmem:[#allocation11] sm:$0xff]
    %v5076 = vld [vmem:[#allocation11 + $0x8] sm:$0xff]
    %v5077 = vld [vmem:[#allocation11 + $0x10] sm:$0xff]
    %v5078 = vld [vmem:[#allocation11 + $0x18] sm:$0xff]
    %v5079 = vld [vmem:[#allocation11 + $0x20] sm:$0xff]
    %v5080 = vld [vmem:[#allocation11 + $0x28] sm:$0xff]
    %v5081 = vld [vmem:[#allocation11 + $0x30] sm:$0xff]
    %v5082 = vld [vmem:[#allocation11 + $0x38] sm:$0xff]
    %v5083 = vld [vmem:[#allocation11 + $0x40] sm:$0xff]
    %v5084 = vld [vmem:[#allocation11 + $0x48] sm:$0xff]
    %v5085 = vld [vmem:[#allocation11 + $0x50] sm:$0xff]
    %v5086 = vld [vmem:[#allocation11 + $0x58] sm:$0xff]
    %v5087 = vld [vmem:[#allocation11 + $0x60] sm:$0xff]
    %v5088 = vld [vmem:[#allocation11 + $0x68] sm:$0xff]
    %v5089 = vld [vmem:[#allocation11 + $0x70] sm:$0xff]
    %v5090 = vld [vmem:[#allocation11 + $0x78] sm:$0xff]
    %v5091 = vld [vmem:[#allocation11 + $0x80] sm:$0xff]
    %v5092 = vld [vmem:[#allocation11 + $0x88] sm:$0xff]
    %v5093 = vld [vmem:[#allocation11 + $0x90] sm:$0xff]
    %v5094 = vld [vmem:[#allocation11 + $0x98] sm:$0xff]
    %v5095 = vld [vmem:[#allocation11 + $0xa0] sm:$0xff]
    %v5096 = vld [vmem:[#allocation11 + $0xa8] sm:$0xff]
    %v5097 = vld [vmem:[#allocation11 + $0xb0] sm:$0xff]
    %v5098 = vld [vmem:[#allocation11 + $0xb8] sm:$0xff]
    %v5099 = vld [vmem:[#allocation11 + $0xc0] sm:$0xff]
    %v5100 = vld [vmem:[#allocation11 + $0xc8] sm:$0xff]
    %v5101 = vld [vmem:[#allocation11 + $0xd0] sm:$0xff]
    %v5102 = vld [vmem:[#allocation11 + $0xd8] sm:$0xff]
    %v5103 = vld [vmem:[#allocation11 + $0xe0] sm:$0xff]
    %v5104 = vld [vmem:[#allocation11 + $0xe8] sm:$0xff]
    %v5105 = vld [vmem:[#allocation11 + $0xf0] sm:$0xff]
    %v5106 = vld [vmem:[#allocation11 + $0xf8] sm:$0xff]
    %v5115 = vunpack.c.l.b16 %v5067
    %v5116 = vunpack.c.l.b16 %v5068
    %v5117 = vunpack.c.l.b16 %v5069
    %v5118 = vunpack.c.l.b16 %v5070
    %v5119 = vunpack.c.l.b16 %v5071
    %v5120 = vunpack.c.l.b16 %v5072
    %v5121 = vunpack.c.l.b16 %v5073
    %v5122 = vunpack.c.l.b16 %v5074
    %v5123 = vrot.slane %v5116, 7
    %v5124 = vsel %vm722, %v5123, %v5115
    %v5125 = vrot.slane %v5117, 6
    %v5126 = vsel %vm718, %v5125, %v5124
    %v5127 = vrot.slane %v5118, 5
    %v5128 = vsel %vm724, %v5127, %v5126
    %v5129 = vrot.slane %v5119, 4
    %v5130 = vsel %vm730, %v5129, %v5128
    %v5131 = vrot.slane %v5120, 3
    %v5132 = vsel %vm736, %v5131, %v5130
    %v5133 = vrot.slane %v5121, 2
    %v5134 = vsel %vm742, %v5133, %v5132
    %v5135 = vrot.slane %v5122, 1
    %v5136 = vsel %vm1447, %v5135, %v5134
    %v5137 = vpack.c.b16 %v5136, %v5136
    %v5171 = vunpack.c.l.b16 %v5075
    %v5172 = vunpack.c.h.b16 %v5075
    %v5173 = vunpack.c.l.b16 %v5076
    %v5174 = vunpack.c.h.b16 %v5076
    %v5175 = vunpack.c.l.b16 %v5077
    %v5176 = vunpack.c.h.b16 %v5077
    %v5177 = vunpack.c.l.b16 %v5078
    %v5178 = vunpack.c.h.b16 %v5078
    %v5179 = vunpack.c.l.b16 %v5079
    %v5180 = vunpack.c.h.b16 %v5079
    %v5181 = vunpack.c.l.b16 %v5080
    %v5182 = vunpack.c.h.b16 %v5080
    %v5183 = vunpack.c.l.b16 %v5081
    %v5184 = vunpack.c.h.b16 %v5081
    %v5185 = vunpack.c.l.b16 %v5082
    %v5186 = vunpack.c.h.b16 %v5082
    %v5187 = vunpack.c.l.b16 %v5083
    %v5188 = vunpack.c.h.b16 %v5083
    %v5189 = vunpack.c.l.b16 %v5084
    %v5190 = vunpack.c.h.b16 %v5084
    %v5191 = vunpack.c.l.b16 %v5085
    %v5192 = vunpack.c.h.b16 %v5085
    %v5193 = vunpack.c.l.b16 %v5086
    %v5194 = vunpack.c.h.b16 %v5086
    %v5195 = vunpack.c.l.b16 %v5087
    %v5196 = vunpack.c.h.b16 %v5087
    %v5197 = vunpack.c.l.b16 %v5088
    %v5198 = vunpack.c.h.b16 %v5088
    %v5199 = vunpack.c.l.b16 %v5089
    %v5200 = vunpack.c.h.b16 %v5089
    %v5201 = vunpack.c.l.b16 %v5090
    %v5202 = vunpack.c.h.b16 %v5090
    %v5203 = vunpack.c.l.b16 %v5091
    %v5204 = vunpack.c.h.b16 %v5091
    %v5205 = vunpack.c.l.b16 %v5092
    %v5206 = vunpack.c.h.b16 %v5092
    %v5207 = vunpack.c.l.b16 %v5093
    %v5208 = vunpack.c.h.b16 %v5093
    %v5209 = vunpack.c.l.b16 %v5094
    %v5210 = vunpack.c.h.b16 %v5094
    %v5211 = vunpack.c.l.b16 %v5095
    %v5212 = vunpack.c.h.b16 %v5095
    %v5213 = vunpack.c.l.b16 %v5096
    %v5214 = vunpack.c.h.b16 %v5096
    %v5215 = vunpack.c.l.b16 %v5097
    %v5216 = vunpack.c.h.b16 %v5097
    %v5217 = vunpack.c.l.b16 %v5098
    %v5218 = vunpack.c.h.b16 %v5098
    %v5219 = vunpack.c.l.b16 %v5099
    %v5220 = vunpack.c.h.b16 %v5099
    %v5221 = vunpack.c.l.b16 %v5100
    %v5222 = vunpack.c.h.b16 %v5100
    %v5223 = vunpack.c.l.b16 %v5101
    %v5224 = vunpack.c.h.b16 %v5101
    %v5225 = vunpack.c.l.b16 %v5102
    %v5226 = vunpack.c.h.b16 %v5102
    %v5227 = vunpack.c.l.b16 %v5103
    %v5228 = vunpack.c.h.b16 %v5103
    %v5229 = vunpack.c.l.b16 %v5104
    %v5230 = vunpack.c.h.b16 %v5104
    %v5231 = vunpack.c.l.b16 %v5105
    %v5232 = vunpack.c.h.b16 %v5105
    %v5233 = vunpack.c.l.b16 %v5106
    %v5234 = vunpack.c.h.b16 %v5106
    %v5235 = vpack.c.b16 %v5175, %v5171
    %v5236 = vpack.c.b16 %v5176, %v5172
    %v5237 = vpack.c.b16 %v5177, %v5173
    %v5238 = vpack.c.b16 %v5178, %v5174
    %v5239 = vpack.c.b16 %v5183, %v5179
    %v5240 = vpack.c.b16 %v5184, %v5180
    %v5241 = vpack.c.b16 %v5185, %v5181
    %v5242 = vpack.c.b16 %v5186, %v5182
    %v5243 = vpack.c.b16 %v5191, %v5187
    %v5244 = vpack.c.b16 %v5192, %v5188
    %v5245 = vpack.c.b16 %v5193, %v5189
    %v5246 = vpack.c.b16 %v5194, %v5190
    %v5247 = vpack.c.b16 %v5199, %v5195
    %v5248 = vpack.c.b16 %v5200, %v5196
    %v5249 = vpack.c.b16 %v5201, %v5197
    %v5250 = vpack.c.b16 %v5202, %v5198
    %v5251 = vpack.c.b16 %v5207, %v5203
    %v5252 = vpack.c.b16 %v5208, %v5204
    %v5253 = vpack.c.b16 %v5209, %v5205
    %v5254 = vpack.c.b16 %v5210, %v5206
    %v5255 = vpack.c.b16 %v5215, %v5211
    %v5256 = vpack.c.b16 %v5216, %v5212
    %v5257 = vpack.c.b16 %v5217, %v5213
    %v5258 = vpack.c.b16 %v5218, %v5214
    %v5259 = vpack.c.b16 %v5223, %v5219
    %v5260 = vpack.c.b16 %v5224, %v5220
    %v5261 = vpack.c.b16 %v5225, %v5221
    %v5262 = vpack.c.b16 %v5226, %v5222
    %v5263 = vpack.c.b16 %v5231, %v5227
    %v5264 = vpack.c.b16 %v5232, %v5228
    %v5265 = vpack.c.b16 %v5233, %v5229
    %v5266 = vpack.c.b16 %v5234, %v5230
    %5299 = vmatpush.bf16.msra.mxu0 %v5263
    %5300 = vmatpush.bf16.msra.mxu0 %v5259
    %5301 = vmatpush.bf16.msra.mxu0 %v5255
    %5302 = vmatpush.bf16.msra.mxu0 %v5251
    %5303 = vmatpush.bf16.msra.mxu0 %v5247
    %5304 = vmatpush.bf16.msra.mxu0 %v5243
    %5305 = vmatpush.bf16.msra.mxu0 %v5239
    %5306 = vmatpush.bf16.msra.mxu0 %v5235
    %5307 = vmatmul.bf16.gmra.mxu0 %v5137
    %v5308 = vpop.f32.mrf.mxu0
    %v5309 = vadd.f32 0.0, %v5308
    %v5310 = vpop.f32.mrf.mxu0
    %5311 = vdwg.mxu0
    %5312 = vmatpush.bf16.msra.mxu0 %v5264
    %5313 = vmatpush.bf16.msra.mxu0 %v5260
    %5314 = vmatpush.bf16.msra.mxu0 %v5256
    %5315 = vmatpush.bf16.msra.mxu0 %v5252
    %5316 = vmatpush.bf16.msra.mxu0 %v5248
    %5317 = vmatpush.bf16.msra.mxu0 %v5244
    %5318 = vmatpush.bf16.msra.mxu0 %v5240
    %5319 = vmatpush.bf16.msra.mxu0 %v5236
    %5320 = vmatmul.bf16.gmra.mxu0 %v5137
    %v5321 = vpop.f32.mrf.mxu0
    %v5322 = vadd.f32 0.0, %v5321
    %v5323 = vpop.f32.mrf.mxu0
    %5324 = vdwg.mxu0
    %5325 = vmatpush.bf16.msra.mxu0 %v5265
    %5326 = vmatpush.bf16.msra.mxu0 %v5261
    %5327 = vmatpush.bf16.msra.mxu0 %v5257
    %5328 = vmatpush.bf16.msra.mxu0 %v5253
    %5329 = vmatpush.bf16.msra.mxu0 %v5249
    %5330 = vmatpush.bf16.msra.mxu0 %v5245
    %5331 = vmatpush.bf16.msra.mxu0 %v5241
    %5332 = vmatpush.bf16.msra.mxu0 %v5237
    %5333 = vmatmul.bf16.gmra.mxu0 %v5137
    %v5334 = vpop.f32.mrf.mxu0
    %v5335 = vadd.f32 0.0, %v5334
    %v5336 = vpop.f32.mrf.mxu0
    %5337 = vdwg.mxu0
    %5338 = vmatpush.bf16.msra.mxu0 %v5266
    %5339 = vmatpush.bf16.msra.mxu0 %v5262
    %5340 = vmatpush.bf16.msra.mxu0 %v5258
    %5341 = vmatpush.bf16.msra.mxu0 %v5254
    %5342 = vmatpush.bf16.msra.mxu0 %v5250
    %5343 = vmatpush.bf16.msra.mxu0 %v5246
    %5344 = vmatpush.bf16.msra.mxu0 %v5242
    %5345 = vmatpush.bf16.msra.mxu0 %v5238
    %5346 = vmatmul.bf16.gmra.mxu0 %v5137
    %v5347 = vpop.f32.mrf.mxu0
    %v5348 = vadd.f32 0.0, %v5347
    %v5349 = vpop.f32.mrf.mxu0
    %5350 = vdwg.mxu0
    %v5355 = vrot.slane %v5322, 7
    %v5356 = vrot.slane %v5335, 6
    %v5357 = vrot.slane %v5348, 5
    %v5358 = vsel %vm716, %v5309, %v5355
    %v5359 = vsel %vm718, %v5356, %v5357
    %v5360 = vsel %vm720, %v5358, %v5359
    %v5361 = vsel %vm722, %v5309, %v5355
    %v5362 = vsel %vm724, %v5356, %v5357
    %v5363 = vsel %vm726, %v5361, %v5362
    %v5364 = vrot.slane %v5363, 1
    %v5365 = vsel %vm718, %v5309, %v5355
    %v5366 = vsel %vm730, %v5356, %v5357
    %v5367 = vsel %vm732, %v5365, %v5366
    %v5368 = vrot.slane %v5367, 2
    %v5369 = vsel %vm724, %v5309, %v5355
    %v5370 = vsel %vm736, %v5356, %v5357
    %v5371 = vsel %vm738, %v5369, %v5370
    %v5372 = vrot.slane %v5371, 3
    %v5373 = vsel %vm730, %v5309, %v5355
    %v5374 = vsel %vm742, %v5356, %v5357
    %v5375 = vsel %vm744, %v5373, %v5374
    %v5376 = vrot.slane %v5375, 4
    %v5377 = vsel %vm736, %v5309, %v5355
    %v5378 = vsel %vm748, %v5357, %v5356
    %v5379 = vsel %vm750, %v5377, %v5378
    %v5380 = vrot.slane %v5379, 5
    %v5381 = vsel %vm742, %v5309, %v5355
    %v5382 = vsel %vm716, %v5356, %v5357
    %v5383 = vsel %vm755, %v5382, %v5381
    %v5384 = vrot.slane %v5383, 6
    %v5385 = vsel %vm748, %v5355, %v5309
    %v5386 = vsel %vm722, %v5356, %v5357
    %v5387 = vsel %vm760, %v5386, %v5385
    %v5388 = vrot.slane %v5387, 7
    %v5397 = vadd.f32 %v5052, %v5360
    %v5398 = vadd.f32 %v5054, %v5364
    %v5399 = vadd.f32 %v5056, %v5368
    %v5400 = vadd.f32 %v5058, %v5372
    %v5401 = vadd.f32 %v5060, %v5376
    %v5402 = vadd.f32 %v5062, %v5380
    %v5403 = vadd.f32 %v5064, %v5384
    %v5404 = vadd.f32 %v5066, %v5388
    %v5405 = vxor.u32 %v5397, 2147483648
    %v5406 = vxor.u32 %v5398, 2147483648
    %v5407 = vxor.u32 %v5399, 2147483648
    %v5408 = vxor.u32 %v5400, 2147483648
    %v5409 = vxor.u32 %v5401, 2147483648
    %v5410 = vxor.u32 %v5402, 2147483648
    %v5411 = vxor.u32 %v5403, 2147483648
    %v5412 = vxor.u32 %v5404, 2147483648
    %v5413 = vmul.f32 %v5405, 1.442695
    %v5414 = vpow.pop %v5413
    %v5415 = vmul.f32 %v5406, 1.442695
    %v5416 = vpow.pop %v5415
    %v5417 = vmul.f32 %v5407, 1.442695
    %v5418 = vpow.pop %v5417
    %v5419 = vmul.f32 %v5408, 1.442695
    %v5420 = vpow.pop %v5419
    %v5421 = vmul.f32 %v5409, 1.442695
    %v5422 = vpow.pop %v5421
    %v5423 = vmul.f32 %v5410, 1.442695
    %v5424 = vpow.pop %v5423
    %v5425 = vmul.f32 %v5411, 1.442695
    %v5426 = vpow.pop %v5425
    %v5427 = vmul.f32 %v5412, 1.442695
    %v5428 = vpow.pop %v5427
    %v5429 = vadd.f32 %v5414, 1.0
    %v5430 = vadd.f32 %v5416, 1.0
    %v5431 = vadd.f32 %v5418, 1.0
    %v5432 = vadd.f32 %v5420, 1.0
    %v5433 = vadd.f32 %v5422, 1.0
    %v5434 = vadd.f32 %v5424, 1.0
    %v5435 = vadd.f32 %v5426, 1.0
    %v5436 = vadd.f32 %v5428, 1.0
    %v5437 = vrcp.pop %v5429
    %v5438 = vmul.f32 %v5429, %v5437
    %v5439 = vsub.f32 1.0, %v5438
    %v5440 = vmul.f32 %v5437, %v5439
    %v5441 = vadd.f32 %v5437, %v5440
    %vm5442 = vweird.f32 %v5429
    %vm5443 = vweird.f32 %v5437
    %vm5444 = vmor %vm5442, %vm5443
    %v5445 = vsel %vm5444, %v5437, %v5441
    %v5446 = vand.u32 2147483647, %v5429
    %vm5447 = vcmp.eq.f32.partialorder %v5446, 8.507059e+37
    %v5448 = vand.u32 %v5429, 2147483648
    %v5449 = vor.u32 1.1754944e-38, %v5448
    %v5450 = vsel %vm5447, %v5449, %v5445
    %v5451 = vmul.f32 1.0, %v5450
    %v5452 = vrcp.pop %v5430
    %v5453 = vmul.f32 %v5430, %v5452
    %v5454 = vsub.f32 1.0, %v5453
    %v5455 = vmul.f32 %v5452, %v5454
    %v5456 = vadd.f32 %v5452, %v5455
    %vm5457 = vweird.f32 %v5430
    %vm5458 = vweird.f32 %v5452
    %vm5459 = vmor %vm5457, %vm5458
    %v5460 = vsel %vm5459, %v5452, %v5456
    %v5461 = vand.u32 2147483647, %v5430
    %vm5462 = vcmp.eq.f32.partialorder %v5461, 8.507059e+37
    %v5463 = vand.u32 %v5430, 2147483648
    %v5464 = vor.u32 1.1754944e-38, %v5463
    %v5465 = vsel %vm5462, %v5464, %v5460
    %v5466 = vmul.f32 1.0, %v5465
    %v5467 = vrcp.pop %v5431
    %v5468 = vmul.f32 %v5431, %v5467
    %v5469 = vsub.f32 1.0, %v5468
    %v5470 = vmul.f32 %v5467, %v5469
    %v5471 = vadd.f32 %v5467, %v5470
    %vm5472 = vweird.f32 %v5431
    %vm5473 = vweird.f32 %v5467
    %vm5474 = vmor %vm5472, %vm5473
    %v5475 = vsel %vm5474, %v5467, %v5471
    %v5476 = vand.u32 2147483647, %v5431
    %vm5477 = vcmp.eq.f32.partialorder %v5476, 8.507059e+37
    %v5478 = vand.u32 %v5431, 2147483648
    %v5479 = vor.u32 1.1754944e-38, %v5478
    %v5480 = vsel %vm5477, %v5479, %v5475
    %v5481 = vmul.f32 1.0, %v5480
    %v5482 = vrcp.pop %v5432
    %v5483 = vmul.f32 %v5432, %v5482
    %v5484 = vsub.f32 1.0, %v5483
    %v5485 = vmul.f32 %v5482, %v5484
    %v5486 = vadd.f32 %v5482, %v5485
    %vm5487 = vweird.f32 %v5432
    %vm5488 = vweird.f32 %v5482
    %vm5489 = vmor %vm5487, %vm5488
    %v5490 = vsel %vm5489, %v5482, %v5486
    %v5491 = vand.u32 2147483647, %v5432
    %vm5492 = vcmp.eq.f32.partialorder %v5491, 8.507059e+37
    %v5493 = vand.u32 %v5432, 2147483648
    %v5494 = vor.u32 1.1754944e-38, %v5493
    %v5495 = vsel %vm5492, %v5494, %v5490
    %v5496 = vmul.f32 1.0, %v5495
    %v5497 = vrcp.pop %v5433
    %v5498 = vmul.f32 %v5433, %v5497
    %v5499 = vsub.f32 1.0, %v5498
    %v5500 = vmul.f32 %v5497, %v5499
    %v5501 = vadd.f32 %v5497, %v5500
    %vm5502 = vweird.f32 %v5433
    %vm5503 = vweird.f32 %v5497
    %vm5504 = vmor %vm5502, %vm5503
    %v5505 = vsel %vm5504, %v5497, %v5501
    %v5506 = vand.u32 2147483647, %v5433
    %vm5507 = vcmp.eq.f32.partialorder %v5506, 8.507059e+37
    %v5508 = vand.u32 %v5433, 2147483648
    %v5509 = vor.u32 1.1754944e-38, %v5508
    %v5510 = vsel %vm5507, %v5509, %v5505
    %v5511 = vmul.f32 1.0, %v5510
    %v5512 = vrcp.pop %v5434
    %v5513 = vmul.f32 %v5434, %v5512
    %v5514 = vsub.f32 1.0, %v5513
    %v5515 = vmul.f32 %v5512, %v5514
    %v5516 = vadd.f32 %v5512, %v5515
    %vm5517 = vweird.f32 %v5434
    %vm5518 = vweird.f32 %v5512
    %vm5519 = vmor %vm5517, %vm5518
    %v5520 = vsel %vm5519, %v5512, %v5516
    %v5521 = vand.u32 2147483647, %v5434
    %vm5522 = vcmp.eq.f32.partialorder %v5521, 8.507059e+37
    %v5523 = vand.u32 %v5434, 2147483648
    %v5524 = vor.u32 1.1754944e-38, %v5523
    %v5525 = vsel %vm5522, %v5524, %v5520
    %v5526 = vmul.f32 1.0, %v5525
    %v5527 = vrcp.pop %v5435
    %v5528 = vmul.f32 %v5435, %v5527
    %v5529 = vsub.f32 1.0, %v5528
    %v5530 = vmul.f32 %v5527, %v5529
    %v5531 = vadd.f32 %v5527, %v5530
    %vm5532 = vweird.f32 %v5435
    %vm5533 = vweird.f32 %v5527
    %vm5534 = vmor %vm5532, %vm5533
    %v5535 = vsel %vm5534, %v5527, %v5531
    %v5536 = vand.u32 2147483647, %v5435
    %vm5537 = vcmp.eq.f32.partialorder %v5536, 8.507059e+37
    %v5538 = vand.u32 %v5435, 2147483648
    %v5539 = vor.u32 1.1754944e-38, %v5538
    %v5540 = vsel %vm5537, %v5539, %v5535
    %v5541 = vmul.f32 1.0, %v5540
    %v5542 = vrcp.pop %v5436
    %v5543 = vmul.f32 %v5436, %v5542
    %v5544 = vsub.f32 1.0, %v5543
    %v5545 = vmul.f32 %v5542, %v5544
    %v5546 = vadd.f32 %v5542, %v5545
    %vm5547 = vweird.f32 %v5436
    %vm5548 = vweird.f32 %v5542
    %vm5549 = vmor %vm5547, %vm5548
    %v5550 = vsel %vm5549, %v5542, %v5546
    %v5551 = vand.u32 2147483647, %v5436
    %vm5552 = vcmp.eq.f32.partialorder %v5551, 8.507059e+37
    %v5553 = vand.u32 %v5436, 2147483648
    %v5554 = vor.u32 1.1754944e-38, %v5553
    %v5555 = vsel %vm5552, %v5554, %v5550
    %v5556 = vmul.f32 1.0, %v5555
    %v5565 = vrot.slane %v5397, 1
    %v5566 = vrot.slane %v5398, 1
    %v5567 = vrot.slane %v5399, 1
    %v5568 = vrot.slane %v5400, 1
    %v5569 = vrot.slane %v5401, 1
    %v5570 = vrot.slane %v5402, 1
    %v5571 = vrot.slane %v5403, 1
    %v5572 = vrot.slane %v5404, 1
    %v5581 = vxor.u32 %v5565, 2147483648
    %v5582 = vxor.u32 %v5566, 2147483648
    %v5583 = vxor.u32 %v5567, 2147483648
    %v5584 = vxor.u32 %v5568, 2147483648
    %v5585 = vxor.u32 %v5569, 2147483648
    %v5586 = vxor.u32 %v5570, 2147483648
    %v5587 = vxor.u32 %v5571, 2147483648
    %v5588 = vxor.u32 %v5572, 2147483648
    %v5589 = vmul.f32 %v5581, 1.442695
    %v5590 = vpow.pop %v5589
    %v5591 = vmul.f32 %v5582, 1.442695
    %v5592 = vpow.pop %v5591
    %v5593 = vmul.f32 %v5583, 1.442695
    %v5594 = vpow.pop %v5593
    %v5595 = vmul.f32 %v5584, 1.442695
    %v5596 = vpow.pop %v5595
    %v5597 = vmul.f32 %v5585, 1.442695
    %v5598 = vpow.pop %v5597
    %v5599 = vmul.f32 %v5586, 1.442695
    %v5600 = vpow.pop %v5599
    %v5601 = vmul.f32 %v5587, 1.442695
    %v5602 = vpow.pop %v5601
    %v5603 = vmul.f32 %v5588, 1.442695
    %v5604 = vpow.pop %v5603
    %v5605 = vadd.f32 %v5590, 1.0
    %v5606 = vadd.f32 %v5592, 1.0
    %v5607 = vadd.f32 %v5594, 1.0
    %v5608 = vadd.f32 %v5596, 1.0
    %v5609 = vadd.f32 %v5598, 1.0
    %v5610 = vadd.f32 %v5600, 1.0
    %v5611 = vadd.f32 %v5602, 1.0
    %v5612 = vadd.f32 %v5604, 1.0
    %v5613 = vrcp.pop %v5605
    %v5614 = vmul.f32 %v5605, %v5613
    %v5615 = vsub.f32 1.0, %v5614
    %v5616 = vmul.f32 %v5613, %v5615
    %v5617 = vadd.f32 %v5613, %v5616
    %vm5618 = vweird.f32 %v5605
    %vm5619 = vweird.f32 %v5613
    %vm5620 = vmor %vm5618, %vm5619
    %v5621 = vsel %vm5620, %v5613, %v5617
    %v5622 = vand.u32 2147483647, %v5605
    %vm5623 = vcmp.eq.f32.partialorder %v5622, 8.507059e+37
    %v5624 = vand.u32 %v5605, 2147483648
    %v5625 = vor.u32 1.1754944e-38, %v5624
    %v5626 = vsel %vm5623, %v5625, %v5621
    %v5627 = vmul.f32 1.0, %v5626
    %v5628 = vrcp.pop %v5606
    %v5629 = vmul.f32 %v5606, %v5628
    %v5630 = vsub.f32 1.0, %v5629
    %v5631 = vmul.f32 %v5628, %v5630
    %v5632 = vadd.f32 %v5628, %v5631
    %vm5633 = vweird.f32 %v5606
    %vm5634 = vweird.f32 %v5628
    %vm5635 = vmor %vm5633, %vm5634
    %v5636 = vsel %vm5635, %v5628, %v5632
    %v5637 = vand.u32 2147483647, %v5606
    %vm5638 = vcmp.eq.f32.partialorder %v5637, 8.507059e+37
    %v5639 = vand.u32 %v5606, 2147483648
    %v5640 = vor.u32 1.1754944e-38, %v5639
    %v5641 = vsel %vm5638, %v5640, %v5636
    %v5642 = vmul.f32 1.0, %v5641
    %v5643 = vrcp.pop %v5607
    %v5644 = vmul.f32 %v5607, %v5643
    %v5645 = vsub.f32 1.0, %v5644
    %v5646 = vmul.f32 %v5643, %v5645
    %v5647 = vadd.f32 %v5643, %v5646
    %vm5648 = vweird.f32 %v5607
    %vm5649 = vweird.f32 %v5643
    %vm5650 = vmor %vm5648, %vm5649
    %v5651 = vsel %vm5650, %v5643, %v5647
    %v5652 = vand.u32 2147483647, %v5607
    %vm5653 = vcmp.eq.f32.partialorder %v5652, 8.507059e+37
    %v5654 = vand.u32 %v5607, 2147483648
    %v5655 = vor.u32 1.1754944e-38, %v5654
    %v5656 = vsel %vm5653, %v5655, %v5651
    %v5657 = vmul.f32 1.0, %v5656
    %v5658 = vrcp.pop %v5608
    %v5659 = vmul.f32 %v5608, %v5658
    %v5660 = vsub.f32 1.0, %v5659
    %v5661 = vmul.f32 %v5658, %v5660
    %v5662 = vadd.f32 %v5658, %v5661
    %vm5663 = vweird.f32 %v5608
    %vm5664 = vweird.f32 %v5658
    %vm5665 = vmor %vm5663, %vm5664
    %v5666 = vsel %vm5665, %v5658, %v5662
    %v5667 = vand.u32 2147483647, %v5608
    %vm5668 = vcmp.eq.f32.partialorder %v5667, 8.507059e+37
    %v5669 = vand.u32 %v5608, 2147483648
    %v5670 = vor.u32 1.1754944e-38, %v5669
    %v5671 = vsel %vm5668, %v5670, %v5666
    %v5672 = vmul.f32 1.0, %v5671
    %v5673 = vrcp.pop %v5609
    %v5674 = vmul.f32 %v5609, %v5673
    %v5675 = vsub.f32 1.0, %v5674
    %v5676 = vmul.f32 %v5673, %v5675
    %v5677 = vadd.f32 %v5673, %v5676
    %vm5678 = vweird.f32 %v5609
    %vm5679 = vweird.f32 %v5673
    %vm5680 = vmor %vm5678, %vm5679
    %v5681 = vsel %vm5680, %v5673, %v5677
    %v5682 = vand.u32 2147483647, %v5609
    %vm5683 = vcmp.eq.f32.partialorder %v5682, 8.507059e+37
    %v5684 = vand.u32 %v5609, 2147483648
    %v5685 = vor.u32 1.1754944e-38, %v5684
    %v5686 = vsel %vm5683, %v5685, %v5681
    %v5687 = vmul.f32 1.0, %v5686
    %v5688 = vrcp.pop %v5610
    %v5689 = vmul.f32 %v5610, %v5688
    %v5690 = vsub.f32 1.0, %v5689
    %v5691 = vmul.f32 %v5688, %v5690
    %v5692 = vadd.f32 %v5688, %v5691
    %vm5693 = vweird.f32 %v5610
    %vm5694 = vweird.f32 %v5688
    %vm5695 = vmor %vm5693, %vm5694
    %v5696 = vsel %vm5695, %v5688, %v5692
    %v5697 = vand.u32 2147483647, %v5610
    %vm5698 = vcmp.eq.f32.partialorder %v5697, 8.507059e+37
    %v5699 = vand.u32 %v5610, 2147483648
    %v5700 = vor.u32 1.1754944e-38, %v5699
    %v5701 = vsel %vm5698, %v5700, %v5696
    %v5702 = vmul.f32 1.0, %v5701
    %v5703 = vrcp.pop %v5611
    %v5704 = vmul.f32 %v5611, %v5703
    %v5705 = vsub.f32 1.0, %v5704
    %v5706 = vmul.f32 %v5703, %v5705
    %v5707 = vadd.f32 %v5703, %v5706
    %vm5708 = vweird.f32 %v5611
    %vm5709 = vweird.f32 %v5703
    %vm5710 = vmor %vm5708, %vm5709
    %v5711 = vsel %vm5710, %v5703, %v5707
    %v5712 = vand.u32 2147483647, %v5611
    %vm5713 = vcmp.eq.f32.partialorder %v5712, 8.507059e+37
    %v5714 = vand.u32 %v5611, 2147483648
    %v5715 = vor.u32 1.1754944e-38, %v5714
    %v5716 = vsel %vm5713, %v5715, %v5711
    %v5717 = vmul.f32 1.0, %v5716
    %v5718 = vrcp.pop %v5612
    %v5719 = vmul.f32 %v5612, %v5718
    %v5720 = vsub.f32 1.0, %v5719
    %v5721 = vmul.f32 %v5718, %v5720
    %v5722 = vadd.f32 %v5718, %v5721
    %vm5723 = vweird.f32 %v5612
    %vm5724 = vweird.f32 %v5718
    %vm5725 = vmor %vm5723, %vm5724
    %v5726 = vsel %vm5725, %v5718, %v5722
    %v5727 = vand.u32 2147483647, %v5612
    %vm5728 = vcmp.eq.f32.partialorder %v5727, 8.507059e+37
    %v5729 = vand.u32 %v5612, 2147483648
    %v5730 = vor.u32 1.1754944e-38, %v5729
    %v5731 = vsel %vm5728, %v5730, %v5726
    %v5732 = vmul.f32 1.0, %v5731
    %v5733 = vrot.slane %v5397, 2
    %v5734 = vrot.slane %v5398, 2
    %v5735 = vrot.slane %v5399, 2
    %v5736 = vrot.slane %v5400, 2
    %v5737 = vrot.slane %v5401, 2
    %v5738 = vrot.slane %v5402, 2
    %v5739 = vrot.slane %v5403, 2
    %v5740 = vrot.slane %v5404, 2
    %v5749 = vtanh.pop %v5733
    %v5750 = vtanh.pop %v5734
    %v5751 = vtanh.pop %v5735
    %v5752 = vtanh.pop %v5736
    %v5753 = vtanh.pop %v5737
    %v5754 = vtanh.pop %v5738
    %v5755 = vtanh.pop %v5739
    %v5756 = vtanh.pop %v5740
    %v5757 = vrot.slane %v5397, 3
    %v5758 = vrot.slane %v5398, 3
    %v5759 = vrot.slane %v5399, 3
    %v5760 = vrot.slane %v5400, 3
    %v5761 = vrot.slane %v5401, 3
    %v5762 = vrot.slane %v5402, 3
    %v5763 = vrot.slane %v5403, 3
    %v5764 = vrot.slane %v5404, 3
    %v5773 = vxor.u32 %v5757, 2147483648
    %v5774 = vxor.u32 %v5758, 2147483648
    %v5775 = vxor.u32 %v5759, 2147483648
    %v5776 = vxor.u32 %v5760, 2147483648
    %v5777 = vxor.u32 %v5761, 2147483648
    %v5778 = vxor.u32 %v5762, 2147483648
    %v5779 = vxor.u32 %v5763, 2147483648
    %v5780 = vxor.u32 %v5764, 2147483648
    %v5781 = vmul.f32 %v5773, 1.442695
    %v5782 = vpow.pop %v5781
    %v5783 = vmul.f32 %v5774, 1.442695
    %v5784 = vpow.pop %v5783
    %v5785 = vmul.f32 %v5775, 1.442695
    %v5786 = vpow.pop %v5785
    %v5787 = vmul.f32 %v5776, 1.442695
    %v5788 = vpow.pop %v5787
    %v5789 = vmul.f32 %v5777, 1.442695
    %v5790 = vpow.pop %v5789
    %v5791 = vmul.f32 %v5778, 1.442695
    %v5792 = vpow.pop %v5791
    %v5793 = vmul.f32 %v5779, 1.442695
    %v5794 = vpow.pop %v5793
    %v5795 = vmul.f32 %v5780, 1.442695
    %v5796 = vpow.pop %v5795
    %v5797 = vadd.f32 %v5782, 1.0
    %v5798 = vadd.f32 %v5784, 1.0
    %v5799 = vadd.f32 %v5786, 1.0
    %v5800 = vadd.f32 %v5788, 1.0
    %v5801 = vadd.f32 %v5790, 1.0
    %v5802 = vadd.f32 %v5792, 1.0
    %v5803 = vadd.f32 %v5794, 1.0
    %v5804 = vadd.f32 %v5796, 1.0
    %v5805 = vrcp.pop %v5797
    %v5806 = vmul.f32 %v5797, %v5805
    %v5807 = vsub.f32 1.0, %v5806
    %v5808 = vmul.f32 %v5805, %v5807
    %v5809 = vadd.f32 %v5805, %v5808
    %vm5810 = vweird.f32 %v5797
    %vm5811 = vweird.f32 %v5805
    %vm5812 = vmor %vm5810, %vm5811
    %v5813 = vsel %vm5812, %v5805, %v5809
    %v5814 = vand.u32 2147483647, %v5797
    %vm5815 = vcmp.eq.f32.partialorder %v5814, 8.507059e+37
    %v5816 = vand.u32 %v5797, 2147483648
    %v5817 = vor.u32 1.1754944e-38, %v5816
    %v5818 = vsel %vm5815, %v5817, %v5813
    %v5819 = vmul.f32 1.0, %v5818
    %v5820 = vrcp.pop %v5798
    %v5821 = vmul.f32 %v5798, %v5820
    %v5822 = vsub.f32 1.0, %v5821
    %v5823 = vmul.f32 %v5820, %v5822
    %v5824 = vadd.f32 %v5820, %v5823
    %vm5825 = vweird.f32 %v5798
    %vm5826 = vweird.f32 %v5820
    %vm5827 = vmor %vm5825, %vm5826
    %v5828 = vsel %vm5827, %v5820, %v5824
    %v5829 = vand.u32 2147483647, %v5798
    %vm5830 = vcmp.eq.f32.partialorder %v5829, 8.507059e+37
    %v5831 = vand.u32 %v5798, 2147483648
    %v5832 = vor.u32 1.1754944e-38, %v5831
    %v5833 = vsel %vm5830, %v5832, %v5828
    %v5834 = vmul.f32 1.0, %v5833
    %v5835 = vrcp.pop %v5799
    %v5836 = vmul.f32 %v5799, %v5835
    %v5837 = vsub.f32 1.0, %v5836
    %v5838 = vmul.f32 %v5835, %v5837
    %v5839 = vadd.f32 %v5835, %v5838
    %vm5840 = vweird.f32 %v5799
    %vm5841 = vweird.f32 %v5835
    %vm5842 = vmor %vm5840, %vm5841
    %v5843 = vsel %vm5842, %v5835, %v5839
    %v5844 = vand.u32 2147483647, %v5799
    %vm5845 = vcmp.eq.f32.partialorder %v5844, 8.507059e+37
    %v5846 = vand.u32 %v5799, 2147483648
    %v5847 = vor.u32 1.1754944e-38, %v5846
    %v5848 = vsel %vm5845, %v5847, %v5843
    %v5849 = vmul.f32 1.0, %v5848
    %v5850 = vrcp.pop %v5800
    %v5851 = vmul.f32 %v5800, %v5850
    %v5852 = vsub.f32 1.0, %v5851
    %v5853 = vmul.f32 %v5850, %v5852
    %v5854 = vadd.f32 %v5850, %v5853
    %vm5855 = vweird.f32 %v5800
    %vm5856 = vweird.f32 %v5850
    %vm5857 = vmor %vm5855, %vm5856
    %v5858 = vsel %vm5857, %v5850, %v5854
    %v5859 = vand.u32 2147483647, %v5800
    %vm5860 = vcmp.eq.f32.partialorder %v5859, 8.507059e+37
    %v5861 = vand.u32 %v5800, 2147483648
    %v5862 = vor.u32 1.1754944e-38, %v5861
    %v5863 = vsel %vm5860, %v5862, %v5858
    %v5864 = vmul.f32 1.0, %v5863
    %v5865 = vrcp.pop %v5801
    %v5866 = vmul.f32 %v5801, %v5865
    %v5867 = vsub.f32 1.0, %v5866
    %v5868 = vmul.f32 %v5865, %v5867
    %v5869 = vadd.f32 %v5865, %v5868
    %vm5870 = vweird.f32 %v5801
    %vm5871 = vweird.f32 %v5865
    %vm5872 = vmor %vm5870, %vm5871
    %v5873 = vsel %vm5872, %v5865, %v5869
    %v5874 = vand.u32 2147483647, %v5801
    %vm5875 = vcmp.eq.f32.partialorder %v5874, 8.507059e+37
    %v5876 = vand.u32 %v5801, 2147483648
    %v5877 = vor.u32 1.1754944e-38, %v5876
    %v5878 = vsel %vm5875, %v5877, %v5873
    %v5879 = vmul.f32 1.0, %v5878
    %v5880 = vrcp.pop %v5802
    %v5881 = vmul.f32 %v5802, %v5880
    %v5882 = vsub.f32 1.0, %v5881
    %v5883 = vmul.f32 %v5880, %v5882
    %v5884 = vadd.f32 %v5880, %v5883
    %vm5885 = vweird.f32 %v5802
    %vm5886 = vweird.f32 %v5880
    %vm5887 = vmor %vm5885, %vm5886
    %v5888 = vsel %vm5887, %v5880, %v5884
    %v5889 = vand.u32 2147483647, %v5802
    %vm5890 = vcmp.eq.f32.partialorder %v5889, 8.507059e+37
    %v5891 = vand.u32 %v5802, 2147483648
    %v5892 = vor.u32 1.1754944e-38, %v5891
    %v5893 = vsel %vm5890, %v5892, %v5888
    %v5894 = vmul.f32 1.0, %v5893
    %v5895 = vrcp.pop %v5803
    %v5896 = vmul.f32 %v5803, %v5895
    %v5897 = vsub.f32 1.0, %v5896
    %v5898 = vmul.f32 %v5895, %v5897
    %v5899 = vadd.f32 %v5895, %v5898
    %vm5900 = vweird.f32 %v5803
    %vm5901 = vweird.f32 %v5895
    %vm5902 = vmor %vm5900, %vm5901
    %v5903 = vsel %vm5902, %v5895, %v5899
    %v5904 = vand.u32 2147483647, %v5803
    %vm5905 = vcmp.eq.f32.partialorder %v5904, 8.507059e+37
    %v5906 = vand.u32 %v5803, 2147483648
    %v5907 = vor.u32 1.1754944e-38, %v5906
    %v5908 = vsel %vm5905, %v5907, %v5903
    %v5909 = vmul.f32 1.0, %v5908
    %v5910 = vrcp.pop %v5804
    %v5911 = vmul.f32 %v5804, %v5910
    %v5912 = vsub.f32 1.0, %v5911
    %v5913 = vmul.f32 %v5910, %v5912
    %v5914 = vadd.f32 %v5910, %v5913
    %vm5915 = vweird.f32 %v5804
    %vm5916 = vweird.f32 %v5910
    %vm5917 = vmor %vm5915, %vm5916
    %v5918 = vsel %vm5917, %v5910, %v5914
    %v5919 = vand.u32 2147483647, %v5804
    %vm5920 = vcmp.eq.f32.partialorder %v5919, 8.507059e+37
    %v5921 = vand.u32 %v5804, 2147483648
    %v5922 = vor.u32 1.1754944e-38, %v5921
    %v5923 = vsel %vm5920, %v5922, %v5918
    %v5924 = vmul.f32 1.0, %v5923
    %v5925 = vmul.f32 %v5627, %v5019
    %v5926 = vmul.f32 %v5642, %v5020
    %v5927 = vmul.f32 %v5657, %v5021
    %v5928 = vmul.f32 %v5672, %v5022
    %v5929 = vmul.f32 %v5687, %v5023
    %v5930 = vmul.f32 %v5702, %v5024
    %v5931 = vmul.f32 %v5717, %v5025
    %v5932 = vmul.f32 %v5732, %v5026
    %v5933 = vmul.f32 %v5451, %v5749
    %v5934 = vmul.f32 %v5466, %v5750
    %v5935 = vmul.f32 %v5481, %v5751
    %v5936 = vmul.f32 %v5496, %v5752
    %v5937 = vmul.f32 %v5511, %v5753
    %v5938 = vmul.f32 %v5526, %v5754
    %v5939 = vmul.f32 %v5541, %v5755
    %v5940 = vmul.f32 %v5556, %v5756
    %v5941 = vadd.f32 %v5925, %v5933
    %v5942 = vadd.f32 %v5926, %v5934
    %v5943 = vadd.f32 %v5927, %v5935
    %v5944 = vadd.f32 %v5928, %v5936
    %v5945 = vadd.f32 %v5929, %v5937
    %v5946 = vadd.f32 %v5930, %v5938
    %v5947 = vadd.f32 %v5931, %v5939
    %v5948 = vadd.f32 %v5932, %v5940
    %v5949 = vtanh.pop %v5941
    %v5950 = vtanh.pop %v5942
    %v5951 = vtanh.pop %v5943
    %v5952 = vtanh.pop %v5944
    %v5953 = vtanh.pop %v5945
    %v5954 = vtanh.pop %v5946
    %v5955 = vtanh.pop %v5947
    %v5956 = vtanh.pop %v5948
    %v5957 = vmul.f32 %v5819, %v5949
    %v5958 = vmul.f32 %v5834, %v5950
    %v5959 = vmul.f32 %v5849, %v5951
    %v5960 = vmul.f32 %v5864, %v5952
    %v5961 = vmul.f32 %v5879, %v5953
    %v5962 = vmul.f32 %v5894, %v5954
    %v5963 = vmul.f32 %v5909, %v5955
    %v5964 = vmul.f32 %v5924, %v5956
    %5965 = vst [vmem:[#allocation3 + $0x5] sm:$0x1] %v5957
    %5966 = vst [vmem:[#allocation3 + $0xd] sm:$0x1] %v5958
    %5967 = vst [vmem:[#allocation3 + $0x15] sm:$0x1] %v5959
    %5968 = vst [vmem:[#allocation3 + $0x1d] sm:$0x1] %v5960
    %5969 = vst [vmem:[#allocation3 + $0x25] sm:$0x1] %v5961
    %5970 = vst [vmem:[#allocation3 + $0x2d] sm:$0x1] %v5962
    %5971 = vst [vmem:[#allocation3 + $0x35] sm:$0x1] %v5963
    %5972 = vst [vmem:[#allocation3 + $0x3d] sm:$0x1] %v5964
    %s5973 = scalar_lea.vmem [#allocation2], 6
    %v5974 = vld [vmem:[%s5973] ss:$8 sm:$0xf]
    %s5975 = scalar_lea.vmem [#allocation2], 38
    %v5976 = vld [vmem:[%s5975] ss:$8 sm:$0xf]
    %s5977 = scalar_lea.vmem [#allocation2], 70
    %v5978 = vld [vmem:[%s5977] ss:$8 sm:$0xf]
    %s5979 = scalar_lea.vmem [#allocation2], 102
    %v5980 = vld [vmem:[%s5979] ss:$8 sm:$0xf]
    %s5981 = scalar_lea.vmem [#allocation2], 134
    %v5982 = vld [vmem:[%s5981] ss:$8 sm:$0xf]
    %s5983 = scalar_lea.vmem [#allocation2], 166
    %v5984 = vld [vmem:[%s5983] ss:$8 sm:$0xf]
    %s5985 = scalar_lea.vmem [#allocation2], 198
    %v5986 = vld [vmem:[%s5985] ss:$8 sm:$0xf]
    %s5987 = scalar_lea.vmem [#allocation2], 230
    %v5988 = vld [vmem:[%s5987] ss:$8 sm:$0xf]
    %v5989 = vpack.c.bf16 %v5957, %v5957
    %v5990 = vpack.c.bf16 %v5958, %v5958
    %v5991 = vpack.c.bf16 %v5959, %v5959
    %v5992 = vpack.c.bf16 %v5960, %v5960
    %v5993 = vpack.c.bf16 %v5961, %v5961
    %v5994 = vpack.c.bf16 %v5962, %v5962
    %v5995 = vpack.c.bf16 %v5963, %v5963
    %v5996 = vpack.c.bf16 %v5964, %v5964
    %v5997 = vld [vmem:[#allocation11] sm:$0xff]
    %v5998 = vld [vmem:[#allocation11 + $0x8] sm:$0xff]
    %v5999 = vld [vmem:[#allocation11 + $0x10] sm:$0xff]
    %v6000 = vld [vmem:[#allocation11 + $0x18] sm:$0xff]
    %v6001 = vld [vmem:[#allocation11 + $0x20] sm:$0xff]
    %v6002 = vld [vmem:[#allocation11 + $0x28] sm:$0xff]
    %v6003 = vld [vmem:[#allocation11 + $0x30] sm:$0xff]
    %v6004 = vld [vmem:[#allocation11 + $0x38] sm:$0xff]
    %v6005 = vld [vmem:[#allocation11 + $0x40] sm:$0xff]
    %v6006 = vld [vmem:[#allocation11 + $0x48] sm:$0xff]
    %v6007 = vld [vmem:[#allocation11 + $0x50] sm:$0xff]
    %v6008 = vld [vmem:[#allocation11 + $0x58] sm:$0xff]
    %v6009 = vld [vmem:[#allocation11 + $0x60] sm:$0xff]
    %v6010 = vld [vmem:[#allocation11 + $0x68] sm:$0xff]
    %v6011 = vld [vmem:[#allocation11 + $0x70] sm:$0xff]
    %v6012 = vld [vmem:[#allocation11 + $0x78] sm:$0xff]
    %v6013 = vld [vmem:[#allocation11 + $0x80] sm:$0xff]
    %v6014 = vld [vmem:[#allocation11 + $0x88] sm:$0xff]
    %v6015 = vld [vmem:[#allocation11 + $0x90] sm:$0xff]
    %v6016 = vld [vmem:[#allocation11 + $0x98] sm:$0xff]
    %v6017 = vld [vmem:[#allocation11 + $0xa0] sm:$0xff]
    %v6018 = vld [vmem:[#allocation11 + $0xa8] sm:$0xff]
    %v6019 = vld [vmem:[#allocation11 + $0xb0] sm:$0xff]
    %v6020 = vld [vmem:[#allocation11 + $0xb8] sm:$0xff]
    %v6021 = vld [vmem:[#allocation11 + $0xc0] sm:$0xff]
    %v6022 = vld [vmem:[#allocation11 + $0xc8] sm:$0xff]
    %v6023 = vld [vmem:[#allocation11 + $0xd0] sm:$0xff]
    %v6024 = vld [vmem:[#allocation11 + $0xd8] sm:$0xff]
    %v6025 = vld [vmem:[#allocation11 + $0xe0] sm:$0xff]
    %v6026 = vld [vmem:[#allocation11 + $0xe8] sm:$0xff]
    %v6027 = vld [vmem:[#allocation11 + $0xf0] sm:$0xff]
    %v6028 = vld [vmem:[#allocation11 + $0xf8] sm:$0xff]
    %v6037 = vunpack.c.l.b16 %v5989
    %v6038 = vunpack.c.l.b16 %v5990
    %v6039 = vunpack.c.l.b16 %v5991
    %v6040 = vunpack.c.l.b16 %v5992
    %v6041 = vunpack.c.l.b16 %v5993
    %v6042 = vunpack.c.l.b16 %v5994
    %v6043 = vunpack.c.l.b16 %v5995
    %v6044 = vunpack.c.l.b16 %v5996
    %v6045 = vrot.slane %v6038, 7
    %v6046 = vsel %vm722, %v6045, %v6037
    %v6047 = vrot.slane %v6039, 6
    %v6048 = vsel %vm718, %v6047, %v6046
    %v6049 = vrot.slane %v6040, 5
    %v6050 = vsel %vm724, %v6049, %v6048
    %v6051 = vrot.slane %v6041, 4
    %v6052 = vsel %vm730, %v6051, %v6050
    %v6053 = vrot.slane %v6042, 3
    %v6054 = vsel %vm736, %v6053, %v6052
    %v6055 = vrot.slane %v6043, 2
    %v6056 = vsel %vm742, %v6055, %v6054
    %v6057 = vrot.slane %v6044, 1
    %v6058 = vsel %vm1447, %v6057, %v6056
    %v6059 = vpack.c.b16 %v6058, %v6058
    %v6093 = vunpack.c.l.b16 %v5997
    %v6094 = vunpack.c.h.b16 %v5997
    %v6095 = vunpack.c.l.b16 %v5998
    %v6096 = vunpack.c.h.b16 %v5998
    %v6097 = vunpack.c.l.b16 %v5999
    %v6098 = vunpack.c.h.b16 %v5999
    %v6099 = vunpack.c.l.b16 %v6000
    %v6100 = vunpack.c.h.b16 %v6000
    %v6101 = vunpack.c.l.b16 %v6001
    %v6102 = vunpack.c.h.b16 %v6001
    %v6103 = vunpack.c.l.b16 %v6002
    %v6104 = vunpack.c.h.b16 %v6002
    %v6105 = vunpack.c.l.b16 %v6003
    %v6106 = vunpack.c.h.b16 %v6003
    %v6107 = vunpack.c.l.b16 %v6004
    %v6108 = vunpack.c.h.b16 %v6004
    %v6109 = vunpack.c.l.b16 %v6005
    %v6110 = vunpack.c.h.b16 %v6005
    %v6111 = vunpack.c.l.b16 %v6006
    %v6112 = vunpack.c.h.b16 %v6006
    %v6113 = vunpack.c.l.b16 %v6007
    %v6114 = vunpack.c.h.b16 %v6007
    %v6115 = vunpack.c.l.b16 %v6008
    %v6116 = vunpack.c.h.b16 %v6008
    %v6117 = vunpack.c.l.b16 %v6009
    %v6118 = vunpack.c.h.b16 %v6009
    %v6119 = vunpack.c.l.b16 %v6010
    %v6120 = vunpack.c.h.b16 %v6010
    %v6121 = vunpack.c.l.b16 %v6011
    %v6122 = vunpack.c.h.b16 %v6011
    %v6123 = vunpack.c.l.b16 %v6012
    %v6124 = vunpack.c.h.b16 %v6012
    %v6125 = vunpack.c.l.b16 %v6013
    %v6126 = vunpack.c.h.b16 %v6013
    %v6127 = vunpack.c.l.b16 %v6014
    %v6128 = vunpack.c.h.b16 %v6014
    %v6129 = vunpack.c.l.b16 %v6015
    %v6130 = vunpack.c.h.b16 %v6015
    %v6131 = vunpack.c.l.b16 %v6016
    %v6132 = vunpack.c.h.b16 %v6016
    %v6133 = vunpack.c.l.b16 %v6017
    %v6134 = vunpack.c.h.b16 %v6017
    %v6135 = vunpack.c.l.b16 %v6018
    %v6136 = vunpack.c.h.b16 %v6018
    %v6137 = vunpack.c.l.b16 %v6019
    %v6138 = vunpack.c.h.b16 %v6019
    %v6139 = vunpack.c.l.b16 %v6020
    %v6140 = vunpack.c.h.b16 %v6020
    %v6141 = vunpack.c.l.b16 %v6021
    %v6142 = vunpack.c.h.b16 %v6021
    %v6143 = vunpack.c.l.b16 %v6022
    %v6144 = vunpack.c.h.b16 %v6022
    %v6145 = vunpack.c.l.b16 %v6023
    %v6146 = vunpack.c.h.b16 %v6023
    %v6147 = vunpack.c.l.b16 %v6024
    %v6148 = vunpack.c.h.b16 %v6024
    %v6149 = vunpack.c.l.b16 %v6025
    %v6150 = vunpack.c.h.b16 %v6025
    %v6151 = vunpack.c.l.b16 %v6026
    %v6152 = vunpack.c.h.b16 %v6026
    %v6153 = vunpack.c.l.b16 %v6027
    %v6154 = vunpack.c.h.b16 %v6027
    %v6155 = vunpack.c.l.b16 %v6028
    %v6156 = vunpack.c.h.b16 %v6028
    %v6157 = vpack.c.b16 %v6097, %v6093
    %v6158 = vpack.c.b16 %v6098, %v6094
    %v6159 = vpack.c.b16 %v6099, %v6095
    %v6160 = vpack.c.b16 %v6100, %v6096
    %v6161 = vpack.c.b16 %v6105, %v6101
    %v6162 = vpack.c.b16 %v6106, %v6102
    %v6163 = vpack.c.b16 %v6107, %v6103
    %v6164 = vpack.c.b16 %v6108, %v6104
    %v6165 = vpack.c.b16 %v6113, %v6109
    %v6166 = vpack.c.b16 %v6114, %v6110
    %v6167 = vpack.c.b16 %v6115, %v6111
    %v6168 = vpack.c.b16 %v6116, %v6112
    %v6169 = vpack.c.b16 %v6121, %v6117
    %v6170 = vpack.c.b16 %v6122, %v6118
    %v6171 = vpack.c.b16 %v6123, %v6119
    %v6172 = vpack.c.b16 %v6124, %v6120
    %v6173 = vpack.c.b16 %v6129, %v6125
    %v6174 = vpack.c.b16 %v6130, %v6126
    %v6175 = vpack.c.b16 %v6131, %v6127
    %v6176 = vpack.c.b16 %v6132, %v6128
    %v6177 = vpack.c.b16 %v6137, %v6133
    %v6178 = vpack.c.b16 %v6138, %v6134
    %v6179 = vpack.c.b16 %v6139, %v6135
    %v6180 = vpack.c.b16 %v6140, %v6136
    %v6181 = vpack.c.b16 %v6145, %v6141
    %v6182 = vpack.c.b16 %v6146, %v6142
    %v6183 = vpack.c.b16 %v6147, %v6143
    %v6184 = vpack.c.b16 %v6148, %v6144
    %v6185 = vpack.c.b16 %v6153, %v6149
    %v6186 = vpack.c.b16 %v6154, %v6150
    %v6187 = vpack.c.b16 %v6155, %v6151
    %v6188 = vpack.c.b16 %v6156, %v6152
    %6221 = vmatpush.bf16.msra.mxu0 %v6185
    %6222 = vmatpush.bf16.msra.mxu0 %v6181
    %6223 = vmatpush.bf16.msra.mxu0 %v6177
    %6224 = vmatpush.bf16.msra.mxu0 %v6173
    %6225 = vmatpush.bf16.msra.mxu0 %v6169
    %6226 = vmatpush.bf16.msra.mxu0 %v6165
    %6227 = vmatpush.bf16.msra.mxu0 %v6161
    %6228 = vmatpush.bf16.msra.mxu0 %v6157
    %6229 = vmatmul.bf16.gmra.mxu0 %v6059
    %v6230 = vpop.f32.mrf.mxu0
    %v6231 = vadd.f32 0.0, %v6230
    %v6232 = vpop.f32.mrf.mxu0
    %6233 = vdwg.mxu0
    %6234 = vmatpush.bf16.msra.mxu0 %v6186
    %6235 = vmatpush.bf16.msra.mxu0 %v6182
    %6236 = vmatpush.bf16.msra.mxu0 %v6178
    %6237 = vmatpush.bf16.msra.mxu0 %v6174
    %6238 = vmatpush.bf16.msra.mxu0 %v6170
    %6239 = vmatpush.bf16.msra.mxu0 %v6166
    %6240 = vmatpush.bf16.msra.mxu0 %v6162
    %6241 = vmatpush.bf16.msra.mxu0 %v6158
    %6242 = vmatmul.bf16.gmra.mxu0 %v6059
    %v6243 = vpop.f32.mrf.mxu0
    %v6244 = vadd.f32 0.0, %v6243
    %v6245 = vpop.f32.mrf.mxu0
    %6246 = vdwg.mxu0
    %6247 = vmatpush.bf16.msra.mxu0 %v6187
    %6248 = vmatpush.bf16.msra.mxu0 %v6183
    %6249 = vmatpush.bf16.msra.mxu0 %v6179
    %6250 = vmatpush.bf16.msra.mxu0 %v6175
    %6251 = vmatpush.bf16.msra.mxu0 %v6171
    %6252 = vmatpush.bf16.msra.mxu0 %v6167
    %6253 = vmatpush.bf16.msra.mxu0 %v6163
    %6254 = vmatpush.bf16.msra.mxu0 %v6159
    %6255 = vmatmul.bf16.gmra.mxu0 %v6059
    %v6256 = vpop.f32.mrf.mxu0
    %v6257 = vadd.f32 0.0, %v6256
    %v6258 = vpop.f32.mrf.mxu0
    %6259 = vdwg.mxu0
    %6260 = vmatpush.bf16.msra.mxu0 %v6188
    %6261 = vmatpush.bf16.msra.mxu0 %v6184
    %6262 = vmatpush.bf16.msra.mxu0 %v6180
    %6263 = vmatpush.bf16.msra.mxu0 %v6176
    %6264 = vmatpush.bf16.msra.mxu0 %v6172
    %6265 = vmatpush.bf16.msra.mxu0 %v6168
    %6266 = vmatpush.bf16.msra.mxu0 %v6164
    %6267 = vmatpush.bf16.msra.mxu0 %v6160
    %6268 = vmatmul.bf16.gmra.mxu0 %v6059
    %v6269 = vpop.f32.mrf.mxu0
    %v6270 = vadd.f32 0.0, %v6269
    %v6271 = vpop.f32.mrf.mxu0
    %6272 = vdwg.mxu0
    %v6277 = vrot.slane %v6244, 7
    %v6278 = vrot.slane %v6257, 6
    %v6279 = vrot.slane %v6270, 5
    %v6280 = vsel %vm716, %v6231, %v6277
    %v6281 = vsel %vm718, %v6278, %v6279
    %v6282 = vsel %vm720, %v6280, %v6281
    %v6283 = vsel %vm722, %v6231, %v6277
    %v6284 = vsel %vm724, %v6278, %v6279
    %v6285 = vsel %vm726, %v6283, %v6284
    %v6286 = vrot.slane %v6285, 1
    %v6287 = vsel %vm718, %v6231, %v6277
    %v6288 = vsel %vm730, %v6278, %v6279
    %v6289 = vsel %vm732, %v6287, %v6288
    %v6290 = vrot.slane %v6289, 2
    %v6291 = vsel %vm724, %v6231, %v6277
    %v6292 = vsel %vm736, %v6278, %v6279
    %v6293 = vsel %vm738, %v6291, %v6292
    %v6294 = vrot.slane %v6293, 3
    %v6295 = vsel %vm730, %v6231, %v6277
    %v6296 = vsel %vm742, %v6278, %v6279
    %v6297 = vsel %vm744, %v6295, %v6296
    %v6298 = vrot.slane %v6297, 4
    %v6299 = vsel %vm736, %v6231, %v6277
    %v6300 = vsel %vm748, %v6279, %v6278
    %v6301 = vsel %vm750, %v6299, %v6300
    %v6302 = vrot.slane %v6301, 5
    %v6303 = vsel %vm742, %v6231, %v6277
    %v6304 = vsel %vm716, %v6278, %v6279
    %v6305 = vsel %vm755, %v6304, %v6303
    %v6306 = vrot.slane %v6305, 6
    %v6307 = vsel %vm748, %v6277, %v6231
    %v6308 = vsel %vm722, %v6278, %v6279
    %v6309 = vsel %vm760, %v6308, %v6307
    %v6310 = vrot.slane %v6309, 7
    %v6319 = vadd.f32 %v5974, %v6282
    %v6320 = vadd.f32 %v5976, %v6286
    %v6321 = vadd.f32 %v5978, %v6290
    %v6322 = vadd.f32 %v5980, %v6294
    %v6323 = vadd.f32 %v5982, %v6298
    %v6324 = vadd.f32 %v5984, %v6302
    %v6325 = vadd.f32 %v5986, %v6306
    %v6326 = vadd.f32 %v5988, %v6310
    %v6327 = vxor.u32 %v6319, 2147483648
    %v6328 = vxor.u32 %v6320, 2147483648
    %v6329 = vxor.u32 %v6321, 2147483648
    %v6330 = vxor.u32 %v6322, 2147483648
    %v6331 = vxor.u32 %v6323, 2147483648
    %v6332 = vxor.u32 %v6324, 2147483648
    %v6333 = vxor.u32 %v6325, 2147483648
    %v6334 = vxor.u32 %v6326, 2147483648
    %v6335 = vmul.f32 %v6327, 1.442695
    %v6336 = vpow.pop %v6335
    %v6337 = vmul.f32 %v6328, 1.442695
    %v6338 = vpow.pop %v6337
    %v6339 = vmul.f32 %v6329, 1.442695
    %v6340 = vpow.pop %v6339
    %v6341 = vmul.f32 %v6330, 1.442695
    %v6342 = vpow.pop %v6341
    %v6343 = vmul.f32 %v6331, 1.442695
    %v6344 = vpow.pop %v6343
    %v6345 = vmul.f32 %v6332, 1.442695
    %v6346 = vpow.pop %v6345
    %v6347 = vmul.f32 %v6333, 1.442695
    %v6348 = vpow.pop %v6347
    %v6349 = vmul.f32 %v6334, 1.442695
    %v6350 = vpow.pop %v6349
    %v6351 = vadd.f32 %v6336, 1.0
    %v6352 = vadd.f32 %v6338, 1.0
    %v6353 = vadd.f32 %v6340, 1.0
    %v6354 = vadd.f32 %v6342, 1.0
    %v6355 = vadd.f32 %v6344, 1.0
    %v6356 = vadd.f32 %v6346, 1.0
    %v6357 = vadd.f32 %v6348, 1.0
    %v6358 = vadd.f32 %v6350, 1.0
    %v6359 = vrcp.pop %v6351
    %v6360 = vmul.f32 %v6351, %v6359
    %v6361 = vsub.f32 1.0, %v6360
    %v6362 = vmul.f32 %v6359, %v6361
    %v6363 = vadd.f32 %v6359, %v6362
    %vm6364 = vweird.f32 %v6351
    %vm6365 = vweird.f32 %v6359
    %vm6366 = vmor %vm6364, %vm6365
    %v6367 = vsel %vm6366, %v6359, %v6363
    %v6368 = vand.u32 2147483647, %v6351
    %vm6369 = vcmp.eq.f32.partialorder %v6368, 8.507059e+37
    %v6370 = vand.u32 %v6351, 2147483648
    %v6371 = vor.u32 1.1754944e-38, %v6370
    %v6372 = vsel %vm6369, %v6371, %v6367
    %v6373 = vmul.f32 1.0, %v6372
    %v6374 = vrcp.pop %v6352
    %v6375 = vmul.f32 %v6352, %v6374
    %v6376 = vsub.f32 1.0, %v6375
    %v6377 = vmul.f32 %v6374, %v6376
    %v6378 = vadd.f32 %v6374, %v6377
    %vm6379 = vweird.f32 %v6352
    %vm6380 = vweird.f32 %v6374
    %vm6381 = vmor %vm6379, %vm6380
    %v6382 = vsel %vm6381, %v6374, %v6378
    %v6383 = vand.u32 2147483647, %v6352
    %vm6384 = vcmp.eq.f32.partialorder %v6383, 8.507059e+37
    %v6385 = vand.u32 %v6352, 2147483648
    %v6386 = vor.u32 1.1754944e-38, %v6385
    %v6387 = vsel %vm6384, %v6386, %v6382
    %v6388 = vmul.f32 1.0, %v6387
    %v6389 = vrcp.pop %v6353
    %v6390 = vmul.f32 %v6353, %v6389
    %v6391 = vsub.f32 1.0, %v6390
    %v6392 = vmul.f32 %v6389, %v6391
    %v6393 = vadd.f32 %v6389, %v6392
    %vm6394 = vweird.f32 %v6353
    %vm6395 = vweird.f32 %v6389
    %vm6396 = vmor %vm6394, %vm6395
    %v6397 = vsel %vm6396, %v6389, %v6393
    %v6398 = vand.u32 2147483647, %v6353
    %vm6399 = vcmp.eq.f32.partialorder %v6398, 8.507059e+37
    %v6400 = vand.u32 %v6353, 2147483648
    %v6401 = vor.u32 1.1754944e-38, %v6400
    %v6402 = vsel %vm6399, %v6401, %v6397
    %v6403 = vmul.f32 1.0, %v6402
    %v6404 = vrcp.pop %v6354
    %v6405 = vmul.f32 %v6354, %v6404
    %v6406 = vsub.f32 1.0, %v6405
    %v6407 = vmul.f32 %v6404, %v6406
    %v6408 = vadd.f32 %v6404, %v6407
    %vm6409 = vweird.f32 %v6354
    %vm6410 = vweird.f32 %v6404
    %vm6411 = vmor %vm6409, %vm6410
    %v6412 = vsel %vm6411, %v6404, %v6408
    %v6413 = vand.u32 2147483647, %v6354
    %vm6414 = vcmp.eq.f32.partialorder %v6413, 8.507059e+37
    %v6415 = vand.u32 %v6354, 2147483648
    %v6416 = vor.u32 1.1754944e-38, %v6415
    %v6417 = vsel %vm6414, %v6416, %v6412
    %v6418 = vmul.f32 1.0, %v6417
    %v6419 = vrcp.pop %v6355
    %v6420 = vmul.f32 %v6355, %v6419
    %v6421 = vsub.f32 1.0, %v6420
    %v6422 = vmul.f32 %v6419, %v6421
    %v6423 = vadd.f32 %v6419, %v6422
    %vm6424 = vweird.f32 %v6355
    %vm6425 = vweird.f32 %v6419
    %vm6426 = vmor %vm6424, %vm6425
    %v6427 = vsel %vm6426, %v6419, %v6423
    %v6428 = vand.u32 2147483647, %v6355
    %vm6429 = vcmp.eq.f32.partialorder %v6428, 8.507059e+37
    %v6430 = vand.u32 %v6355, 2147483648
    %v6431 = vor.u32 1.1754944e-38, %v6430
    %v6432 = vsel %vm6429, %v6431, %v6427
    %v6433 = vmul.f32 1.0, %v6432
    %v6434 = vrcp.pop %v6356
    %v6435 = vmul.f32 %v6356, %v6434
    %v6436 = vsub.f32 1.0, %v6435
    %v6437 = vmul.f32 %v6434, %v6436
    %v6438 = vadd.f32 %v6434, %v6437
    %vm6439 = vweird.f32 %v6356
    %vm6440 = vweird.f32 %v6434
    %vm6441 = vmor %vm6439, %vm6440
    %v6442 = vsel %vm6441, %v6434, %v6438
    %v6443 = vand.u32 2147483647, %v6356
    %vm6444 = vcmp.eq.f32.partialorder %v6443, 8.507059e+37
    %v6445 = vand.u32 %v6356, 2147483648
    %v6446 = vor.u32 1.1754944e-38, %v6445
    %v6447 = vsel %vm6444, %v6446, %v6442
    %v6448 = vmul.f32 1.0, %v6447
    %v6449 = vrcp.pop %v6357
    %v6450 = vmul.f32 %v6357, %v6449
    %v6451 = vsub.f32 1.0, %v6450
    %v6452 = vmul.f32 %v6449, %v6451
    %v6453 = vadd.f32 %v6449, %v6452
    %vm6454 = vweird.f32 %v6357
    %vm6455 = vweird.f32 %v6449
    %vm6456 = vmor %vm6454, %vm6455
    %v6457 = vsel %vm6456, %v6449, %v6453
    %v6458 = vand.u32 2147483647, %v6357
    %vm6459 = vcmp.eq.f32.partialorder %v6458, 8.507059e+37
    %v6460 = vand.u32 %v6357, 2147483648
    %v6461 = vor.u32 1.1754944e-38, %v6460
    %v6462 = vsel %vm6459, %v6461, %v6457
    %v6463 = vmul.f32 1.0, %v6462
    %v6464 = vrcp.pop %v6358
    %v6465 = vmul.f32 %v6358, %v6464
    %v6466 = vsub.f32 1.0, %v6465
    %v6467 = vmul.f32 %v6464, %v6466
    %v6468 = vadd.f32 %v6464, %v6467
    %vm6469 = vweird.f32 %v6358
    %vm6470 = vweird.f32 %v6464
    %vm6471 = vmor %vm6469, %vm6470
    %v6472 = vsel %vm6471, %v6464, %v6468
    %v6473 = vand.u32 2147483647, %v6358
    %vm6474 = vcmp.eq.f32.partialorder %v6473, 8.507059e+37
    %v6475 = vand.u32 %v6358, 2147483648
    %v6476 = vor.u32 1.1754944e-38, %v6475
    %v6477 = vsel %vm6474, %v6476, %v6472
    %v6478 = vmul.f32 1.0, %v6477
    %v6487 = vrot.slane %v6319, 1
    %v6488 = vrot.slane %v6320, 1
    %v6489 = vrot.slane %v6321, 1
    %v6490 = vrot.slane %v6322, 1
    %v6491 = vrot.slane %v6323, 1
    %v6492 = vrot.slane %v6324, 1
    %v6493 = vrot.slane %v6325, 1
    %v6494 = vrot.slane %v6326, 1
    %v6503 = vxor.u32 %v6487, 2147483648
    %v6504 = vxor.u32 %v6488, 2147483648
    %v6505 = vxor.u32 %v6489, 2147483648
    %v6506 = vxor.u32 %v6490, 2147483648
    %v6507 = vxor.u32 %v6491, 2147483648
    %v6508 = vxor.u32 %v6492, 2147483648
    %v6509 = vxor.u32 %v6493, 2147483648
    %v6510 = vxor.u32 %v6494, 2147483648
    %v6511 = vmul.f32 %v6503, 1.442695
    %v6512 = vpow.pop %v6511
    %v6513 = vmul.f32 %v6504, 1.442695
    %v6514 = vpow.pop %v6513
    %v6515 = vmul.f32 %v6505, 1.442695
    %v6516 = vpow.pop %v6515
    %v6517 = vmul.f32 %v6506, 1.442695
    %v6518 = vpow.pop %v6517
    %v6519 = vmul.f32 %v6507, 1.442695
    %v6520 = vpow.pop %v6519
    %v6521 = vmul.f32 %v6508, 1.442695
    %v6522 = vpow.pop %v6521
    %v6523 = vmul.f32 %v6509, 1.442695
    %v6524 = vpow.pop %v6523
    %v6525 = vmul.f32 %v6510, 1.442695
    %v6526 = vpow.pop %v6525
    %v6527 = vadd.f32 %v6512, 1.0
    %v6528 = vadd.f32 %v6514, 1.0
    %v6529 = vadd.f32 %v6516, 1.0
    %v6530 = vadd.f32 %v6518, 1.0
    %v6531 = vadd.f32 %v6520, 1.0
    %v6532 = vadd.f32 %v6522, 1.0
    %v6533 = vadd.f32 %v6524, 1.0
    %v6534 = vadd.f32 %v6526, 1.0
    %v6535 = vrcp.pop %v6527
    %v6536 = vmul.f32 %v6527, %v6535
    %v6537 = vsub.f32 1.0, %v6536
    %v6538 = vmul.f32 %v6535, %v6537
    %v6539 = vadd.f32 %v6535, %v6538
    %vm6540 = vweird.f32 %v6527
    %vm6541 = vweird.f32 %v6535
    %vm6542 = vmor %vm6540, %vm6541
    %v6543 = vsel %vm6542, %v6535, %v6539
    %v6544 = vand.u32 2147483647, %v6527
    %vm6545 = vcmp.eq.f32.partialorder %v6544, 8.507059e+37
    %v6546 = vand.u32 %v6527, 2147483648
    %v6547 = vor.u32 1.1754944e-38, %v6546
    %v6548 = vsel %vm6545, %v6547, %v6543
    %v6549 = vmul.f32 1.0, %v6548
    %v6550 = vrcp.pop %v6528
    %v6551 = vmul.f32 %v6528, %v6550
    %v6552 = vsub.f32 1.0, %v6551
    %v6553 = vmul.f32 %v6550, %v6552
    %v6554 = vadd.f32 %v6550, %v6553
    %vm6555 = vweird.f32 %v6528
    %vm6556 = vweird.f32 %v6550
    %vm6557 = vmor %vm6555, %vm6556
    %v6558 = vsel %vm6557, %v6550, %v6554
    %v6559 = vand.u32 2147483647, %v6528
    %vm6560 = vcmp.eq.f32.partialorder %v6559, 8.507059e+37
    %v6561 = vand.u32 %v6528, 2147483648
    %v6562 = vor.u32 1.1754944e-38, %v6561
    %v6563 = vsel %vm6560, %v6562, %v6558
    %v6564 = vmul.f32 1.0, %v6563
    %v6565 = vrcp.pop %v6529
    %v6566 = vmul.f32 %v6529, %v6565
    %v6567 = vsub.f32 1.0, %v6566
    %v6568 = vmul.f32 %v6565, %v6567
    %v6569 = vadd.f32 %v6565, %v6568
    %vm6570 = vweird.f32 %v6529
    %vm6571 = vweird.f32 %v6565
    %vm6572 = vmor %vm6570, %vm6571
    %v6573 = vsel %vm6572, %v6565, %v6569
    %v6574 = vand.u32 2147483647, %v6529
    %vm6575 = vcmp.eq.f32.partialorder %v6574, 8.507059e+37
    %v6576 = vand.u32 %v6529, 2147483648
    %v6577 = vor.u32 1.1754944e-38, %v6576
    %v6578 = vsel %vm6575, %v6577, %v6573
    %v6579 = vmul.f32 1.0, %v6578
    %v6580 = vrcp.pop %v6530
    %v6581 = vmul.f32 %v6530, %v6580
    %v6582 = vsub.f32 1.0, %v6581
    %v6583 = vmul.f32 %v6580, %v6582
    %v6584 = vadd.f32 %v6580, %v6583
    %vm6585 = vweird.f32 %v6530
    %vm6586 = vweird.f32 %v6580
    %vm6587 = vmor %vm6585, %vm6586
    %v6588 = vsel %vm6587, %v6580, %v6584
    %v6589 = vand.u32 2147483647, %v6530
    %vm6590 = vcmp.eq.f32.partialorder %v6589, 8.507059e+37
    %v6591 = vand.u32 %v6530, 2147483648
    %v6592 = vor.u32 1.1754944e-38, %v6591
    %v6593 = vsel %vm6590, %v6592, %v6588
    %v6594 = vmul.f32 1.0, %v6593
    %v6595 = vrcp.pop %v6531
    %v6596 = vmul.f32 %v6531, %v6595
    %v6597 = vsub.f32 1.0, %v6596
    %v6598 = vmul.f32 %v6595, %v6597
    %v6599 = vadd.f32 %v6595, %v6598
    %vm6600 = vweird.f32 %v6531
    %vm6601 = vweird.f32 %v6595
    %vm6602 = vmor %vm6600, %vm6601
    %v6603 = vsel %vm6602, %v6595, %v6599
    %v6604 = vand.u32 2147483647, %v6531
    %vm6605 = vcmp.eq.f32.partialorder %v6604, 8.507059e+37
    %v6606 = vand.u32 %v6531, 2147483648
    %v6607 = vor.u32 1.1754944e-38, %v6606
    %v6608 = vsel %vm6605, %v6607, %v6603
    %v6609 = vmul.f32 1.0, %v6608
    %v6610 = vrcp.pop %v6532
    %v6611 = vmul.f32 %v6532, %v6610
    %v6612 = vsub.f32 1.0, %v6611
    %v6613 = vmul.f32 %v6610, %v6612
    %v6614 = vadd.f32 %v6610, %v6613
    %vm6615 = vweird.f32 %v6532
    %vm6616 = vweird.f32 %v6610
    %vm6617 = vmor %vm6615, %vm6616
    %v6618 = vsel %vm6617, %v6610, %v6614
    %v6619 = vand.u32 2147483647, %v6532
    %vm6620 = vcmp.eq.f32.partialorder %v6619, 8.507059e+37
    %v6621 = vand.u32 %v6532, 2147483648
    %v6622 = vor.u32 1.1754944e-38, %v6621
    %v6623 = vsel %vm6620, %v6622, %v6618
    %v6624 = vmul.f32 1.0, %v6623
    %v6625 = vrcp.pop %v6533
    %v6626 = vmul.f32 %v6533, %v6625
    %v6627 = vsub.f32 1.0, %v6626
    %v6628 = vmul.f32 %v6625, %v6627
    %v6629 = vadd.f32 %v6625, %v6628
    %vm6630 = vweird.f32 %v6533
    %vm6631 = vweird.f32 %v6625
    %vm6632 = vmor %vm6630, %vm6631
    %v6633 = vsel %vm6632, %v6625, %v6629
    %v6634 = vand.u32 2147483647, %v6533
    %vm6635 = vcmp.eq.f32.partialorder %v6634, 8.507059e+37
    %v6636 = vand.u32 %v6533, 2147483648
    %v6637 = vor.u32 1.1754944e-38, %v6636
    %v6638 = vsel %vm6635, %v6637, %v6633
    %v6639 = vmul.f32 1.0, %v6638
    %v6640 = vrcp.pop %v6534
    %v6641 = vmul.f32 %v6534, %v6640
    %v6642 = vsub.f32 1.0, %v6641
    %v6643 = vmul.f32 %v6640, %v6642
    %v6644 = vadd.f32 %v6640, %v6643
    %vm6645 = vweird.f32 %v6534
    %vm6646 = vweird.f32 %v6640
    %vm6647 = vmor %vm6645, %vm6646
    %v6648 = vsel %vm6647, %v6640, %v6644
    %v6649 = vand.u32 2147483647, %v6534
    %vm6650 = vcmp.eq.f32.partialorder %v6649, 8.507059e+37
    %v6651 = vand.u32 %v6534, 2147483648
    %v6652 = vor.u32 1.1754944e-38, %v6651
    %v6653 = vsel %vm6650, %v6652, %v6648
    %v6654 = vmul.f32 1.0, %v6653
    %v6655 = vrot.slane %v6319, 2
    %v6656 = vrot.slane %v6320, 2
    %v6657 = vrot.slane %v6321, 2
    %v6658 = vrot.slane %v6322, 2
    %v6659 = vrot.slane %v6323, 2
    %v6660 = vrot.slane %v6324, 2
    %v6661 = vrot.slane %v6325, 2
    %v6662 = vrot.slane %v6326, 2
    %v6671 = vtanh.pop %v6655
    %v6672 = vtanh.pop %v6656
    %v6673 = vtanh.pop %v6657
    %v6674 = vtanh.pop %v6658
    %v6675 = vtanh.pop %v6659
    %v6676 = vtanh.pop %v6660
    %v6677 = vtanh.pop %v6661
    %v6678 = vtanh.pop %v6662
    %v6679 = vrot.slane %v6319, 3
    %v6680 = vrot.slane %v6320, 3
    %v6681 = vrot.slane %v6321, 3
    %v6682 = vrot.slane %v6322, 3
    %v6683 = vrot.slane %v6323, 3
    %v6684 = vrot.slane %v6324, 3
    %v6685 = vrot.slane %v6325, 3
    %v6686 = vrot.slane %v6326, 3
    %v6695 = vxor.u32 %v6679, 2147483648
    %v6696 = vxor.u32 %v6680, 2147483648
    %v6697 = vxor.u32 %v6681, 2147483648
    %v6698 = vxor.u32 %v6682, 2147483648
    %v6699 = vxor.u32 %v6683, 2147483648
    %v6700 = vxor.u32 %v6684, 2147483648
    %v6701 = vxor.u32 %v6685, 2147483648
    %v6702 = vxor.u32 %v6686, 2147483648
    %v6703 = vmul.f32 %v6695, 1.442695
    %v6704 = vpow.pop %v6703
    %v6705 = vmul.f32 %v6696, 1.442695
    %v6706 = vpow.pop %v6705
    %v6707 = vmul.f32 %v6697, 1.442695
    %v6708 = vpow.pop %v6707
    %v6709 = vmul.f32 %v6698, 1.442695
    %v6710 = vpow.pop %v6709
    %v6711 = vmul.f32 %v6699, 1.442695
    %v6712 = vpow.pop %v6711
    %v6713 = vmul.f32 %v6700, 1.442695
    %v6714 = vpow.pop %v6713
    %v6715 = vmul.f32 %v6701, 1.442695
    %v6716 = vpow.pop %v6715
    %v6717 = vmul.f32 %v6702, 1.442695
    %v6718 = vpow.pop %v6717
    %v6719 = vadd.f32 %v6704, 1.0
    %v6720 = vadd.f32 %v6706, 1.0
    %v6721 = vadd.f32 %v6708, 1.0
    %v6722 = vadd.f32 %v6710, 1.0
    %v6723 = vadd.f32 %v6712, 1.0
    %v6724 = vadd.f32 %v6714, 1.0
    %v6725 = vadd.f32 %v6716, 1.0
    %v6726 = vadd.f32 %v6718, 1.0
    %v6727 = vrcp.pop %v6719
    %v6728 = vmul.f32 %v6719, %v6727
    %v6729 = vsub.f32 1.0, %v6728
    %v6730 = vmul.f32 %v6727, %v6729
    %v6731 = vadd.f32 %v6727, %v6730
    %vm6732 = vweird.f32 %v6719
    %vm6733 = vweird.f32 %v6727
    %vm6734 = vmor %vm6732, %vm6733
    %v6735 = vsel %vm6734, %v6727, %v6731
    %v6736 = vand.u32 2147483647, %v6719
    %vm6737 = vcmp.eq.f32.partialorder %v6736, 8.507059e+37
    %v6738 = vand.u32 %v6719, 2147483648
    %v6739 = vor.u32 1.1754944e-38, %v6738
    %v6740 = vsel %vm6737, %v6739, %v6735
    %v6741 = vmul.f32 1.0, %v6740
    %v6742 = vrcp.pop %v6720
    %v6743 = vmul.f32 %v6720, %v6742
    %v6744 = vsub.f32 1.0, %v6743
    %v6745 = vmul.f32 %v6742, %v6744
    %v6746 = vadd.f32 %v6742, %v6745
    %vm6747 = vweird.f32 %v6720
    %vm6748 = vweird.f32 %v6742
    %vm6749 = vmor %vm6747, %vm6748
    %v6750 = vsel %vm6749, %v6742, %v6746
    %v6751 = vand.u32 2147483647, %v6720
    %vm6752 = vcmp.eq.f32.partialorder %v6751, 8.507059e+37
    %v6753 = vand.u32 %v6720, 2147483648
    %v6754 = vor.u32 1.1754944e-38, %v6753
    %v6755 = vsel %vm6752, %v6754, %v6750
    %v6756 = vmul.f32 1.0, %v6755
    %v6757 = vrcp.pop %v6721
    %v6758 = vmul.f32 %v6721, %v6757
    %v6759 = vsub.f32 1.0, %v6758
    %v6760 = vmul.f32 %v6757, %v6759
    %v6761 = vadd.f32 %v6757, %v6760
    %vm6762 = vweird.f32 %v6721
    %vm6763 = vweird.f32 %v6757
    %vm6764 = vmor %vm6762, %vm6763
    %v6765 = vsel %vm6764, %v6757, %v6761
    %v6766 = vand.u32 2147483647, %v6721
    %vm6767 = vcmp.eq.f32.partialorder %v6766, 8.507059e+37
    %v6768 = vand.u32 %v6721, 2147483648
    %v6769 = vor.u32 1.1754944e-38, %v6768
    %v6770 = vsel %vm6767, %v6769, %v6765
    %v6771 = vmul.f32 1.0, %v6770
    %v6772 = vrcp.pop %v6722
    %v6773 = vmul.f32 %v6722, %v6772
    %v6774 = vsub.f32 1.0, %v6773
    %v6775 = vmul.f32 %v6772, %v6774
    %v6776 = vadd.f32 %v6772, %v6775
    %vm6777 = vweird.f32 %v6722
    %vm6778 = vweird.f32 %v6772
    %vm6779 = vmor %vm6777, %vm6778
    %v6780 = vsel %vm6779, %v6772, %v6776
    %v6781 = vand.u32 2147483647, %v6722
    %vm6782 = vcmp.eq.f32.partialorder %v6781, 8.507059e+37
    %v6783 = vand.u32 %v6722, 2147483648
    %v6784 = vor.u32 1.1754944e-38, %v6783
    %v6785 = vsel %vm6782, %v6784, %v6780
    %v6786 = vmul.f32 1.0, %v6785
    %v6787 = vrcp.pop %v6723
    %v6788 = vmul.f32 %v6723, %v6787
    %v6789 = vsub.f32 1.0, %v6788
    %v6790 = vmul.f32 %v6787, %v6789
    %v6791 = vadd.f32 %v6787, %v6790
    %vm6792 = vweird.f32 %v6723
    %vm6793 = vweird.f32 %v6787
    %vm6794 = vmor %vm6792, %vm6793
    %v6795 = vsel %vm6794, %v6787, %v6791
    %v6796 = vand.u32 2147483647, %v6723
    %vm6797 = vcmp.eq.f32.partialorder %v6796, 8.507059e+37
    %v6798 = vand.u32 %v6723, 2147483648
    %v6799 = vor.u32 1.1754944e-38, %v6798
    %v6800 = vsel %vm6797, %v6799, %v6795
    %v6801 = vmul.f32 1.0, %v6800
    %v6802 = vrcp.pop %v6724
    %v6803 = vmul.f32 %v6724, %v6802
    %v6804 = vsub.f32 1.0, %v6803
    %v6805 = vmul.f32 %v6802, %v6804
    %v6806 = vadd.f32 %v6802, %v6805
    %vm6807 = vweird.f32 %v6724
    %vm6808 = vweird.f32 %v6802
    %vm6809 = vmor %vm6807, %vm6808
    %v6810 = vsel %vm6809, %v6802, %v6806
    %v6811 = vand.u32 2147483647, %v6724
    %vm6812 = vcmp.eq.f32.partialorder %v6811, 8.507059e+37
    %v6813 = vand.u32 %v6724, 2147483648
    %v6814 = vor.u32 1.1754944e-38, %v6813
    %v6815 = vsel %vm6812, %v6814, %v6810
    %v6816 = vmul.f32 1.0, %v6815
    %v6817 = vrcp.pop %v6725
    %v6818 = vmul.f32 %v6725, %v6817
    %v6819 = vsub.f32 1.0, %v6818
    %v6820 = vmul.f32 %v6817, %v6819
    %v6821 = vadd.f32 %v6817, %v6820
    %vm6822 = vweird.f32 %v6725
    %vm6823 = vweird.f32 %v6817
    %vm6824 = vmor %vm6822, %vm6823
    %v6825 = vsel %vm6824, %v6817, %v6821
    %v6826 = vand.u32 2147483647, %v6725
    %vm6827 = vcmp.eq.f32.partialorder %v6826, 8.507059e+37
    %v6828 = vand.u32 %v6725, 2147483648
    %v6829 = vor.u32 1.1754944e-38, %v6828
    %v6830 = vsel %vm6827, %v6829, %v6825
    %v6831 = vmul.f32 1.0, %v6830
    %v6832 = vrcp.pop %v6726
    %v6833 = vmul.f32 %v6726, %v6832
    %v6834 = vsub.f32 1.0, %v6833
    %v6835 = vmul.f32 %v6832, %v6834
    %v6836 = vadd.f32 %v6832, %v6835
    %vm6837 = vweird.f32 %v6726
    %vm6838 = vweird.f32 %v6832
    %vm6839 = vmor %vm6837, %vm6838
    %v6840 = vsel %vm6839, %v6832, %v6836
    %v6841 = vand.u32 2147483647, %v6726
    %vm6842 = vcmp.eq.f32.partialorder %v6841, 8.507059e+37
    %v6843 = vand.u32 %v6726, 2147483648
    %v6844 = vor.u32 1.1754944e-38, %v6843
    %v6845 = vsel %vm6842, %v6844, %v6840
    %v6846 = vmul.f32 1.0, %v6845
    %v6847 = vmul.f32 %v6549, %v5941
    %v6848 = vmul.f32 %v6564, %v5942
    %v6849 = vmul.f32 %v6579, %v5943
    %v6850 = vmul.f32 %v6594, %v5944
    %v6851 = vmul.f32 %v6609, %v5945
    %v6852 = vmul.f32 %v6624, %v5946
    %v6853 = vmul.f32 %v6639, %v5947
    %v6854 = vmul.f32 %v6654, %v5948
    %v6855 = vmul.f32 %v6373, %v6671
    %v6856 = vmul.f32 %v6388, %v6672
    %v6857 = vmul.f32 %v6403, %v6673
    %v6858 = vmul.f32 %v6418, %v6674
    %v6859 = vmul.f32 %v6433, %v6675
    %v6860 = vmul.f32 %v6448, %v6676
    %v6861 = vmul.f32 %v6463, %v6677
    %v6862 = vmul.f32 %v6478, %v6678
    %v6863 = vadd.f32 %v6847, %v6855
    %v6864 = vadd.f32 %v6848, %v6856
    %v6865 = vadd.f32 %v6849, %v6857
    %v6866 = vadd.f32 %v6850, %v6858
    %v6867 = vadd.f32 %v6851, %v6859
    %v6868 = vadd.f32 %v6852, %v6860
    %v6869 = vadd.f32 %v6853, %v6861
    %v6870 = vadd.f32 %v6854, %v6862
    %v6871 = vtanh.pop %v6863
    %v6872 = vtanh.pop %v6864
    %v6873 = vtanh.pop %v6865
    %v6874 = vtanh.pop %v6866
    %v6875 = vtanh.pop %v6867
    %v6876 = vtanh.pop %v6868
    %v6877 = vtanh.pop %v6869
    %v6878 = vtanh.pop %v6870
    %v6879 = vmul.f32 %v6741, %v6871
    %v6880 = vmul.f32 %v6756, %v6872
    %v6881 = vmul.f32 %v6771, %v6873
    %v6882 = vmul.f32 %v6786, %v6874
    %v6883 = vmul.f32 %v6801, %v6875
    %v6884 = vmul.f32 %v6816, %v6876
    %v6885 = vmul.f32 %v6831, %v6877
    %v6886 = vmul.f32 %v6846, %v6878
    %6887 = vst [vmem:[#allocation3 + $0x6] sm:$0x1] %v6879
    %6888 = vst [vmem:[#allocation3 + $0xe] sm:$0x1] %v6880
    %6889 = vst [vmem:[#allocation3 + $0x16] sm:$0x1] %v6881
    %6890 = vst [vmem:[#allocation3 + $0x1e] sm:$0x1] %v6882
    %6891 = vst [vmem:[#allocation3 + $0x26] sm:$0x1] %v6883
    %6892 = vst [vmem:[#allocation3 + $0x2e] sm:$0x1] %v6884
    %6893 = vst [vmem:[#allocation3 + $0x36] sm:$0x1] %v6885
    %6894 = vst [vmem:[#allocation3 + $0x3e] sm:$0x1] %v6886
    %s6895 = scalar_lea.vmem [#allocation2], 7
    %v6896 = vld [vmem:[%s6895] ss:$8 sm:$0xf]
    %s6897 = scalar_lea.vmem [#allocation2], 39
    %v6898 = vld [vmem:[%s6897] ss:$8 sm:$0xf]
    %s6899 = scalar_lea.vmem [#allocation2], 71
    %v6900 = vld [vmem:[%s6899] ss:$8 sm:$0xf]
    %s6901 = scalar_lea.vmem [#allocation2], 103
    %v6902 = vld [vmem:[%s6901] ss:$8 sm:$0xf]
    %s6903 = scalar_lea.vmem [#allocation2], 135
    %v6904 = vld [vmem:[%s6903] ss:$8 sm:$0xf]
    %s6905 = scalar_lea.vmem [#allocation2], 167
    %v6906 = vld [vmem:[%s6905] ss:$8 sm:$0xf]
    %s6907 = scalar_lea.vmem [#allocation2], 199
    %v6908 = vld [vmem:[%s6907] ss:$8 sm:$0xf]
    %s6909 = scalar_lea.vmem [#allocation2], 231
    %v6910 = vld [vmem:[%s6909] ss:$8 sm:$0xf]
    %v6911 = vpack.c.bf16 %v6879, %v6879
    %v6912 = vpack.c.bf16 %v6880, %v6880
    %v6913 = vpack.c.bf16 %v6881, %v6881
    %v6914 = vpack.c.bf16 %v6882, %v6882
    %v6915 = vpack.c.bf16 %v6883, %v6883
    %v6916 = vpack.c.bf16 %v6884, %v6884
    %v6917 = vpack.c.bf16 %v6885, %v6885
    %v6918 = vpack.c.bf16 %v6886, %v6886
    %v6919 = vld [vmem:[#allocation11] sm:$0xff]
    %v6920 = vld [vmem:[#allocation11 + $0x8] sm:$0xff]
    %v6921 = vld [vmem:[#allocation11 + $0x10] sm:$0xff]
    %v6922 = vld [vmem:[#allocation11 + $0x18] sm:$0xff]
    %v6923 = vld [vmem:[#allocation11 + $0x20] sm:$0xff]
    %v6924 = vld [vmem:[#allocation11 + $0x28] sm:$0xff]
    %v6925 = vld [vmem:[#allocation11 + $0x30] sm:$0xff]
    %v6926 = vld [vmem:[#allocation11 + $0x38] sm:$0xff]
    %v6927 = vld [vmem:[#allocation11 + $0x40] sm:$0xff]
    %v6928 = vld [vmem:[#allocation11 + $0x48] sm:$0xff]
    %v6929 = vld [vmem:[#allocation11 + $0x50] sm:$0xff]
    %v6930 = vld [vmem:[#allocation11 + $0x58] sm:$0xff]
    %v6931 = vld [vmem:[#allocation11 + $0x60] sm:$0xff]
    %v6932 = vld [vmem:[#allocation11 + $0x68] sm:$0xff]
    %v6933 = vld [vmem:[#allocation11 + $0x70] sm:$0xff]
    %v6934 = vld [vmem:[#allocation11 + $0x78] sm:$0xff]
    %v6935 = vld [vmem:[#allocation11 + $0x80] sm:$0xff]
    %v6936 = vld [vmem:[#allocation11 + $0x88] sm:$0xff]
    %v6937 = vld [vmem:[#allocation11 + $0x90] sm:$0xff]
    %v6938 = vld [vmem:[#allocation11 + $0x98] sm:$0xff]
    %v6939 = vld [vmem:[#allocation11 + $0xa0] sm:$0xff]
    %v6940 = vld [vmem:[#allocation11 + $0xa8] sm:$0xff]
    %v6941 = vld [vmem:[#allocation11 + $0xb0] sm:$0xff]
    %v6942 = vld [vmem:[#allocation11 + $0xb8] sm:$0xff]
    %v6943 = vld [vmem:[#allocation11 + $0xc0] sm:$0xff]
    %v6944 = vld [vmem:[#allocation11 + $0xc8] sm:$0xff]
    %v6945 = vld [vmem:[#allocation11 + $0xd0] sm:$0xff]
    %v6946 = vld [vmem:[#allocation11 + $0xd8] sm:$0xff]
    %v6947 = vld [vmem:[#allocation11 + $0xe0] sm:$0xff]
    %v6948 = vld [vmem:[#allocation11 + $0xe8] sm:$0xff]
    %v6949 = vld [vmem:[#allocation11 + $0xf0] sm:$0xff]
    %v6950 = vld [vmem:[#allocation11 + $0xf8] sm:$0xff]
    %v6959 = vunpack.c.l.b16 %v6911
    %v6960 = vunpack.c.l.b16 %v6912
    %v6961 = vunpack.c.l.b16 %v6913
    %v6962 = vunpack.c.l.b16 %v6914
    %v6963 = vunpack.c.l.b16 %v6915
    %v6964 = vunpack.c.l.b16 %v6916
    %v6965 = vunpack.c.l.b16 %v6917
    %v6966 = vunpack.c.l.b16 %v6918
    %v6967 = vrot.slane %v6960, 7
    %v6968 = vsel %vm722, %v6967, %v6959
    %v6969 = vrot.slane %v6961, 6
    %v6970 = vsel %vm718, %v6969, %v6968
    %v6971 = vrot.slane %v6962, 5
    %v6972 = vsel %vm724, %v6971, %v6970
    %v6973 = vrot.slane %v6963, 4
    %v6974 = vsel %vm730, %v6973, %v6972
    %v6975 = vrot.slane %v6964, 3
    %v6976 = vsel %vm736, %v6975, %v6974
    %v6977 = vrot.slane %v6965, 2
    %v6978 = vsel %vm742, %v6977, %v6976
    %v6979 = vrot.slane %v6966, 1
    %v6980 = vsel %vm1447, %v6979, %v6978
    %v6981 = vpack.c.b16 %v6980, %v6980
    %v7015 = vunpack.c.l.b16 %v6919
    %v7016 = vunpack.c.h.b16 %v6919
    %v7017 = vunpack.c.l.b16 %v6920
    %v7018 = vunpack.c.h.b16 %v6920
    %v7019 = vunpack.c.l.b16 %v6921
    %v7020 = vunpack.c.h.b16 %v6921
    %v7021 = vunpack.c.l.b16 %v6922
    %v7022 = vunpack.c.h.b16 %v6922
    %v7023 = vunpack.c.l.b16 %v6923
    %v7024 = vunpack.c.h.b16 %v6923
    %v7025 = vunpack.c.l.b16 %v6924
    %v7026 = vunpack.c.h.b16 %v6924
    %v7027 = vunpack.c.l.b16 %v6925
    %v7028 = vunpack.c.h.b16 %v6925
    %v7029 = vunpack.c.l.b16 %v6926
    %v7030 = vunpack.c.h.b16 %v6926
    %v7031 = vunpack.c.l.b16 %v6927
    %v7032 = vunpack.c.h.b16 %v6927
    %v7033 = vunpack.c.l.b16 %v6928
    %v7034 = vunpack.c.h.b16 %v6928
    %v7035 = vunpack.c.l.b16 %v6929
    %v7036 = vunpack.c.h.b16 %v6929
    %v7037 = vunpack.c.l.b16 %v6930
    %v7038 = vunpack.c.h.b16 %v6930
    %v7039 = vunpack.c.l.b16 %v6931
    %v7040 = vunpack.c.h.b16 %v6931
    %v7041 = vunpack.c.l.b16 %v6932
    %v7042 = vunpack.c.h.b16 %v6932
    %v7043 = vunpack.c.l.b16 %v6933
    %v7044 = vunpack.c.h.b16 %v6933
    %v7045 = vunpack.c.l.b16 %v6934
    %v7046 = vunpack.c.h.b16 %v6934
    %v7047 = vunpack.c.l.b16 %v6935
    %v7048 = vunpack.c.h.b16 %v6935
    %v7049 = vunpack.c.l.b16 %v6936
    %v7050 = vunpack.c.h.b16 %v6936
    %v7051 = vunpack.c.l.b16 %v6937
    %v7052 = vunpack.c.h.b16 %v6937
    %v7053 = vunpack.c.l.b16 %v6938
    %v7054 = vunpack.c.h.b16 %v6938
    %v7055 = vunpack.c.l.b16 %v6939
    %v7056 = vunpack.c.h.b16 %v6939
    %v7057 = vunpack.c.l.b16 %v6940
    %v7058 = vunpack.c.h.b16 %v6940
    %v7059 = vunpack.c.l.b16 %v6941
    %v7060 = vunpack.c.h.b16 %v6941
    %v7061 = vunpack.c.l.b16 %v6942
    %v7062 = vunpack.c.h.b16 %v6942
    %v7063 = vunpack.c.l.b16 %v6943
    %v7064 = vunpack.c.h.b16 %v6943
    %v7065 = vunpack.c.l.b16 %v6944
    %v7066 = vunpack.c.h.b16 %v6944
    %v7067 = vunpack.c.l.b16 %v6945
    %v7068 = vunpack.c.h.b16 %v6945
    %v7069 = vunpack.c.l.b16 %v6946
    %v7070 = vunpack.c.h.b16 %v6946
    %v7071 = vunpack.c.l.b16 %v6947
    %v7072 = vunpack.c.h.b16 %v6947
    %v7073 = vunpack.c.l.b16 %v6948
    %v7074 = vunpack.c.h.b16 %v6948
    %v7075 = vunpack.c.l.b16 %v6949
    %v7076 = vunpack.c.h.b16 %v6949
    %v7077 = vunpack.c.l.b16 %v6950
    %v7078 = vunpack.c.h.b16 %v6950
    %v7079 = vpack.c.b16 %v7019, %v7015
    %v7080 = vpack.c.b16 %v7020, %v7016
    %v7081 = vpack.c.b16 %v7021, %v7017
    %v7082 = vpack.c.b16 %v7022, %v7018
    %v7083 = vpack.c.b16 %v7027, %v7023
    %v7084 = vpack.c.b16 %v7028, %v7024
    %v7085 = vpack.c.b16 %v7029, %v7025
    %v7086 = vpack.c.b16 %v7030, %v7026
    %v7087 = vpack.c.b16 %v7035, %v7031
    %v7088 = vpack.c.b16 %v7036, %v7032
    %v7089 = vpack.c.b16 %v7037, %v7033
    %v7090 = vpack.c.b16 %v7038, %v7034
    %v7091 = vpack.c.b16 %v7043, %v7039
    %v7092 = vpack.c.b16 %v7044, %v7040
    %v7093 = vpack.c.b16 %v7045, %v7041
    %v7094 = vpack.c.b16 %v7046, %v7042
    %v7095 = vpack.c.b16 %v7051, %v7047
    %v7096 = vpack.c.b16 %v7052, %v7048
    %v7097 = vpack.c.b16 %v7053, %v7049
    %v7098 = vpack.c.b16 %v7054, %v7050
    %v7099 = vpack.c.b16 %v7059, %v7055
    %v7100 = vpack.c.b16 %v7060, %v7056
    %v7101 = vpack.c.b16 %v7061, %v7057
    %v7102 = vpack.c.b16 %v7062, %v7058
    %v7103 = vpack.c.b16 %v7067, %v7063
    %v7104 = vpack.c.b16 %v7068, %v7064
    %v7105 = vpack.c.b16 %v7069, %v7065
    %v7106 = vpack.c.b16 %v7070, %v7066
    %v7107 = vpack.c.b16 %v7075, %v7071
    %v7108 = vpack.c.b16 %v7076, %v7072
    %v7109 = vpack.c.b16 %v7077, %v7073
    %v7110 = vpack.c.b16 %v7078, %v7074
    %7143 = vmatpush.bf16.msra.mxu0 %v7107
    %7144 = vmatpush.bf16.msra.mxu0 %v7103
    %7145 = vmatpush.bf16.msra.mxu0 %v7099
    %7146 = vmatpush.bf16.msra.mxu0 %v7095
    %7147 = vmatpush.bf16.msra.mxu0 %v7091
    %7148 = vmatpush.bf16.msra.mxu0 %v7087
    %7149 = vmatpush.bf16.msra.mxu0 %v7083
    %7150 = vmatpush.bf16.msra.mxu0 %v7079
    %7151 = vmatmul.bf16.gmra.mxu0 %v6981
    %v7152 = vpop.f32.mrf.mxu0
    %v7153 = vadd.f32 0.0, %v7152
    %v7154 = vpop.f32.mrf.mxu0
    %7155 = vdwg.mxu0
    %7156 = vmatpush.bf16.msra.mxu0 %v7108
    %7157 = vmatpush.bf16.msra.mxu0 %v7104
    %7158 = vmatpush.bf16.msra.mxu0 %v7100
    %7159 = vmatpush.bf16.msra.mxu0 %v7096
    %7160 = vmatpush.bf16.msra.mxu0 %v7092
    %7161 = vmatpush.bf16.msra.mxu0 %v7088
    %7162 = vmatpush.bf16.msra.mxu0 %v7084
    %7163 = vmatpush.bf16.msra.mxu0 %v7080
    %7164 = vmatmul.bf16.gmra.mxu0 %v6981
    %v7165 = vpop.f32.mrf.mxu0
    %v7166 = vadd.f32 0.0, %v7165
    %v7167 = vpop.f32.mrf.mxu0
    %7168 = vdwg.mxu0
    %7169 = vmatpush.bf16.msra.mxu0 %v7109
    %7170 = vmatpush.bf16.msra.mxu0 %v7105
    %7171 = vmatpush.bf16.msra.mxu0 %v7101
    %7172 = vmatpush.bf16.msra.mxu0 %v7097
    %7173 = vmatpush.bf16.msra.mxu0 %v7093
    %7174 = vmatpush.bf16.msra.mxu0 %v7089
    %7175 = vmatpush.bf16.msra.mxu0 %v7085
    %7176 = vmatpush.bf16.msra.mxu0 %v7081
    %7177 = vmatmul.bf16.gmra.mxu0 %v6981
    %v7178 = vpop.f32.mrf.mxu0
    %v7179 = vadd.f32 0.0, %v7178
    %v7180 = vpop.f32.mrf.mxu0
    %7181 = vdwg.mxu0
    %7182 = vmatpush.bf16.msra.mxu0 %v7110
    %7183 = vmatpush.bf16.msra.mxu0 %v7106
    %7184 = vmatpush.bf16.msra.mxu0 %v7102
    %7185 = vmatpush.bf16.msra.mxu0 %v7098
    %7186 = vmatpush.bf16.msra.mxu0 %v7094
    %7187 = vmatpush.bf16.msra.mxu0 %v7090
    %7188 = vmatpush.bf16.msra.mxu0 %v7086
    %7189 = vmatpush.bf16.msra.mxu0 %v7082
    %7190 = vmatmul.bf16.gmra.mxu0 %v6981
    %v7191 = vpop.f32.mrf.mxu0
    %v7192 = vadd.f32 0.0, %v7191
    %v7193 = vpop.f32.mrf.mxu0
    %7194 = vdwg.mxu0
    %v7199 = vrot.slane %v7166, 7
    %v7200 = vrot.slane %v7179, 6
    %v7201 = vrot.slane %v7192, 5
    %v7202 = vsel %vm716, %v7153, %v7199
    %v7203 = vsel %vm718, %v7200, %v7201
    %v7204 = vsel %vm720, %v7202, %v7203
    %v7205 = vsel %vm722, %v7153, %v7199
    %v7206 = vsel %vm724, %v7200, %v7201
    %v7207 = vsel %vm726, %v7205, %v7206
    %v7208 = vrot.slane %v7207, 1
    %v7209 = vsel %vm718, %v7153, %v7199
    %v7210 = vsel %vm730, %v7200, %v7201
    %v7211 = vsel %vm732, %v7209, %v7210
    %v7212 = vrot.slane %v7211, 2
    %v7213 = vsel %vm724, %v7153, %v7199
    %v7214 = vsel %vm736, %v7200, %v7201
    %v7215 = vsel %vm738, %v7213, %v7214
    %v7216 = vrot.slane %v7215, 3
    %v7217 = vsel %vm730, %v7153, %v7199
    %v7218 = vsel %vm742, %v7200, %v7201
    %v7219 = vsel %vm744, %v7217, %v7218
    %v7220 = vrot.slane %v7219, 4
    %v7221 = vsel %vm736, %v7153, %v7199
    %v7222 = vsel %vm748, %v7201, %v7200
    %v7223 = vsel %vm750, %v7221, %v7222
    %v7224 = vrot.slane %v7223, 5
    %v7225 = vsel %vm742, %v7153, %v7199
    %v7226 = vsel %vm716, %v7200, %v7201
    %v7227 = vsel %vm755, %v7226, %v7225
    %v7228 = vrot.slane %v7227, 6
    %v7229 = vsel %vm748, %v7199, %v7153
    %v7230 = vsel %vm722, %v7200, %v7201
    %v7231 = vsel %vm760, %v7230, %v7229
    %v7232 = vrot.slane %v7231, 7
    %v7241 = vadd.f32 %v6896, %v7204
    %v7242 = vadd.f32 %v6898, %v7208
    %v7243 = vadd.f32 %v6900, %v7212
    %v7244 = vadd.f32 %v6902, %v7216
    %v7245 = vadd.f32 %v6904, %v7220
    %v7246 = vadd.f32 %v6906, %v7224
    %v7247 = vadd.f32 %v6908, %v7228
    %v7248 = vadd.f32 %v6910, %v7232
    %v7249 = vxor.u32 %v7241, 2147483648
    %v7250 = vxor.u32 %v7242, 2147483648
    %v7251 = vxor.u32 %v7243, 2147483648
    %v7252 = vxor.u32 %v7244, 2147483648
    %v7253 = vxor.u32 %v7245, 2147483648
    %v7254 = vxor.u32 %v7246, 2147483648
    %v7255 = vxor.u32 %v7247, 2147483648
    %v7256 = vxor.u32 %v7248, 2147483648
    %v7257 = vmul.f32 %v7249, 1.442695
    %v7258 = vpow.pop %v7257
    %v7259 = vmul.f32 %v7250, 1.442695
    %v7260 = vpow.pop %v7259
    %v7261 = vmul.f32 %v7251, 1.442695
    %v7262 = vpow.pop %v7261
    %v7263 = vmul.f32 %v7252, 1.442695
    %v7264 = vpow.pop %v7263
    %v7265 = vmul.f32 %v7253, 1.442695
    %v7266 = vpow.pop %v7265
    %v7267 = vmul.f32 %v7254, 1.442695
    %v7268 = vpow.pop %v7267
    %v7269 = vmul.f32 %v7255, 1.442695
    %v7270 = vpow.pop %v7269
    %v7271 = vmul.f32 %v7256, 1.442695
    %v7272 = vpow.pop %v7271
    %v7273 = vadd.f32 %v7258, 1.0
    %v7274 = vadd.f32 %v7260, 1.0
    %v7275 = vadd.f32 %v7262, 1.0
    %v7276 = vadd.f32 %v7264, 1.0
    %v7277 = vadd.f32 %v7266, 1.0
    %v7278 = vadd.f32 %v7268, 1.0
    %v7279 = vadd.f32 %v7270, 1.0
    %v7280 = vadd.f32 %v7272, 1.0
    %v7281 = vrcp.pop %v7273
    %v7282 = vmul.f32 %v7273, %v7281
    %v7283 = vsub.f32 1.0, %v7282
    %v7284 = vmul.f32 %v7281, %v7283
    %v7285 = vadd.f32 %v7281, %v7284
    %vm7286 = vweird.f32 %v7273
    %vm7287 = vweird.f32 %v7281
    %vm7288 = vmor %vm7286, %vm7287
    %v7289 = vsel %vm7288, %v7281, %v7285
    %v7290 = vand.u32 2147483647, %v7273
    %vm7291 = vcmp.eq.f32.partialorder %v7290, 8.507059e+37
    %v7292 = vand.u32 %v7273, 2147483648
    %v7293 = vor.u32 1.1754944e-38, %v7292
    %v7294 = vsel %vm7291, %v7293, %v7289
    %v7295 = vmul.f32 1.0, %v7294
    %v7296 = vrcp.pop %v7274
    %v7297 = vmul.f32 %v7274, %v7296
    %v7298 = vsub.f32 1.0, %v7297
    %v7299 = vmul.f32 %v7296, %v7298
    %v7300 = vadd.f32 %v7296, %v7299
    %vm7301 = vweird.f32 %v7274
    %vm7302 = vweird.f32 %v7296
    %vm7303 = vmor %vm7301, %vm7302
    %v7304 = vsel %vm7303, %v7296, %v7300
    %v7305 = vand.u32 2147483647, %v7274
    %vm7306 = vcmp.eq.f32.partialorder %v7305, 8.507059e+37
    %v7307 = vand.u32 %v7274, 2147483648
    %v7308 = vor.u32 1.1754944e-38, %v7307
    %v7309 = vsel %vm7306, %v7308, %v7304
    %v7310 = vmul.f32 1.0, %v7309
    %v7311 = vrcp.pop %v7275
    %v7312 = vmul.f32 %v7275, %v7311
    %v7313 = vsub.f32 1.0, %v7312
    %v7314 = vmul.f32 %v7311, %v7313
    %v7315 = vadd.f32 %v7311, %v7314
    %vm7316 = vweird.f32 %v7275
    %vm7317 = vweird.f32 %v7311
    %vm7318 = vmor %vm7316, %vm7317
    %v7319 = vsel %vm7318, %v7311, %v7315
    %v7320 = vand.u32 2147483647, %v7275
    %vm7321 = vcmp.eq.f32.partialorder %v7320, 8.507059e+37
    %v7322 = vand.u32 %v7275, 2147483648
    %v7323 = vor.u32 1.1754944e-38, %v7322
    %v7324 = vsel %vm7321, %v7323, %v7319
    %v7325 = vmul.f32 1.0, %v7324
    %v7326 = vrcp.pop %v7276
    %v7327 = vmul.f32 %v7276, %v7326
    %v7328 = vsub.f32 1.0, %v7327
    %v7329 = vmul.f32 %v7326, %v7328
    %v7330 = vadd.f32 %v7326, %v7329
    %vm7331 = vweird.f32 %v7276
    %vm7332 = vweird.f32 %v7326
    %vm7333 = vmor %vm7331, %vm7332
    %v7334 = vsel %vm7333, %v7326, %v7330
    %v7335 = vand.u32 2147483647, %v7276
    %vm7336 = vcmp.eq.f32.partialorder %v7335, 8.507059e+37
    %v7337 = vand.u32 %v7276, 2147483648
    %v7338 = vor.u32 1.1754944e-38, %v7337
    %v7339 = vsel %vm7336, %v7338, %v7334
    %v7340 = vmul.f32 1.0, %v7339
    %v7341 = vrcp.pop %v7277
    %v7342 = vmul.f32 %v7277, %v7341
    %v7343 = vsub.f32 1.0, %v7342
    %v7344 = vmul.f32 %v7341, %v7343
    %v7345 = vadd.f32 %v7341, %v7344
    %vm7346 = vweird.f32 %v7277
    %vm7347 = vweird.f32 %v7341
    %vm7348 = vmor %vm7346, %vm7347
    %v7349 = vsel %vm7348, %v7341, %v7345
    %v7350 = vand.u32 2147483647, %v7277
    %vm7351 = vcmp.eq.f32.partialorder %v7350, 8.507059e+37
    %v7352 = vand.u32 %v7277, 2147483648
    %v7353 = vor.u32 1.1754944e-38, %v7352
    %v7354 = vsel %vm7351, %v7353, %v7349
    %v7355 = vmul.f32 1.0, %v7354
    %v7356 = vrcp.pop %v7278
    %v7357 = vmul.f32 %v7278, %v7356
    %v7358 = vsub.f32 1.0, %v7357
    %v7359 = vmul.f32 %v7356, %v7358
    %v7360 = vadd.f32 %v7356, %v7359
    %vm7361 = vweird.f32 %v7278
    %vm7362 = vweird.f32 %v7356
    %vm7363 = vmor %vm7361, %vm7362
    %v7364 = vsel %vm7363, %v7356, %v7360
    %v7365 = vand.u32 2147483647, %v7278
    %vm7366 = vcmp.eq.f32.partialorder %v7365, 8.507059e+37
    %v7367 = vand.u32 %v7278, 2147483648
    %v7368 = vor.u32 1.1754944e-38, %v7367
    %v7369 = vsel %vm7366, %v7368, %v7364
    %v7370 = vmul.f32 1.0, %v7369
    %v7371 = vrcp.pop %v7279
    %v7372 = vmul.f32 %v7279, %v7371
    %v7373 = vsub.f32 1.0, %v7372
    %v7374 = vmul.f32 %v7371, %v7373
    %v7375 = vadd.f32 %v7371, %v7374
    %vm7376 = vweird.f32 %v7279
    %vm7377 = vweird.f32 %v7371
    %vm7378 = vmor %vm7376, %vm7377
    %v7379 = vsel %vm7378, %v7371, %v7375
    %v7380 = vand.u32 2147483647, %v7279
    %vm7381 = vcmp.eq.f32.partialorder %v7380, 8.507059e+37
    %v7382 = vand.u32 %v7279, 2147483648
    %v7383 = vor.u32 1.1754944e-38, %v7382
    %v7384 = vsel %vm7381, %v7383, %v7379
    %v7385 = vmul.f32 1.0, %v7384
    %v7386 = vrcp.pop %v7280
    %v7387 = vmul.f32 %v7280, %v7386
    %v7388 = vsub.f32 1.0, %v7387
    %v7389 = vmul.f32 %v7386, %v7388
    %v7390 = vadd.f32 %v7386, %v7389
    %vm7391 = vweird.f32 %v7280
    %vm7392 = vweird.f32 %v7386
    %vm7393 = vmor %vm7391, %vm7392
    %v7394 = vsel %vm7393, %v7386, %v7390
    %v7395 = vand.u32 2147483647, %v7280
    %vm7396 = vcmp.eq.f32.partialorder %v7395, 8.507059e+37
    %v7397 = vand.u32 %v7280, 2147483648
    %v7398 = vor.u32 1.1754944e-38, %v7397
    %v7399 = vsel %vm7396, %v7398, %v7394
    %v7400 = vmul.f32 1.0, %v7399
    %v7409 = vrot.slane %v7241, 1
    %v7410 = vrot.slane %v7242, 1
    %v7411 = vrot.slane %v7243, 1
    %v7412 = vrot.slane %v7244, 1
    %v7413 = vrot.slane %v7245, 1
    %v7414 = vrot.slane %v7246, 1
    %v7415 = vrot.slane %v7247, 1
    %v7416 = vrot.slane %v7248, 1
    %v7425 = vxor.u32 %v7409, 2147483648
    %v7426 = vxor.u32 %v7410, 2147483648
    %v7427 = vxor.u32 %v7411, 2147483648
    %v7428 = vxor.u32 %v7412, 2147483648
    %v7429 = vxor.u32 %v7413, 2147483648
    %v7430 = vxor.u32 %v7414, 2147483648
    %v7431 = vxor.u32 %v7415, 2147483648
    %v7432 = vxor.u32 %v7416, 2147483648
    %v7433 = vmul.f32 %v7425, 1.442695
    %v7434 = vpow.pop %v7433
    %v7435 = vmul.f32 %v7426, 1.442695
    %v7436 = vpow.pop %v7435
    %v7437 = vmul.f32 %v7427, 1.442695
    %v7438 = vpow.pop %v7437
    %v7439 = vmul.f32 %v7428, 1.442695
    %v7440 = vpow.pop %v7439
    %v7441 = vmul.f32 %v7429, 1.442695
    %v7442 = vpow.pop %v7441
    %v7443 = vmul.f32 %v7430, 1.442695
    %v7444 = vpow.pop %v7443
    %v7445 = vmul.f32 %v7431, 1.442695
    %v7446 = vpow.pop %v7445
    %v7447 = vmul.f32 %v7432, 1.442695
    %v7448 = vpow.pop %v7447
    %v7449 = vadd.f32 %v7434, 1.0
    %v7450 = vadd.f32 %v7436, 1.0
    %v7451 = vadd.f32 %v7438, 1.0
    %v7452 = vadd.f32 %v7440, 1.0
    %v7453 = vadd.f32 %v7442, 1.0
    %v7454 = vadd.f32 %v7444, 1.0
    %v7455 = vadd.f32 %v7446, 1.0
    %v7456 = vadd.f32 %v7448, 1.0
    %v7457 = vrcp.pop %v7449
    %v7458 = vmul.f32 %v7449, %v7457
    %v7459 = vsub.f32 1.0, %v7458
    %v7460 = vmul.f32 %v7457, %v7459
    %v7461 = vadd.f32 %v7457, %v7460
    %vm7462 = vweird.f32 %v7449
    %vm7463 = vweird.f32 %v7457
    %vm7464 = vmor %vm7462, %vm7463
    %v7465 = vsel %vm7464, %v7457, %v7461
    %v7466 = vand.u32 2147483647, %v7449
    %vm7467 = vcmp.eq.f32.partialorder %v7466, 8.507059e+37
    %v7468 = vand.u32 %v7449, 2147483648
    %v7469 = vor.u32 1.1754944e-38, %v7468
    %v7470 = vsel %vm7467, %v7469, %v7465
    %v7471 = vmul.f32 1.0, %v7470
    %v7472 = vrcp.pop %v7450
    %v7473 = vmul.f32 %v7450, %v7472
    %v7474 = vsub.f32 1.0, %v7473
    %v7475 = vmul.f32 %v7472, %v7474
    %v7476 = vadd.f32 %v7472, %v7475
    %vm7477 = vweird.f32 %v7450
    %vm7478 = vweird.f32 %v7472
    %vm7479 = vmor %vm7477, %vm7478
    %v7480 = vsel %vm7479, %v7472, %v7476
    %v7481 = vand.u32 2147483647, %v7450
    %vm7482 = vcmp.eq.f32.partialorder %v7481, 8.507059e+37
    %v7483 = vand.u32 %v7450, 2147483648
    %v7484 = vor.u32 1.1754944e-38, %v7483
    %v7485 = vsel %vm7482, %v7484, %v7480
    %v7486 = vmul.f32 1.0, %v7485
    %v7487 = vrcp.pop %v7451
    %v7488 = vmul.f32 %v7451, %v7487
    %v7489 = vsub.f32 1.0, %v7488
    %v7490 = vmul.f32 %v7487, %v7489
    %v7491 = vadd.f32 %v7487, %v7490
    %vm7492 = vweird.f32 %v7451
    %vm7493 = vweird.f32 %v7487
    %vm7494 = vmor %vm7492, %vm7493
    %v7495 = vsel %vm7494, %v7487, %v7491
    %v7496 = vand.u32 2147483647, %v7451
    %vm7497 = vcmp.eq.f32.partialorder %v7496, 8.507059e+37
    %v7498 = vand.u32 %v7451, 2147483648
    %v7499 = vor.u32 1.1754944e-38, %v7498
    %v7500 = vsel %vm7497, %v7499, %v7495
    %v7501 = vmul.f32 1.0, %v7500
    %v7502 = vrcp.pop %v7452
    %v7503 = vmul.f32 %v7452, %v7502
    %v7504 = vsub.f32 1.0, %v7503
    %v7505 = vmul.f32 %v7502, %v7504
    %v7506 = vadd.f32 %v7502, %v7505
    %vm7507 = vweird.f32 %v7452
    %vm7508 = vweird.f32 %v7502
    %vm7509 = vmor %vm7507, %vm7508
    %v7510 = vsel %vm7509, %v7502, %v7506
    %v7511 = vand.u32 2147483647, %v7452
    %vm7512 = vcmp.eq.f32.partialorder %v7511, 8.507059e+37
    %v7513 = vand.u32 %v7452, 2147483648
    %v7514 = vor.u32 1.1754944e-38, %v7513
    %v7515 = vsel %vm7512, %v7514, %v7510
    %v7516 = vmul.f32 1.0, %v7515
    %v7517 = vrcp.pop %v7453
    %v7518 = vmul.f32 %v7453, %v7517
    %v7519 = vsub.f32 1.0, %v7518
    %v7520 = vmul.f32 %v7517, %v7519
    %v7521 = vadd.f32 %v7517, %v7520
    %vm7522 = vweird.f32 %v7453
    %vm7523 = vweird.f32 %v7517
    %vm7524 = vmor %vm7522, %vm7523
    %v7525 = vsel %vm7524, %v7517, %v7521
    %v7526 = vand.u32 2147483647, %v7453
    %vm7527 = vcmp.eq.f32.partialorder %v7526, 8.507059e+37
    %v7528 = vand.u32 %v7453, 2147483648
    %v7529 = vor.u32 1.1754944e-38, %v7528
    %v7530 = vsel %vm7527, %v7529, %v7525
    %v7531 = vmul.f32 1.0, %v7530
    %v7532 = vrcp.pop %v7454
    %v7533 = vmul.f32 %v7454, %v7532
    %v7534 = vsub.f32 1.0, %v7533
    %v7535 = vmul.f32 %v7532, %v7534
    %v7536 = vadd.f32 %v7532, %v7535
    %vm7537 = vweird.f32 %v7454
    %vm7538 = vweird.f32 %v7532
    %vm7539 = vmor %vm7537, %vm7538
    %v7540 = vsel %vm7539, %v7532, %v7536
    %v7541 = vand.u32 2147483647, %v7454
    %vm7542 = vcmp.eq.f32.partialorder %v7541, 8.507059e+37
    %v7543 = vand.u32 %v7454, 2147483648
    %v7544 = vor.u32 1.1754944e-38, %v7543
    %v7545 = vsel %vm7542, %v7544, %v7540
    %v7546 = vmul.f32 1.0, %v7545
    %v7547 = vrcp.pop %v7455
    %v7548 = vmul.f32 %v7455, %v7547
    %v7549 = vsub.f32 1.0, %v7548
    %v7550 = vmul.f32 %v7547, %v7549
    %v7551 = vadd.f32 %v7547, %v7550
    %vm7552 = vweird.f32 %v7455
    %vm7553 = vweird.f32 %v7547
    %vm7554 = vmor %vm7552, %vm7553
    %v7555 = vsel %vm7554, %v7547, %v7551
    %v7556 = vand.u32 2147483647, %v7455
    %vm7557 = vcmp.eq.f32.partialorder %v7556, 8.507059e+37
    %v7558 = vand.u32 %v7455, 2147483648
    %v7559 = vor.u32 1.1754944e-38, %v7558
    %v7560 = vsel %vm7557, %v7559, %v7555
    %v7561 = vmul.f32 1.0, %v7560
    %v7562 = vrcp.pop %v7456
    %v7563 = vmul.f32 %v7456, %v7562
    %v7564 = vsub.f32 1.0, %v7563
    %v7565 = vmul.f32 %v7562, %v7564
    %v7566 = vadd.f32 %v7562, %v7565
    %vm7567 = vweird.f32 %v7456
    %vm7568 = vweird.f32 %v7562
    %vm7569 = vmor %vm7567, %vm7568
    %v7570 = vsel %vm7569, %v7562, %v7566
    %v7571 = vand.u32 2147483647, %v7456
    %vm7572 = vcmp.eq.f32.partialorder %v7571, 8.507059e+37
    %v7573 = vand.u32 %v7456, 2147483648
    %v7574 = vor.u32 1.1754944e-38, %v7573
    %v7575 = vsel %vm7572, %v7574, %v7570
    %v7576 = vmul.f32 1.0, %v7575
    %v7577 = vrot.slane %v7241, 2
    %v7578 = vrot.slane %v7242, 2
    %v7579 = vrot.slane %v7243, 2
    %v7580 = vrot.slane %v7244, 2
    %v7581 = vrot.slane %v7245, 2
    %v7582 = vrot.slane %v7246, 2
    %v7583 = vrot.slane %v7247, 2
    %v7584 = vrot.slane %v7248, 2
    %v7593 = vtanh.pop %v7577
    %v7594 = vtanh.pop %v7578
    %v7595 = vtanh.pop %v7579
    %v7596 = vtanh.pop %v7580
    %v7597 = vtanh.pop %v7581
    %v7598 = vtanh.pop %v7582
    %v7599 = vtanh.pop %v7583
    %v7600 = vtanh.pop %v7584
    %v7601 = vrot.slane %v7241, 3
    %v7602 = vrot.slane %v7242, 3
    %v7603 = vrot.slane %v7243, 3
    %v7604 = vrot.slane %v7244, 3
    %v7605 = vrot.slane %v7245, 3
    %v7606 = vrot.slane %v7246, 3
    %v7607 = vrot.slane %v7247, 3
    %v7608 = vrot.slane %v7248, 3
    %v7617 = vxor.u32 %v7601, 2147483648
    %v7618 = vxor.u32 %v7602, 2147483648
    %v7619 = vxor.u32 %v7603, 2147483648
    %v7620 = vxor.u32 %v7604, 2147483648
    %v7621 = vxor.u32 %v7605, 2147483648
    %v7622 = vxor.u32 %v7606, 2147483648
    %v7623 = vxor.u32 %v7607, 2147483648
    %v7624 = vxor.u32 %v7608, 2147483648
    %v7625 = vmul.f32 %v7617, 1.442695
    %v7626 = vpow.pop %v7625
    %v7627 = vmul.f32 %v7618, 1.442695
    %v7628 = vpow.pop %v7627
    %v7629 = vmul.f32 %v7619, 1.442695
    %v7630 = vpow.pop %v7629
    %v7631 = vmul.f32 %v7620, 1.442695
    %v7632 = vpow.pop %v7631
    %v7633 = vmul.f32 %v7621, 1.442695
    %v7634 = vpow.pop %v7633
    %v7635 = vmul.f32 %v7622, 1.442695
    %v7636 = vpow.pop %v7635
    %v7637 = vmul.f32 %v7623, 1.442695
    %v7638 = vpow.pop %v7637
    %v7639 = vmul.f32 %v7624, 1.442695
    %v7640 = vpow.pop %v7639
    %v7641 = vadd.f32 %v7626, 1.0
    %v7642 = vadd.f32 %v7628, 1.0
    %v7643 = vadd.f32 %v7630, 1.0
    %v7644 = vadd.f32 %v7632, 1.0
    %v7645 = vadd.f32 %v7634, 1.0
    %v7646 = vadd.f32 %v7636, 1.0
    %v7647 = vadd.f32 %v7638, 1.0
    %v7648 = vadd.f32 %v7640, 1.0
    %v7649 = vrcp.pop %v7641
    %v7650 = vmul.f32 %v7641, %v7649
    %v7651 = vsub.f32 1.0, %v7650
    %v7652 = vmul.f32 %v7649, %v7651
    %v7653 = vadd.f32 %v7649, %v7652
    %vm7654 = vweird.f32 %v7641
    %vm7655 = vweird.f32 %v7649
    %vm7656 = vmor %vm7654, %vm7655
    %v7657 = vsel %vm7656, %v7649, %v7653
    %v7658 = vand.u32 2147483647, %v7641
    %vm7659 = vcmp.eq.f32.partialorder %v7658, 8.507059e+37
    %v7660 = vand.u32 %v7641, 2147483648
    %v7661 = vor.u32 1.1754944e-38, %v7660
    %v7662 = vsel %vm7659, %v7661, %v7657
    %v7663 = vmul.f32 1.0, %v7662
    %v7664 = vrcp.pop %v7642
    %v7665 = vmul.f32 %v7642, %v7664
    %v7666 = vsub.f32 1.0, %v7665
    %v7667 = vmul.f32 %v7664, %v7666
    %v7668 = vadd.f32 %v7664, %v7667
    %vm7669 = vweird.f32 %v7642
    %vm7670 = vweird.f32 %v7664
    %vm7671 = vmor %vm7669, %vm7670
    %v7672 = vsel %vm7671, %v7664, %v7668
    %v7673 = vand.u32 2147483647, %v7642
    %vm7674 = vcmp.eq.f32.partialorder %v7673, 8.507059e+37
    %v7675 = vand.u32 %v7642, 2147483648
    %v7676 = vor.u32 1.1754944e-38, %v7675
    %v7677 = vsel %vm7674, %v7676, %v7672
    %v7678 = vmul.f32 1.0, %v7677
    %v7679 = vrcp.pop %v7643
    %v7680 = vmul.f32 %v7643, %v7679
    %v7681 = vsub.f32 1.0, %v7680
    %v7682 = vmul.f32 %v7679, %v7681
    %v7683 = vadd.f32 %v7679, %v7682
    %vm7684 = vweird.f32 %v7643
    %vm7685 = vweird.f32 %v7679
    %vm7686 = vmor %vm7684, %vm7685
    %v7687 = vsel %vm7686, %v7679, %v7683
    %v7688 = vand.u32 2147483647, %v7643
    %vm7689 = vcmp.eq.f32.partialorder %v7688, 8.507059e+37
    %v7690 = vand.u32 %v7643, 2147483648
    %v7691 = vor.u32 1.1754944e-38, %v7690
    %v7692 = vsel %vm7689, %v7691, %v7687
    %v7693 = vmul.f32 1.0, %v7692
    %v7694 = vrcp.pop %v7644
    %v7695 = vmul.f32 %v7644, %v7694
    %v7696 = vsub.f32 1.0, %v7695
    %v7697 = vmul.f32 %v7694, %v7696
    %v7698 = vadd.f32 %v7694, %v7697
    %vm7699 = vweird.f32 %v7644
    %vm7700 = vweird.f32 %v7694
    %vm7701 = vmor %vm7699, %vm7700
    %v7702 = vsel %vm7701, %v7694, %v7698
    %v7703 = vand.u32 2147483647, %v7644
    %vm7704 = vcmp.eq.f32.partialorder %v7703, 8.507059e+37
    %v7705 = vand.u32 %v7644, 2147483648
    %v7706 = vor.u32 1.1754944e-38, %v7705
    %v7707 = vsel %vm7704, %v7706, %v7702
    %v7708 = vmul.f32 1.0, %v7707
    %v7709 = vrcp.pop %v7645
    %v7710 = vmul.f32 %v7645, %v7709
    %v7711 = vsub.f32 1.0, %v7710
    %v7712 = vmul.f32 %v7709, %v7711
    %v7713 = vadd.f32 %v7709, %v7712
    %vm7714 = vweird.f32 %v7645
    %vm7715 = vweird.f32 %v7709
    %vm7716 = vmor %vm7714, %vm7715
    %v7717 = vsel %vm7716, %v7709, %v7713
    %v7718 = vand.u32 2147483647, %v7645
    %vm7719 = vcmp.eq.f32.partialorder %v7718, 8.507059e+37
    %v7720 = vand.u32 %v7645, 2147483648
    %v7721 = vor.u32 1.1754944e-38, %v7720
    %v7722 = vsel %vm7719, %v7721, %v7717
    %v7723 = vmul.f32 1.0, %v7722
    %v7724 = vrcp.pop %v7646
    %v7725 = vmul.f32 %v7646, %v7724
    %v7726 = vsub.f32 1.0, %v7725
    %v7727 = vmul.f32 %v7724, %v7726
    %v7728 = vadd.f32 %v7724, %v7727
    %vm7729 = vweird.f32 %v7646
    %vm7730 = vweird.f32 %v7724
    %vm7731 = vmor %vm7729, %vm7730
    %v7732 = vsel %vm7731, %v7724, %v7728
    %v7733 = vand.u32 2147483647, %v7646
    %vm7734 = vcmp.eq.f32.partialorder %v7733, 8.507059e+37
    %v7735 = vand.u32 %v7646, 2147483648
    %v7736 = vor.u32 1.1754944e-38, %v7735
    %v7737 = vsel %vm7734, %v7736, %v7732
    %v7738 = vmul.f32 1.0, %v7737
    %v7739 = vrcp.pop %v7647
    %v7740 = vmul.f32 %v7647, %v7739
    %v7741 = vsub.f32 1.0, %v7740
    %v7742 = vmul.f32 %v7739, %v7741
    %v7743 = vadd.f32 %v7739, %v7742
    %vm7744 = vweird.f32 %v7647
    %vm7745 = vweird.f32 %v7739
    %vm7746 = vmor %vm7744, %vm7745
    %v7747 = vsel %vm7746, %v7739, %v7743
    %v7748 = vand.u32 2147483647, %v7647
    %vm7749 = vcmp.eq.f32.partialorder %v7748, 8.507059e+37
    %v7750 = vand.u32 %v7647, 2147483648
    %v7751 = vor.u32 1.1754944e-38, %v7750
    %v7752 = vsel %vm7749, %v7751, %v7747
    %v7753 = vmul.f32 1.0, %v7752
    %v7754 = vrcp.pop %v7648
    %v7755 = vmul.f32 %v7648, %v7754
    %v7756 = vsub.f32 1.0, %v7755
    %v7757 = vmul.f32 %v7754, %v7756
    %v7758 = vadd.f32 %v7754, %v7757
    %vm7759 = vweird.f32 %v7648
    %vm7760 = vweird.f32 %v7754
    %vm7761 = vmor %vm7759, %vm7760
    %v7762 = vsel %vm7761, %v7754, %v7758
    %v7763 = vand.u32 2147483647, %v7648
    %vm7764 = vcmp.eq.f32.partialorder %v7763, 8.507059e+37
    %v7765 = vand.u32 %v7648, 2147483648
    %v7766 = vor.u32 1.1754944e-38, %v7765
    %v7767 = vsel %vm7764, %v7766, %v7762
    %v7768 = vmul.f32 1.0, %v7767
    %v7769 = vmul.f32 %v7471, %v6863
    %v7770 = vmul.f32 %v7486, %v6864
    %v7771 = vmul.f32 %v7501, %v6865
    %v7772 = vmul.f32 %v7516, %v6866
    %v7773 = vmul.f32 %v7531, %v6867
    %v7774 = vmul.f32 %v7546, %v6868
    %v7775 = vmul.f32 %v7561, %v6869
    %v7776 = vmul.f32 %v7576, %v6870
    %v7777 = vmul.f32 %v7295, %v7593
    %v7778 = vmul.f32 %v7310, %v7594
    %v7779 = vmul.f32 %v7325, %v7595
    %v7780 = vmul.f32 %v7340, %v7596
    %v7781 = vmul.f32 %v7355, %v7597
    %v7782 = vmul.f32 %v7370, %v7598
    %v7783 = vmul.f32 %v7385, %v7599
    %v7784 = vmul.f32 %v7400, %v7600
    %v7785 = vadd.f32 %v7769, %v7777
    %v7786 = vadd.f32 %v7770, %v7778
    %v7787 = vadd.f32 %v7771, %v7779
    %v7788 = vadd.f32 %v7772, %v7780
    %v7789 = vadd.f32 %v7773, %v7781
    %v7790 = vadd.f32 %v7774, %v7782
    %v7791 = vadd.f32 %v7775, %v7783
    %v7792 = vadd.f32 %v7776, %v7784
    %v7793 = vtanh.pop %v7785
    %v7794 = vtanh.pop %v7786
    %v7795 = vtanh.pop %v7787
    %v7796 = vtanh.pop %v7788
    %v7797 = vtanh.pop %v7789
    %v7798 = vtanh.pop %v7790
    %v7799 = vtanh.pop %v7791
    %v7800 = vtanh.pop %v7792
    %v7801 = vmul.f32 %v7663, %v7793
    %v7802 = vmul.f32 %v7678, %v7794
    %v7803 = vmul.f32 %v7693, %v7795
    %v7804 = vmul.f32 %v7708, %v7796
    %v7805 = vmul.f32 %v7723, %v7797
    %v7806 = vmul.f32 %v7738, %v7798
    %v7807 = vmul.f32 %v7753, %v7799
    %v7808 = vmul.f32 %v7768, %v7800
    %7809 = vst [vmem:[#allocation3 + $0x7] sm:$0x1] %v7801
    %7810 = vst [vmem:[#allocation3 + $0xf] sm:$0x1] %v7802
    %7811 = vst [vmem:[#allocation3 + $0x17] sm:$0x1] %v7803
    %7812 = vst [vmem:[#allocation3 + $0x1f] sm:$0x1] %v7804
    %7813 = vst [vmem:[#allocation3 + $0x27] sm:$0x1] %v7805
    %7814 = vst [vmem:[#allocation3 + $0x2f] sm:$0x1] %v7806
    %7815 = vst [vmem:[#allocation3 + $0x37] sm:$0x1] %v7807
    %7816 = vst [vmem:[#allocation3 + $0x3f] sm:$0x1] %v7808
    %7825 = vst [vmem:[#allocation1] ss:$9 sm:$0xff] %v7801
    %s7826 = scalar_lea.vmem [#allocation1], 1
    %7827 = vst [vmem:[%s7826] ss:$9 sm:$0xff] %v7802
    %s7828 = scalar_lea.vmem [#allocation1], 2
    %7829 = vst [vmem:[%s7828] ss:$9 sm:$0xff] %v7803
    %s7830 = scalar_lea.vmem [#allocation1], 3
    %7831 = vst [vmem:[%s7830] ss:$9 sm:$0xff] %v7804
    %s7832 = scalar_lea.vmem [#allocation1], 4
    %7833 = vst [vmem:[%s7832] ss:$9 sm:$0xff] %v7805
    %s7834 = scalar_lea.vmem [#allocation1], 5
    %7835 = vst [vmem:[%s7834] ss:$9 sm:$0xff] %v7806
    %s7836 = scalar_lea.vmem [#allocation1], 6
    %7837 = vst [vmem:[%s7836] ss:$9 sm:$0xff] %v7807
    %s7838 = scalar_lea.vmem [#allocation1], 7
    %7839 = vst [vmem:[%s7838] ss:$9 sm:$0xff] %v7808
    %v7840 = vld [vmem:[#allocation1] sm:$0xff]
    %7842 = vst [vmem:[#allocation4] sm:$0xff] %v7840
    %7851 = vst [vmem:[#allocation1] ss:$9 sm:$0xff] %v7785
    %s7852 = scalar_lea.vmem [#allocation1], 1
    %7853 = vst [vmem:[%s7852] ss:$9 sm:$0xff] %v7786
    %s7854 = scalar_lea.vmem [#allocation1], 2
    %7855 = vst [vmem:[%s7854] ss:$9 sm:$0xff] %v7787
    %s7856 = scalar_lea.vmem [#allocation1], 3
    %7857 = vst [vmem:[%s7856] ss:$9 sm:$0xff] %v7788
    %s7858 = scalar_lea.vmem [#allocation1], 4
    %7859 = vst [vmem:[%s7858] ss:$9 sm:$0xff] %v7789
    %s7860 = scalar_lea.vmem [#allocation1], 5
    %7861 = vst [vmem:[%s7860] ss:$9 sm:$0xff] %v7790
    %s7862 = scalar_lea.vmem [#allocation1], 6
    %7863 = vst [vmem:[%s7862] ss:$9 sm:$0xff] %v7791
    %s7864 = scalar_lea.vmem [#allocation1], 7
    %7865 = vst [vmem:[%s7864] ss:$9 sm:$0xff] %v7792
    %v7866 = vld [vmem:[#allocation1] sm:$0xff]
    %7868 = vst [vmem:[#allocation5] sm:$0xff] %v7866
    %v7869 = vld [vmem:[#allocation3] sm:$0xff]
    %v7870 = vld [vmem:[#allocation3 + $0x8] sm:$0xff]
    %v7871 = vld [vmem:[#allocation3 + $0x10] sm:$0xff]
    %v7872 = vld [vmem:[#allocation3 + $0x18] sm:$0xff]
    %v7873 = vld [vmem:[#allocation3 + $0x20] sm:$0xff]
    %v7874 = vld [vmem:[#allocation3 + $0x28] sm:$0xff]
    %v7875 = vld [vmem:[#allocation3 + $0x30] sm:$0xff]
    %v7876 = vld [vmem:[#allocation3 + $0x38] sm:$0xff]
    %v7877 = vpack.c.bf16 %v7869, %v7869
    %v7878 = vpack.c.bf16 %v7870, %v7870
    %v7879 = vpack.c.bf16 %v7871, %v7871
    %v7880 = vpack.c.bf16 %v7872, %v7872
    %v7881 = vpack.c.bf16 %v7873, %v7873
    %v7882 = vpack.c.bf16 %v7874, %v7874
    %v7883 = vpack.c.bf16 %v7875, %v7875
    %v7884 = vpack.c.bf16 %v7876, %v7876
    %7885 = vst [vmem:[#allocation14] sm:$0xf] %v7877
    %7886 = vst [vmem:[#allocation14 + $0x4] sm:$0xf] %v7878
    %7887 = vst [vmem:[#allocation14 + $0x8] sm:$0xf] %v7879
    %7888 = vst [vmem:[#allocation14 + $0xc] sm:$0xf] %v7880
    %7889 = vst [vmem:[#allocation14 + $0x10] sm:$0xf] %v7881
    %7890 = vst [vmem:[#allocation14 + $0x14] sm:$0xf] %v7882
    %7891 = vst [vmem:[#allocation14 + $0x18] sm:$0xf] %v7883
    %7892 = vst [vmem:[#allocation14 + $0x1c] sm:$0xf] %v7884
    // Predicated region
    $region38: #{tpu_custom_call.1} parent=1 // pred_check
      _
    $region39: #{tpu_custom_call.1} parent=1 // pred_check_branch
      %7894 = sbr.rel (0) target = $region41
    $region40: #{tpu_custom_call.1} parent=1 // pred_region
      %7896 = vsyncadd [#allocation8], 0
      %s7897 = sshll.u32 [#allocation14], 4
      %s7898 = int_to_ptr.vmem [resolvable:$true] %s7897
      %s7899 = sshll.u32 %s4, 4
      %s7900 = int_to_ptr.hbm [resolvable:$true] %s7899
      %7905 = dma.vmem_to_hbm [thread:$0]  %s7898, 512, %s7900, [#allocation8], 64, 64, 4
    $region41: #{tpu_custom_call.1} parent=1 // pred_fallthru
      _
    // Predicated region
    $region42: #{tpu_custom_call.1} parent=1 // pred_check
      _
    $region43: #{tpu_custom_call.1} parent=1 // pred_check_branch
      %7907 = sbr.rel (0) target = $region45
    $region44: #{tpu_custom_call.1} parent=1 // pred_region
      %7909 = dma.done [#allocation8], 512
    $region45: #{tpu_custom_call.1} parent=1 // pred_fallthru
      _
    %7910 = vsyncpa [#allocation7], 1
    %7911 = vsyncpa [#allocation10], 1
    %7912 = vsyncpa [#allocation13], 1
    %7913 = vsyncpa [#allocation8], 1

</llo_original>
